<compile_context>
chip_gen: v7x
topology: tpu7x:2x2x1
jax: 0.10.0
libtpu: 0.0.40
codegen_flags: <defaults>
</compile_context>

<pallas_src>
import functools

import jax
import jax.numpy as jnp
import numpy as np
from jax.experimental import pallas as pl
from jax.experimental.pallas import tpu as pltpu


# ------------------------------- fused kernel --------------------------------

def fused_gat_kernel(x_ref, bias_ref,
                     w1_ref, attn1_ref, w2_ref, attn2_ref,
                     pool_ref, mw1_ref, mb1_ref, mw2_ref, mb2_ref, mw3_ref, mb3_ref,
                     o_ref, *, num_heads, head_dim, alpha):
    H, D = num_heads, head_dim

    # Block-diagonal super-graph additive mask, hoisted once per grid step and shared by
    # both layers and all heads.  bias[dst, src] = 0.0 on edges, -1e30 otherwise.
    bias = bias_ref[...]                                   # [GBN, GBN] f32
    edge = bias >= 0.0                                     # boolean edge mask

    def attention(ft, attn_ref):
        """GAT attention + aggregation + ELU for every head.

        ft: [GBN, H*D] f32 node features of the super-graph.
        Returns H per-head outputs, each [GBN, D] f32 (head concat is never materialized).
        """
        ft_bf = ft.astype(jnp.bfloat16)
        # One MXU matmul produces src (attn_l) and dst (attn_r) scores for all heads.
        scores = jnp.dot(ft_bf, attn_ref[...],
                         preferred_element_type=jnp.float32)        # [GBN, 128] (cols 0..2H-1 used)
        scores_t = scores.T                                          # one transpose/layer: lane-major src
        outs = []
        for h in range(H):                                           # static unroll over heads
            a_src = scores_t[h:h + 1, :]                             # [1,  GBN] a1[src], lane-major
            a_dst = scores[:, H + h:H + h + 1]                       # [GBN, 1]  a2[dst], sublane-major
            s = a_dst + a_src                                        # [GBN(dst), GBN(src)]
            s = jnp.where(s > 0, s, alpha * s)                       # LeakyReLU(0.2)
            s = s + bias                                             # mask off non-edges / cross-graph
            m = jnp.max(s, axis=-1, keepdims=True)                   # softmax over in-edges (src, lanes)
            e = jnp.where(edge, jnp.exp(s - m), 0.0)
            denom = jnp.sum(e, axis=-1, keepdims=True)
            denom = jnp.where(denom == 0.0, 1.0, denom)              # guard dst with no in-edges
            att = e * pl.reciprocal(denom, approx=True)              # divide on the EUP slot
            # Aggregation: one [GBN, GBN] x [GBN, D] MXU matmul per head (bf16 operands, f32 acc).
            agg = jnp.dot(att.astype(jnp.bfloat16), ft_bf[:, h * D:(h + 1) * D],
                          preferred_element_type=jnp.float32)        # [GBN, D]
            # agg_activation = ELU (exp only on the non-positive branch)
            outs.append(jnp.where(agg > 0, agg, jnp.exp(jnp.minimum(agg, 0.0)) - 1.0))
        return outs

    # ---- layer 1: fc over every node of every graph in the block (one 128-row matmul) ----
    ft1 = jnp.dot(x_ref[...], w1_ref[...], preferred_element_type=jnp.float32)   # [GBN, H*D]
    outs1 = attention(ft1, attn1_ref)

    # ---- layer 2 fc: fold the head concat into K-slice accumulation (no lane-offset stores) ----
    ft2 = jnp.dot(outs1[0].astype(jnp.bfloat16), w2_ref[0:D, :],
                  preferred_element_type=jnp.float32)
    for h in range(1, H):
        ft2 = ft2 + jnp.dot(outs1[h].astype(jnp.bfloat16), w2_ref[h * D:(h + 1) * D, :],
                            preferred_element_type=jnp.float32)
    outs2 = attention(ft2, attn2_ref)

    # ---- readout: dgl.mean_nodes as a pooling matmul, folded per-head into MLP layer 1 ----
    z = mb1_ref[...]                                                 # [1, 64] bias, broadcasts
    for h in range(H):
        pooled = jnp.dot(pool_ref[...], outs2[h].astype(jnp.bfloat16),
                         preferred_element_type=jnp.float32)         # [GB, D] per-graph means
        z = z + jnp.dot(pooled.astype(jnp.bfloat16), mw1_ref[h * D:(h + 1) * D, :],
                        preferred_element_type=jnp.float32)
    z = jnp.maximum(z, 0.0)
    z = jnp.maximum(jnp.dot(z.astype(jnp.bfloat16), mw2_ref[...],
                            preferred_element_type=jnp.float32) + mb2_ref[...], 0.0)
    # Lane-dense 128-wide logits store; the wrapper slices out [:, :n_classes].
    o_ref[...] = jnp.dot(z.astype(jnp.bfloat16), mw3_ref[...],
                         preferred_element_type=jnp.float32) + mb3_ref[...]


def gat_classifier(x, adj, p, *, num_heads, head_dim, n_classes, graphs_per_block):
    G, N, fin = x.shape
    gb = graphs_per_block
    assert G % gb == 0, "G must be a multiple of graphs_per_block"
    nb = G // gb
    gbn = gb * N
    o_pad = p['mw3p'].shape[1]

    # Flatten nodes: each grid step works on one GB-graph super-graph of GB*N nodes.
    x_flat = x.reshape(G * N, fin).astype(jnp.bfloat16)

    # Block-diagonal additive attention bias: bias[dst, src] = 0 on (src->dst) edges of the
    # same graph, -1e30 elsewhere (non-edges and cross-graph pairs).
    adj_t = jnp.swapaxes(adj, 1, 2)                                  # [G, dst, src]
    blk = adj_t.reshape(nb, gb, N, N)
    eye_gb = jnp.eye(gb, dtype=adj.dtype)
    bd = (blk[:, :, :, None, :] * eye_gb[None, :, None, :, None]).reshape(nb, gbn, gbn)
    bias_bd = jnp.where(bd > 0, 0.0, -1e30).astype(jnp.float32).reshape(nb * gbn, gbn)

    # Per-graph mean-nodes pooling matrix (block-diagonal rows of 1/N), same for all blocks.
    pool = (jnp.repeat(jnp.eye(gb, dtype=jnp.float32), N, axis=1) / N).astype(jnp.bfloat16)

    def rep(shape):
        nd = len(shape)
        return pl.BlockSpec(shape, lambda g, _nd=nd: (0,) * _nd)

    kernel = functools.partial(fused_gat_kernel, num_heads=num_heads,
                               head_dim=head_dim, alpha=0.2)
    out_pad = pl.pallas_call(
        kernel,
        out_shape=jax.ShapeDtypeStruct((G, o_pad), jnp.float32),
        grid_spec=pltpu.PrefetchScalarGridSpec(
            num_scalar_prefetch=0,
            grid=(nb,),                                              # (2,): both v7x TCs get a step
            in_specs=[
                pl.BlockSpec((gbn, fin), lambda g: (g, 0)),          # super-graph node features
                pl.BlockSpec((gbn, gbn), lambda g: (g, 0)),          # additive attention bias
                rep(p['w1'].shape),
                rep(p['attn1'].shape),
                rep(p['w2'].shape),
                rep(p['attn2'].shape),
                rep(pool.shape),
                rep(p['mw1'].shape),
                rep(p['mb1'].shape),
                rep(p['mw2'].shape),
                rep(p['mb2'].shape),
                rep(p['mw3p'].shape),
                rep(p['mb3p'].shape),
            ],
            out_specs=pl.BlockSpec((gb, o_pad), lambda g: (g, 0)),
        ),
        compiler_params=pltpu.CompilerParams(dimension_semantics=("parallel",)),
    )(x_flat, bias_bd, p['w1'], p['attn1'], p['w2'], p['attn2'], pool,
      p['mw1'], p['mb1'], p['mw2'], p['mb2'], p['mw3p'], p['mb3p'])
    return out_pad[:, :n_classes]


def block_diag_attn(a):
    """[H, D] per-head attention vectors -> [H*D, H] block-diagonal matrix."""
    H, D = a.shape
    eye = jnp.eye(H, dtype=a.dtype)
    return (a[:, :, None] * eye[:, None, :]).reshape(H * D, H)


# ------------------------------ pure-JAX reference ----------------------------
# Same math as the kernel (including bf16 MXU operands with f32 accumulation).

def gat_layer_ref(x, adj, w, al, ar, alpha=0.2):
    G, N, _ = x.shape
    H, D = al.shape
    ft = jnp.einsum('gnf,fo->gno', x.astype(jnp.bfloat16), w.astype(jnp.bfloat16),
                    preferred_element_type=jnp.float32)
    ftb = ft.astype(jnp.bfloat16).reshape(G, N, H, D)
    a1 = jnp.einsum('gnhd,hd->gnh', ftb, al.astype(jnp.bfloat16),
                    preferred_element_type=jnp.float32)
    a2 = jnp.einsum('gnhd,hd->gnh', ftb, ar.astype(jnp.bfloat16),
                    preferred_element_type=jnp.float32)
    s = a1[:, :, None, :] + a2[:, None, :, :]                 # [G, src, dst, H]
    s = jnp.where(s > 0, s, alpha * s)
    mask = adj[..., None] > 0
    masked = jnp.where(mask, s, -1e30)
    m = jnp.max(masked, axis=1, keepdims=True)
    e = jnp.where(mask, jnp.exp(masked - m), 0.0)
    denom = jnp.sum(e, axis=1, keepdims=True)
    denom = jnp.where(denom == 0.0, 1.0, denom)
    att = (e / denom).astype(jnp.bfloat16)
    out = jnp.einsum('gsdh,gshf->gdhf', att, ftb,
                     preferred_element_type=jnp.float32).reshape(G, N, H * D)
    return jnp.where(out > 0, out, jnp.exp(jnp.minimum(out, 0.0)) - 1.0)


def classifier_ref(x, adj, p):
    h = gat_layer_ref(x, adj, p['w1'], p['al1'], p['ar1'])
    h = gat_layer_ref(h, adj, p['w2'], p['al2'], p['ar2'])
    hg = jnp.mean(h, axis=1)
    z = jnp.maximum(jnp.dot(hg.astype(jnp.bfloat16), p['mw1'].astype(jnp.bfloat16),
                            preferred_element_type=jnp.float32) + p['mb1'], 0.0)
    z = jnp.maximum(jnp.dot(z.astype(jnp.bfloat16), p['mw2'].astype(jnp.bfloat16),
                            preferred_element_type=jnp.float32) + p['mb2'], 0.0)
    return jnp.dot(z.astype(jnp.bfloat16), p['mw3'].astype(jnp.bfloat16),
                   preferred_element_type=jnp.float32) + p['mb3']


# ----------------------------------- main -------------------------------------

if __name__ == "__main__":
    key = jax.random.PRNGKey(0)
    ks = jax.random.split(key, 12)

    # hidden_dim * num_heads must be 128 to match the hard-coded MLP(128, 64, 2) tail
    G, N = 32, 8                       # 32 small graphs, 8 nodes each
    GB = 16                            # graphs per grid step -> GB*N = 128 MXU rows, grid=(2,)
    in_dim, hidden_dim, num_heads = 16, 32, 4
    HD = hidden_dim * num_heads        # 128
    H2 = 2 * num_heads
    n_classes = 2
    O_PAD = 128                        # lane-dense padded logits store
    A_PAD = 128                        # lane-dense padded attention-score matmul / transpose

    # node features + adjacency (self-loops so every dst has an in-edge)
    x = jax.random.normal(ks[0], (G, N, in_dim), dtype=jnp.float32)
    adj_f = (jax.random.uniform(ks[1], (G, N, N)) < 0.4).astype(jnp.float32)
    adj_f = jnp.maximum(adj_f, jnp.eye(N, dtype=jnp.float32)[None])

    # deterministic synthetic parameters
    w1 = jax.random.normal(ks[2], (in_dim, HD), jnp.float32) * 0.1
    al1 = jax.random.normal(ks[3], (num_heads, hidden_dim), jnp.float32)
    ar1 = jax.random.normal(ks[4], (num_heads, hidden_dim), jnp.float32)
    w2 = jax.random.normal(ks[5], (HD, HD), jnp.float32) * 0.1
    al2 = jax.random.normal(ks[6], (num_heads, hidden_dim), jnp.float32)
    ar2 = jax.random.normal(ks[7], (num_heads, hidden_dim), jnp.float32)
    mw1 = jax.random.normal(ks[8], (HD, 64), jnp.float32) * 0.1
    mb1 = jax.random.normal(ks[9], (1, 64), jnp.float32) * 0.1
    mw2 = jax.random.normal(ks[10], (64, 64), jnp.float32) * 0.1
    mb2 = jnp.zeros((1, 64), jnp.float32)
    mw3 = jax.random.normal(ks[11], (64, n_classes), jnp.float32) * 0.1
    mb3 = jnp.zeros((1, n_classes), jnp.float32)

    def attn_cat(al, ar):
        """Fused [HD, 128] matrix: cols 0..H-1 = attn_l heads, H..2H-1 = attn_r heads, rest 0."""
        c = jnp.zeros((HD, A_PAD), jnp.float32)
        c = c.at[:, :num_heads].set(block_diag_attn(al))
        c = c.at[:, num_heads:H2].set(block_diag_attn(ar))
        return c.astype(jnp.bfloat16)

    kernel_params = dict(
        w1=w1.astype(jnp.bfloat16), attn1=attn_cat(al1, ar1),
        w2=w2.astype(jnp.bfloat16), attn2=attn_cat(al2, ar2),
        mw1=mw1.astype(jnp.bfloat16), mb1=mb1,
        mw2=mw2.astype(jnp.bfloat16), mb2=mb2,
        mw3p=jnp.zeros((64, O_PAD), jnp.float32).at[:, :n_classes].set(mw3).astype(jnp.bfloat16),
        mb3p=jnp.zeros((1, O_PAD), jnp.float32).at[:, :n_classes].set(mb3),
    )

    # Pallas fused forward
    out = gat_classifier(x, adj_f, kernel_params,
                         num_heads=num_heads, head_dim=hidden_dim,
                         n_classes=n_classes, graphs_per_block=GB)
    out = jax.block_until_ready(out)

    # correctness check against a pure-JAX reference of the same (bf16-MXU) math;
    # tolerance accounts for pl.reciprocal(approx=True) and bf16 rounding points.
    ref_params = dict(w1=w1, al1=al1, ar1=ar1, w2=w2, al2=al2, ar2=ar2,
                      mw1=mw1, mb1=mb1, mw2=mw2, mb2=mb2, mw3=mw3, mb3=mb3)
    ref = jax.block_until_ready(classifier_ref(x, adj_f, ref_params))
    np.testing.assert_allclose(np.asarray(out), np.asarray(ref), rtol=1e-2, atol=1e-2)

    print("KERNEL_OK")
</pallas_src>

<mosaic_0001>
module attributes {stable_mosaic.version = 11 : i64} {
  func.func @fused_gat_kernel(%arg0: i32, %arg1: memref<128x16xbf16, #tpu.memory_space<vmem>>, %arg2: memref<128x128xf32, #tpu.memory_space<vmem>>, %arg3: memref<16x128xbf16, #tpu.memory_space<vmem>>, %arg4: memref<128x128xbf16, #tpu.memory_space<vmem>>, %arg5: memref<128x128xbf16, #tpu.memory_space<vmem>>, %arg6: memref<128x128xbf16, #tpu.memory_space<vmem>>, %arg7: memref<16x128xbf16, #tpu.memory_space<vmem>>, %arg8: memref<128x64xbf16, #tpu.memory_space<vmem>>, %arg9: memref<1x64xf32, #tpu.memory_space<vmem>>, %arg10: memref<64x64xbf16, #tpu.memory_space<vmem>>, %arg11: memref<1x64xf32, #tpu.memory_space<vmem>>, %arg12: memref<64x128xbf16, #tpu.memory_space<vmem>>, %arg13: memref<1x128xf32, #tpu.memory_space<vmem>>, %arg14: memref<16x128xf32, #tpu.memory_space<vmem>>) attributes {dimension_semantics = [#tpu.dimension_semantics<parallel>], iteration_bounds = array<i64: 2>, scalar_prefetch = 0 : i64, scratch_operands = 0 : i64, tpu.core_type = #tpu.core_type<tc>, window_params = [{transform_indices = @transform_0, window_bounds = array<i64: 128, 16>}, {transform_indices = @transform_1, window_bounds = array<i64: 128, 128>}, {pipeline_mode = #tpu.pipeline_mode<synchronous>, transform_indices = @transform_2, window_bounds = array<i64: 16, 128>}, {pipeline_mode = #tpu.pipeline_mode<synchronous>, transform_indices = @transform_3, window_bounds = array<i64: 128, 128>}, {pipeline_mode = #tpu.pipeline_mode<synchronous>, transform_indices = @transform_4, window_bounds = array<i64: 128, 128>}, {pipeline_mode = #tpu.pipeline_mode<synchronous>, transform_indices = @transform_5, window_bounds = array<i64: 128, 128>}, {pipeline_mode = #tpu.pipeline_mode<synchronous>, transform_indices = @transform_6, window_bounds = array<i64: 16, 128>}, {pipeline_mode = #tpu.pipeline_mode<synchronous>, transform_indices = @transform_7, window_bounds = array<i64: 128, 64>}, {pipeline_mode = #tpu.pipeline_mode<synchronous>, transform_indices = @transform_8, window_bounds = array<i64: 1, 64>}, {pipeline_mode = #tpu.pipeline_mode<synchronous>, transform_indices = @transform_9, window_bounds = array<i64: 64, 64>}, {pipeline_mode = #tpu.pipeline_mode<synchronous>, transform_indices = @transform_10, window_bounds = array<i64: 1, 64>}, {pipeline_mode = #tpu.pipeline_mode<synchronous>, transform_indices = @transform_11, window_bounds = array<i64: 64, 128>}, {pipeline_mode = #tpu.pipeline_mode<synchronous>, transform_indices = @transform_12, window_bounds = array<i64: 1, 128>}, {transform_indices = @transform_13, window_bounds = array<i64: 16, 128>}]} {
    %c0 = arith.constant 0 : index
    %c0_0 = arith.constant 0 : index
    %0 = vector.load %arg2[%c0, %c0_0] : memref<128x128xf32, #tpu.memory_space<vmem>>, vector<128x128xf32>
    %cst = arith.constant 0.000000e+00 : f32
    %1 = vector.broadcast %cst : f32 to vector<128x128xf32>
    %2 = arith.cmpf oge, %0, %1 : vector<128x128xf32>
    %c0_1 = arith.constant 0 : index
    %c0_2 = arith.constant 0 : index
    %3 = vector.load %arg1[%c0_1, %c0_2] : memref<128x16xbf16, #tpu.memory_space<vmem>>, vector<128x16xbf16>
    %c0_3 = arith.constant 0 : index
    %c0_4 = arith.constant 0 : index
    %4 = vector.load %arg3[%c0_3, %c0_4] : memref<16x128xbf16, #tpu.memory_space<vmem>>, vector<16x128xbf16>
    %cst_5 = arith.constant dense<0.000000e+00> : vector<128x128xf32>
    %5 = tpu.matmul %3, %4, %cst_5 {dimension_numbers = #tpu.dot_dimension_numbers<[1], [0], [0], [1], [0, 0, 1, 1], [], []>} : vector<128x16xbf16>, vector<16x128xbf16>, vector<128x128xf32> -> vector<128x128xf32>
    %6 = arith.truncf %5 : vector<128x128xf32> to vector<128x128xbf16>
    %c0_6 = arith.constant 0 : index
    %c0_7 = arith.constant 0 : index
    %7 = vector.load %arg4[%c0_6, %c0_7] : memref<128x128xbf16, #tpu.memory_space<vmem>>, vector<128x128xbf16>
    %cst_8 = arith.constant dense<0.000000e+00> : vector<128x128xf32>
    %8 = tpu.matmul %6, %7, %cst_8 {dimension_numbers = #tpu.dot_dimension_numbers<[1], [0], [0], [1], [0, 0, 1, 1], [], []>} : vector<128x128xbf16>, vector<128x128xbf16>, vector<128x128xf32> -> vector<128x128xf32>
    %9 = tpu.transpose %8, [1, 0] : vector<128x128xf32> -> vector<128x128xf32>
    %10 = vector.extract_strided_slice %9 {offsets = [0, 0], sizes = [1, 128], strides = [1, 1]} : vector<128x128xf32> to vector<1x128xf32>
    %11 = vector.extract_strided_slice %8 {offsets = [0, 4], sizes = [128, 1], strides = [1, 1]} : vector<128x128xf32> to vector<128x1xf32>
    %12 = vector.broadcast %11 : vector<128x1xf32> to vector<128x128xf32>
    %13 = vector.broadcast %10 : vector<1x128xf32> to vector<128x128xf32>
    %14 = arith.addf %12, %13 : vector<128x128xf32>
    %cst_9 = arith.constant 0.000000e+00 : f32
    %15 = vector.broadcast %cst_9 : f32 to vector<128x128xf32>
    %16 = arith.cmpf ogt, %14, %15 : vector<128x128xf32>
    %cst_10 = arith.constant 2.000000e-01 : f32
    %17 = vector.broadcast %cst_10 : f32 to vector<128x128xf32>
    %18 = arith.mulf %17, %14 : vector<128x128xf32>
    %19 = arith.select %16, %14, %18 : vector<128x128xi1>, vector<128x128xf32>
    %20 = arith.addf %19, %0 : vector<128x128xf32>
    %cst_11 = arith.constant dense<0xFF800000> : vector<128xf32>
    %21 = vector.multi_reduction <maximumf>, %20, %cst_11 [1] : vector<128x128xf32> to vector<128xf32>
    %22 = vector.shape_cast %21 : vector<128xf32> to vector<128x1xf32>
    %23 = vector.broadcast %22 : vector<128x1xf32> to vector<128x128xf32>
    %24 = arith.subf %20, %23 : vector<128x128xf32>
    %25 = math.exp %24 : vector<128x128xf32>
    %cst_12 = arith.constant 0.000000e+00 : f32
    %26 = vector.broadcast %cst_12 : f32 to vector<128x128xf32>
    %27 = arith.select %2, %25, %26 : vector<128x128xi1>, vector<128x128xf32>
    %cst_13 = arith.constant dense<0.000000e+00> : vector<128xf32>
    %28 = vector.multi_reduction <add>, %27, %cst_13 [1] : vector<128x128xf32> to vector<128xf32>
    %29 = vector.shape_cast %28 : vector<128xf32> to vector<128x1xf32>
    %cst_14 = arith.constant 0.000000e+00 : f32
    %30 = vector.broadcast %cst_14 : f32 to vector<128x1xf32>
    %31 = arith.cmpf oeq, %29, %30 : vector<128x1xf32>
    %cst_15 = arith.constant 1.000000e+00 : f32
    %32 = vector.broadcast %cst_15 : f32 to vector<128x1xf32>
    %33 = arith.select %31, %32, %29 : vector<128x1xi1>, vector<128x1xf32>
    %34 = tpu.reciprocal %33 {approx = true} : vector<128x1xf32> -> vector<128x1xf32>
    %35 = vector.broadcast %34 : vector<128x1xf32> to vector<128x128xf32>
    %36 = arith.mulf %27, %35 : vector<128x128xf32>
    %37 = arith.truncf %36 : vector<128x128xf32> to vector<128x128xbf16>
    %38 = vector.extract_strided_slice %6 {offsets = [0, 0], sizes = [128, 32], strides = [1, 1]} : vector<128x128xbf16> to vector<128x32xbf16>
    %cst_16 = arith.constant dense<0.000000e+00> : vector<128x32xf32>
    %39 = tpu.matmul %37, %38, %cst_16 {dimension_numbers = #tpu.dot_dimension_numbers<[1], [0], [0], [1], [0, 0, 1, 1], [], []>} : vector<128x128xbf16>, vector<128x32xbf16>, vector<128x32xf32> -> vector<128x32xf32>
    %cst_17 = arith.constant 0.000000e+00 : f32
    %40 = vector.broadcast %cst_17 : f32 to vector<128x32xf32>
    %41 = arith.cmpf ogt, %39, %40 : vector<128x32xf32>
    %cst_18 = arith.constant 0.000000e+00 : f32
    %42 = vector.broadcast %cst_18 : f32 to vector<128x32xf32>
    %43 = arith.minimumf %39, %42 : vector<128x32xf32>
    %44 = math.exp %43 : vector<128x32xf32>
    %cst_19 = arith.constant 1.000000e+00 : f32
    %45 = vector.broadcast %cst_19 : f32 to vector<128x32xf32>
    %46 = arith.subf %44, %45 : vector<128x32xf32>
    %47 = arith.select %41, %39, %46 : vector<128x32xi1>, vector<128x32xf32>
    %48 = vector.extract_strided_slice %9 {offsets = [1, 0], sizes = [1, 128], strides = [1, 1]} : vector<128x128xf32> to vector<1x128xf32>
    %49 = vector.extract_strided_slice %8 {offsets = [0, 5], sizes = [128, 1], strides = [1, 1]} : vector<128x128xf32> to vector<128x1xf32>
    %50 = vector.broadcast %49 : vector<128x1xf32> to vector<128x128xf32>
    %51 = vector.broadcast %48 : vector<1x128xf32> to vector<128x128xf32>
    %52 = arith.addf %50, %51 : vector<128x128xf32>
    %cst_20 = arith.constant 0.000000e+00 : f32
    %53 = vector.broadcast %cst_20 : f32 to vector<128x128xf32>
    %54 = arith.cmpf ogt, %52, %53 : vector<128x128xf32>
    %cst_21 = arith.constant 2.000000e-01 : f32
    %55 = vector.broadcast %cst_21 : f32 to vector<128x128xf32>
    %56 = arith.mulf %55, %52 : vector<128x128xf32>
    %57 = arith.select %54, %52, %56 : vector<128x128xi1>, vector<128x128xf32>
    %58 = arith.addf %57, %0 : vector<128x128xf32>
    %cst_22 = arith.constant dense<0xFF800000> : vector<128xf32>
    %59 = vector.multi_reduction <maximumf>, %58, %cst_22 [1] : vector<128x128xf32> to vector<128xf32>
    %60 = vector.shape_cast %59 : vector<128xf32> to vector<128x1xf32>
    %61 = vector.broadcast %60 : vector<128x1xf32> to vector<128x128xf32>
    %62 = arith.subf %58, %61 : vector<128x128xf32>
    %63 = math.exp %62 : vector<128x128xf32>
    %cst_23 = arith.constant 0.000000e+00 : f32
    %64 = vector.broadcast %cst_23 : f32 to vector<128x128xf32>
    %65 = arith.select %2, %63, %64 : vector<128x128xi1>, vector<128x128xf32>
    %cst_24 = arith.constant dense<0.000000e+00> : vector<128xf32>
    %66 = vector.multi_reduction <add>, %65, %cst_24 [1] : vector<128x128xf32> to vector<128xf32>
    %67 = vector.shape_cast %66 : vector<128xf32> to vector<128x1xf32>
    %cst_25 = arith.constant 0.000000e+00 : f32
    %68 = vector.broadcast %cst_25 : f32 to vector<128x1xf32>
    %69 = arith.cmpf oeq, %67, %68 : vector<128x1xf32>
    %cst_26 = arith.constant 1.000000e+00 : f32
    %70 = vector.broadcast %cst_26 : f32 to vector<128x1xf32>
    %71 = arith.select %69, %70, %67 : vector<128x1xi1>, vector<128x1xf32>
    %72 = tpu.reciprocal %71 {approx = true} : vector<128x1xf32> -> vector<128x1xf32>
    %73 = vector.broadcast %72 : vector<128x1xf32> to vector<128x128xf32>
    %74 = arith.mulf %65, %73 : vector<128x128xf32>
    %75 = arith.truncf %74 : vector<128x128xf32> to vector<128x128xbf16>
    %76 = vector.extract_strided_slice %6 {offsets = [0, 32], sizes = [128, 32], strides = [1, 1]} : vector<128x128xbf16> to vector<128x32xbf16>
    %cst_27 = arith.constant dense<0.000000e+00> : vector<128x32xf32>
    %77 = tpu.matmul %75, %76, %cst_27 {dimension_numbers = #tpu.dot_dimension_numbers<[1], [0], [0], [1], [0, 0, 1, 1], [], []>} : vector<128x128xbf16>, vector<128x32xbf16>, vector<128x32xf32> -> vector<128x32xf32>
    %cst_28 = arith.constant 0.000000e+00 : f32
    %78 = vector.broadcast %cst_28 : f32 to vector<128x32xf32>
    %79 = arith.cmpf ogt, %77, %78 : vector<128x32xf32>
    %cst_29 = arith.constant 0.000000e+00 : f32
    %80 = vector.broadcast %cst_29 : f32 to vector<128x32xf32>
    %81 = arith.minimumf %77, %80 : vector<128x32xf32>
    %82 = math.exp %81 : vector<128x32xf32>
    %cst_30 = arith.constant 1.000000e+00 : f32
    %83 = vector.broadcast %cst_30 : f32 to vector<128x32xf32>
    %84 = arith.subf %82, %83 : vector<128x32xf32>
    %85 = arith.select %79, %77, %84 : vector<128x32xi1>, vector<128x32xf32>
    %86 = vector.extract_strided_slice %9 {offsets = [2, 0], sizes = [1, 128], strides = [1, 1]} : vector<128x128xf32> to vector<1x128xf32>
    %87 = vector.extract_strided_slice %8 {offsets = [0, 6], sizes = [128, 1], strides = [1, 1]} : vector<128x128xf32> to vector<128x1xf32>
    %88 = vector.broadcast %87 : vector<128x1xf32> to vector<128x128xf32>
    %89 = vector.broadcast %86 : vector<1x128xf32> to vector<128x128xf32>
    %90 = arith.addf %88, %89 : vector<128x128xf32>
    %cst_31 = arith.constant 0.000000e+00 : f32
    %91 = vector.broadcast %cst_31 : f32 to vector<128x128xf32>
    %92 = arith.cmpf ogt, %90, %91 : vector<128x128xf32>
    %cst_32 = arith.constant 2.000000e-01 : f32
    %93 = vector.broadcast %cst_32 : f32 to vector<128x128xf32>
    %94 = arith.mulf %93, %90 : vector<128x128xf32>
    %95 = arith.select %92, %90, %94 : vector<128x128xi1>, vector<128x128xf32>
    %96 = arith.addf %95, %0 : vector<128x128xf32>
    %cst_33 = arith.constant dense<0xFF800000> : vector<128xf32>
    %97 = vector.multi_reduction <maximumf>, %96, %cst_33 [1] : vector<128x128xf32> to vector<128xf32>
    %98 = vector.shape_cast %97 : vector<128xf32> to vector<128x1xf32>
    %99 = vector.broadcast %98 : vector<128x1xf32> to vector<128x128xf32>
    %100 = arith.subf %96, %99 : vector<128x128xf32>
    %101 = math.exp %100 : vector<128x128xf32>
    %cst_34 = arith.constant 0.000000e+00 : f32
    %102 = vector.broadcast %cst_34 : f32 to vector<128x128xf32>
    %103 = arith.select %2, %101, %102 : vector<128x128xi1>, vector<128x128xf32>
    %cst_35 = arith.constant dense<0.000000e+00> : vector<128xf32>
    %104 = vector.multi_reduction <add>, %103, %cst_35 [1] : vector<128x128xf32> to vector<128xf32>
    %105 = vector.shape_cast %104 : vector<128xf32> to vector<128x1xf32>
    %cst_36 = arith.constant 0.000000e+00 : f32
    %106 = vector.broadcast %cst_36 : f32 to vector<128x1xf32>
    %107 = arith.cmpf oeq, %105, %106 : vector<128x1xf32>
    %cst_37 = arith.constant 1.000000e+00 : f32
    %108 = vector.broadcast %cst_37 : f32 to vector<128x1xf32>
    %109 = arith.select %107, %108, %105 : vector<128x1xi1>, vector<128x1xf32>
    %110 = tpu.reciprocal %109 {approx = true} : vector<128x1xf32> -> vector<128x1xf32>
    %111 = vector.broadcast %110 : vector<128x1xf32> to vector<128x128xf32>
    %112 = arith.mulf %103, %111 : vector<128x128xf32>
    %113 = arith.truncf %112 : vector<128x128xf32> to vector<128x128xbf16>
    %114 = vector.extract_strided_slice %6 {offsets = [0, 64], sizes = [128, 32], strides = [1, 1]} : vector<128x128xbf16> to vector<128x32xbf16>
    %cst_38 = arith.constant dense<0.000000e+00> : vector<128x32xf32>
    %115 = tpu.matmul %113, %114, %cst_38 {dimension_numbers = #tpu.dot_dimension_numbers<[1], [0], [0], [1], [0, 0, 1, 1], [], []>} : vector<128x128xbf16>, vector<128x32xbf16>, vector<128x32xf32> -> vector<128x32xf32>
    %cst_39 = arith.constant 0.000000e+00 : f32
    %116 = vector.broadcast %cst_39 : f32 to vector<128x32xf32>
    %117 = arith.cmpf ogt, %115, %116 : vector<128x32xf32>
    %cst_40 = arith.constant 0.000000e+00 : f32
    %118 = vector.broadcast %cst_40 : f32 to vector<128x32xf32>
    %119 = arith.minimumf %115, %118 : vector<128x32xf32>
    %120 = math.exp %119 : vector<128x32xf32>
    %cst_41 = arith.constant 1.000000e+00 : f32
    %121 = vector.broadcast %cst_41 : f32 to vector<128x32xf32>
    %122 = arith.subf %120, %121 : vector<128x32xf32>
    %123 = arith.select %117, %115, %122 : vector<128x32xi1>, vector<128x32xf32>
    %124 = vector.extract_strided_slice %9 {offsets = [3, 0], sizes = [1, 128], strides = [1, 1]} : vector<128x128xf32> to vector<1x128xf32>
    %125 = vector.extract_strided_slice %8 {offsets = [0, 7], sizes = [128, 1], strides = [1, 1]} : vector<128x128xf32> to vector<128x1xf32>
    %126 = vector.broadcast %125 : vector<128x1xf32> to vector<128x128xf32>
    %127 = vector.broadcast %124 : vector<1x128xf32> to vector<128x128xf32>
    %128 = arith.addf %126, %127 : vector<128x128xf32>
    %cst_42 = arith.constant 0.000000e+00 : f32
    %129 = vector.broadcast %cst_42 : f32 to vector<128x128xf32>
    %130 = arith.cmpf ogt, %128, %129 : vector<128x128xf32>
    %cst_43 = arith.constant 2.000000e-01 : f32
    %131 = vector.broadcast %cst_43 : f32 to vector<128x128xf32>
    %132 = arith.mulf %131, %128 : vector<128x128xf32>
    %133 = arith.select %130, %128, %132 : vector<128x128xi1>, vector<128x128xf32>
    %134 = arith.addf %133, %0 : vector<128x128xf32>
    %cst_44 = arith.constant dense<0xFF800000> : vector<128xf32>
    %135 = vector.multi_reduction <maximumf>, %134, %cst_44 [1] : vector<128x128xf32> to vector<128xf32>
    %136 = vector.shape_cast %135 : vector<128xf32> to vector<128x1xf32>
    %137 = vector.broadcast %136 : vector<128x1xf32> to vector<128x128xf32>
    %138 = arith.subf %134, %137 : vector<128x128xf32>
    %139 = math.exp %138 : vector<128x128xf32>
    %cst_45 = arith.constant 0.000000e+00 : f32
    %140 = vector.broadcast %cst_45 : f32 to vector<128x128xf32>
    %141 = arith.select %2, %139, %140 : vector<128x128xi1>, vector<128x128xf32>
    %cst_46 = arith.constant dense<0.000000e+00> : vector<128xf32>
    %142 = vector.multi_reduction <add>, %141, %cst_46 [1] : vector<128x128xf32> to vector<128xf32>
    %143 = vector.shape_cast %142 : vector<128xf32> to vector<128x1xf32>
    %cst_47 = arith.constant 0.000000e+00 : f32
    %144 = vector.broadcast %cst_47 : f32 to vector<128x1xf32>
    %145 = arith.cmpf oeq, %143, %144 : vector<128x1xf32>
    %cst_48 = arith.constant 1.000000e+00 : f32
    %146 = vector.broadcast %cst_48 : f32 to vector<128x1xf32>
    %147 = arith.select %145, %146, %143 : vector<128x1xi1>, vector<128x1xf32>
    %148 = tpu.reciprocal %147 {approx = true} : vector<128x1xf32> -> vector<128x1xf32>
    %149 = vector.broadcast %148 : vector<128x1xf32> to vector<128x128xf32>
    %150 = arith.mulf %141, %149 : vector<128x128xf32>
    %151 = arith.truncf %150 : vector<128x128xf32> to vector<128x128xbf16>
    %152 = vector.extract_strided_slice %6 {offsets = [0, 96], sizes = [128, 32], strides = [1, 1]} : vector<128x128xbf16> to vector<128x32xbf16>
    %cst_49 = arith.constant dense<0.000000e+00> : vector<128x32xf32>
    %153 = tpu.matmul %151, %152, %cst_49 {dimension_numbers = #tpu.dot_dimension_numbers<[1], [0], [0], [1], [0, 0, 1, 1], [], []>} : vector<128x128xbf16>, vector<128x32xbf16>, vector<128x32xf32> -> vector<128x32xf32>
    %cst_50 = arith.constant 0.000000e+00 : f32
    %154 = vector.broadcast %cst_50 : f32 to vector<128x32xf32>
    %155 = arith.cmpf ogt, %153, %154 : vector<128x32xf32>
    %cst_51 = arith.constant 0.000000e+00 : f32
    %156 = vector.broadcast %cst_51 : f32 to vector<128x32xf32>
    %157 = arith.minimumf %153, %156 : vector<128x32xf32>
    %158 = math.exp %157 : vector<128x32xf32>
    %cst_52 = arith.constant 1.000000e+00 : f32
    %159 = vector.broadcast %cst_52 : f32 to vector<128x32xf32>
    %160 = arith.subf %158, %159 : vector<128x32xf32>
    %161 = arith.select %155, %153, %160 : vector<128x32xi1>, vector<128x32xf32>
    %162 = arith.truncf %47 : vector<128x32xf32> to vector<128x32xbf16>
    %c0_53 = arith.constant 0 : index
    %c0_54 = arith.constant 0 : index
    %163 = vector.load %arg5[%c0_53, %c0_54] : memref<128x128xbf16, #tpu.memory_space<vmem>>, vector<32x128xbf16>
    %cst_55 = arith.constant dense<0.000000e+00> : vector<128x128xf32>
    %164 = tpu.matmul %162, %163, %cst_55 {dimension_numbers = #tpu.dot_dimension_numbers<[1], [0], [0], [1], [0, 0, 1, 1], [], []>} : vector<128x32xbf16>, vector<32x128xbf16>, vector<128x128xf32> -> vector<128x128xf32>
    %165 = arith.truncf %85 : vector<128x32xf32> to vector<128x32xbf16>
    %c32 = arith.constant 32 : index
    %c0_56 = arith.constant 0 : index
    %166 = vector.load %arg5[%c32, %c0_56] : memref<128x128xbf16, #tpu.memory_space<vmem>>, vector<32x128xbf16>
    %cst_57 = arith.constant dense<0.000000e+00> : vector<128x128xf32>
    %167 = tpu.matmul %165, %166, %cst_57 {dimension_numbers = #tpu.dot_dimension_numbers<[1], [0], [0], [1], [0, 0, 1, 1], [], []>} : vector<128x32xbf16>, vector<32x128xbf16>, vector<128x128xf32> -> vector<128x128xf32>
    %168 = arith.addf %164, %167 : vector<128x128xf32>
    %169 = arith.truncf %123 : vector<128x32xf32> to vector<128x32xbf16>
    %c64 = arith.constant 64 : index
    %c0_58 = arith.constant 0 : index
    %170 = vector.load %arg5[%c64, %c0_58] : memref<128x128xbf16, #tpu.memory_space<vmem>>, vector<32x128xbf16>
    %cst_59 = arith.constant dense<0.000000e+00> : vector<128x128xf32>
    %171 = tpu.matmul %169, %170, %cst_59 {dimension_numbers = #tpu.dot_dimension_numbers<[1], [0], [0], [1], [0, 0, 1, 1], [], []>} : vector<128x32xbf16>, vector<32x128xbf16>, vector<128x128xf32> -> vector<128x128xf32>
    %172 = arith.addf %168, %171 : vector<128x128xf32>
    %173 = arith.truncf %161 : vector<128x32xf32> to vector<128x32xbf16>
    %c96 = arith.constant 96 : index
    %c0_60 = arith.constant 0 : index
    %174 = vector.load %arg5[%c96, %c0_60] : memref<128x128xbf16, #tpu.memory_space<vmem>>, vector<32x128xbf16>
    %cst_61 = arith.constant dense<0.000000e+00> : vector<128x128xf32>
    %175 = tpu.matmul %173, %174, %cst_61 {dimension_numbers = #tpu.dot_dimension_numbers<[1], [0], [0], [1], [0, 0, 1, 1], [], []>} : vector<128x32xbf16>, vector<32x128xbf16>, vector<128x128xf32> -> vector<128x128xf32>
    %176 = arith.addf %172, %175 : vector<128x128xf32>
    %177 = arith.truncf %176 : vector<128x128xf32> to vector<128x128xbf16>
    %c0_62 = arith.constant 0 : index
    %c0_63 = arith.constant 0 : index
    %178 = vector.load %arg6[%c0_62, %c0_63] : memref<128x128xbf16, #tpu.memory_space<vmem>>, vector<128x128xbf16>
    %cst_64 = arith.constant dense<0.000000e+00> : vector<128x128xf32>
    %179 = tpu.matmul %177, %178, %cst_64 {dimension_numbers = #tpu.dot_dimension_numbers<[1], [0], [0], [1], [0, 0, 1, 1], [], []>} : vector<128x128xbf16>, vector<128x128xbf16>, vector<128x128xf32> -> vector<128x128xf32>
    %180 = tpu.transpose %179, [1, 0] : vector<128x128xf32> -> vector<128x128xf32>
    %181 = vector.extract_strided_slice %180 {offsets = [0, 0], sizes = [1, 128], strides = [1, 1]} : vector<128x128xf32> to vector<1x128xf32>
    %182 = vector.extract_strided_slice %179 {offsets = [0, 4], sizes = [128, 1], strides = [1, 1]} : vector<128x128xf32> to vector<128x1xf32>
    %183 = vector.broadcast %182 : vector<128x1xf32> to vector<128x128xf32>
    %184 = vector.broadcast %181 : vector<1x128xf32> to vector<128x128xf32>
    %185 = arith.addf %183, %184 : vector<128x128xf32>
    %cst_65 = arith.constant 0.000000e+00 : f32
    %186 = vector.broadcast %cst_65 : f32 to vector<128x128xf32>
    %187 = arith.cmpf ogt, %185, %186 : vector<128x128xf32>
    %cst_66 = arith.constant 2.000000e-01 : f32
    %188 = vector.broadcast %cst_66 : f32 to vector<128x128xf32>
    %189 = arith.mulf %188, %185 : vector<128x128xf32>
    %190 = arith.select %187, %185, %189 : vector<128x128xi1>, vector<128x128xf32>
    %191 = arith.addf %190, %0 : vector<128x128xf32>
    %cst_67 = arith.constant dense<0xFF800000> : vector<128xf32>
    %192 = vector.multi_reduction <maximumf>, %191, %cst_67 [1] : vector<128x128xf32> to vector<128xf32>
    %193 = vector.shape_cast %192 : vector<128xf32> to vector<128x1xf32>
    %194 = vector.broadcast %193 : vector<128x1xf32> to vector<128x128xf32>
    %195 = arith.subf %191, %194 : vector<128x128xf32>
    %196 = math.exp %195 : vector<128x128xf32>
    %cst_68 = arith.constant 0.000000e+00 : f32
    %197 = vector.broadcast %cst_68 : f32 to vector<128x128xf32>
    %198 = arith.select %2, %196, %197 : vector<128x128xi1>, vector<128x128xf32>
    %cst_69 = arith.constant dense<0.000000e+00> : vector<128xf32>
    %199 = vector.multi_reduction <add>, %198, %cst_69 [1] : vector<128x128xf32> to vector<128xf32>
    %200 = vector.shape_cast %199 : vector<128xf32> to vector<128x1xf32>
    %cst_70 = arith.constant 0.000000e+00 : f32
    %201 = vector.broadcast %cst_70 : f32 to vector<128x1xf32>
    %202 = arith.cmpf oeq, %200, %201 : vector<128x1xf32>
    %cst_71 = arith.constant 1.000000e+00 : f32
    %203 = vector.broadcast %cst_71 : f32 to vector<128x1xf32>
    %204 = arith.select %202, %203, %200 : vector<128x1xi1>, vector<128x1xf32>
    %205 = tpu.reciprocal %204 {approx = true} : vector<128x1xf32> -> vector<128x1xf32>
    %206 = vector.broadcast %205 : vector<128x1xf32> to vector<128x128xf32>
    %207 = arith.mulf %198, %206 : vector<128x128xf32>
    %208 = arith.truncf %207 : vector<128x128xf32> to vector<128x128xbf16>
    %209 = vector.extract_strided_slice %177 {offsets = [0, 0], sizes = [128, 32], strides = [1, 1]} : vector<128x128xbf16> to vector<128x32xbf16>
    %cst_72 = arith.constant dense<0.000000e+00> : vector<128x32xf32>
    %210 = tpu.matmul %208, %209, %cst_72 {dimension_numbers = #tpu.dot_dimension_numbers<[1], [0], [0], [1], [0, 0, 1, 1], [], []>} : vector<128x128xbf16>, vector<128x32xbf16>, vector<128x32xf32> -> vector<128x32xf32>
    %cst_73 = arith.constant 0.000000e+00 : f32
    %211 = vector.broadcast %cst_73 : f32 to vector<128x32xf32>
    %212 = arith.cmpf ogt, %210, %211 : vector<128x32xf32>
    %cst_74 = arith.constant 0.000000e+00 : f32
    %213 = vector.broadcast %cst_74 : f32 to vector<128x32xf32>
    %214 = arith.minimumf %210, %213 : vector<128x32xf32>
    %215 = math.exp %214 : vector<128x32xf32>
    %cst_75 = arith.constant 1.000000e+00 : f32
    %216 = vector.broadcast %cst_75 : f32 to vector<128x32xf32>
    %217 = arith.subf %215, %216 : vector<128x32xf32>
    %218 = arith.select %212, %210, %217 : vector<128x32xi1>, vector<128x32xf32>
    %219 = vector.extract_strided_slice %180 {offsets = [1, 0], sizes = [1, 128], strides = [1, 1]} : vector<128x128xf32> to vector<1x128xf32>
    %220 = vector.extract_strided_slice %179 {offsets = [0, 5], sizes = [128, 1], strides = [1, 1]} : vector<128x128xf32> to vector<128x1xf32>
    %221 = vector.broadcast %220 : vector<128x1xf32> to vector<128x128xf32>
    %222 = vector.broadcast %219 : vector<1x128xf32> to vector<128x128xf32>
    %223 = arith.addf %221, %222 : vector<128x128xf32>
    %cst_76 = arith.constant 0.000000e+00 : f32
    %224 = vector.broadcast %cst_76 : f32 to vector<128x128xf32>
    %225 = arith.cmpf ogt, %223, %224 : vector<128x128xf32>
    %cst_77 = arith.constant 2.000000e-01 : f32
    %226 = vector.broadcast %cst_77 : f32 to vector<128x128xf32>
    %227 = arith.mulf %226, %223 : vector<128x128xf32>
    %228 = arith.select %225, %223, %227 : vector<128x128xi1>, vector<128x128xf32>
    %229 = arith.addf %228, %0 : vector<128x128xf32>
    %cst_78 = arith.constant dense<0xFF800000> : vector<128xf32>
    %230 = vector.multi_reduction <maximumf>, %229, %cst_78 [1] : vector<128x128xf32> to vector<128xf32>
    %231 = vector.shape_cast %230 : vector<128xf32> to vector<128x1xf32>
    %232 = vector.broadcast %231 : vector<128x1xf32> to vector<128x128xf32>
    %233 = arith.subf %229, %232 : vector<128x128xf32>
    %234 = math.exp %233 : vector<128x128xf32>
    %cst_79 = arith.constant 0.000000e+00 : f32
    %235 = vector.broadcast %cst_79 : f32 to vector<128x128xf32>
    %236 = arith.select %2, %234, %235 : vector<128x128xi1>, vector<128x128xf32>
    %cst_80 = arith.constant dense<0.000000e+00> : vector<128xf32>
    %237 = vector.multi_reduction <add>, %236, %cst_80 [1] : vector<128x128xf32> to vector<128xf32>
    %238 = vector.shape_cast %237 : vector<128xf32> to vector<128x1xf32>
    %cst_81 = arith.constant 0.000000e+00 : f32
    %239 = vector.broadcast %cst_81 : f32 to vector<128x1xf32>
    %240 = arith.cmpf oeq, %238, %239 : vector<128x1xf32>
    %cst_82 = arith.constant 1.000000e+00 : f32
    %241 = vector.broadcast %cst_82 : f32 to vector<128x1xf32>
    %242 = arith.select %240, %241, %238 : vector<128x1xi1>, vector<128x1xf32>
    %243 = tpu.reciprocal %242 {approx = true} : vector<128x1xf32> -> vector<128x1xf32>
    %244 = vector.broadcast %243 : vector<128x1xf32> to vector<128x128xf32>
    %245 = arith.mulf %236, %244 : vector<128x128xf32>
    %246 = arith.truncf %245 : vector<128x128xf32> to vector<128x128xbf16>
    %247 = vector.extract_strided_slice %177 {offsets = [0, 32], sizes = [128, 32], strides = [1, 1]} : vector<128x128xbf16> to vector<128x32xbf16>
    %cst_83 = arith.constant dense<0.000000e+00> : vector<128x32xf32>
    %248 = tpu.matmul %246, %247, %cst_83 {dimension_numbers = #tpu.dot_dimension_numbers<[1], [0], [0], [1], [0, 0, 1, 1], [], []>} : vector<128x128xbf16>, vector<128x32xbf16>, vector<128x32xf32> -> vector<128x32xf32>
    %cst_84 = arith.constant 0.000000e+00 : f32
    %249 = vector.broadcast %cst_84 : f32 to vector<128x32xf32>
    %250 = arith.cmpf ogt, %248, %249 : vector<128x32xf32>
    %cst_85 = arith.constant 0.000000e+00 : f32
    %251 = vector.broadcast %cst_85 : f32 to vector<128x32xf32>
    %252 = arith.minimumf %248, %251 : vector<128x32xf32>
    %253 = math.exp %252 : vector<128x32xf32>
    %cst_86 = arith.constant 1.000000e+00 : f32
    %254 = vector.broadcast %cst_86 : f32 to vector<128x32xf32>
    %255 = arith.subf %253, %254 : vector<128x32xf32>
    %256 = arith.select %250, %248, %255 : vector<128x32xi1>, vector<128x32xf32>
    %257 = vector.extract_strided_slice %180 {offsets = [2, 0], sizes = [1, 128], strides = [1, 1]} : vector<128x128xf32> to vector<1x128xf32>
    %258 = vector.extract_strided_slice %179 {offsets = [0, 6], sizes = [128, 1], strides = [1, 1]} : vector<128x128xf32> to vector<128x1xf32>
    %259 = vector.broadcast %258 : vector<128x1xf32> to vector<128x128xf32>
    %260 = vector.broadcast %257 : vector<1x128xf32> to vector<128x128xf32>
    %261 = arith.addf %259, %260 : vector<128x128xf32>
    %cst_87 = arith.constant 0.000000e+00 : f32
    %262 = vector.broadcast %cst_87 : f32 to vector<128x128xf32>
    %263 = arith.cmpf ogt, %261, %262 : vector<128x128xf32>
    %cst_88 = arith.constant 2.000000e-01 : f32
    %264 = vector.broadcast %cst_88 : f32 to vector<128x128xf32>
    %265 = arith.mulf %264, %261 : vector<128x128xf32>
    %266 = arith.select %263, %261, %265 : vector<128x128xi1>, vector<128x128xf32>
    %267 = arith.addf %266, %0 : vector<128x128xf32>
    %cst_89 = arith.constant dense<0xFF800000> : vector<128xf32>
    %268 = vector.multi_reduction <maximumf>, %267, %cst_89 [1] : vector<128x128xf32> to vector<128xf32>
    %269 = vector.shape_cast %268 : vector<128xf32> to vector<128x1xf32>
    %270 = vector.broadcast %269 : vector<128x1xf32> to vector<128x128xf32>
    %271 = arith.subf %267, %270 : vector<128x128xf32>
    %272 = math.exp %271 : vector<128x128xf32>
    %cst_90 = arith.constant 0.000000e+00 : f32
    %273 = vector.broadcast %cst_90 : f32 to vector<128x128xf32>
    %274 = arith.select %2, %272, %273 : vector<128x128xi1>, vector<128x128xf32>
    %cst_91 = arith.constant dense<0.000000e+00> : vector<128xf32>
    %275 = vector.multi_reduction <add>, %274, %cst_91 [1] : vector<128x128xf32> to vector<128xf32>
    %276 = vector.shape_cast %275 : vector<128xf32> to vector<128x1xf32>
    %cst_92 = arith.constant 0.000000e+00 : f32
    %277 = vector.broadcast %cst_92 : f32 to vector<128x1xf32>
    %278 = arith.cmpf oeq, %276, %277 : vector<128x1xf32>
    %cst_93 = arith.constant 1.000000e+00 : f32
    %279 = vector.broadcast %cst_93 : f32 to vector<128x1xf32>
    %280 = arith.select %278, %279, %276 : vector<128x1xi1>, vector<128x1xf32>
    %281 = tpu.reciprocal %280 {approx = true} : vector<128x1xf32> -> vector<128x1xf32>
    %282 = vector.broadcast %281 : vector<128x1xf32> to vector<128x128xf32>
    %283 = arith.mulf %274, %282 : vector<128x128xf32>
    %284 = arith.truncf %283 : vector<128x128xf32> to vector<128x128xbf16>
    %285 = vector.extract_strided_slice %177 {offsets = [0, 64], sizes = [128, 32], strides = [1, 1]} : vector<128x128xbf16> to vector<128x32xbf16>
    %cst_94 = arith.constant dense<0.000000e+00> : vector<128x32xf32>
    %286 = tpu.matmul %284, %285, %cst_94 {dimension_numbers = #tpu.dot_dimension_numbers<[1], [0], [0], [1], [0, 0, 1, 1], [], []>} : vector<128x128xbf16>, vector<128x32xbf16>, vector<128x32xf32> -> vector<128x32xf32>
    %cst_95 = arith.constant 0.000000e+00 : f32
    %287 = vector.broadcast %cst_95 : f32 to vector<128x32xf32>
    %288 = arith.cmpf ogt, %286, %287 : vector<128x32xf32>
    %cst_96 = arith.constant 0.000000e+00 : f32
    %289 = vector.broadcast %cst_96 : f32 to vector<128x32xf32>
    %290 = arith.minimumf %286, %289 : vector<128x32xf32>
    %291 = math.exp %290 : vector<128x32xf32>
    %cst_97 = arith.constant 1.000000e+00 : f32
    %292 = vector.broadcast %cst_97 : f32 to vector<128x32xf32>
    %293 = arith.subf %291, %292 : vector<128x32xf32>
    %294 = arith.select %288, %286, %293 : vector<128x32xi1>, vector<128x32xf32>
    %295 = vector.extract_strided_slice %180 {offsets = [3, 0], sizes = [1, 128], strides = [1, 1]} : vector<128x128xf32> to vector<1x128xf32>
    %296 = vector.extract_strided_slice %179 {offsets = [0, 7], sizes = [128, 1], strides = [1, 1]} : vector<128x128xf32> to vector<128x1xf32>
    %297 = vector.broadcast %296 : vector<128x1xf32> to vector<128x128xf32>
    %298 = vector.broadcast %295 : vector<1x128xf32> to vector<128x128xf32>
    %299 = arith.addf %297, %298 : vector<128x128xf32>
    %cst_98 = arith.constant 0.000000e+00 : f32
    %300 = vector.broadcast %cst_98 : f32 to vector<128x128xf32>
    %301 = arith.cmpf ogt, %299, %300 : vector<128x128xf32>
    %cst_99 = arith.constant 2.000000e-01 : f32
    %302 = vector.broadcast %cst_99 : f32 to vector<128x128xf32>
    %303 = arith.mulf %302, %299 : vector<128x128xf32>
    %304 = arith.select %301, %299, %303 : vector<128x128xi1>, vector<128x128xf32>
    %305 = arith.addf %304, %0 : vector<128x128xf32>
    %cst_100 = arith.constant dense<0xFF800000> : vector<128xf32>
    %306 = vector.multi_reduction <maximumf>, %305, %cst_100 [1] : vector<128x128xf32> to vector<128xf32>
    %307 = vector.shape_cast %306 : vector<128xf32> to vector<128x1xf32>
    %308 = vector.broadcast %307 : vector<128x1xf32> to vector<128x128xf32>
    %309 = arith.subf %305, %308 : vector<128x128xf32>
    %310 = math.exp %309 : vector<128x128xf32>
    %cst_101 = arith.constant 0.000000e+00 : f32
    %311 = vector.broadcast %cst_101 : f32 to vector<128x128xf32>
    %312 = arith.select %2, %310, %311 : vector<128x128xi1>, vector<128x128xf32>
    %cst_102 = arith.constant dense<0.000000e+00> : vector<128xf32>
    %313 = vector.multi_reduction <add>, %312, %cst_102 [1] : vector<128x128xf32> to vector<128xf32>
    %314 = vector.shape_cast %313 : vector<128xf32> to vector<128x1xf32>
    %cst_103 = arith.constant 0.000000e+00 : f32
    %315 = vector.broadcast %cst_103 : f32 to vector<128x1xf32>
    %316 = arith.cmpf oeq, %314, %315 : vector<128x1xf32>
    %cst_104 = arith.constant 1.000000e+00 : f32
    %317 = vector.broadcast %cst_104 : f32 to vector<128x1xf32>
    %318 = arith.select %316, %317, %314 : vector<128x1xi1>, vector<128x1xf32>
    %319 = tpu.reciprocal %318 {approx = true} : vector<128x1xf32> -> vector<128x1xf32>
    %320 = vector.broadcast %319 : vector<128x1xf32> to vector<128x128xf32>
    %321 = arith.mulf %312, %320 : vector<128x128xf32>
    %322 = arith.truncf %321 : vector<128x128xf32> to vector<128x128xbf16>
    %323 = vector.extract_strided_slice %177 {offsets = [0, 96], sizes = [128, 32], strides = [1, 1]} : vector<128x128xbf16> to vector<128x32xbf16>
    %cst_105 = arith.constant dense<0.000000e+00> : vector<128x32xf32>
    %324 = tpu.matmul %322, %323, %cst_105 {dimension_numbers = #tpu.dot_dimension_numbers<[1], [0], [0], [1], [0, 0, 1, 1], [], []>} : vector<128x128xbf16>, vector<128x32xbf16>, vector<128x32xf32> -> vector<128x32xf32>
    %cst_106 = arith.constant 0.000000e+00 : f32
    %325 = vector.broadcast %cst_106 : f32 to vector<128x32xf32>
    %326 = arith.cmpf ogt, %324, %325 : vector<128x32xf32>
    %cst_107 = arith.constant 0.000000e+00 : f32
    %327 = vector.broadcast %cst_107 : f32 to vector<128x32xf32>
    %328 = arith.minimumf %324, %327 : vector<128x32xf32>
    %329 = math.exp %328 : vector<128x32xf32>
    %cst_108 = arith.constant 1.000000e+00 : f32
    %330 = vector.broadcast %cst_108 : f32 to vector<128x32xf32>
    %331 = arith.subf %329, %330 : vector<128x32xf32>
    %332 = arith.select %326, %324, %331 : vector<128x32xi1>, vector<128x32xf32>
    %c0_109 = arith.constant 0 : index
    %c0_110 = arith.constant 0 : index
    %333 = vector.load %arg9[%c0_109, %c0_110] : memref<1x64xf32, #tpu.memory_space<vmem>>, vector<1x64xf32>
    %c0_111 = arith.constant 0 : index
    %c0_112 = arith.constant 0 : index
    %334 = vector.load %arg7[%c0_111, %c0_112] : memref<16x128xbf16, #tpu.memory_space<vmem>>, vector<16x128xbf16>
    %335 = arith.truncf %218 : vector<128x32xf32> to vector<128x32xbf16>
    %cst_113 = arith.constant dense<0.000000e+00> : vector<16x32xf32>
    %336 = tpu.matmul %334, %335, %cst_113 {dimension_numbers = #tpu.dot_dimension_numbers<[1], [0], [0], [1], [0, 0, 1, 1], [], []>} : vector<16x128xbf16>, vector<128x32xbf16>, vector<16x32xf32> -> vector<16x32xf32>
    %337 = arith.truncf %336 : vector<16x32xf32> to vector<16x32xbf16>
    %c0_114 = arith.constant 0 : index
    %c0_115 = arith.constant 0 : index
    %338 = vector.load %arg8[%c0_114, %c0_115] : memref<128x64xbf16, #tpu.memory_space<vmem>>, vector<32x64xbf16>
    %cst_116 = arith.constant dense<0.000000e+00> : vector<16x64xf32>
    %339 = tpu.matmul %337, %338, %cst_116 {dimension_numbers = #tpu.dot_dimension_numbers<[1], [0], [0], [1], [0, 0, 1, 1], [], []>} : vector<16x32xbf16>, vector<32x64xbf16>, vector<16x64xf32> -> vector<16x64xf32>
    %340 = vector.broadcast %333 : vector<1x64xf32> to vector<16x64xf32>
    %341 = arith.addf %340, %339 : vector<16x64xf32>
    %c0_117 = arith.constant 0 : index
    %c0_118 = arith.constant 0 : index
    %342 = vector.load %arg7[%c0_117, %c0_118] : memref<16x128xbf16, #tpu.memory_space<vmem>>, vector<16x128xbf16>
    %343 = arith.truncf %256 : vector<128x32xf32> to vector<128x32xbf16>
    %cst_119 = arith.constant dense<0.000000e+00> : vector<16x32xf32>
    %344 = tpu.matmul %342, %343, %cst_119 {dimension_numbers = #tpu.dot_dimension_numbers<[1], [0], [0], [1], [0, 0, 1, 1], [], []>} : vector<16x128xbf16>, vector<128x32xbf16>, vector<16x32xf32> -> vector<16x32xf32>
    %345 = arith.truncf %344 : vector<16x32xf32> to vector<16x32xbf16>
    %c32_120 = arith.constant 32 : index
    %c0_121 = arith.constant 0 : index
    %346 = vector.load %arg8[%c32_120, %c0_121] : memref<128x64xbf16, #tpu.memory_space<vmem>>, vector<32x64xbf16>
    %cst_122 = arith.constant dense<0.000000e+00> : vector<16x64xf32>
    %347 = tpu.matmul %345, %346, %cst_122 {dimension_numbers = #tpu.dot_dimension_numbers<[1], [0], [0], [1], [0, 0, 1, 1], [], []>} : vector<16x32xbf16>, vector<32x64xbf16>, vector<16x64xf32> -> vector<16x64xf32>
    %348 = arith.addf %341, %347 : vector<16x64xf32>
    %c0_123 = arith.constant 0 : index
    %c0_124 = arith.constant 0 : index
    %349 = vector.load %arg7[%c0_123, %c0_124] : memref<16x128xbf16, #tpu.memory_space<vmem>>, vector<16x128xbf16>
    %350 = arith.truncf %294 : vector<128x32xf32> to vector<128x32xbf16>
    %cst_125 = arith.constant dense<0.000000e+00> : vector<16x32xf32>
    %351 = tpu.matmul %349, %350, %cst_125 {dimension_numbers = #tpu.dot_dimension_numbers<[1], [0], [0], [1], [0, 0, 1, 1], [], []>} : vector<16x128xbf16>, vector<128x32xbf16>, vector<16x32xf32> -> vector<16x32xf32>
    %352 = arith.truncf %351 : vector<16x32xf32> to vector<16x32xbf16>
    %c64_126 = arith.constant 64 : index
    %c0_127 = arith.constant 0 : index
    %353 = vector.load %arg8[%c64_126, %c0_127] : memref<128x64xbf16, #tpu.memory_space<vmem>>, vector<32x64xbf16>
    %cst_128 = arith.constant dense<0.000000e+00> : vector<16x64xf32>
    %354 = tpu.matmul %352, %353, %cst_128 {dimension_numbers = #tpu.dot_dimension_numbers<[1], [0], [0], [1], [0, 0, 1, 1], [], []>} : vector<16x32xbf16>, vector<32x64xbf16>, vector<16x64xf32> -> vector<16x64xf32>
    %355 = arith.addf %348, %354 : vector<16x64xf32>
    %c0_129 = arith.constant 0 : index
    %c0_130 = arith.constant 0 : index
    %356 = vector.load %arg7[%c0_129, %c0_130] : memref<16x128xbf16, #tpu.memory_space<vmem>>, vector<16x128xbf16>
    %357 = arith.truncf %332 : vector<128x32xf32> to vector<128x32xbf16>
    %cst_131 = arith.constant dense<0.000000e+00> : vector<16x32xf32>
    %358 = tpu.matmul %356, %357, %cst_131 {dimension_numbers = #tpu.dot_dimension_numbers<[1], [0], [0], [1], [0, 0, 1, 1], [], []>} : vector<16x128xbf16>, vector<128x32xbf16>, vector<16x32xf32> -> vector<16x32xf32>
    %359 = arith.truncf %358 : vector<16x32xf32> to vector<16x32xbf16>
    %c96_132 = arith.constant 96 : index
    %c0_133 = arith.constant 0 : index
    %360 = vector.load %arg8[%c96_132, %c0_133] : memref<128x64xbf16, #tpu.memory_space<vmem>>, vector<32x64xbf16>
    %cst_134 = arith.constant dense<0.000000e+00> : vector<16x64xf32>
    %361 = tpu.matmul %359, %360, %cst_134 {dimension_numbers = #tpu.dot_dimension_numbers<[1], [0], [0], [1], [0, 0, 1, 1], [], []>} : vector<16x32xbf16>, vector<32x64xbf16>, vector<16x64xf32> -> vector<16x64xf32>
    %362 = arith.addf %355, %361 : vector<16x64xf32>
    %cst_135 = arith.constant 0.000000e+00 : f32
    %363 = vector.broadcast %cst_135 : f32 to vector<16x64xf32>
    %364 = arith.maximumf %362, %363 : vector<16x64xf32>
    %365 = arith.truncf %364 : vector<16x64xf32> to vector<16x64xbf16>
    %c0_136 = arith.constant 0 : index
    %c0_137 = arith.constant 0 : index
    %366 = vector.load %arg10[%c0_136, %c0_137] : memref<64x64xbf16, #tpu.memory_space<vmem>>, vector<64x64xbf16>
    %cst_138 = arith.constant dense<0.000000e+00> : vector<16x64xf32>
    %367 = tpu.matmul %365, %366, %cst_138 {dimension_numbers = #tpu.dot_dimension_numbers<[1], [0], [0], [1], [0, 0, 1, 1], [], []>} : vector<16x64xbf16>, vector<64x64xbf16>, vector<16x64xf32> -> vector<16x64xf32>
    %c0_139 = arith.constant 0 : index
    %c0_140 = arith.constant 0 : index
    %368 = vector.load %arg11[%c0_139, %c0_140] : memref<1x64xf32, #tpu.memory_space<vmem>>, vector<1x64xf32>
    %369 = vector.broadcast %368 : vector<1x64xf32> to vector<16x64xf32>
    %370 = arith.addf %367, %369 : vector<16x64xf32>
    %cst_141 = arith.constant 0.000000e+00 : f32
    %371 = vector.broadcast %cst_141 : f32 to vector<16x64xf32>
    %372 = arith.maximumf %370, %371 : vector<16x64xf32>
    %373 = arith.truncf %372 : vector<16x64xf32> to vector<16x64xbf16>
    %c0_142 = arith.constant 0 : index
    %c0_143 = arith.constant 0 : index
    %374 = vector.load %arg12[%c0_142, %c0_143] : memref<64x128xbf16, #tpu.memory_space<vmem>>, vector<64x128xbf16>
    %cst_144 = arith.constant dense<0.000000e+00> : vector<16x128xf32>
    %375 = tpu.matmul %373, %374, %cst_144 {dimension_numbers = #tpu.dot_dimension_numbers<[1], [0], [0], [1], [0, 0, 1, 1], [], []>} : vector<16x64xbf16>, vector<64x128xbf16>, vector<16x128xf32> -> vector<16x128xf32>
    %c0_145 = arith.constant 0 : index
    %c0_146 = arith.constant 0 : index
    %376 = vector.load %arg13[%c0_145, %c0_146] : memref<1x128xf32, #tpu.memory_space<vmem>>, vector<1x128xf32>
    %377 = vector.broadcast %376 : vector<1x128xf32> to vector<16x128xf32>
    %378 = arith.addf %375, %377 : vector<16x128xf32>
    %c0_147 = arith.constant 0 : index
    %c0_148 = arith.constant 0 : index
    %379 = vector.load %arg14[%c0_147, %c0_148] : memref<16x128xf32, #tpu.memory_space<vmem>>, vector<16x128xf32>
    tpu.vector_store %arg14[%c0_147, %c0_148], %378 {strides = array<i32>} : memref<16x128xf32, #tpu.memory_space<vmem>>, vector<16x128xf32>,
    return
  }
  func.func @transform_0(%arg0: i32) -> (i32, i32) {
    %c0_i32 = arith.constant 0 : i32
    %c0_i32_0 = arith.constant 0 : i32
    return %arg0, %c0_i32 : i32, i32
  }
  func.func @transform_1(%arg0: i32) -> (i32, i32) {
    %c0_i32 = arith.constant 0 : i32
    %c0_i32_0 = arith.constant 0 : i32
    return %arg0, %c0_i32 : i32, i32
  }
  func.func @transform_2(%arg0: i32) -> (i32, i32) {
    %c0_i32 = arith.constant 0 : i32
    %c0_i32_0 = arith.constant 0 : i32
    %c0_i32_1 = arith.constant 0 : i32
    return %c0_i32, %c0_i32_0 : i32, i32
  }
  func.func @transform_3(%arg0: i32) -> (i32, i32) {
    %c0_i32 = arith.constant 0 : i32
    %c0_i32_0 = arith.constant 0 : i32
    %c0_i32_1 = arith.constant 0 : i32
    return %c0_i32, %c0_i32_0 : i32, i32
  }
  func.func @transform_4(%arg0: i32) -> (i32, i32) {
    %c0_i32 = arith.constant 0 : i32
    %c0_i32_0 = arith.constant 0 : i32
    %c0_i32_1 = arith.constant 0 : i32
    return %c0_i32, %c0_i32_0 : i32, i32
  }
  func.func @transform_5(%arg0: i32) -> (i32, i32) {
    %c0_i32 = arith.constant 0 : i32
    %c0_i32_0 = arith.constant 0 : i32
    %c0_i32_1 = arith.constant 0 : i32
    return %c0_i32, %c0_i32_0 : i32, i32
  }
  func.func @transform_6(%arg0: i32) -> (i32, i32) {
    %c0_i32 = arith.constant 0 : i32
    %c0_i32_0 = arith.constant 0 : i32
    %c0_i32_1 = arith.constant 0 : i32
    return %c0_i32, %c0_i32_0 : i32, i32
  }
  func.func @transform_7(%arg0: i32) -> (i32, i32) {
    %c0_i32 = arith.constant 0 : i32
    %c0_i32_0 = arith.constant 0 : i32
    %c0_i32_1 = arith.constant 0 : i32
    return %c0_i32, %c0_i32_0 : i32, i32
  }
  func.func @transform_8(%arg0: i32) -> (i32, i32) {
    %c0_i32 = arith.constant 0 : i32
    %c0_i32_0 = arith.constant 0 : i32
    %c0_i32_1 = arith.constant 0 : i32
    return %c0_i32, %c0_i32_0 : i32, i32
  }
  func.func @transform_9(%arg0: i32) -> (i32, i32) {
    %c0_i32 = arith.constant 0 : i32
    %c0_i32_0 = arith.constant 0 : i32
    %c0_i32_1 = arith.constant 0 : i32
    return %c0_i32, %c0_i32_0 : i32, i32
  }
  func.func @transform_10(%arg0: i32) -> (i32, i32) {
    %c0_i32 = arith.constant 0 : i32
    %c0_i32_0 = arith.constant 0 : i32
    %c0_i32_1 = arith.constant 0 : i32
    return %c0_i32, %c0_i32_0 : i32, i32
  }
  func.func @transform_11(%arg0: i32) -> (i32, i32) {
    %c0_i32 = arith.constant 0 : i32
    %c0_i32_0 = arith.constant 0 : i32
    %c0_i32_1 = arith.constant 0 : i32
    return %c0_i32, %c0_i32_0 : i32, i32
  }
  func.func @transform_12(%arg0: i32) -> (i32, i32) {
    %c0_i32 = arith.constant 0 : i32
    %c0_i32_0 = arith.constant 0 : i32
    %c0_i32_1 = arith.constant 0 : i32
    return %c0_i32, %c0_i32_0 : i32, i32
  }
  func.func @transform_13(%arg0: i32) -> (i32, i32) {
    %c0_i32 = arith.constant 0 : i32
    %c0_i32_0 = arith.constant 0 : i32
    return %arg0, %c0_i32 : i32, i32
  }
}

</mosaic_0001>

<llo_original>
// kernel: tpu_custom_call.1
$region0: #{tpu_custom_call.1}
  #allocation0 [shape = 'u32[]', space=smem, size = 0x4, offset = 0x4, fixed_abs, tag = 'smem constant byte address 0x4 - core index']
  #allocation1 [shape = 'u32[144,128]{1,0:T(1,128)}', space=vmem, size = 0x12000, scoped, tag = 'internal scratch']
  %s0 = inlined_call_operand.vmem [shape: bf16[256,16], index: 0, kind: input, shape index: {}]
  %s1 = inlined_call_operand.hbm [shape: f32[256,128], index: 1, kind: input, shape index: {}]
  %s2 = inlined_call_operand.hbm [shape: bf16[16,128], index: 2, kind: input, shape index: {}]
  %s3 = inlined_call_operand.vmem [shape: bf16[128,128], index: 3, kind: input, shape index: {}]
  %s4 = inlined_call_operand.vmem [shape: bf16[128,128], index: 4, kind: input, shape index: {}]
  %s5 = inlined_call_operand.vmem [shape: bf16[128,128], index: 5, kind: input, shape index: {}]
  %s6 = inlined_call_operand.hbm [shape: bf16[16,128], index: 6, kind: input, shape index: {}]
  %s7 = inlined_call_operand.vmem [shape: bf16[128,64], index: 7, kind: input, shape index: {}]
  %s8 = inlined_call_operand.vmem [shape: f32[1,64], index: 8, kind: input, shape index: {}]
  %s9 = inlined_call_operand.vmem [shape: bf16[64,64], index: 9, kind: input, shape index: {}]
  %s10 = inlined_call_operand.vmem [shape: f32[1,64], index: 10, kind: input, shape index: {}]
  %s11 = inlined_call_operand.vmem [shape: bf16[64,128], index: 11, kind: input, shape index: {}]
  %s12 = inlined_call_operand.vmem [shape: f32[1,128], index: 12, kind: input, shape index: {}]
  %s13 = inlined_call_operand.hbm [shape: f32[32,128], index: 13, kind: output, shape index: {}]
  %s14 = sld [smem:[#allocation0]]
  $region97: #{tpu_custom_call.1} parent=0
    _
  %s16 = ssub.s32 1, %s14
  %s17 = scalar_select 0, %s16, %s14
  $region1: #{tpu_custom_call.1} parent=0
    #allocation2 [shape = 'u8[131072]{0}', space=vmem, size = 0x20000, scoped, tag = 'input window, operand 1']
    #allocation3 [shape = 's32[2]{0}', space=sflag, size = 0x8, scoped, tag = 'scoped memory for tpu_custom_call.1']
    #allocation4 [shape = 's32[2]{0}', space=sflag, size = 0x8, scoped, tag = 'scoped memory for tpu_custom_call.1']
    #allocation5 [shape = 'u8[4096]{0}', space=vmem, size = 0x1000, scoped, tag = 'input window, operand 2, single buffered']
    #allocation6 [shape = 's32[1]{0}', space=sflag, size = 0x4, scoped, tag = 'scoped memory for tpu_custom_call.1']
    #allocation7 [shape = 'u8[4096]{0}', space=vmem, size = 0x1000, scoped, tag = 'input window, operand 6, single buffered']
    #allocation8 [shape = 'u8[16384]{0}', space=vmem, size = 0x4000, scoped, tag = 'output window, operand 0']
    %18 = vsyncpa [#allocation3], 0
    %s19 = scalar_lea.sflag [#allocation3], 1
    %20 = vsyncpa %s19, 0
    %21 = vsyncpa [#allocation6], 0
    %22 = vsyncpa [#allocation4], 0
    %s23 = scalar_lea.sflag [#allocation4], 1
    %24 = vsyncpa %s23, 0
    loop: start=0, step=1, limit=4
    $region2: #{tpu_custom_call.1} parent=1 // loop_pre_header
      _
    $region3: #{tpu_custom_call.1} parent=1 // loop_header
      %s26 = sphi 0, %s30
      %p27 = scmp.ge.s32.totalorder %s26, 4
      %s36 = sphi 0, %s38
      %s39 = sphi 0, %s36
      %s40 = sphi 0, %s39
      %s56 = sphi 0, %s40
      %s62 = sphi 0, %s64
      %s65 = sphi 0, %s62
      %s66 = sphi 0, %s65
      %s82 = sphi 0, %s66
      %s86 = sphi 0, %s86
      %s88 = sphi 0, %s86
      %s89 = sphi 0, %s88
      %s103 = sphi 0, %s89
      %s107 = sphi 0, %s107
      %s109 = sphi 0, %s107
      %s110 = sphi 0, %s109
      %s124 = sphi 0, %s110
      %s128 = sphi 0, %s128
      %s130 = sphi 0, %s128
      %s131 = sphi 0, %s130
      %s145 = sphi 0, %s131
      %s149 = sphi 0, %s149
      %s151 = sphi 0, %s149
      %s152 = sphi 0, %s151
      %s166 = sphi 0, %s152
      %s170 = sphi 0, %s170
      %s172 = sphi 0, %s170
      %s173 = sphi 0, %s172
      %s187 = sphi 0, %s173
      %s191 = sphi 0, %s191
      %s193 = sphi 0, %s191
      %s194 = sphi 0, %s193
      %s208 = sphi 0, %s194
      %s212 = sphi 0, %s212
      %s214 = sphi 0, %s212
      %s215 = sphi 0, %s214
      %s229 = sphi 0, %s215
      %s233 = sphi 0, %s233
      %s235 = sphi 0, %s233
      %s236 = sphi 0, %s235
      %s250 = sphi 0, %s236
      %s254 = sphi 0, %s254
      %s256 = sphi 0, %s254
      %s257 = sphi 0, %s256
      %s271 = sphi 0, %s257
      %s275 = sphi 0, %s275
      %s277 = sphi 0, %s275
      %s278 = sphi 0, %s277
      %s292 = sphi 0, %s278
      %s296 = sphi 0, %s296
      %s298 = sphi 0, %s296
      %s299 = sphi 0, %s298
      %s313 = sphi 0, %s299
      %s319 = sphi 0, %s321
      %s322 = sphi 0, %s319
      %s323 = sphi 0, %s322
      %s339 = sphi 0, %s323
    $region4: #{tpu_custom_call.1} parent=1 // loop_header_branch
      %29 = sbr.rel (%p27) target = $region8
    $region5: #{tpu_custom_call.1} parent=1 // loop_body
      %s31 = ssub.s32 %s26, 1
      %s32 = ssub.s32 %s26, 2
      %s33 = sadd.s32 %s26, 1
      %s34 = ssub.s32 %s26, %s33
      %p35 = scmp.eq.s32.totalorder %s34, 0
      %s37 = sadd.s32 %s36, 1
      %s38 = scalar_select %p35, %s36, %s37
      %p41 = pneg %p35
      %p42 = scmp.eq.s32.totalorder %s26, 1
      %p43 = por %p41, %p42
      %p44 = scmp.ne.s32.totalorder %s36, %s39
      %p45 = scmp.eq.s32.totalorder %s26, 0
      %p46 = por %p44, %p45
      %p47 = scmp.ne.s32.totalorder %s36, %s39
      %p48 = scmp.eq.s32.totalorder %s31, 1
      %p49 = por %p47, %p48
      %p50 = scmp.ne.s32.totalorder %s39, %s40
      %p51 = scmp.eq.s32.totalorder %s31, 0
      %p52 = por %p50, %p51
      %p53 = scmp.ne.s32.totalorder %s39, %s40
      %p54 = scmp.eq.s32.totalorder %s32, 1
      %p55 = por %p53, %p54
      %p57 = scmp.ne.s32.totalorder %s40, %s56
      %p58 = scmp.eq.s32.totalorder %s32, 0
      %p59 = por %p57, %p58
      %s60 = ssub.s32 %s26, %s33
      %p61 = scmp.eq.s32.totalorder %s60, 0
      %s63 = sadd.s32 %s62, 1
      %s64 = scalar_select %p61, %s62, %s63
      %p67 = pneg %p61
      %p68 = scmp.eq.s32.totalorder %s26, 1
      %p69 = por %p67, %p68
      %p70 = scmp.ne.s32.totalorder %s62, %s65
      %p71 = scmp.eq.s32.totalorder %s26, 0
      %p72 = por %p70, %p71
      %p73 = scmp.ne.s32.totalorder %s62, %s65
      %p74 = scmp.eq.s32.totalorder %s31, 1
      %p75 = por %p73, %p74
      %p76 = scmp.ne.s32.totalorder %s65, %s66
      %p77 = scmp.eq.s32.totalorder %s31, 0
      %p78 = por %p76, %p77
      %p79 = scmp.ne.s32.totalorder %s65, %s66
      %p80 = scmp.eq.s32.totalorder %s32, 1
      %p81 = por %p79, %p80
      %p83 = scmp.ne.s32.totalorder %s66, %s82
      %p84 = scmp.eq.s32.totalorder %s32, 0
      %p85 = por %p83, %p84
      %s87 = sadd.s32 %s86, 1
      %p90 = scmp.eq.s32.totalorder %s26, 1
      %p91 = scmp.ne.s32.totalorder %s86, %s88
      %p92 = scmp.eq.s32.totalorder %s26, 0
      %p93 = por %p91, %p92
      %p94 = scmp.ne.s32.totalorder %s86, %s88
      %p95 = scmp.eq.s32.totalorder %s31, 1
      %p96 = por %p94, %p95
      %p97 = scmp.ne.s32.totalorder %s88, %s89
      %p98 = scmp.eq.s32.totalorder %s31, 0
      %p99 = por %p97, %p98
      %p100 = scmp.ne.s32.totalorder %s88, %s89
      %p101 = scmp.eq.s32.totalorder %s32, 1
      %p102 = por %p100, %p101
      %p104 = scmp.ne.s32.totalorder %s89, %s103
      %p105 = scmp.eq.s32.totalorder %s32, 0
      %p106 = por %p104, %p105
      %s108 = sadd.s32 %s107, 1
      %p111 = scmp.eq.s32.totalorder %s26, 1
      %p112 = scmp.ne.s32.totalorder %s107, %s109
      %p113 = scmp.eq.s32.totalorder %s26, 0
      %p114 = por %p112, %p113
      %p115 = scmp.ne.s32.totalorder %s107, %s109
      %p116 = scmp.eq.s32.totalorder %s31, 1
      %p117 = por %p115, %p116
      %p118 = scmp.ne.s32.totalorder %s109, %s110
      %p119 = scmp.eq.s32.totalorder %s31, 0
      %p120 = por %p118, %p119
      %p121 = scmp.ne.s32.totalorder %s109, %s110
      %p122 = scmp.eq.s32.totalorder %s32, 1
      %p123 = por %p121, %p122
      %p125 = scmp.ne.s32.totalorder %s110, %s124
      %p126 = scmp.eq.s32.totalorder %s32, 0
      %p127 = por %p125, %p126
      %s129 = sadd.s32 %s128, 1
      %p132 = scmp.eq.s32.totalorder %s26, 1
      %p133 = scmp.ne.s32.totalorder %s128, %s130
      %p134 = scmp.eq.s32.totalorder %s26, 0
      %p135 = por %p133, %p134
      %p136 = scmp.ne.s32.totalorder %s128, %s130
      %p137 = scmp.eq.s32.totalorder %s31, 1
      %p138 = por %p136, %p137
      %p139 = scmp.ne.s32.totalorder %s130, %s131
      %p140 = scmp.eq.s32.totalorder %s31, 0
      %p141 = por %p139, %p140
      %p142 = scmp.ne.s32.totalorder %s130, %s131
      %p143 = scmp.eq.s32.totalorder %s32, 1
      %p144 = por %p142, %p143
      %p146 = scmp.ne.s32.totalorder %s131, %s145
      %p147 = scmp.eq.s32.totalorder %s32, 0
      %p148 = por %p146, %p147
      %s150 = sadd.s32 %s149, 1
      %p153 = scmp.eq.s32.totalorder %s26, 1
      %p154 = scmp.ne.s32.totalorder %s149, %s151
      %p155 = scmp.eq.s32.totalorder %s26, 0
      %p156 = por %p154, %p155
      %p157 = scmp.ne.s32.totalorder %s149, %s151
      %p158 = scmp.eq.s32.totalorder %s31, 1
      %p159 = por %p157, %p158
      %p160 = scmp.ne.s32.totalorder %s151, %s152
      %p161 = scmp.eq.s32.totalorder %s31, 0
      %p162 = por %p160, %p161
      %p163 = scmp.ne.s32.totalorder %s151, %s152
      %p164 = scmp.eq.s32.totalorder %s32, 1
      %p165 = por %p163, %p164
      %p167 = scmp.ne.s32.totalorder %s152, %s166
      %p168 = scmp.eq.s32.totalorder %s32, 0
      %p169 = por %p167, %p168
      %s171 = sadd.s32 %s170, 1
      %p174 = scmp.eq.s32.totalorder %s26, 1
      %p175 = scmp.ne.s32.totalorder %s170, %s172
      %p176 = scmp.eq.s32.totalorder %s26, 0
      %p177 = por %p175, %p176
      %p178 = scmp.ne.s32.totalorder %s170, %s172
      %p179 = scmp.eq.s32.totalorder %s31, 1
      %p180 = por %p178, %p179
      %p181 = scmp.ne.s32.totalorder %s172, %s173
      %p182 = scmp.eq.s32.totalorder %s31, 0
      %p183 = por %p181, %p182
      %p184 = scmp.ne.s32.totalorder %s172, %s173
      %p185 = scmp.eq.s32.totalorder %s32, 1
      %p186 = por %p184, %p185
      %p188 = scmp.ne.s32.totalorder %s173, %s187
      %p189 = scmp.eq.s32.totalorder %s32, 0
      %p190 = por %p188, %p189
      %s192 = sadd.s32 %s191, 1
      %p195 = scmp.eq.s32.totalorder %s26, 1
      %p196 = scmp.ne.s32.totalorder %s191, %s193
      %p197 = scmp.eq.s32.totalorder %s26, 0
      %p198 = por %p196, %p197
      %p199 = scmp.ne.s32.totalorder %s191, %s193
      %p200 = scmp.eq.s32.totalorder %s31, 1
      %p201 = por %p199, %p200
      %p202 = scmp.ne.s32.totalorder %s193, %s194
      %p203 = scmp.eq.s32.totalorder %s31, 0
      %p204 = por %p202, %p203
      %p205 = scmp.ne.s32.totalorder %s193, %s194
      %p206 = scmp.eq.s32.totalorder %s32, 1
      %p207 = por %p205, %p206
      %p209 = scmp.ne.s32.totalorder %s194, %s208
      %p210 = scmp.eq.s32.totalorder %s32, 0
      %p211 = por %p209, %p210
      %s213 = sadd.s32 %s212, 1
      %p216 = scmp.eq.s32.totalorder %s26, 1
      %p217 = scmp.ne.s32.totalorder %s212, %s214
      %p218 = scmp.eq.s32.totalorder %s26, 0
      %p219 = por %p217, %p218
      %p220 = scmp.ne.s32.totalorder %s212, %s214
      %p221 = scmp.eq.s32.totalorder %s31, 1
      %p222 = por %p220, %p221
      %p223 = scmp.ne.s32.totalorder %s214, %s215
      %p224 = scmp.eq.s32.totalorder %s31, 0
      %p225 = por %p223, %p224
      %p226 = scmp.ne.s32.totalorder %s214, %s215
      %p227 = scmp.eq.s32.totalorder %s32, 1
      %p228 = por %p226, %p227
      %p230 = scmp.ne.s32.totalorder %s215, %s229
      %p231 = scmp.eq.s32.totalorder %s32, 0
      %p232 = por %p230, %p231
      %s234 = sadd.s32 %s233, 1
      %p237 = scmp.eq.s32.totalorder %s26, 1
      %p238 = scmp.ne.s32.totalorder %s233, %s235
      %p239 = scmp.eq.s32.totalorder %s26, 0
      %p240 = por %p238, %p239
      %p241 = scmp.ne.s32.totalorder %s233, %s235
      %p242 = scmp.eq.s32.totalorder %s31, 1
      %p243 = por %p241, %p242
      %p244 = scmp.ne.s32.totalorder %s235, %s236
      %p245 = scmp.eq.s32.totalorder %s31, 0
      %p246 = por %p244, %p245
      %p247 = scmp.ne.s32.totalorder %s235, %s236
      %p248 = scmp.eq.s32.totalorder %s32, 1
      %p249 = por %p247, %p248
      %p251 = scmp.ne.s32.totalorder %s236, %s250
      %p252 = scmp.eq.s32.totalorder %s32, 0
      %p253 = por %p251, %p252
      %s255 = sadd.s32 %s254, 1
      %p258 = scmp.eq.s32.totalorder %s26, 1
      %p259 = scmp.ne.s32.totalorder %s254, %s256
      %p260 = scmp.eq.s32.totalorder %s26, 0
      %p261 = por %p259, %p260
      %p262 = scmp.ne.s32.totalorder %s254, %s256
      %p263 = scmp.eq.s32.totalorder %s31, 1
      %p264 = por %p262, %p263
      %p265 = scmp.ne.s32.totalorder %s256, %s257
      %p266 = scmp.eq.s32.totalorder %s31, 0
      %p267 = por %p265, %p266
      %p268 = scmp.ne.s32.totalorder %s256, %s257
      %p269 = scmp.eq.s32.totalorder %s32, 1
      %p270 = por %p268, %p269
      %p272 = scmp.ne.s32.totalorder %s257, %s271
      %p273 = scmp.eq.s32.totalorder %s32, 0
      %p274 = por %p272, %p273
      %s276 = sadd.s32 %s275, 1
      %p279 = scmp.eq.s32.totalorder %s26, 1
      %p280 = scmp.ne.s32.totalorder %s275, %s277
      %p281 = scmp.eq.s32.totalorder %s26, 0
      %p282 = por %p280, %p281
      %p283 = scmp.ne.s32.totalorder %s275, %s277
      %p284 = scmp.eq.s32.totalorder %s31, 1
      %p285 = por %p283, %p284
      %p286 = scmp.ne.s32.totalorder %s277, %s278
      %p287 = scmp.eq.s32.totalorder %s31, 0
      %p288 = por %p286, %p287
      %p289 = scmp.ne.s32.totalorder %s277, %s278
      %p290 = scmp.eq.s32.totalorder %s32, 1
      %p291 = por %p289, %p290
      %p293 = scmp.ne.s32.totalorder %s278, %s292
      %p294 = scmp.eq.s32.totalorder %s32, 0
      %p295 = por %p293, %p294
      %s297 = sadd.s32 %s296, 1
      %p300 = scmp.eq.s32.totalorder %s26, 1
      %p301 = scmp.ne.s32.totalorder %s296, %s298
      %p302 = scmp.eq.s32.totalorder %s26, 0
      %p303 = por %p301, %p302
      %p304 = scmp.ne.s32.totalorder %s296, %s298
      %p305 = scmp.eq.s32.totalorder %s31, 1
      %p306 = por %p304, %p305
      %p307 = scmp.ne.s32.totalorder %s298, %s299
      %p308 = scmp.eq.s32.totalorder %s31, 0
      %p309 = por %p307, %p308
      %p310 = scmp.ne.s32.totalorder %s298, %s299
      %p311 = scmp.eq.s32.totalorder %s32, 1
      %p312 = por %p310, %p311
      %p314 = scmp.ne.s32.totalorder %s299, %s313
      %p315 = scmp.eq.s32.totalorder %s32, 0
      %p316 = por %p314, %p315
      %s317 = ssub.s32 %s26, %s33
      %p318 = scmp.eq.s32.totalorder %s317, 0
      %s320 = sadd.s32 %s319, 1
      %s321 = scalar_select %p318, %s319, %s320
      %p324 = pneg %p318
      %p325 = scmp.eq.s32.totalorder %s26, 1
      %p326 = por %p324, %p325
      %p327 = scmp.ne.s32.totalorder %s319, %s322
      %p328 = scmp.eq.s32.totalorder %s26, 0
      %p329 = por %p327, %p328
      %p330 = scmp.ne.s32.totalorder %s319, %s322
      %p331 = scmp.eq.s32.totalorder %s31, 1
      %p332 = por %p330, %p331
      %p333 = scmp.ne.s32.totalorder %s322, %s323
      %p334 = scmp.eq.s32.totalorder %s31, 0
      %p335 = por %p333, %p334
      %p336 = scmp.ne.s32.totalorder %s322, %s323
      %p337 = scmp.eq.s32.totalorder %s32, 1
      %p338 = por %p336, %p337
      %p340 = scmp.ne.s32.totalorder %s323, %s339
      %p341 = scmp.eq.s32.totalorder %s32, 0
      %p342 = por %p340, %p341
      %p343 = scmp.le.s32.totalorder 1, %s26
      %p344 = scmp.lt.s32.totalorder %s26, 3
      %p345 = pnand %p343, %p344
      %p346 = pneg %p345
      // Predicated region
      $region9: #{tpu_custom_call.1} parent=5 // pred_check
        _
      $region10: #{tpu_custom_call.1} parent=5 // pred_check_branch
        %348 = sbr.rel (%p345) target = $region12
      $region11: #{tpu_custom_call.1} parent=5 // pred_region
        %s349 = ssub.s32 %s26, 1
        // Predicated region
        $region13: #{tpu_custom_call.1} parent=11 // pred_check
          %p350 = pneg %p99
        $region14: #{tpu_custom_call.1} parent=11 // pred_check_branch
          %352 = sbr.rel (%p350) target = $region16
        $region15: #{tpu_custom_call.1} parent=11 // pred_region
          %s354 = ssub.s32 128, 128
          %355 = vsyncadd [#allocation6], %s354
          %s356 = sshll.u32 [#allocation5], 4
          %s357 = int_to_ptr.vmem [resolvable:$true] %s356
          %362 = dma.hbm_to_vmem [thread:$0]  %s2, 128, %s357, [#allocation6], 64, 64, 4
        $region16: #{tpu_custom_call.1} parent=11 // pred_fallthru
          _
        // Predicated region
        $region17: #{tpu_custom_call.1} parent=11 // pred_check
          %p363 = pneg %p120
        $region18: #{tpu_custom_call.1} parent=11 // pred_check_branch
          %365 = sbr.rel (%p363) target = $region20
        $region19: #{tpu_custom_call.1} parent=11 // pred_region
          _
        $region20: #{tpu_custom_call.1} parent=11 // pred_fallthru
          _
        // Predicated region
        $region21: #{tpu_custom_call.1} parent=11 // pred_check
          %p366 = pneg %p141
        $region22: #{tpu_custom_call.1} parent=11 // pred_check_branch
          %368 = sbr.rel (%p366) target = $region24
        $region23: #{tpu_custom_call.1} parent=11 // pred_region
          _
        $region24: #{tpu_custom_call.1} parent=11 // pred_fallthru
          _
        // Predicated region
        $region25: #{tpu_custom_call.1} parent=11 // pred_check
          %p369 = pneg %p162
        $region26: #{tpu_custom_call.1} parent=11 // pred_check_branch
          %371 = sbr.rel (%p369) target = $region28
        $region27: #{tpu_custom_call.1} parent=11 // pred_region
          _
        $region28: #{tpu_custom_call.1} parent=11 // pred_fallthru
          _
        // Predicated region
        $region29: #{tpu_custom_call.1} parent=11 // pred_check
          %p372 = pneg %p183
        $region30: #{tpu_custom_call.1} parent=11 // pred_check_branch
          %374 = sbr.rel (%p372) target = $region32
        $region31: #{tpu_custom_call.1} parent=11 // pred_region
          %s376 = ssub.s32 128, 128
          %377 = vsyncadd [#allocation6], %s376
          %s378 = sshll.u32 [#allocation7], 4
          %s379 = int_to_ptr.vmem [resolvable:$true] %s378
          %384 = dma.hbm_to_vmem [thread:$0]  %s6, 128, %s379, [#allocation6], 64, 64, 4
        $region32: #{tpu_custom_call.1} parent=11 // pred_fallthru
          _
        // Predicated region
        $region33: #{tpu_custom_call.1} parent=11 // pred_check
          %p385 = pneg %p204
        $region34: #{tpu_custom_call.1} parent=11 // pred_check_branch
          %387 = sbr.rel (%p385) target = $region36
        $region35: #{tpu_custom_call.1} parent=11 // pred_region
          _
        $region36: #{tpu_custom_call.1} parent=11 // pred_fallthru
          _
        // Predicated region
        $region37: #{tpu_custom_call.1} parent=11 // pred_check
          %p388 = pneg %p225
        $region38: #{tpu_custom_call.1} parent=11 // pred_check_branch
          %390 = sbr.rel (%p388) target = $region40
        $region39: #{tpu_custom_call.1} parent=11 // pred_region
          _
        $region40: #{tpu_custom_call.1} parent=11 // pred_fallthru
          _
        // Predicated region
        $region41: #{tpu_custom_call.1} parent=11 // pred_check
          %p391 = pneg %p246
        $region42: #{tpu_custom_call.1} parent=11 // pred_check_branch
          %393 = sbr.rel (%p391) target = $region44
        $region43: #{tpu_custom_call.1} parent=11 // pred_region
          _
        $region44: #{tpu_custom_call.1} parent=11 // pred_fallthru
          _
        // Predicated region
        $region45: #{tpu_custom_call.1} parent=11 // pred_check
          %p394 = pneg %p267
        $region46: #{tpu_custom_call.1} parent=11 // pred_check_branch
          %396 = sbr.rel (%p394) target = $region48
        $region47: #{tpu_custom_call.1} parent=11 // pred_region
          _
        $region48: #{tpu_custom_call.1} parent=11 // pred_fallthru
          _
        // Predicated region
        $region49: #{tpu_custom_call.1} parent=11 // pred_check
          %p397 = pneg %p288
        $region50: #{tpu_custom_call.1} parent=11 // pred_check_branch
          %399 = sbr.rel (%p397) target = $region52
        $region51: #{tpu_custom_call.1} parent=11 // pred_region
          _
        $region52: #{tpu_custom_call.1} parent=11 // pred_fallthru
          _
        // Predicated region
        $region53: #{tpu_custom_call.1} parent=11 // pred_check
          %p400 = pneg %p309
        $region54: #{tpu_custom_call.1} parent=11 // pred_check_branch
          %402 = sbr.rel (%p400) target = $region56
        $region55: #{tpu_custom_call.1} parent=11 // pred_region
          _
        $region56: #{tpu_custom_call.1} parent=11 // pred_fallthru
          _
      $region12: #{tpu_custom_call.1} parent=5 // pred_fallthru
        _
      %p403 = scmp.lt.s32.totalorder %s26, 2
      // Predicated region
      $region57: #{tpu_custom_call.1} parent=5 // pred_check
        %p404 = pneg %p403
      $region58: #{tpu_custom_call.1} parent=5 // pred_check_branch
        %406 = sbr.rel (%p404) target = $region60
      $region59: #{tpu_custom_call.1} parent=5 // pred_region
        // Predicated region
        $region61: #{tpu_custom_call.1} parent=59 // pred_check
          %p407 = pneg %p46
        $region62: #{tpu_custom_call.1} parent=59 // pred_check_branch
          %409 = sbr.rel (%p407) target = $region64
        $region63: #{tpu_custom_call.1} parent=59 // pred_region
          %s410 = smul.u32 16, %s26
          %p411 = scmp.lt.s32.totalorder %s410, 31
          %s412 = scalar_select %p411, %s410, 31
          %s413 = smul.addr %s412, 4
          %s414 = scalar_lea.vmem %s0, %s413
          %s415 = smul.u32 16, %s26
        $region64: #{tpu_custom_call.1} parent=59 // pred_fallthru
          _
        // Predicated region
        $region65: #{tpu_custom_call.1} parent=59 // pred_check
          %p416 = pneg %p72
        $region66: #{tpu_custom_call.1} parent=59 // pred_check_branch
          %418 = sbr.rel (%p416) target = $region68
        $region67: #{tpu_custom_call.1} parent=59 // pred_region
          %s419 = sand.u32 %s62, 1
          %s420 = scalar_lea.sflag [#allocation3], %s419
          %s421 = sand.u32 %s62, 1
          %s422 = smul.addr %s421, 128
          %s423 = scalar_lea.vmem [#allocation2], %s422
          %s424 = smul.u32 16, %s26
          %s426 = ssub.s32 2048, 2048
          %427 = vsyncadd %s420, %s426
          %s428 = smul.addr %s424, 128
          %s429 = scalar_lea.hbm %s1, %s428
          %s430 = sshll.u32 %s423, 4
          %s431 = int_to_ptr.vmem [resolvable:$true] %s430
          %436 = dma.hbm_to_vmem [thread:$0]  %s429, 2048, %s431, %s420, 128, 128, 8
        $region68: #{tpu_custom_call.1} parent=59 // pred_fallthru
          _
      $region60: #{tpu_custom_call.1} parent=5 // pred_fallthru
        _
      %p437 = scmp.le.s32.totalorder 1, %s26
      %p438 = scmp.lt.s32.totalorder %s26, 3
      %p439 = pnand %p437, %p438
      %p440 = pneg %p439
      // Predicated region
      $region69: #{tpu_custom_call.1} parent=5 // pred_check
        _
      $region70: #{tpu_custom_call.1} parent=5 // pred_check_branch
        %442 = sbr.rel (%p439) target = $region72
      $region71: #{tpu_custom_call.1} parent=5 // pred_region
        %s443 = ssub.s32 %s26, 1
        %s444 = sand.u32 %s65, 1
        %s445 = scalar_lea.sflag [#allocation3], %s444
        %s446 = sand.u32 %s65, 1
        %s447 = smul.addr %s446, 128
        %s448 = scalar_lea.vmem [#allocation2], %s447
        // Predicated region
        $region73: #{tpu_custom_call.1} parent=71 // pred_check
          %p449 = pneg %p78
        $region74: #{tpu_custom_call.1} parent=71 // pred_check_branch
          %451 = sbr.rel (%p449) target = $region76
        $region75: #{tpu_custom_call.1} parent=71 // pred_region
          %452 = dma.done %s445, 2048
        $region76: #{tpu_custom_call.1} parent=71 // pred_fallthru
          _
        // Predicated region
        $region77: #{tpu_custom_call.1} parent=71 // pred_check
          %p453 = pneg %p99
        $region78: #{tpu_custom_call.1} parent=71 // pred_check_branch
          %455 = sbr.rel (%p453) target = $region80
        $region79: #{tpu_custom_call.1} parent=71 // pred_region
          %456 = dma.done [#allocation6], 128
        $region80: #{tpu_custom_call.1} parent=71 // pred_fallthru
          _
        // Predicated region
        $region81: #{tpu_custom_call.1} parent=71 // pred_check
          %p457 = pneg %p183
        $region82: #{tpu_custom_call.1} parent=71 // pred_check_branch
          %459 = sbr.rel (%p457) target = $region84
        $region83: #{tpu_custom_call.1} parent=71 // pred_region
          %460 = dma.done [#allocation6], 128
        $region84: #{tpu_custom_call.1} parent=71 // pred_fallthru
          _
        %s461 = smul.u32 16, %s31
        %p462 = scmp.lt.s32.totalorder %s461, 31
        %s463 = scalar_select %p462, %s461, 31
        %s464 = smul.addr %s463, 4
        %s465 = scalar_lea.vmem %s0, %s464
        %p466 = pneg %p52
        %p467 = pneg %p49
        %s468 = sand.u32 %s65, 1
        %s469 = scalar_lea.sflag [#allocation3], %s468
        %s470 = sand.u32 %s65, 1
        %s471 = smul.addr %s470, 128
        %s472 = scalar_lea.vmem [#allocation2], %s471
        %p473 = pneg %p78
        %p474 = pneg %p75
        %p475 = pneg %p99
        %p476 = pneg %p96
        %p477 = pneg %p120
        %p478 = pneg %p117
        %p479 = pneg %p141
        %p480 = pneg %p138
        %p481 = pneg %p162
        %p482 = pneg %p159
        %p483 = pneg %p183
        %p484 = pneg %p180
        %p485 = pneg %p204
        %p486 = pneg %p201
        %p487 = pneg %p225
        %p488 = pneg %p222
        %p489 = pneg %p246
        %p490 = pneg %p243
        %p491 = pneg %p267
        %p492 = pneg %p264
        %p493 = pneg %p288
        %p494 = pneg %p285
        %p495 = pneg %p309
        %p496 = pneg %p306
        %p497 = pneg %p335
        %p498 = pneg %p332
        %s499 = sand.u32 %s322, 1
        %s500 = scalar_lea.sflag [#allocation4], %s499
        %s501 = sand.u32 %s322, 1
        %s502 = smul.addr %s501, 16
        %s503 = scalar_lea.vmem [#allocation8], %s502
        %s504 = smul.u32 16, %s31
        %p505 = scmp.lt.s32.totalorder %s504, 31
        %s506 = scalar_select %p505, %s504, 31
        %s507 = smul.addr %s506, 4
        %s508 = scalar_lea.vmem %s0, %s507
        %s509 = smul.u32 16, %s31
        %s510 = smul.u32 16, %s31
        %s511 = smul.u32 2, %s31
        %v513 = vld [vmem:[%s448] sm:$0xff]
        %v514 = vld [vmem:[%s448 + $0x8] sm:$0xff]
        %v515 = vld [vmem:[%s448 + $0x10] sm:$0xff]
        %v516 = vld [vmem:[%s448 + $0x18] sm:$0xff]
        %v517 = vld [vmem:[%s448 + $0x20] sm:$0xff]
        %v518 = vld [vmem:[%s448 + $0x28] sm:$0xff]
        %v519 = vld [vmem:[%s448 + $0x30] sm:$0xff]
        %v520 = vld [vmem:[%s448 + $0x38] sm:$0xff]
        %v521 = vld [vmem:[%s448 + $0x40] sm:$0xff]
        %v522 = vld [vmem:[%s448 + $0x48] sm:$0xff]
        %v523 = vld [vmem:[%s448 + $0x50] sm:$0xff]
        %v524 = vld [vmem:[%s448 + $0x58] sm:$0xff]
        %v525 = vld [vmem:[%s448 + $0x60] sm:$0xff]
        %v526 = vld [vmem:[%s448 + $0x68] sm:$0xff]
        %v527 = vld [vmem:[%s448 + $0x70] sm:$0xff]
        %v528 = vld [vmem:[%s448 + $0x78] sm:$0xff]
        %vm529 = vcmp.ge.f32.partialorder %v513, 0.0
        %vm530 = vcmp.ge.f32.partialorder %v514, 0.0
        %vm531 = vcmp.ge.f32.partialorder %v515, 0.0
        %vm532 = vcmp.ge.f32.partialorder %v516, 0.0
        %vm533 = vcmp.ge.f32.partialorder %v517, 0.0
        %vm534 = vcmp.ge.f32.partialorder %v518, 0.0
        %vm535 = vcmp.ge.f32.partialorder %v519, 0.0
        %vm536 = vcmp.ge.f32.partialorder %v520, 0.0
        %vm537 = vcmp.ge.f32.partialorder %v521, 0.0
        %vm538 = vcmp.ge.f32.partialorder %v522, 0.0
        %vm539 = vcmp.ge.f32.partialorder %v523, 0.0
        %vm540 = vcmp.ge.f32.partialorder %v524, 0.0
        %vm541 = vcmp.ge.f32.partialorder %v525, 0.0
        %vm542 = vcmp.ge.f32.partialorder %v526, 0.0
        %vm543 = vcmp.ge.f32.partialorder %v527, 0.0
        %vm544 = vcmp.ge.f32.partialorder %v528, 0.0
        %v545 = vld [vmem:[%s508] sm:$0xf]
        %v546 = vld [vmem:[%s508 + $0x4] sm:$0xf]
        %v547 = vld [vmem:[%s508 + $0x8] sm:$0xf]
        %v548 = vld [vmem:[%s508 + $0xc] sm:$0xf]
        %v549 = vld [vmem:[%s508 + $0x10] sm:$0xf]
        %v550 = vld [vmem:[%s508 + $0x14] sm:$0xf]
        %v551 = vld [vmem:[%s508 + $0x18] sm:$0xf]
        %v552 = vld [vmem:[%s508 + $0x1c] sm:$0xf]
        %v553 = vld [vmem:[%s508 + $0x20] sm:$0xf]
        %v554 = vld [vmem:[%s508 + $0x24] sm:$0xf]
        %v555 = vld [vmem:[%s508 + $0x28] sm:$0xf]
        %v556 = vld [vmem:[%s508 + $0x2c] sm:$0xf]
        %v557 = vld [vmem:[%s508 + $0x30] sm:$0xf]
        %v558 = vld [vmem:[%s508 + $0x34] sm:$0xf]
        %v559 = vld [vmem:[%s508 + $0x38] sm:$0xf]
        %v560 = vld [vmem:[%s508 + $0x3c] sm:$0xf]
        %v561 = vld [vmem:[#allocation5] sm:$0xf]
        %v562 = vld [vmem:[#allocation5 + $0x4] sm:$0xf]
        %v579 = vunpack.c.l.b16 %v545
        %v580 = vunpack.c.l.b16 %v546
        %v581 = vunpack.c.l.b16 %v547
        %v582 = vunpack.c.l.b16 %v548
        %v583 = vunpack.c.l.b16 %v549
        %v584 = vunpack.c.l.b16 %v550
        %v585 = vunpack.c.l.b16 %v551
        %v586 = vunpack.c.l.b16 %v552
        %v587 = vunpack.c.l.b16 %v553
        %v588 = vunpack.c.l.b16 %v554
        %v589 = vunpack.c.l.b16 %v555
        %v590 = vunpack.c.l.b16 %v556
        %v591 = vunpack.c.l.b16 %v557
        %v592 = vunpack.c.l.b16 %v558
        %v593 = vunpack.c.l.b16 %v559
        %v594 = vunpack.c.l.b16 %v560
        %v595 = vpack.c.b16 %v580, %v579
        %v596 = vpack.c.b16 %v582, %v581
        %v597 = vpack.c.b16 %v584, %v583
        %v598 = vpack.c.b16 %v586, %v585
        %v599 = vpack.c.b16 %v588, %v587
        %v600 = vpack.c.b16 %v590, %v589
        %v601 = vpack.c.b16 %v592, %v591
        %v602 = vpack.c.b16 %v594, %v593
        %v605 = vunpack.c.l.b16 %v561
        %v606 = vunpack.c.l.b16 %v562
        %v607 = vpack.c.b16 %v606, %v605
        %vm609 = vcmask 130048
        %v611 = vsel %vm609, %v595, 0
        %v614 = vsel %vm609, %v596, 0
        %v617 = vsel %vm609, %v597, 0
        %v620 = vsel %vm609, %v598, 0
        %v623 = vsel %vm609, %v599, 0
        %v626 = vsel %vm609, %v600, 0
        %v629 = vsel %vm609, %v601, 0
        %v632 = vsel %vm609, %v602, 0
        %634 = vmatprep.subr.bf16.mxu0 0
        %635 = vmatpush1.bf16.msra.mxu0 %v607
        %636 = vmatprep.subr.bf16.mxu0 0
        %637 = vmatpush1.bf16.msra.mxu0 0
        %638 = vmatprep.subr.bf16.mxu0 0
        %639 = vmatpush1.bf16.msra.mxu0 0
        %640 = vmatprep.subr.bf16.mxu0 0
        %641 = vmatpush1.bf16.msra.mxu0 0
        %642 = vmatprep.subr.bf16.mxu0 0
        %643 = vmatpush1.bf16.msra.mxu0 0
        %644 = vmatprep.subr.bf16.mxu0 0
        %645 = vmatpush1.bf16.msra.mxu0 0
        %646 = vmatprep.subr.bf16.mxu0 0
        %647 = vmatpush1.bf16.msra.mxu0 0
        %648 = vmatprep.subr.bf16.mxu0 0
        %649 = vmatpush1.bf16.msra.mxu0 0
        %650 = vmatprep.subr.bf16.mxu0 0
        %651 = vmatpush1.bf16.msra.mxu0 0
        %652 = vmatprep.subr.bf16.mxu0 0
        %653 = vmatpush1.bf16.msra.mxu0 0
        %654 = vmatprep.subr.bf16.mxu0 0
        %655 = vmatpush1.bf16.msra.mxu0 0
        %656 = vmatprep.subr.bf16.mxu0 0
        %657 = vmatpush1.bf16.msra.mxu0 0
        %658 = vmatprep.subr.bf16.mxu0 0
        %659 = vmatpush1.bf16.msra.mxu0 0
        %660 = vmatprep.subr.bf16.mxu0 0
        %661 = vmatpush1.bf16.msra.mxu0 0
        %662 = vmatprep.subr.bf16.mxu0 0
        %663 = vmatpush1.bf16.msra.mxu0 0
        %664 = vmatprep.subr.bf16.mxu0 0
        %665 = vmatpush1.bf16.msra.mxu0 0
        %666 = vmatprep.mubr.bf16.mxu0 0
        %667 = vmatmul.mubr.bf16.gmra.mrb[0].mxu0 %v611
        %v668 = vpop.f32.mrb[0].mxu0
        %v669 = vadd.f32 0.0, %v668
        %v670 = vpop.f32.mrb[0].mxu0
        %v671 = vpop.f32.mrb[0].mxu0
        %v672 = vadd.f32 0.0, %v671
        %v673 = vpop.f32.mrb[0].mxu0
        %674 = vmatprep.mubr.bf16.mxu0 0
        %675 = vmatmul.mubr.bf16.gmra.mrb[0].mxu0 %v614
        %v676 = vpop.f32.mrb[0].mxu0
        %v677 = vadd.f32 0.0, %v676
        %v678 = vpop.f32.mrb[0].mxu0
        %v679 = vpop.f32.mrb[0].mxu0
        %v680 = vadd.f32 0.0, %v679
        %v681 = vpop.f32.mrb[0].mxu0
        %682 = vmatprep.mubr.bf16.mxu0 0
        %683 = vmatmul.mubr.bf16.gmra.mrb[0].mxu0 %v617
        %v684 = vpop.f32.mrb[0].mxu0
        %v685 = vadd.f32 0.0, %v684
        %v686 = vpop.f32.mrb[0].mxu0
        %v687 = vpop.f32.mrb[0].mxu0
        %v688 = vadd.f32 0.0, %v687
        %v689 = vpop.f32.mrb[0].mxu0
        %690 = vmatprep.mubr.bf16.mxu0 0
        %691 = vmatmul.mubr.bf16.gmra.mrb[0].mxu0 %v620
        %v692 = vpop.f32.mrb[0].mxu0
        %v693 = vadd.f32 0.0, %v692
        %v694 = vpop.f32.mrb[0].mxu0
        %v695 = vpop.f32.mrb[0].mxu0
        %v696 = vadd.f32 0.0, %v695
        %v697 = vpop.f32.mrb[0].mxu0
        %698 = vmatprep.mubr.bf16.mxu0 0
        %699 = vmatmul.mubr.bf16.gmra.mrb[0].mxu0 %v623
        %v700 = vpop.f32.mrb[0].mxu0
        %v701 = vadd.f32 0.0, %v700
        %v702 = vpop.f32.mrb[0].mxu0
        %v703 = vpop.f32.mrb[0].mxu0
        %v704 = vadd.f32 0.0, %v703
        %v705 = vpop.f32.mrb[0].mxu0
        %706 = vmatprep.mubr.bf16.mxu0 0
        %707 = vmatmul.mubr.bf16.gmra.mrb[0].mxu0 %v626
        %v708 = vpop.f32.mrb[0].mxu0
        %v709 = vadd.f32 0.0, %v708
        %v710 = vpop.f32.mrb[0].mxu0
        %v711 = vpop.f32.mrb[0].mxu0
        %v712 = vadd.f32 0.0, %v711
        %v713 = vpop.f32.mrb[0].mxu0
        %714 = vmatprep.mubr.bf16.mxu0 0
        %715 = vmatmul.mubr.bf16.gmra.mrb[0].mxu0 %v629
        %v716 = vpop.f32.mrb[0].mxu0
        %v717 = vadd.f32 0.0, %v716
        %v718 = vpop.f32.mrb[0].mxu0
        %v719 = vpop.f32.mrb[0].mxu0
        %v720 = vadd.f32 0.0, %v719
        %v721 = vpop.f32.mrb[0].mxu0
        %722 = vmatprep.mubr.bf16.mxu0 0
        %723 = vmatmul.mubr.bf16.gmra.mrb[0].mxu0 %v632
        %v724 = vpop.f32.mrb[0].mxu0
        %v725 = vadd.f32 0.0, %v724
        %v726 = vpop.f32.mrb[0].mxu0
        %v727 = vpop.f32.mrb[0].mxu0
        %v728 = vadd.f32 0.0, %v727
        %v729 = vpop.f32.mrb[0].mxu0
        %730 = vdwg.mxu0
        %v731 = vpack.c.bf16 %v672, %v669
        %v732 = vpack.c.bf16 %v680, %v677
        %v733 = vpack.c.bf16 %v688, %v685
        %v734 = vpack.c.bf16 %v696, %v693
        %v735 = vpack.c.bf16 %v704, %v701
        %v736 = vpack.c.bf16 %v712, %v709
        %v737 = vpack.c.bf16 %v720, %v717
        %v738 = vpack.c.bf16 %v728, %v725
        %v739 = vld [vmem:[%s3] sm:$0xf]
        %v740 = vld [vmem:[%s3 + $0x4] sm:$0xf]
        %v741 = vld [vmem:[%s3 + $0x8] sm:$0xf]
        %v742 = vld [vmem:[%s3 + $0xc] sm:$0xf]
        %v743 = vld [vmem:[%s3 + $0x10] sm:$0xf]
        %v744 = vld [vmem:[%s3 + $0x14] sm:$0xf]
        %v745 = vld [vmem:[%s3 + $0x18] sm:$0xf]
        %v746 = vld [vmem:[%s3 + $0x1c] sm:$0xf]
        %v747 = vld [vmem:[%s3 + $0x20] sm:$0xf]
        %v748 = vld [vmem:[%s3 + $0x24] sm:$0xf]
        %v749 = vld [vmem:[%s3 + $0x28] sm:$0xf]
        %v750 = vld [vmem:[%s3 + $0x2c] sm:$0xf]
        %v751 = vld [vmem:[%s3 + $0x30] sm:$0xf]
        %v752 = vld [vmem:[%s3 + $0x34] sm:$0xf]
        %v753 = vld [vmem:[%s3 + $0x38] sm:$0xf]
        %v754 = vld [vmem:[%s3 + $0x3c] sm:$0xf]
        %v771 = vunpack.c.l.b16 %v739
        %v772 = vunpack.c.l.b16 %v740
        %v773 = vunpack.c.l.b16 %v741
        %v774 = vunpack.c.l.b16 %v742
        %v775 = vunpack.c.l.b16 %v743
        %v776 = vunpack.c.l.b16 %v744
        %v777 = vunpack.c.l.b16 %v745
        %v778 = vunpack.c.l.b16 %v746
        %v779 = vunpack.c.l.b16 %v747
        %v780 = vunpack.c.l.b16 %v748
        %v781 = vunpack.c.l.b16 %v749
        %v782 = vunpack.c.l.b16 %v750
        %v783 = vunpack.c.l.b16 %v751
        %v784 = vunpack.c.l.b16 %v752
        %v785 = vunpack.c.l.b16 %v753
        %v786 = vunpack.c.l.b16 %v754
        %v787 = vpack.c.b16 %v772, %v771
        %v788 = vpack.c.b16 %v774, %v773
        %v789 = vpack.c.b16 %v776, %v775
        %v790 = vpack.c.b16 %v778, %v777
        %v791 = vpack.c.b16 %v780, %v779
        %v792 = vpack.c.b16 %v782, %v781
        %v793 = vpack.c.b16 %v784, %v783
        %v794 = vpack.c.b16 %v786, %v785
        %803 = vmatprep.subr.bf16.mxu0 0
        %804 = vmatpush1.bf16.msra.mxu0 %v787
        %805 = vmatprep.subr.bf16.mxu0 0
        %806 = vmatpush1.bf16.msra.mxu0 %v788
        %807 = vmatprep.subr.bf16.mxu0 0
        %808 = vmatpush1.bf16.msra.mxu0 %v789
        %809 = vmatprep.subr.bf16.mxu0 0
        %810 = vmatpush1.bf16.msra.mxu0 %v790
        %811 = vmatprep.subr.bf16.mxu0 0
        %812 = vmatpush1.bf16.msra.mxu0 %v791
        %813 = vmatprep.subr.bf16.mxu0 0
        %814 = vmatpush1.bf16.msra.mxu0 %v792
        %815 = vmatprep.subr.bf16.mxu0 0
        %816 = vmatpush1.bf16.msra.mxu0 %v793
        %817 = vmatprep.subr.bf16.mxu0 0
        %818 = vmatpush1.bf16.msra.mxu0 %v794
        %819 = vmatprep.subr.bf16.mxu0 0
        %820 = vmatpush1.bf16.msra.mxu0 0
        %821 = vmatprep.subr.bf16.mxu0 0
        %822 = vmatpush1.bf16.msra.mxu0 0
        %823 = vmatprep.subr.bf16.mxu0 0
        %824 = vmatpush1.bf16.msra.mxu0 0
        %825 = vmatprep.subr.bf16.mxu0 0
        %826 = vmatpush1.bf16.msra.mxu0 0
        %827 = vmatprep.subr.bf16.mxu0 0
        %828 = vmatpush1.bf16.msra.mxu0 0
        %829 = vmatprep.subr.bf16.mxu0 0
        %830 = vmatpush1.bf16.msra.mxu0 0
        %831 = vmatprep.subr.bf16.mxu0 0
        %832 = vmatpush1.bf16.msra.mxu0 0
        %833 = vmatprep.subr.bf16.mxu0 0
        %834 = vmatpush1.bf16.msra.mxu0 0
        %835 = vmatprep.mubr.bf16.mxu0 0
        %836 = vmatmul.mubr.bf16.gmra.mrb[0].mxu0 %v731
        %v837 = vpop.f32.mrb[0].mxu0
        %v838 = vadd.f32 0.0, %v837
        %v839 = vpop.f32.mrb[0].mxu0
        %v840 = vpop.f32.mrb[0].mxu0
        %v841 = vadd.f32 0.0, %v840
        %v842 = vpop.f32.mrb[0].mxu0
        %843 = vmatprep.mubr.bf16.mxu0 0
        %844 = vmatmul.mubr.bf16.gmra.mrb[0].mxu0 %v732
        %v845 = vpop.f32.mrb[0].mxu0
        %v846 = vadd.f32 0.0, %v845
        %v847 = vpop.f32.mrb[0].mxu0
        %v848 = vpop.f32.mrb[0].mxu0
        %v849 = vadd.f32 0.0, %v848
        %v850 = vpop.f32.mrb[0].mxu0
        %851 = vmatprep.mubr.bf16.mxu0 0
        %852 = vmatmul.mubr.bf16.gmra.mrb[0].mxu0 %v733
        %v853 = vpop.f32.mrb[0].mxu0
        %v854 = vadd.f32 0.0, %v853
        %v855 = vpop.f32.mrb[0].mxu0
        %v856 = vpop.f32.mrb[0].mxu0
        %v857 = vadd.f32 0.0, %v856
        %v858 = vpop.f32.mrb[0].mxu0
        %859 = vmatprep.mubr.bf16.mxu0 0
        %860 = vmatmul.mubr.bf16.gmra.mrb[0].mxu0 %v734
        %v861 = vpop.f32.mrb[0].mxu0
        %v862 = vadd.f32 0.0, %v861
        %v863 = vpop.f32.mrb[0].mxu0
        %v864 = vpop.f32.mrb[0].mxu0
        %v865 = vadd.f32 0.0, %v864
        %v866 = vpop.f32.mrb[0].mxu0
        %867 = vmatprep.mubr.bf16.mxu0 0
        %868 = vmatmul.mubr.bf16.gmra.mrb[0].mxu0 %v735
        %v869 = vpop.f32.mrb[0].mxu0
        %v870 = vadd.f32 0.0, %v869
        %v871 = vpop.f32.mrb[0].mxu0
        %v872 = vpop.f32.mrb[0].mxu0
        %v873 = vadd.f32 0.0, %v872
        %v874 = vpop.f32.mrb[0].mxu0
        %875 = vmatprep.mubr.bf16.mxu0 0
        %876 = vmatmul.mubr.bf16.gmra.mrb[0].mxu0 %v736
        %v877 = vpop.f32.mrb[0].mxu0
        %v878 = vadd.f32 0.0, %v877
        %v879 = vpop.f32.mrb[0].mxu0
        %v880 = vpop.f32.mrb[0].mxu0
        %v881 = vadd.f32 0.0, %v880
        %v882 = vpop.f32.mrb[0].mxu0
        %883 = vmatprep.mubr.bf16.mxu0 0
        %884 = vmatmul.mubr.bf16.gmra.mrb[0].mxu0 %v737
        %v885 = vpop.f32.mrb[0].mxu0
        %v886 = vadd.f32 0.0, %v885
        %v887 = vpop.f32.mrb[0].mxu0
        %v888 = vpop.f32.mrb[0].mxu0
        %v889 = vadd.f32 0.0, %v888
        %v890 = vpop.f32.mrb[0].mxu0
        %891 = vmatprep.mubr.bf16.mxu0 0
        %892 = vmatmul.mubr.bf16.gmra.mrb[0].mxu0 %v738
        %v893 = vpop.f32.mrb[0].mxu0
        %v894 = vadd.f32 0.0, %v893
        %v895 = vpop.f32.mrb[0].mxu0
        %v896 = vpop.f32.mrb[0].mxu0
        %v897 = vadd.f32 0.0, %v896
        %v898 = vpop.f32.mrb[0].mxu0
        %899 = vdwg.mxu0
        %900 = vxpose.xlu0.b32.start [1/16] %v838, 128
        %901 = vxpose.xlu0.b32.cont [2/16] %v841, 128
        %902 = vxpose.xlu0.b32.cont [3/16] %v846, 128
        %903 = vxpose.xlu0.b32.cont [4/16] %v849, 128
        %904 = vxpose.xlu0.b32.cont [5/16] %v854, 128
        %905 = vxpose.xlu0.b32.cont [6/16] %v857, 128
        %906 = vxpose.xlu0.b32.cont [7/16] %v862, 128
        %907 = vxpose.xlu0.b32.cont [8/16] %v865, 128
        %908 = vxpose.xlu0.b32.cont [9/16] %v870, 128
        %909 = vxpose.xlu0.b32.cont [10/16] %v873, 128
        %910 = vxpose.xlu0.b32.cont [11/16] %v878, 128
        %911 = vxpose.xlu0.b32.cont [12/16] %v881, 128
        %912 = vxpose.xlu0.b32.cont [13/16] %v886, 128
        %913 = vxpose.xlu0.b32.cont [14/16] %v889, 128
        %914 = vxpose.xlu0.b32.cont [15/16] %v894, 128
        %915 = vxpose.xlu0.b32.end [16/16] %v897, 128
        %v916 = vpop.trf.xlu0
        %v917 = vpop.trf.xlu0
        %v918 = vpop.trf.xlu0
        %v919 = vpop.trf.xlu0
        %v920 = vpop.trf.xlu0
        %v921 = vpop.trf.xlu0
        %v922 = vpop.trf.xlu0
        %v923 = vpop.trf.xlu0
        %v924 = vpop.trf.xlu0
        %v925 = vpop.trf.xlu0
        %v926 = vpop.trf.xlu0
        %v927 = vpop.trf.xlu0
        %v928 = vpop.trf.xlu0
        %v929 = vpop.trf.xlu0
        %v930 = vpop.trf.xlu0
        %v931 = vpop.trf.xlu0
        %933 = vset.pattern.permute.xlu0 4
        %934 = vperm.xlu0 %933, %v838
        %v935 = vpop.permute.xlu0 %934
        %938 = vset.pattern.permute.xlu0 4
        %939 = vperm.xlu0 %938, %v841
        %v940 = vpop.permute.xlu0 %939
        %943 = vset.pattern.permute.xlu0 4
        %944 = vperm.xlu0 %943, %v846
        %v945 = vpop.permute.xlu0 %944
        %948 = vset.pattern.permute.xlu0 4
        %949 = vperm.xlu0 %948, %v849
        %v950 = vpop.permute.xlu0 %949
        %953 = vset.pattern.permute.xlu0 4
        %954 = vperm.xlu0 %953, %v854
        %v955 = vpop.permute.xlu0 %954
        %958 = vset.pattern.permute.xlu0 4
        %959 = vperm.xlu0 %958, %v857
        %v960 = vpop.permute.xlu0 %959
        %963 = vset.pattern.permute.xlu0 4
        %964 = vperm.xlu0 %963, %v862
        %v965 = vpop.permute.xlu0 %964
        %968 = vset.pattern.permute.xlu0 4
        %969 = vperm.xlu0 %968, %v865
        %v970 = vpop.permute.xlu0 %969
        %973 = vset.pattern.permute.xlu0 4
        %974 = vperm.xlu0 %973, %v870
        %v975 = vpop.permute.xlu0 %974
        %978 = vset.pattern.permute.xlu0 4
        %979 = vperm.xlu0 %978, %v873
        %v980 = vpop.permute.xlu0 %979
        %983 = vset.pattern.permute.xlu0 4
        %984 = vperm.xlu0 %983, %v878
        %v985 = vpop.permute.xlu0 %984
        %988 = vset.pattern.permute.xlu0 4
        %989 = vperm.xlu0 %988, %v881
        %v990 = vpop.permute.xlu0 %989
        %993 = vset.pattern.permute.xlu0 4
        %994 = vperm.xlu0 %993, %v886
        %v995 = vpop.permute.xlu0 %994
        %998 = vset.pattern.permute.xlu0 4
        %999 = vperm.xlu0 %998, %v889
        %v1000 = vpop.permute.xlu0 %999
        %1003 = vset.pattern.permute.xlu0 4
        %1004 = vperm.xlu0 %1003, %v894
        %v1005 = vpop.permute.xlu0 %1004
        %1008 = vset.pattern.permute.xlu0 4
        %1009 = vperm.xlu0 %1008, %v897
        %v1010 = vpop.permute.xlu0 %1009
        %v1012 = vlaneseq
        %v1013 = vshrl.u32 %v1012, 7
        %v1014 = vsub.s32 0, %v1013
        %v1015 = vrot.slane %v916, %v1014
        %v1016 = vadd.f32 %v935, %v1015
        %v1017 = vadd.f32 %v940, %v1015
        %v1018 = vadd.f32 %v945, %v1015
        %v1019 = vadd.f32 %v950, %v1015
        %v1020 = vadd.f32 %v955, %v1015
        %v1021 = vadd.f32 %v960, %v1015
        %v1022 = vadd.f32 %v965, %v1015
        %v1023 = vadd.f32 %v970, %v1015
        %v1024 = vadd.f32 %v975, %v1015
        %v1025 = vadd.f32 %v980, %v1015
        %v1026 = vadd.f32 %v985, %v1015
        %v1027 = vadd.f32 %v990, %v1015
        %v1028 = vadd.f32 %v995, %v1015
        %v1029 = vadd.f32 %v1000, %v1015
        %v1030 = vadd.f32 %v1005, %v1015
        %v1031 = vadd.f32 %v1010, %v1015
        %vm1032 = vcmp.gt.f32.partialorder %v1016, 0.0
        %vm1033 = vcmp.gt.f32.partialorder %v1017, 0.0
        %vm1034 = vcmp.gt.f32.partialorder %v1018, 0.0
        %vm1035 = vcmp.gt.f32.partialorder %v1019, 0.0
        %vm1036 = vcmp.gt.f32.partialorder %v1020, 0.0
        %vm1037 = vcmp.gt.f32.partialorder %v1021, 0.0
        %vm1038 = vcmp.gt.f32.partialorder %v1022, 0.0
        %vm1039 = vcmp.gt.f32.partialorder %v1023, 0.0
        %vm1040 = vcmp.gt.f32.partialorder %v1024, 0.0
        %vm1041 = vcmp.gt.f32.partialorder %v1025, 0.0
        %vm1042 = vcmp.gt.f32.partialorder %v1026, 0.0
        %vm1043 = vcmp.gt.f32.partialorder %v1027, 0.0
        %vm1044 = vcmp.gt.f32.partialorder %v1028, 0.0
        %vm1045 = vcmp.gt.f32.partialorder %v1029, 0.0
        %vm1046 = vcmp.gt.f32.partialorder %v1030, 0.0
        %vm1047 = vcmp.gt.f32.partialorder %v1031, 0.0
        %v1048 = vmul.f32 %v1016, 0.2
        %v1049 = vmul.f32 %v1017, 0.2
        %v1050 = vmul.f32 %v1018, 0.2
        %v1051 = vmul.f32 %v1019, 0.2
        %v1052 = vmul.f32 %v1020, 0.2
        %v1053 = vmul.f32 %v1021, 0.2
        %v1054 = vmul.f32 %v1022, 0.2
        %v1055 = vmul.f32 %v1023, 0.2
        %v1056 = vmul.f32 %v1024, 0.2
        %v1057 = vmul.f32 %v1025, 0.2
        %v1058 = vmul.f32 %v1026, 0.2
        %v1059 = vmul.f32 %v1027, 0.2
        %v1060 = vmul.f32 %v1028, 0.2
        %v1061 = vmul.f32 %v1029, 0.2
        %v1062 = vmul.f32 %v1030, 0.2
        %v1063 = vmul.f32 %v1031, 0.2
        %v1064 = vsel %vm1032, %v1016, %v1048
        %v1065 = vsel %vm1033, %v1017, %v1049
        %v1066 = vsel %vm1034, %v1018, %v1050
        %v1067 = vsel %vm1035, %v1019, %v1051
        %v1068 = vsel %vm1036, %v1020, %v1052
        %v1069 = vsel %vm1037, %v1021, %v1053
        %v1070 = vsel %vm1038, %v1022, %v1054
        %v1071 = vsel %vm1039, %v1023, %v1055
        %v1072 = vsel %vm1040, %v1024, %v1056
        %v1073 = vsel %vm1041, %v1025, %v1057
        %v1074 = vsel %vm1042, %v1026, %v1058
        %v1075 = vsel %vm1043, %v1027, %v1059
        %v1076 = vsel %vm1044, %v1028, %v1060
        %v1077 = vsel %vm1045, %v1029, %v1061
        %v1078 = vsel %vm1046, %v1030, %v1062
        %v1079 = vsel %vm1047, %v1031, %v1063
        %v1080 = vadd.f32 %v1064, %v513
        %v1081 = vadd.f32 %v1065, %v514
        %v1082 = vadd.f32 %v1066, %v515
        %v1083 = vadd.f32 %v1067, %v516
        %v1084 = vadd.f32 %v1068, %v517
        %v1085 = vadd.f32 %v1069, %v518
        %v1086 = vadd.f32 %v1070, %v519
        %v1087 = vadd.f32 %v1071, %v520
        %v1088 = vadd.f32 %v1072, %v521
        %v1089 = vadd.f32 %v1073, %v522
        %v1090 = vadd.f32 %v1074, %v523
        %v1091 = vadd.f32 %v1075, %v524
        %v1092 = vadd.f32 %v1076, %v525
        %v1093 = vadd.f32 %v1077, %v526
        %v1094 = vadd.f32 %v1078, %v527
        %v1095 = vadd.f32 %v1079, %v528
        %1096 = vmax.xlane.f32.xlu0 %v1080
        %v1097 = vpop.xlane.xlu0 %1096
        %1098 = vmax.xlane.f32.xlu0 %v1081
        %v1099 = vpop.xlane.xlu0 %1098
        %1100 = vmax.xlane.f32.xlu0 %v1082
        %v1101 = vpop.xlane.xlu0 %1100
        %1102 = vmax.xlane.f32.xlu0 %v1083
        %v1103 = vpop.xlane.xlu0 %1102
        %1104 = vmax.xlane.f32.xlu0 %v1084
        %v1105 = vpop.xlane.xlu0 %1104
        %1106 = vmax.xlane.f32.xlu0 %v1085
        %v1107 = vpop.xlane.xlu0 %1106
        %1108 = vmax.xlane.f32.xlu0 %v1086
        %v1109 = vpop.xlane.xlu0 %1108
        %1110 = vmax.xlane.f32.xlu0 %v1087
        %v1111 = vpop.xlane.xlu0 %1110
        %1112 = vmax.xlane.f32.xlu0 %v1088
        %v1113 = vpop.xlane.xlu0 %1112
        %1114 = vmax.xlane.f32.xlu0 %v1089
        %v1115 = vpop.xlane.xlu0 %1114
        %1116 = vmax.xlane.f32.xlu0 %v1090
        %v1117 = vpop.xlane.xlu0 %1116
        %1118 = vmax.xlane.f32.xlu0 %v1091
        %v1119 = vpop.xlane.xlu0 %1118
        %1120 = vmax.xlane.f32.xlu0 %v1092
        %v1121 = vpop.xlane.xlu0 %1120
        %1122 = vmax.xlane.f32.xlu0 %v1093
        %v1123 = vpop.xlane.xlu0 %1122
        %1124 = vmax.xlane.f32.xlu0 %v1094
        %v1125 = vpop.xlane.xlu0 %1124
        %1126 = vmax.xlane.f32.xlu0 %v1095
        %v1127 = vpop.xlane.xlu0 %1126
        %v1128 = vsub.f32 %v1080, %v1097
        %v1129 = vsub.f32 %v1081, %v1099
        %v1130 = vsub.f32 %v1082, %v1101
        %v1131 = vsub.f32 %v1083, %v1103
        %v1132 = vsub.f32 %v1084, %v1105
        %v1133 = vsub.f32 %v1085, %v1107
        %v1134 = vsub.f32 %v1086, %v1109
        %v1135 = vsub.f32 %v1087, %v1111
        %v1136 = vsub.f32 %v1088, %v1113
        %v1137 = vsub.f32 %v1089, %v1115
        %v1138 = vsub.f32 %v1090, %v1117
        %v1139 = vsub.f32 %v1091, %v1119
        %v1140 = vsub.f32 %v1092, %v1121
        %v1141 = vsub.f32 %v1093, %v1123
        %v1142 = vsub.f32 %v1094, %v1125
        %v1143 = vsub.f32 %v1095, %v1127
        %v1144 = vmul.f32 %v1128, 1.442695
        %v1145 = vpow.pop %v1144
        %v1146 = vmul.f32 %v1129, 1.442695
        %v1147 = vpow.pop %v1146
        %v1148 = vmul.f32 %v1130, 1.442695
        %v1149 = vpow.pop %v1148
        %v1150 = vmul.f32 %v1131, 1.442695
        %v1151 = vpow.pop %v1150
        %v1152 = vmul.f32 %v1132, 1.442695
        %v1153 = vpow.pop %v1152
        %v1154 = vmul.f32 %v1133, 1.442695
        %v1155 = vpow.pop %v1154
        %v1156 = vmul.f32 %v1134, 1.442695
        %v1157 = vpow.pop %v1156
        %v1158 = vmul.f32 %v1135, 1.442695
        %v1159 = vpow.pop %v1158
        %v1160 = vmul.f32 %v1136, 1.442695
        %v1161 = vpow.pop %v1160
        %v1162 = vmul.f32 %v1137, 1.442695
        %v1163 = vpow.pop %v1162
        %v1164 = vmul.f32 %v1138, 1.442695
        %v1165 = vpow.pop %v1164
        %v1166 = vmul.f32 %v1139, 1.442695
        %v1167 = vpow.pop %v1166
        %v1168 = vmul.f32 %v1140, 1.442695
        %v1169 = vpow.pop %v1168
        %v1170 = vmul.f32 %v1141, 1.442695
        %v1171 = vpow.pop %v1170
        %v1172 = vmul.f32 %v1142, 1.442695
        %v1173 = vpow.pop %v1172
        %v1174 = vmul.f32 %v1143, 1.442695
        %v1175 = vpow.pop %v1174
        %v1176 = vsel %vm529, %v1145, 0.0
        %v1177 = vsel %vm530, %v1147, 0.0
        %v1178 = vsel %vm531, %v1149, 0.0
        %v1179 = vsel %vm532, %v1151, 0.0
        %v1180 = vsel %vm533, %v1153, 0.0
        %v1181 = vsel %vm534, %v1155, 0.0
        %v1182 = vsel %vm535, %v1157, 0.0
        %v1183 = vsel %vm536, %v1159, 0.0
        %v1184 = vsel %vm537, %v1161, 0.0
        %v1185 = vsel %vm538, %v1163, 0.0
        %v1186 = vsel %vm539, %v1165, 0.0
        %v1187 = vsel %vm540, %v1167, 0.0
        %v1188 = vsel %vm541, %v1169, 0.0
        %v1189 = vsel %vm542, %v1171, 0.0
        %v1190 = vsel %vm543, %v1173, 0.0
        %v1191 = vsel %vm544, %v1175, 0.0
        %1192 = vadd.xlane.f32.xlu0 %v1176
        %v1193 = vpop.xlane.xlu0 %1192
        %1194 = vadd.xlane.f32.xlu0 %v1177
        %v1195 = vpop.xlane.xlu0 %1194
        %1196 = vadd.xlane.f32.xlu0 %v1178
        %v1197 = vpop.xlane.xlu0 %1196
        %1198 = vadd.xlane.f32.xlu0 %v1179
        %v1199 = vpop.xlane.xlu0 %1198
        %1200 = vadd.xlane.f32.xlu0 %v1180
        %v1201 = vpop.xlane.xlu0 %1200
        %1202 = vadd.xlane.f32.xlu0 %v1181
        %v1203 = vpop.xlane.xlu0 %1202
        %1204 = vadd.xlane.f32.xlu0 %v1182
        %v1205 = vpop.xlane.xlu0 %1204
        %1206 = vadd.xlane.f32.xlu0 %v1183
        %v1207 = vpop.xlane.xlu0 %1206
        %1208 = vadd.xlane.f32.xlu0 %v1184
        %v1209 = vpop.xlane.xlu0 %1208
        %1210 = vadd.xlane.f32.xlu0 %v1185
        %v1211 = vpop.xlane.xlu0 %1210
        %1212 = vadd.xlane.f32.xlu0 %v1186
        %v1213 = vpop.xlane.xlu0 %1212
        %1214 = vadd.xlane.f32.xlu0 %v1187
        %v1215 = vpop.xlane.xlu0 %1214
        %1216 = vadd.xlane.f32.xlu0 %v1188
        %v1217 = vpop.xlane.xlu0 %1216
        %1218 = vadd.xlane.f32.xlu0 %v1189
        %v1219 = vpop.xlane.xlu0 %1218
        %1220 = vadd.xlane.f32.xlu0 %v1190
        %v1221 = vpop.xlane.xlu0 %1220
        %1222 = vadd.xlane.f32.xlu0 %v1191
        %v1223 = vpop.xlane.xlu0 %1222
        %vm1224 = vcmp.eq.f32.partialorder %v1193, 0.0
        %vm1225 = vcmp.eq.f32.partialorder %v1195, 0.0
        %vm1226 = vcmp.eq.f32.partialorder %v1197, 0.0
        %vm1227 = vcmp.eq.f32.partialorder %v1199, 0.0
        %vm1228 = vcmp.eq.f32.partialorder %v1201, 0.0
        %vm1229 = vcmp.eq.f32.partialorder %v1203, 0.0
        %vm1230 = vcmp.eq.f32.partialorder %v1205, 0.0
        %vm1231 = vcmp.eq.f32.partialorder %v1207, 0.0
        %vm1232 = vcmp.eq.f32.partialorder %v1209, 0.0
        %vm1233 = vcmp.eq.f32.partialorder %v1211, 0.0
        %vm1234 = vcmp.eq.f32.partialorder %v1213, 0.0
        %vm1235 = vcmp.eq.f32.partialorder %v1215, 0.0
        %vm1236 = vcmp.eq.f32.partialorder %v1217, 0.0
        %vm1237 = vcmp.eq.f32.partialorder %v1219, 0.0
        %vm1238 = vcmp.eq.f32.partialorder %v1221, 0.0
        %vm1239 = vcmp.eq.f32.partialorder %v1223, 0.0
        %v1240 = vsel %vm1224, 1.0, %v1193
        %v1241 = vsel %vm1225, 1.0, %v1195
        %v1242 = vsel %vm1226, 1.0, %v1197
        %v1243 = vsel %vm1227, 1.0, %v1199
        %v1244 = vsel %vm1228, 1.0, %v1201
        %v1245 = vsel %vm1229, 1.0, %v1203
        %v1246 = vsel %vm1230, 1.0, %v1205
        %v1247 = vsel %vm1231, 1.0, %v1207
        %v1248 = vsel %vm1232, 1.0, %v1209
        %v1249 = vsel %vm1233, 1.0, %v1211
        %v1250 = vsel %vm1234, 1.0, %v1213
        %v1251 = vsel %vm1235, 1.0, %v1215
        %v1252 = vsel %vm1236, 1.0, %v1217
        %v1253 = vsel %vm1237, 1.0, %v1219
        %v1254 = vsel %vm1238, 1.0, %v1221
        %v1255 = vsel %vm1239, 1.0, %v1223
        %v1256 = vrcp.pop %v1240
        %v1257 = vrcp.pop %v1241
        %v1258 = vrcp.pop %v1242
        %v1259 = vrcp.pop %v1243
        %v1260 = vrcp.pop %v1244
        %v1261 = vrcp.pop %v1245
        %v1262 = vrcp.pop %v1246
        %v1263 = vrcp.pop %v1247
        %v1264 = vrcp.pop %v1248
        %v1265 = vrcp.pop %v1249
        %v1266 = vrcp.pop %v1250
        %v1267 = vrcp.pop %v1251
        %v1268 = vrcp.pop %v1252
        %v1269 = vrcp.pop %v1253
        %v1270 = vrcp.pop %v1254
        %v1271 = vrcp.pop %v1255
        %v1272 = vmul.f32 %v1176, %v1256
        %v1273 = vmul.f32 %v1177, %v1257
        %v1274 = vmul.f32 %v1178, %v1258
        %v1275 = vmul.f32 %v1179, %v1259
        %v1276 = vmul.f32 %v1180, %v1260
        %v1277 = vmul.f32 %v1181, %v1261
        %v1278 = vmul.f32 %v1182, %v1262
        %v1279 = vmul.f32 %v1183, %v1263
        %v1280 = vmul.f32 %v1184, %v1264
        %v1281 = vmul.f32 %v1185, %v1265
        %v1282 = vmul.f32 %v1186, %v1266
        %v1283 = vmul.f32 %v1187, %v1267
        %v1284 = vmul.f32 %v1188, %v1268
        %v1285 = vmul.f32 %v1189, %v1269
        %v1286 = vmul.f32 %v1190, %v1270
        %v1287 = vmul.f32 %v1191, %v1271
        %v1288 = vpack.c.bf16 %v1273, %v1272
        %v1289 = vpack.c.bf16 %v1275, %v1274
        %v1290 = vpack.c.bf16 %v1277, %v1276
        %v1291 = vpack.c.bf16 %v1279, %v1278
        %v1292 = vpack.c.bf16 %v1281, %v1280
        %v1293 = vpack.c.bf16 %v1283, %v1282
        %v1294 = vpack.c.bf16 %v1285, %v1284
        %v1295 = vpack.c.bf16 %v1287, %v1286
        %1296 = vmatprep.subr.bf16.mxu0 0
        %1297 = vmatpush1.bf16.msra.mxu0 %v731
        %1298 = vmatprep.subr.bf16.mxu0 0
        %1299 = vmatpush1.bf16.msra.mxu0 %v732
        %1300 = vmatprep.subr.bf16.mxu0 0
        %1301 = vmatpush1.bf16.msra.mxu0 %v733
        %1302 = vmatprep.subr.bf16.mxu0 0
        %1303 = vmatpush1.bf16.msra.mxu0 %v734
        %1304 = vmatprep.subr.bf16.mxu0 0
        %1305 = vmatpush1.bf16.msra.mxu0 %v735
        %1306 = vmatprep.subr.bf16.mxu0 0
        %1307 = vmatpush1.bf16.msra.mxu0 %v736
        %1308 = vmatprep.subr.bf16.mxu0 0
        %1309 = vmatpush1.bf16.msra.mxu0 %v737
        %1310 = vmatprep.subr.bf16.mxu0 0
        %1311 = vmatpush1.bf16.msra.mxu0 %v738
        %1312 = vmatprep.subr.bf16.mxu0 0
        %1313 = vmatpush1.bf16.msra.mxu0 0
        %1314 = vmatprep.subr.bf16.mxu0 0
        %1315 = vmatpush1.bf16.msra.mxu0 0
        %1316 = vmatprep.subr.bf16.mxu0 0
        %1317 = vmatpush1.bf16.msra.mxu0 0
        %1318 = vmatprep.subr.bf16.mxu0 0
        %1319 = vmatpush1.bf16.msra.mxu0 0
        %1320 = vmatprep.subr.bf16.mxu0 0
        %1321 = vmatpush1.bf16.msra.mxu0 0
        %1322 = vmatprep.subr.bf16.mxu0 0
        %1323 = vmatpush1.bf16.msra.mxu0 0
        %1324 = vmatprep.subr.bf16.mxu0 0
        %1325 = vmatpush1.bf16.msra.mxu0 0
        %1326 = vmatprep.subr.bf16.mxu0 0
        %1327 = vmatpush1.bf16.msra.mxu0 0
        %1328 = vmatprep.mubr.bf16.mxu0 0
        %1329 = vmatmul.mubr.bf16.gmra.mrb[0].mxu0 %v1288
        %v1330 = vpop.f32.mrb[0].mxu0
        %v1331 = vadd.f32 0.0, %v1330
        %v1332 = vpop.f32.mrb[0].mxu0
        %v1333 = vpop.f32.mrb[0].mxu0
        %v1334 = vadd.f32 0.0, %v1333
        %v1335 = vpop.f32.mrb[0].mxu0
        %1336 = vmatprep.mubr.bf16.mxu0 0
        %1337 = vmatmul.mubr.bf16.gmra.mrb[0].mxu0 %v1289
        %v1338 = vpop.f32.mrb[0].mxu0
        %v1339 = vadd.f32 0.0, %v1338
        %v1340 = vpop.f32.mrb[0].mxu0
        %v1341 = vpop.f32.mrb[0].mxu0
        %v1342 = vadd.f32 0.0, %v1341
        %v1343 = vpop.f32.mrb[0].mxu0
        %1344 = vmatprep.mubr.bf16.mxu0 0
        %1345 = vmatmul.mubr.bf16.gmra.mrb[0].mxu0 %v1290
        %v1346 = vpop.f32.mrb[0].mxu0
        %v1347 = vadd.f32 0.0, %v1346
        %v1348 = vpop.f32.mrb[0].mxu0
        %v1349 = vpop.f32.mrb[0].mxu0
        %v1350 = vadd.f32 0.0, %v1349
        %v1351 = vpop.f32.mrb[0].mxu0
        %1352 = vmatprep.mubr.bf16.mxu0 0
        %1353 = vmatmul.mubr.bf16.gmra.mrb[0].mxu0 %v1291
        %v1354 = vpop.f32.mrb[0].mxu0
        %v1355 = vadd.f32 0.0, %v1354
        %v1356 = vpop.f32.mrb[0].mxu0
        %v1357 = vpop.f32.mrb[0].mxu0
        %v1358 = vadd.f32 0.0, %v1357
        %v1359 = vpop.f32.mrb[0].mxu0
        %1360 = vmatprep.mubr.bf16.mxu0 0
        %1361 = vmatmul.mubr.bf16.gmra.mrb[0].mxu0 %v1292
        %v1362 = vpop.f32.mrb[0].mxu0
        %v1363 = vadd.f32 0.0, %v1362
        %v1364 = vpop.f32.mrb[0].mxu0
        %v1365 = vpop.f32.mrb[0].mxu0
        %v1366 = vadd.f32 0.0, %v1365
        %v1367 = vpop.f32.mrb[0].mxu0
        %1368 = vmatprep.mubr.bf16.mxu0 0
        %1369 = vmatmul.mubr.bf16.gmra.mrb[0].mxu0 %v1293
        %v1370 = vpop.f32.mrb[0].mxu0
        %v1371 = vadd.f32 0.0, %v1370
        %v1372 = vpop.f32.mrb[0].mxu0
        %v1373 = vpop.f32.mrb[0].mxu0
        %v1374 = vadd.f32 0.0, %v1373
        %v1375 = vpop.f32.mrb[0].mxu0
        %1376 = vmatprep.mubr.bf16.mxu0 0
        %1377 = vmatmul.mubr.bf16.gmra.mrb[0].mxu0 %v1294
        %v1378 = vpop.f32.mrb[0].mxu0
        %v1379 = vadd.f32 0.0, %v1378
        %v1380 = vpop.f32.mrb[0].mxu0
        %v1381 = vpop.f32.mrb[0].mxu0
        %v1382 = vadd.f32 0.0, %v1381
        %v1383 = vpop.f32.mrb[0].mxu0
        %1384 = vmatprep.mubr.bf16.mxu0 0
        %1385 = vmatmul.mubr.bf16.gmra.mrb[0].mxu0 %v1295
        %v1386 = vpop.f32.mrb[0].mxu0
        %v1387 = vadd.f32 0.0, %v1386
        %v1388 = vpop.f32.mrb[0].mxu0
        %v1389 = vpop.f32.mrb[0].mxu0
        %v1390 = vadd.f32 0.0, %v1389
        %v1391 = vpop.f32.mrb[0].mxu0
        %1392 = vdwg.mxu0
        %vm1393 = vcmp.gt.f32.partialorder %v1331, 0.0
        %vm1394 = vcmp.gt.f32.partialorder %v1334, 0.0
        %vm1395 = vcmp.gt.f32.partialorder %v1339, 0.0
        %vm1396 = vcmp.gt.f32.partialorder %v1342, 0.0
        %vm1397 = vcmp.gt.f32.partialorder %v1347, 0.0
        %vm1398 = vcmp.gt.f32.partialorder %v1350, 0.0
        %vm1399 = vcmp.gt.f32.partialorder %v1355, 0.0
        %vm1400 = vcmp.gt.f32.partialorder %v1358, 0.0
        %vm1401 = vcmp.gt.f32.partialorder %v1363, 0.0
        %vm1402 = vcmp.gt.f32.partialorder %v1366, 0.0
        %vm1403 = vcmp.gt.f32.partialorder %v1371, 0.0
        %vm1404 = vcmp.gt.f32.partialorder %v1374, 0.0
        %vm1405 = vcmp.gt.f32.partialorder %v1379, 0.0
        %vm1406 = vcmp.gt.f32.partialorder %v1382, 0.0
        %vm1407 = vcmp.gt.f32.partialorder %v1387, 0.0
        %vm1408 = vcmp.gt.f32.partialorder %v1390, 0.0
        %v1409 = vmin.f32 %v1331, 0.0
        %v1410 = vmin.f32 %v1334, 0.0
        %v1411 = vmin.f32 %v1339, 0.0
        %v1412 = vmin.f32 %v1342, 0.0
        %v1413 = vmin.f32 %v1347, 0.0
        %v1414 = vmin.f32 %v1350, 0.0
        %v1415 = vmin.f32 %v1355, 0.0
        %v1416 = vmin.f32 %v1358, 0.0
        %v1417 = vmin.f32 %v1363, 0.0
        %v1418 = vmin.f32 %v1366, 0.0
        %v1419 = vmin.f32 %v1371, 0.0
        %v1420 = vmin.f32 %v1374, 0.0
        %v1421 = vmin.f32 %v1379, 0.0
        %v1422 = vmin.f32 %v1382, 0.0
        %v1423 = vmin.f32 %v1387, 0.0
        %v1424 = vmin.f32 %v1390, 0.0
        %v1425 = vmul.f32 %v1409, 1.442695
        %v1426 = vpow.pop %v1425
        %v1427 = vmul.f32 %v1410, 1.442695
        %v1428 = vpow.pop %v1427
        %v1429 = vmul.f32 %v1411, 1.442695
        %v1430 = vpow.pop %v1429
        %v1431 = vmul.f32 %v1412, 1.442695
        %v1432 = vpow.pop %v1431
        %v1433 = vmul.f32 %v1413, 1.442695
        %v1434 = vpow.pop %v1433
        %v1435 = vmul.f32 %v1414, 1.442695
        %v1436 = vpow.pop %v1435
        %v1437 = vmul.f32 %v1415, 1.442695
        %v1438 = vpow.pop %v1437
        %v1439 = vmul.f32 %v1416, 1.442695
        %v1440 = vpow.pop %v1439
        %v1441 = vmul.f32 %v1417, 1.442695
        %v1442 = vpow.pop %v1441
        %v1443 = vmul.f32 %v1418, 1.442695
        %v1444 = vpow.pop %v1443
        %v1445 = vmul.f32 %v1419, 1.442695
        %v1446 = vpow.pop %v1445
        %v1447 = vmul.f32 %v1420, 1.442695
        %v1448 = vpow.pop %v1447
        %v1449 = vmul.f32 %v1421, 1.442695
        %v1450 = vpow.pop %v1449
        %v1451 = vmul.f32 %v1422, 1.442695
        %v1452 = vpow.pop %v1451
        %v1453 = vmul.f32 %v1423, 1.442695
        %v1454 = vpow.pop %v1453
        %v1455 = vmul.f32 %v1424, 1.442695
        %v1456 = vpow.pop %v1455
        %v1457 = vsub.f32 %v1426, 1.0
        %v1458 = vsub.f32 %v1428, 1.0
        %v1459 = vsub.f32 %v1430, 1.0
        %v1460 = vsub.f32 %v1432, 1.0
        %v1461 = vsub.f32 %v1434, 1.0
        %v1462 = vsub.f32 %v1436, 1.0
        %v1463 = vsub.f32 %v1438, 1.0
        %v1464 = vsub.f32 %v1440, 1.0
        %v1465 = vsub.f32 %v1442, 1.0
        %v1466 = vsub.f32 %v1444, 1.0
        %v1467 = vsub.f32 %v1446, 1.0
        %v1468 = vsub.f32 %v1448, 1.0
        %v1469 = vsub.f32 %v1450, 1.0
        %v1470 = vsub.f32 %v1452, 1.0
        %v1471 = vsub.f32 %v1454, 1.0
        %v1472 = vsub.f32 %v1456, 1.0
        %v1473 = vsel %vm1393, %v1331, %v1457
        %v1474 = vsel %vm1394, %v1334, %v1458
        %v1475 = vsel %vm1395, %v1339, %v1459
        %v1476 = vsel %vm1396, %v1342, %v1460
        %v1477 = vsel %vm1397, %v1347, %v1461
        %v1478 = vsel %vm1398, %v1350, %v1462
        %v1479 = vsel %vm1399, %v1355, %v1463
        %v1480 = vsel %vm1400, %v1358, %v1464
        %v1481 = vsel %vm1401, %v1363, %v1465
        %v1482 = vsel %vm1402, %v1366, %v1466
        %v1483 = vsel %vm1403, %v1371, %v1467
        %v1484 = vsel %vm1404, %v1374, %v1468
        %v1485 = vsel %vm1405, %v1379, %v1469
        %v1486 = vsel %vm1406, %v1382, %v1470
        %v1487 = vsel %vm1407, %v1387, %v1471
        %v1488 = vsel %vm1408, %v1390, %v1472
        %1489 = vset.pattern.permute.xlu0 5
        %1490 = vperm.xlu0 %1489, %v838
        %v1491 = vpop.permute.xlu0 %1490
        %1493 = vset.pattern.permute.xlu0 5
        %1494 = vperm.xlu0 %1493, %v841
        %v1495 = vpop.permute.xlu0 %1494
        %1497 = vset.pattern.permute.xlu0 5
        %1498 = vperm.xlu0 %1497, %v846
        %v1499 = vpop.permute.xlu0 %1498
        %1501 = vset.pattern.permute.xlu0 5
        %1502 = vperm.xlu0 %1501, %v849
        %v1503 = vpop.permute.xlu0 %1502
        %1505 = vset.pattern.permute.xlu0 5
        %1506 = vperm.xlu0 %1505, %v854
        %v1507 = vpop.permute.xlu0 %1506
        %1509 = vset.pattern.permute.xlu0 5
        %1510 = vperm.xlu0 %1509, %v857
        %v1511 = vpop.permute.xlu0 %1510
        %1513 = vset.pattern.permute.xlu0 5
        %1514 = vperm.xlu0 %1513, %v862
        %v1515 = vpop.permute.xlu0 %1514
        %1517 = vset.pattern.permute.xlu0 5
        %1518 = vperm.xlu0 %1517, %v865
        %v1519 = vpop.permute.xlu0 %1518
        %1521 = vset.pattern.permute.xlu0 5
        %1522 = vperm.xlu0 %1521, %v870
        %v1523 = vpop.permute.xlu0 %1522
        %1525 = vset.pattern.permute.xlu0 5
        %1526 = vperm.xlu0 %1525, %v873
        %v1527 = vpop.permute.xlu0 %1526
        %1529 = vset.pattern.permute.xlu0 5
        %1530 = vperm.xlu0 %1529, %v878
        %v1531 = vpop.permute.xlu0 %1530
        %1533 = vset.pattern.permute.xlu0 5
        %1534 = vperm.xlu0 %1533, %v881
        %v1535 = vpop.permute.xlu0 %1534
        %1537 = vset.pattern.permute.xlu0 5
        %1538 = vperm.xlu0 %1537, %v886
        %v1539 = vpop.permute.xlu0 %1538
        %1541 = vset.pattern.permute.xlu0 5
        %1542 = vperm.xlu0 %1541, %v889
        %v1543 = vpop.permute.xlu0 %1542
        %1545 = vset.pattern.permute.xlu0 5
        %1546 = vperm.xlu0 %1545, %v894
        %v1547 = vpop.permute.xlu0 %1546
        %1549 = vset.pattern.permute.xlu0 5
        %1550 = vperm.xlu0 %1549, %v897
        %v1551 = vpop.permute.xlu0 %1550
        %v1553 = vlaneseq
        %v1554 = vshrl.u32 %v1553, 7
        %v1555 = vsub.s32 1, %v1554
        %v1556 = vrot.slane %v916, %v1555
        %v1557 = vadd.f32 %v1491, %v1556
        %v1558 = vadd.f32 %v1495, %v1556
        %v1559 = vadd.f32 %v1499, %v1556
        %v1560 = vadd.f32 %v1503, %v1556
        %v1561 = vadd.f32 %v1507, %v1556
        %v1562 = vadd.f32 %v1511, %v1556
        %v1563 = vadd.f32 %v1515, %v1556
        %v1564 = vadd.f32 %v1519, %v1556
        %v1565 = vadd.f32 %v1523, %v1556
        %v1566 = vadd.f32 %v1527, %v1556
        %v1567 = vadd.f32 %v1531, %v1556
        %v1568 = vadd.f32 %v1535, %v1556
        %v1569 = vadd.f32 %v1539, %v1556
        %v1570 = vadd.f32 %v1543, %v1556
        %v1571 = vadd.f32 %v1547, %v1556
        %v1572 = vadd.f32 %v1551, %v1556
        %vm1573 = vcmp.gt.f32.partialorder %v1557, 0.0
        %vm1574 = vcmp.gt.f32.partialorder %v1558, 0.0
        %vm1575 = vcmp.gt.f32.partialorder %v1559, 0.0
        %vm1576 = vcmp.gt.f32.partialorder %v1560, 0.0
        %vm1577 = vcmp.gt.f32.partialorder %v1561, 0.0
        %vm1578 = vcmp.gt.f32.partialorder %v1562, 0.0
        %vm1579 = vcmp.gt.f32.partialorder %v1563, 0.0
        %vm1580 = vcmp.gt.f32.partialorder %v1564, 0.0
        %vm1581 = vcmp.gt.f32.partialorder %v1565, 0.0
        %vm1582 = vcmp.gt.f32.partialorder %v1566, 0.0
        %vm1583 = vcmp.gt.f32.partialorder %v1567, 0.0
        %vm1584 = vcmp.gt.f32.partialorder %v1568, 0.0
        %vm1585 = vcmp.gt.f32.partialorder %v1569, 0.0
        %vm1586 = vcmp.gt.f32.partialorder %v1570, 0.0
        %vm1587 = vcmp.gt.f32.partialorder %v1571, 0.0
        %vm1588 = vcmp.gt.f32.partialorder %v1572, 0.0
        %v1589 = vmul.f32 %v1557, 0.2
        %v1590 = vmul.f32 %v1558, 0.2
        %v1591 = vmul.f32 %v1559, 0.2
        %v1592 = vmul.f32 %v1560, 0.2
        %v1593 = vmul.f32 %v1561, 0.2
        %v1594 = vmul.f32 %v1562, 0.2
        %v1595 = vmul.f32 %v1563, 0.2
        %v1596 = vmul.f32 %v1564, 0.2
        %v1597 = vmul.f32 %v1565, 0.2
        %v1598 = vmul.f32 %v1566, 0.2
        %v1599 = vmul.f32 %v1567, 0.2
        %v1600 = vmul.f32 %v1568, 0.2
        %v1601 = vmul.f32 %v1569, 0.2
        %v1602 = vmul.f32 %v1570, 0.2
        %v1603 = vmul.f32 %v1571, 0.2
        %v1604 = vmul.f32 %v1572, 0.2
        %v1605 = vsel %vm1573, %v1557, %v1589
        %v1606 = vsel %vm1574, %v1558, %v1590
        %v1607 = vsel %vm1575, %v1559, %v1591
        %v1608 = vsel %vm1576, %v1560, %v1592
        %v1609 = vsel %vm1577, %v1561, %v1593
        %v1610 = vsel %vm1578, %v1562, %v1594
        %v1611 = vsel %vm1579, %v1563, %v1595
        %v1612 = vsel %vm1580, %v1564, %v1596
        %v1613 = vsel %vm1581, %v1565, %v1597
        %v1614 = vsel %vm1582, %v1566, %v1598
        %v1615 = vsel %vm1583, %v1567, %v1599
        %v1616 = vsel %vm1584, %v1568, %v1600
        %v1617 = vsel %vm1585, %v1569, %v1601
        %v1618 = vsel %vm1586, %v1570, %v1602
        %v1619 = vsel %vm1587, %v1571, %v1603
        %v1620 = vsel %vm1588, %v1572, %v1604
        %v1621 = vadd.f32 %v1605, %v513
        %v1622 = vadd.f32 %v1606, %v514
        %v1623 = vadd.f32 %v1607, %v515
        %v1624 = vadd.f32 %v1608, %v516
        %v1625 = vadd.f32 %v1609, %v517
        %v1626 = vadd.f32 %v1610, %v518
        %v1627 = vadd.f32 %v1611, %v519
        %v1628 = vadd.f32 %v1612, %v520
        %v1629 = vadd.f32 %v1613, %v521
        %v1630 = vadd.f32 %v1614, %v522
        %v1631 = vadd.f32 %v1615, %v523
        %v1632 = vadd.f32 %v1616, %v524
        %v1633 = vadd.f32 %v1617, %v525
        %v1634 = vadd.f32 %v1618, %v526
        %v1635 = vadd.f32 %v1619, %v527
        %v1636 = vadd.f32 %v1620, %v528
        %1637 = vmax.xlane.f32.xlu0 %v1621
        %v1638 = vpop.xlane.xlu0 %1637
        %1639 = vmax.xlane.f32.xlu0 %v1622
        %v1640 = vpop.xlane.xlu0 %1639
        %1641 = vmax.xlane.f32.xlu0 %v1623
        %v1642 = vpop.xlane.xlu0 %1641
        %1643 = vmax.xlane.f32.xlu0 %v1624
        %v1644 = vpop.xlane.xlu0 %1643
        %1645 = vmax.xlane.f32.xlu0 %v1625
        %v1646 = vpop.xlane.xlu0 %1645
        %1647 = vmax.xlane.f32.xlu0 %v1626
        %v1648 = vpop.xlane.xlu0 %1647
        %1649 = vmax.xlane.f32.xlu0 %v1627
        %v1650 = vpop.xlane.xlu0 %1649
        %1651 = vmax.xlane.f32.xlu0 %v1628
        %v1652 = vpop.xlane.xlu0 %1651
        %1653 = vmax.xlane.f32.xlu0 %v1629
        %v1654 = vpop.xlane.xlu0 %1653
        %1655 = vmax.xlane.f32.xlu0 %v1630
        %v1656 = vpop.xlane.xlu0 %1655
        %1657 = vmax.xlane.f32.xlu0 %v1631
        %v1658 = vpop.xlane.xlu0 %1657
        %1659 = vmax.xlane.f32.xlu0 %v1632
        %v1660 = vpop.xlane.xlu0 %1659
        %1661 = vmax.xlane.f32.xlu0 %v1633
        %v1662 = vpop.xlane.xlu0 %1661
        %1663 = vmax.xlane.f32.xlu0 %v1634
        %v1664 = vpop.xlane.xlu0 %1663
        %1665 = vmax.xlane.f32.xlu0 %v1635
        %v1666 = vpop.xlane.xlu0 %1665
        %1667 = vmax.xlane.f32.xlu0 %v1636
        %v1668 = vpop.xlane.xlu0 %1667
        %v1669 = vsub.f32 %v1621, %v1638
        %v1670 = vsub.f32 %v1622, %v1640
        %v1671 = vsub.f32 %v1623, %v1642
        %v1672 = vsub.f32 %v1624, %v1644
        %v1673 = vsub.f32 %v1625, %v1646
        %v1674 = vsub.f32 %v1626, %v1648
        %v1675 = vsub.f32 %v1627, %v1650
        %v1676 = vsub.f32 %v1628, %v1652
        %v1677 = vsub.f32 %v1629, %v1654
        %v1678 = vsub.f32 %v1630, %v1656
        %v1679 = vsub.f32 %v1631, %v1658
        %v1680 = vsub.f32 %v1632, %v1660
        %v1681 = vsub.f32 %v1633, %v1662
        %v1682 = vsub.f32 %v1634, %v1664
        %v1683 = vsub.f32 %v1635, %v1666
        %v1684 = vsub.f32 %v1636, %v1668
        %v1685 = vmul.f32 %v1669, 1.442695
        %v1686 = vpow.pop %v1685
        %v1687 = vmul.f32 %v1670, 1.442695
        %v1688 = vpow.pop %v1687
        %v1689 = vmul.f32 %v1671, 1.442695
        %v1690 = vpow.pop %v1689
        %v1691 = vmul.f32 %v1672, 1.442695
        %v1692 = vpow.pop %v1691
        %v1693 = vmul.f32 %v1673, 1.442695
        %v1694 = vpow.pop %v1693
        %v1695 = vmul.f32 %v1674, 1.442695
        %v1696 = vpow.pop %v1695
        %v1697 = vmul.f32 %v1675, 1.442695
        %v1698 = vpow.pop %v1697
        %v1699 = vmul.f32 %v1676, 1.442695
        %v1700 = vpow.pop %v1699
        %v1701 = vmul.f32 %v1677, 1.442695
        %v1702 = vpow.pop %v1701
        %v1703 = vmul.f32 %v1678, 1.442695
        %v1704 = vpow.pop %v1703
        %v1705 = vmul.f32 %v1679, 1.442695
        %v1706 = vpow.pop %v1705
        %v1707 = vmul.f32 %v1680, 1.442695
        %v1708 = vpow.pop %v1707
        %v1709 = vmul.f32 %v1681, 1.442695
        %v1710 = vpow.pop %v1709
        %v1711 = vmul.f32 %v1682, 1.442695
        %v1712 = vpow.pop %v1711
        %v1713 = vmul.f32 %v1683, 1.442695
        %v1714 = vpow.pop %v1713
        %v1715 = vmul.f32 %v1684, 1.442695
        %v1716 = vpow.pop %v1715
        %v1717 = vsel %vm529, %v1686, 0.0
        %v1718 = vsel %vm530, %v1688, 0.0
        %v1719 = vsel %vm531, %v1690, 0.0
        %v1720 = vsel %vm532, %v1692, 0.0
        %v1721 = vsel %vm533, %v1694, 0.0
        %v1722 = vsel %vm534, %v1696, 0.0
        %v1723 = vsel %vm535, %v1698, 0.0
        %v1724 = vsel %vm536, %v1700, 0.0
        %v1725 = vsel %vm537, %v1702, 0.0
        %v1726 = vsel %vm538, %v1704, 0.0
        %v1727 = vsel %vm539, %v1706, 0.0
        %v1728 = vsel %vm540, %v1708, 0.0
        %v1729 = vsel %vm541, %v1710, 0.0
        %v1730 = vsel %vm542, %v1712, 0.0
        %v1731 = vsel %vm543, %v1714, 0.0
        %v1732 = vsel %vm544, %v1716, 0.0
        %1733 = vadd.xlane.f32.xlu0 %v1717
        %v1734 = vpop.xlane.xlu0 %1733
        %1735 = vadd.xlane.f32.xlu0 %v1718
        %v1736 = vpop.xlane.xlu0 %1735
        %1737 = vadd.xlane.f32.xlu0 %v1719
        %v1738 = vpop.xlane.xlu0 %1737
        %1739 = vadd.xlane.f32.xlu0 %v1720
        %v1740 = vpop.xlane.xlu0 %1739
        %1741 = vadd.xlane.f32.xlu0 %v1721
        %v1742 = vpop.xlane.xlu0 %1741
        %1743 = vadd.xlane.f32.xlu0 %v1722
        %v1744 = vpop.xlane.xlu0 %1743
        %1745 = vadd.xlane.f32.xlu0 %v1723
        %v1746 = vpop.xlane.xlu0 %1745
        %1747 = vadd.xlane.f32.xlu0 %v1724
        %v1748 = vpop.xlane.xlu0 %1747
        %1749 = vadd.xlane.f32.xlu0 %v1725
        %v1750 = vpop.xlane.xlu0 %1749
        %1751 = vadd.xlane.f32.xlu0 %v1726
        %v1752 = vpop.xlane.xlu0 %1751
        %1753 = vadd.xlane.f32.xlu0 %v1727
        %v1754 = vpop.xlane.xlu0 %1753
        %1755 = vadd.xlane.f32.xlu0 %v1728
        %v1756 = vpop.xlane.xlu0 %1755
        %1757 = vadd.xlane.f32.xlu0 %v1729
        %v1758 = vpop.xlane.xlu0 %1757
        %1759 = vadd.xlane.f32.xlu0 %v1730
        %v1760 = vpop.xlane.xlu0 %1759
        %1761 = vadd.xlane.f32.xlu0 %v1731
        %v1762 = vpop.xlane.xlu0 %1761
        %1763 = vadd.xlane.f32.xlu0 %v1732
        %v1764 = vpop.xlane.xlu0 %1763
        %vm1765 = vcmp.eq.f32.partialorder %v1734, 0.0
        %vm1766 = vcmp.eq.f32.partialorder %v1736, 0.0
        %vm1767 = vcmp.eq.f32.partialorder %v1738, 0.0
        %vm1768 = vcmp.eq.f32.partialorder %v1740, 0.0
        %vm1769 = vcmp.eq.f32.partialorder %v1742, 0.0
        %vm1770 = vcmp.eq.f32.partialorder %v1744, 0.0
        %vm1771 = vcmp.eq.f32.partialorder %v1746, 0.0
        %vm1772 = vcmp.eq.f32.partialorder %v1748, 0.0
        %vm1773 = vcmp.eq.f32.partialorder %v1750, 0.0
        %vm1774 = vcmp.eq.f32.partialorder %v1752, 0.0
        %vm1775 = vcmp.eq.f32.partialorder %v1754, 0.0
        %vm1776 = vcmp.eq.f32.partialorder %v1756, 0.0
        %vm1777 = vcmp.eq.f32.partialorder %v1758, 0.0
        %vm1778 = vcmp.eq.f32.partialorder %v1760, 0.0
        %vm1779 = vcmp.eq.f32.partialorder %v1762, 0.0
        %vm1780 = vcmp.eq.f32.partialorder %v1764, 0.0
        %v1781 = vsel %vm1765, 1.0, %v1734
        %v1782 = vsel %vm1766, 1.0, %v1736
        %v1783 = vsel %vm1767, 1.0, %v1738
        %v1784 = vsel %vm1768, 1.0, %v1740
        %v1785 = vsel %vm1769, 1.0, %v1742
        %v1786 = vsel %vm1770, 1.0, %v1744
        %v1787 = vsel %vm1771, 1.0, %v1746
        %v1788 = vsel %vm1772, 1.0, %v1748
        %v1789 = vsel %vm1773, 1.0, %v1750
        %v1790 = vsel %vm1774, 1.0, %v1752
        %v1791 = vsel %vm1775, 1.0, %v1754
        %v1792 = vsel %vm1776, 1.0, %v1756
        %v1793 = vsel %vm1777, 1.0, %v1758
        %v1794 = vsel %vm1778, 1.0, %v1760
        %v1795 = vsel %vm1779, 1.0, %v1762
        %v1796 = vsel %vm1780, 1.0, %v1764
        %v1797 = vrcp.pop %v1781
        %v1798 = vrcp.pop %v1782
        %v1799 = vrcp.pop %v1783
        %v1800 = vrcp.pop %v1784
        %v1801 = vrcp.pop %v1785
        %v1802 = vrcp.pop %v1786
        %v1803 = vrcp.pop %v1787
        %v1804 = vrcp.pop %v1788
        %v1805 = vrcp.pop %v1789
        %v1806 = vrcp.pop %v1790
        %v1807 = vrcp.pop %v1791
        %v1808 = vrcp.pop %v1792
        %v1809 = vrcp.pop %v1793
        %v1810 = vrcp.pop %v1794
        %v1811 = vrcp.pop %v1795
        %v1812 = vrcp.pop %v1796
        %v1813 = vmul.f32 %v1717, %v1797
        %v1814 = vmul.f32 %v1718, %v1798
        %v1815 = vmul.f32 %v1719, %v1799
        %v1816 = vmul.f32 %v1720, %v1800
        %v1817 = vmul.f32 %v1721, %v1801
        %v1818 = vmul.f32 %v1722, %v1802
        %v1819 = vmul.f32 %v1723, %v1803
        %v1820 = vmul.f32 %v1724, %v1804
        %v1821 = vmul.f32 %v1725, %v1805
        %v1822 = vmul.f32 %v1726, %v1806
        %v1823 = vmul.f32 %v1727, %v1807
        %v1824 = vmul.f32 %v1728, %v1808
        %v1825 = vmul.f32 %v1729, %v1809
        %v1826 = vmul.f32 %v1730, %v1810
        %v1827 = vmul.f32 %v1731, %v1811
        %v1828 = vmul.f32 %v1732, %v1812
        %v1829 = vpack.c.bf16 %v1814, %v1813
        %v1830 = vpack.c.bf16 %v1816, %v1815
        %v1831 = vpack.c.bf16 %v1818, %v1817
        %v1832 = vpack.c.bf16 %v1820, %v1819
        %v1833 = vpack.c.bf16 %v1822, %v1821
        %v1834 = vpack.c.bf16 %v1824, %v1823
        %v1835 = vpack.c.bf16 %v1826, %v1825
        %v1836 = vpack.c.bf16 %v1828, %v1827
        %1845 = vrot.lane.b32.xlu0 %v731, 96
        %v1846 = vpop.permute.xlu0 %1845
        %1847 = vrot.lane.b32.xlu0 %v732, 96
        %v1848 = vpop.permute.xlu0 %1847
        %1849 = vrot.lane.b32.xlu0 %v733, 96
        %v1850 = vpop.permute.xlu0 %1849
        %1851 = vrot.lane.b32.xlu0 %v734, 96
        %v1852 = vpop.permute.xlu0 %1851
        %1853 = vrot.lane.b32.xlu0 %v735, 96
        %v1854 = vpop.permute.xlu0 %1853
        %1855 = vrot.lane.b32.xlu0 %v736, 96
        %v1856 = vpop.permute.xlu0 %1855
        %1857 = vrot.lane.b32.xlu0 %v737, 96
        %v1858 = vpop.permute.xlu0 %1857
        %1859 = vrot.lane.b32.xlu0 %v738, 96
        %v1860 = vpop.permute.xlu0 %1859
        %1869 = vmatprep.subr.bf16.mxu0 0
        %1870 = vmatpush1.bf16.msra.mxu0 %v1846
        %1871 = vmatprep.subr.bf16.mxu0 0
        %1872 = vmatpush1.bf16.msra.mxu0 %v1848
        %1873 = vmatprep.subr.bf16.mxu0 0
        %1874 = vmatpush1.bf16.msra.mxu0 %v1850
        %1875 = vmatprep.subr.bf16.mxu0 0
        %1876 = vmatpush1.bf16.msra.mxu0 %v1852
        %1877 = vmatprep.subr.bf16.mxu0 0
        %1878 = vmatpush1.bf16.msra.mxu0 %v1854
        %1879 = vmatprep.subr.bf16.mxu0 0
        %1880 = vmatpush1.bf16.msra.mxu0 %v1856
        %1881 = vmatprep.subr.bf16.mxu0 0
        %1882 = vmatpush1.bf16.msra.mxu0 %v1858
        %1883 = vmatprep.subr.bf16.mxu0 0
        %1884 = vmatpush1.bf16.msra.mxu0 %v1860
        %1885 = vmatprep.subr.bf16.mxu0 0
        %1886 = vmatpush1.bf16.msra.mxu0 0
        %1887 = vmatprep.subr.bf16.mxu0 0
        %1888 = vmatpush1.bf16.msra.mxu0 0
        %1889 = vmatprep.subr.bf16.mxu0 0
        %1890 = vmatpush1.bf16.msra.mxu0 0
        %1891 = vmatprep.subr.bf16.mxu0 0
        %1892 = vmatpush1.bf16.msra.mxu0 0
        %1893 = vmatprep.subr.bf16.mxu0 0
        %1894 = vmatpush1.bf16.msra.mxu0 0
        %1895 = vmatprep.subr.bf16.mxu0 0
        %1896 = vmatpush1.bf16.msra.mxu0 0
        %1897 = vmatprep.subr.bf16.mxu0 0
        %1898 = vmatpush1.bf16.msra.mxu0 0
        %1899 = vmatprep.subr.bf16.mxu0 0
        %1900 = vmatpush1.bf16.msra.mxu0 0
        %1901 = vmatprep.mubr.bf16.mxu0 0
        %1902 = vmatmul.mubr.bf16.gmra.mrb[0].mxu0 %v1829
        %v1903 = vpop.f32.mrb[0].mxu0
        %v1904 = vadd.f32 0.0, %v1903
        %v1905 = vpop.f32.mrb[0].mxu0
        %v1906 = vpop.f32.mrb[0].mxu0
        %v1907 = vadd.f32 0.0, %v1906
        %v1908 = vpop.f32.mrb[0].mxu0
        %1909 = vmatprep.mubr.bf16.mxu0 0
        %1910 = vmatmul.mubr.bf16.gmra.mrb[0].mxu0 %v1830
        %v1911 = vpop.f32.mrb[0].mxu0
        %v1912 = vadd.f32 0.0, %v1911
        %v1913 = vpop.f32.mrb[0].mxu0
        %v1914 = vpop.f32.mrb[0].mxu0
        %v1915 = vadd.f32 0.0, %v1914
        %v1916 = vpop.f32.mrb[0].mxu0
        %1917 = vmatprep.mubr.bf16.mxu0 0
        %1918 = vmatmul.mubr.bf16.gmra.mrb[0].mxu0 %v1831
        %v1919 = vpop.f32.mrb[0].mxu0
        %v1920 = vadd.f32 0.0, %v1919
        %v1921 = vpop.f32.mrb[0].mxu0
        %v1922 = vpop.f32.mrb[0].mxu0
        %v1923 = vadd.f32 0.0, %v1922
        %v1924 = vpop.f32.mrb[0].mxu0
        %1925 = vmatprep.mubr.bf16.mxu0 0
        %1926 = vmatmul.mubr.bf16.gmra.mrb[0].mxu0 %v1832
        %v1927 = vpop.f32.mrb[0].mxu0
        %v1928 = vadd.f32 0.0, %v1927
        %v1929 = vpop.f32.mrb[0].mxu0
        %v1930 = vpop.f32.mrb[0].mxu0
        %v1931 = vadd.f32 0.0, %v1930
        %v1932 = vpop.f32.mrb[0].mxu0
        %1933 = vmatprep.mubr.bf16.mxu0 0
        %1934 = vmatmul.mubr.bf16.gmra.mrb[0].mxu0 %v1833
        %v1935 = vpop.f32.mrb[0].mxu0
        %v1936 = vadd.f32 0.0, %v1935
        %v1937 = vpop.f32.mrb[0].mxu0
        %v1938 = vpop.f32.mrb[0].mxu0
        %v1939 = vadd.f32 0.0, %v1938
        %v1940 = vpop.f32.mrb[0].mxu0
        %1941 = vmatprep.mubr.bf16.mxu0 0
        %1942 = vmatmul.mubr.bf16.gmra.mrb[0].mxu0 %v1834
        %v1943 = vpop.f32.mrb[0].mxu0
        %v1944 = vadd.f32 0.0, %v1943
        %v1945 = vpop.f32.mrb[0].mxu0
        %v1946 = vpop.f32.mrb[0].mxu0
        %v1947 = vadd.f32 0.0, %v1946
        %v1948 = vpop.f32.mrb[0].mxu0
        %1949 = vmatprep.mubr.bf16.mxu0 0
        %1950 = vmatmul.mubr.bf16.gmra.mrb[0].mxu0 %v1835
        %v1951 = vpop.f32.mrb[0].mxu0
        %v1952 = vadd.f32 0.0, %v1951
        %v1953 = vpop.f32.mrb[0].mxu0
        %v1954 = vpop.f32.mrb[0].mxu0
        %v1955 = vadd.f32 0.0, %v1954
        %v1956 = vpop.f32.mrb[0].mxu0
        %1957 = vmatprep.mubr.bf16.mxu0 0
        %1958 = vmatmul.mubr.bf16.gmra.mrb[0].mxu0 %v1836
        %v1959 = vpop.f32.mrb[0].mxu0
        %v1960 = vadd.f32 0.0, %v1959
        %v1961 = vpop.f32.mrb[0].mxu0
        %v1962 = vpop.f32.mrb[0].mxu0
        %v1963 = vadd.f32 0.0, %v1962
        %v1964 = vpop.f32.mrb[0].mxu0
        %1965 = vdwg.mxu0
        %vm1966 = vcmp.gt.f32.partialorder %v1904, 0.0
        %vm1967 = vcmp.gt.f32.partialorder %v1907, 0.0
        %vm1968 = vcmp.gt.f32.partialorder %v1912, 0.0
        %vm1969 = vcmp.gt.f32.partialorder %v1915, 0.0
        %vm1970 = vcmp.gt.f32.partialorder %v1920, 0.0
        %vm1971 = vcmp.gt.f32.partialorder %v1923, 0.0
        %vm1972 = vcmp.gt.f32.partialorder %v1928, 0.0
        %vm1973 = vcmp.gt.f32.partialorder %v1931, 0.0
        %vm1974 = vcmp.gt.f32.partialorder %v1936, 0.0
        %vm1975 = vcmp.gt.f32.partialorder %v1939, 0.0
        %vm1976 = vcmp.gt.f32.partialorder %v1944, 0.0
        %vm1977 = vcmp.gt.f32.partialorder %v1947, 0.0
        %vm1978 = vcmp.gt.f32.partialorder %v1952, 0.0
        %vm1979 = vcmp.gt.f32.partialorder %v1955, 0.0
        %vm1980 = vcmp.gt.f32.partialorder %v1960, 0.0
        %vm1981 = vcmp.gt.f32.partialorder %v1963, 0.0
        %v1982 = vmin.f32 %v1904, 0.0
        %v1983 = vmin.f32 %v1907, 0.0
        %v1984 = vmin.f32 %v1912, 0.0
        %v1985 = vmin.f32 %v1915, 0.0
        %v1986 = vmin.f32 %v1920, 0.0
        %v1987 = vmin.f32 %v1923, 0.0
        %v1988 = vmin.f32 %v1928, 0.0
        %v1989 = vmin.f32 %v1931, 0.0
        %v1990 = vmin.f32 %v1936, 0.0
        %v1991 = vmin.f32 %v1939, 0.0
        %v1992 = vmin.f32 %v1944, 0.0
        %v1993 = vmin.f32 %v1947, 0.0
        %v1994 = vmin.f32 %v1952, 0.0
        %v1995 = vmin.f32 %v1955, 0.0
        %v1996 = vmin.f32 %v1960, 0.0
        %v1997 = vmin.f32 %v1963, 0.0
        %v1998 = vmul.f32 %v1982, 1.442695
        %v1999 = vpow.pop %v1998
        %v2000 = vmul.f32 %v1983, 1.442695
        %v2001 = vpow.pop %v2000
        %v2002 = vmul.f32 %v1984, 1.442695
        %v2003 = vpow.pop %v2002
        %v2004 = vmul.f32 %v1985, 1.442695
        %v2005 = vpow.pop %v2004
        %v2006 = vmul.f32 %v1986, 1.442695
        %v2007 = vpow.pop %v2006
        %v2008 = vmul.f32 %v1987, 1.442695
        %v2009 = vpow.pop %v2008
        %v2010 = vmul.f32 %v1988, 1.442695
        %v2011 = vpow.pop %v2010
        %v2012 = vmul.f32 %v1989, 1.442695
        %v2013 = vpow.pop %v2012
        %v2014 = vmul.f32 %v1990, 1.442695
        %v2015 = vpow.pop %v2014
        %v2016 = vmul.f32 %v1991, 1.442695
        %v2017 = vpow.pop %v2016
        %v2018 = vmul.f32 %v1992, 1.442695
        %v2019 = vpow.pop %v2018
        %v2020 = vmul.f32 %v1993, 1.442695
        %v2021 = vpow.pop %v2020
        %v2022 = vmul.f32 %v1994, 1.442695
        %v2023 = vpow.pop %v2022
        %v2024 = vmul.f32 %v1995, 1.442695
        %v2025 = vpow.pop %v2024
        %v2026 = vmul.f32 %v1996, 1.442695
        %v2027 = vpow.pop %v2026
        %v2028 = vmul.f32 %v1997, 1.442695
        %v2029 = vpow.pop %v2028
        %v2030 = vsub.f32 %v1999, 1.0
        %v2031 = vsub.f32 %v2001, 1.0
        %v2032 = vsub.f32 %v2003, 1.0
        %v2033 = vsub.f32 %v2005, 1.0
        %v2034 = vsub.f32 %v2007, 1.0
        %v2035 = vsub.f32 %v2009, 1.0
        %v2036 = vsub.f32 %v2011, 1.0
        %v2037 = vsub.f32 %v2013, 1.0
        %v2038 = vsub.f32 %v2015, 1.0
        %v2039 = vsub.f32 %v2017, 1.0
        %v2040 = vsub.f32 %v2019, 1.0
        %v2041 = vsub.f32 %v2021, 1.0
        %v2042 = vsub.f32 %v2023, 1.0
        %v2043 = vsub.f32 %v2025, 1.0
        %v2044 = vsub.f32 %v2027, 1.0
        %v2045 = vsub.f32 %v2029, 1.0
        %v2046 = vsel %vm1966, %v1904, %v2030
        %v2047 = vsel %vm1967, %v1907, %v2031
        %v2048 = vsel %vm1968, %v1912, %v2032
        %v2049 = vsel %vm1969, %v1915, %v2033
        %v2050 = vsel %vm1970, %v1920, %v2034
        %v2051 = vsel %vm1971, %v1923, %v2035
        %v2052 = vsel %vm1972, %v1928, %v2036
        %v2053 = vsel %vm1973, %v1931, %v2037
        %v2054 = vsel %vm1974, %v1936, %v2038
        %v2055 = vsel %vm1975, %v1939, %v2039
        %v2056 = vsel %vm1976, %v1944, %v2040
        %v2057 = vsel %vm1977, %v1947, %v2041
        %v2058 = vsel %vm1978, %v1952, %v2042
        %v2059 = vsel %vm1979, %v1955, %v2043
        %v2060 = vsel %vm1980, %v1960, %v2044
        %v2061 = vsel %vm1981, %v1963, %v2045
        %2062 = vset.pattern.permute.xlu0 6
        %2063 = vperm.xlu0 %2062, %v838
        %v2064 = vpop.permute.xlu0 %2063
        %2066 = vset.pattern.permute.xlu0 6
        %2067 = vperm.xlu0 %2066, %v841
        %v2068 = vpop.permute.xlu0 %2067
        %2070 = vset.pattern.permute.xlu0 6
        %2071 = vperm.xlu0 %2070, %v846
        %v2072 = vpop.permute.xlu0 %2071
        %2074 = vset.pattern.permute.xlu0 6
        %2075 = vperm.xlu0 %2074, %v849
        %v2076 = vpop.permute.xlu0 %2075
        %2078 = vset.pattern.permute.xlu0 6
        %2079 = vperm.xlu0 %2078, %v854
        %v2080 = vpop.permute.xlu0 %2079
        %2082 = vset.pattern.permute.xlu0 6
        %2083 = vperm.xlu0 %2082, %v857
        %v2084 = vpop.permute.xlu0 %2083
        %2086 = vset.pattern.permute.xlu0 6
        %2087 = vperm.xlu0 %2086, %v862
        %v2088 = vpop.permute.xlu0 %2087
        %2090 = vset.pattern.permute.xlu0 6
        %2091 = vperm.xlu0 %2090, %v865
        %v2092 = vpop.permute.xlu0 %2091
        %2094 = vset.pattern.permute.xlu0 6
        %2095 = vperm.xlu0 %2094, %v870
        %v2096 = vpop.permute.xlu0 %2095
        %2098 = vset.pattern.permute.xlu0 6
        %2099 = vperm.xlu0 %2098, %v873
        %v2100 = vpop.permute.xlu0 %2099
        %2102 = vset.pattern.permute.xlu0 6
        %2103 = vperm.xlu0 %2102, %v878
        %v2104 = vpop.permute.xlu0 %2103
        %2106 = vset.pattern.permute.xlu0 6
        %2107 = vperm.xlu0 %2106, %v881
        %v2108 = vpop.permute.xlu0 %2107
        %2110 = vset.pattern.permute.xlu0 6
        %2111 = vperm.xlu0 %2110, %v886
        %v2112 = vpop.permute.xlu0 %2111
        %2114 = vset.pattern.permute.xlu0 6
        %2115 = vperm.xlu0 %2114, %v889
        %v2116 = vpop.permute.xlu0 %2115
        %2118 = vset.pattern.permute.xlu0 6
        %2119 = vperm.xlu0 %2118, %v894
        %v2120 = vpop.permute.xlu0 %2119
        %2122 = vset.pattern.permute.xlu0 6
        %2123 = vperm.xlu0 %2122, %v897
        %v2124 = vpop.permute.xlu0 %2123
        %v2126 = vlaneseq
        %v2127 = vshrl.u32 %v2126, 7
        %v2128 = vsub.s32 2, %v2127
        %v2129 = vrot.slane %v916, %v2128
        %v2130 = vadd.f32 %v2064, %v2129
        %v2131 = vadd.f32 %v2068, %v2129
        %v2132 = vadd.f32 %v2072, %v2129
        %v2133 = vadd.f32 %v2076, %v2129
        %v2134 = vadd.f32 %v2080, %v2129
        %v2135 = vadd.f32 %v2084, %v2129
        %v2136 = vadd.f32 %v2088, %v2129
        %v2137 = vadd.f32 %v2092, %v2129
        %v2138 = vadd.f32 %v2096, %v2129
        %v2139 = vadd.f32 %v2100, %v2129
        %v2140 = vadd.f32 %v2104, %v2129
        %v2141 = vadd.f32 %v2108, %v2129
        %v2142 = vadd.f32 %v2112, %v2129
        %v2143 = vadd.f32 %v2116, %v2129
        %v2144 = vadd.f32 %v2120, %v2129
        %v2145 = vadd.f32 %v2124, %v2129
        %vm2146 = vcmp.gt.f32.partialorder %v2130, 0.0
        %vm2147 = vcmp.gt.f32.partialorder %v2131, 0.0
        %vm2148 = vcmp.gt.f32.partialorder %v2132, 0.0
        %vm2149 = vcmp.gt.f32.partialorder %v2133, 0.0
        %vm2150 = vcmp.gt.f32.partialorder %v2134, 0.0
        %vm2151 = vcmp.gt.f32.partialorder %v2135, 0.0
        %vm2152 = vcmp.gt.f32.partialorder %v2136, 0.0
        %vm2153 = vcmp.gt.f32.partialorder %v2137, 0.0
        %vm2154 = vcmp.gt.f32.partialorder %v2138, 0.0
        %vm2155 = vcmp.gt.f32.partialorder %v2139, 0.0
        %vm2156 = vcmp.gt.f32.partialorder %v2140, 0.0
        %vm2157 = vcmp.gt.f32.partialorder %v2141, 0.0
        %vm2158 = vcmp.gt.f32.partialorder %v2142, 0.0
        %vm2159 = vcmp.gt.f32.partialorder %v2143, 0.0
        %vm2160 = vcmp.gt.f32.partialorder %v2144, 0.0
        %vm2161 = vcmp.gt.f32.partialorder %v2145, 0.0
        %v2162 = vmul.f32 %v2130, 0.2
        %v2163 = vmul.f32 %v2131, 0.2
        %v2164 = vmul.f32 %v2132, 0.2
        %v2165 = vmul.f32 %v2133, 0.2
        %v2166 = vmul.f32 %v2134, 0.2
        %v2167 = vmul.f32 %v2135, 0.2
        %v2168 = vmul.f32 %v2136, 0.2
        %v2169 = vmul.f32 %v2137, 0.2
        %v2170 = vmul.f32 %v2138, 0.2
        %v2171 = vmul.f32 %v2139, 0.2
        %v2172 = vmul.f32 %v2140, 0.2
        %v2173 = vmul.f32 %v2141, 0.2
        %v2174 = vmul.f32 %v2142, 0.2
        %v2175 = vmul.f32 %v2143, 0.2
        %v2176 = vmul.f32 %v2144, 0.2
        %v2177 = vmul.f32 %v2145, 0.2
        %v2178 = vsel %vm2146, %v2130, %v2162
        %v2179 = vsel %vm2147, %v2131, %v2163
        %v2180 = vsel %vm2148, %v2132, %v2164
        %v2181 = vsel %vm2149, %v2133, %v2165
        %v2182 = vsel %vm2150, %v2134, %v2166
        %v2183 = vsel %vm2151, %v2135, %v2167
        %v2184 = vsel %vm2152, %v2136, %v2168
        %v2185 = vsel %vm2153, %v2137, %v2169
        %v2186 = vsel %vm2154, %v2138, %v2170
        %v2187 = vsel %vm2155, %v2139, %v2171
        %v2188 = vsel %vm2156, %v2140, %v2172
        %v2189 = vsel %vm2157, %v2141, %v2173
        %v2190 = vsel %vm2158, %v2142, %v2174
        %v2191 = vsel %vm2159, %v2143, %v2175
        %v2192 = vsel %vm2160, %v2144, %v2176
        %v2193 = vsel %vm2161, %v2145, %v2177
        %v2194 = vadd.f32 %v2178, %v513
        %v2195 = vadd.f32 %v2179, %v514
        %v2196 = vadd.f32 %v2180, %v515
        %v2197 = vadd.f32 %v2181, %v516
        %v2198 = vadd.f32 %v2182, %v517
        %v2199 = vadd.f32 %v2183, %v518
        %v2200 = vadd.f32 %v2184, %v519
        %v2201 = vadd.f32 %v2185, %v520
        %v2202 = vadd.f32 %v2186, %v521
        %v2203 = vadd.f32 %v2187, %v522
        %v2204 = vadd.f32 %v2188, %v523
        %v2205 = vadd.f32 %v2189, %v524
        %v2206 = vadd.f32 %v2190, %v525
        %v2207 = vadd.f32 %v2191, %v526
        %v2208 = vadd.f32 %v2192, %v527
        %v2209 = vadd.f32 %v2193, %v528
        %2210 = vmax.xlane.f32.xlu0 %v2194
        %v2211 = vpop.xlane.xlu0 %2210
        %2212 = vmax.xlane.f32.xlu0 %v2195
        %v2213 = vpop.xlane.xlu0 %2212
        %2214 = vmax.xlane.f32.xlu0 %v2196
        %v2215 = vpop.xlane.xlu0 %2214
        %2216 = vmax.xlane.f32.xlu0 %v2197
        %v2217 = vpop.xlane.xlu0 %2216
        %2218 = vmax.xlane.f32.xlu0 %v2198
        %v2219 = vpop.xlane.xlu0 %2218
        %2220 = vmax.xlane.f32.xlu0 %v2199
        %v2221 = vpop.xlane.xlu0 %2220
        %2222 = vmax.xlane.f32.xlu0 %v2200
        %v2223 = vpop.xlane.xlu0 %2222
        %2224 = vmax.xlane.f32.xlu0 %v2201
        %v2225 = vpop.xlane.xlu0 %2224
        %2226 = vmax.xlane.f32.xlu0 %v2202
        %v2227 = vpop.xlane.xlu0 %2226
        %2228 = vmax.xlane.f32.xlu0 %v2203
        %v2229 = vpop.xlane.xlu0 %2228
        %2230 = vmax.xlane.f32.xlu0 %v2204
        %v2231 = vpop.xlane.xlu0 %2230
        %2232 = vmax.xlane.f32.xlu0 %v2205
        %v2233 = vpop.xlane.xlu0 %2232
        %2234 = vmax.xlane.f32.xlu0 %v2206
        %v2235 = vpop.xlane.xlu0 %2234
        %2236 = vmax.xlane.f32.xlu0 %v2207
        %v2237 = vpop.xlane.xlu0 %2236
        %2238 = vmax.xlane.f32.xlu0 %v2208
        %v2239 = vpop.xlane.xlu0 %2238
        %2240 = vmax.xlane.f32.xlu0 %v2209
        %v2241 = vpop.xlane.xlu0 %2240
        %v2242 = vsub.f32 %v2194, %v2211
        %v2243 = vsub.f32 %v2195, %v2213
        %v2244 = vsub.f32 %v2196, %v2215
        %v2245 = vsub.f32 %v2197, %v2217
        %v2246 = vsub.f32 %v2198, %v2219
        %v2247 = vsub.f32 %v2199, %v2221
        %v2248 = vsub.f32 %v2200, %v2223
        %v2249 = vsub.f32 %v2201, %v2225
        %v2250 = vsub.f32 %v2202, %v2227
        %v2251 = vsub.f32 %v2203, %v2229
        %v2252 = vsub.f32 %v2204, %v2231
        %v2253 = vsub.f32 %v2205, %v2233
        %v2254 = vsub.f32 %v2206, %v2235
        %v2255 = vsub.f32 %v2207, %v2237
        %v2256 = vsub.f32 %v2208, %v2239
        %v2257 = vsub.f32 %v2209, %v2241
        %v2258 = vmul.f32 %v2242, 1.442695
        %v2259 = vpow.pop %v2258
        %v2260 = vmul.f32 %v2243, 1.442695
        %v2261 = vpow.pop %v2260
        %v2262 = vmul.f32 %v2244, 1.442695
        %v2263 = vpow.pop %v2262
        %v2264 = vmul.f32 %v2245, 1.442695
        %v2265 = vpow.pop %v2264
        %v2266 = vmul.f32 %v2246, 1.442695
        %v2267 = vpow.pop %v2266
        %v2268 = vmul.f32 %v2247, 1.442695
        %v2269 = vpow.pop %v2268
        %v2270 = vmul.f32 %v2248, 1.442695
        %v2271 = vpow.pop %v2270
        %v2272 = vmul.f32 %v2249, 1.442695
        %v2273 = vpow.pop %v2272
        %v2274 = vmul.f32 %v2250, 1.442695
        %v2275 = vpow.pop %v2274
        %v2276 = vmul.f32 %v2251, 1.442695
        %v2277 = vpow.pop %v2276
        %v2278 = vmul.f32 %v2252, 1.442695
        %v2279 = vpow.pop %v2278
        %v2280 = vmul.f32 %v2253, 1.442695
        %v2281 = vpow.pop %v2280
        %v2282 = vmul.f32 %v2254, 1.442695
        %v2283 = vpow.pop %v2282
        %v2284 = vmul.f32 %v2255, 1.442695
        %v2285 = vpow.pop %v2284
        %v2286 = vmul.f32 %v2256, 1.442695
        %v2287 = vpow.pop %v2286
        %v2288 = vmul.f32 %v2257, 1.442695
        %v2289 = vpow.pop %v2288
        %v2290 = vsel %vm529, %v2259, 0.0
        %v2291 = vsel %vm530, %v2261, 0.0
        %v2292 = vsel %vm531, %v2263, 0.0
        %v2293 = vsel %vm532, %v2265, 0.0
        %v2294 = vsel %vm533, %v2267, 0.0
        %v2295 = vsel %vm534, %v2269, 0.0
        %v2296 = vsel %vm535, %v2271, 0.0
        %v2297 = vsel %vm536, %v2273, 0.0
        %v2298 = vsel %vm537, %v2275, 0.0
        %v2299 = vsel %vm538, %v2277, 0.0
        %v2300 = vsel %vm539, %v2279, 0.0
        %v2301 = vsel %vm540, %v2281, 0.0
        %v2302 = vsel %vm541, %v2283, 0.0
        %v2303 = vsel %vm542, %v2285, 0.0
        %v2304 = vsel %vm543, %v2287, 0.0
        %v2305 = vsel %vm544, %v2289, 0.0
        %2306 = vadd.xlane.f32.xlu0 %v2290
        %v2307 = vpop.xlane.xlu0 %2306
        %2308 = vadd.xlane.f32.xlu0 %v2291
        %v2309 = vpop.xlane.xlu0 %2308
        %2310 = vadd.xlane.f32.xlu0 %v2292
        %v2311 = vpop.xlane.xlu0 %2310
        %2312 = vadd.xlane.f32.xlu0 %v2293
        %v2313 = vpop.xlane.xlu0 %2312
        %2314 = vadd.xlane.f32.xlu0 %v2294
        %v2315 = vpop.xlane.xlu0 %2314
        %2316 = vadd.xlane.f32.xlu0 %v2295
        %v2317 = vpop.xlane.xlu0 %2316
        %2318 = vadd.xlane.f32.xlu0 %v2296
        %v2319 = vpop.xlane.xlu0 %2318
        %2320 = vadd.xlane.f32.xlu0 %v2297
        %v2321 = vpop.xlane.xlu0 %2320
        %2322 = vadd.xlane.f32.xlu0 %v2298
        %v2323 = vpop.xlane.xlu0 %2322
        %2324 = vadd.xlane.f32.xlu0 %v2299
        %v2325 = vpop.xlane.xlu0 %2324
        %2326 = vadd.xlane.f32.xlu0 %v2300
        %v2327 = vpop.xlane.xlu0 %2326
        %2328 = vadd.xlane.f32.xlu0 %v2301
        %v2329 = vpop.xlane.xlu0 %2328
        %2330 = vadd.xlane.f32.xlu0 %v2302
        %v2331 = vpop.xlane.xlu0 %2330
        %2332 = vadd.xlane.f32.xlu0 %v2303
        %v2333 = vpop.xlane.xlu0 %2332
        %2334 = vadd.xlane.f32.xlu0 %v2304
        %v2335 = vpop.xlane.xlu0 %2334
        %2336 = vadd.xlane.f32.xlu0 %v2305
        %v2337 = vpop.xlane.xlu0 %2336
        %vm2338 = vcmp.eq.f32.partialorder %v2307, 0.0
        %vm2339 = vcmp.eq.f32.partialorder %v2309, 0.0
        %vm2340 = vcmp.eq.f32.partialorder %v2311, 0.0
        %vm2341 = vcmp.eq.f32.partialorder %v2313, 0.0
        %vm2342 = vcmp.eq.f32.partialorder %v2315, 0.0
        %vm2343 = vcmp.eq.f32.partialorder %v2317, 0.0
        %vm2344 = vcmp.eq.f32.partialorder %v2319, 0.0
        %vm2345 = vcmp.eq.f32.partialorder %v2321, 0.0
        %vm2346 = vcmp.eq.f32.partialorder %v2323, 0.0
        %vm2347 = vcmp.eq.f32.partialorder %v2325, 0.0
        %vm2348 = vcmp.eq.f32.partialorder %v2327, 0.0
        %vm2349 = vcmp.eq.f32.partialorder %v2329, 0.0
        %vm2350 = vcmp.eq.f32.partialorder %v2331, 0.0
        %vm2351 = vcmp.eq.f32.partialorder %v2333, 0.0
        %vm2352 = vcmp.eq.f32.partialorder %v2335, 0.0
        %vm2353 = vcmp.eq.f32.partialorder %v2337, 0.0
        %v2354 = vsel %vm2338, 1.0, %v2307
        %v2355 = vsel %vm2339, 1.0, %v2309
        %v2356 = vsel %vm2340, 1.0, %v2311
        %v2357 = vsel %vm2341, 1.0, %v2313
        %v2358 = vsel %vm2342, 1.0, %v2315
        %v2359 = vsel %vm2343, 1.0, %v2317
        %v2360 = vsel %vm2344, 1.0, %v2319
        %v2361 = vsel %vm2345, 1.0, %v2321
        %v2362 = vsel %vm2346, 1.0, %v2323
        %v2363 = vsel %vm2347, 1.0, %v2325
        %v2364 = vsel %vm2348, 1.0, %v2327
        %v2365 = vsel %vm2349, 1.0, %v2329
        %v2366 = vsel %vm2350, 1.0, %v2331
        %v2367 = vsel %vm2351, 1.0, %v2333
        %v2368 = vsel %vm2352, 1.0, %v2335
        %v2369 = vsel %vm2353, 1.0, %v2337
        %v2370 = vrcp.pop %v2354
        %v2371 = vrcp.pop %v2355
        %v2372 = vrcp.pop %v2356
        %v2373 = vrcp.pop %v2357
        %v2374 = vrcp.pop %v2358
        %v2375 = vrcp.pop %v2359
        %v2376 = vrcp.pop %v2360
        %v2377 = vrcp.pop %v2361
        %v2378 = vrcp.pop %v2362
        %v2379 = vrcp.pop %v2363
        %v2380 = vrcp.pop %v2364
        %v2381 = vrcp.pop %v2365
        %v2382 = vrcp.pop %v2366
        %v2383 = vrcp.pop %v2367
        %v2384 = vrcp.pop %v2368
        %v2385 = vrcp.pop %v2369
        %v2386 = vmul.f32 %v2290, %v2370
        %v2387 = vmul.f32 %v2291, %v2371
        %v2388 = vmul.f32 %v2292, %v2372
        %v2389 = vmul.f32 %v2293, %v2373
        %v2390 = vmul.f32 %v2294, %v2374
        %v2391 = vmul.f32 %v2295, %v2375
        %v2392 = vmul.f32 %v2296, %v2376
        %v2393 = vmul.f32 %v2297, %v2377
        %v2394 = vmul.f32 %v2298, %v2378
        %v2395 = vmul.f32 %v2299, %v2379
        %v2396 = vmul.f32 %v2300, %v2380
        %v2397 = vmul.f32 %v2301, %v2381
        %v2398 = vmul.f32 %v2302, %v2382
        %v2399 = vmul.f32 %v2303, %v2383
        %v2400 = vmul.f32 %v2304, %v2384
        %v2401 = vmul.f32 %v2305, %v2385
        %v2402 = vpack.c.bf16 %v2387, %v2386
        %v2403 = vpack.c.bf16 %v2389, %v2388
        %v2404 = vpack.c.bf16 %v2391, %v2390
        %v2405 = vpack.c.bf16 %v2393, %v2392
        %v2406 = vpack.c.bf16 %v2395, %v2394
        %v2407 = vpack.c.bf16 %v2397, %v2396
        %v2408 = vpack.c.bf16 %v2399, %v2398
        %v2409 = vpack.c.bf16 %v2401, %v2400
        %2410 = vrot.lane.b32.xlu0 %v731, 64
        %v2411 = vpop.permute.xlu0 %2410
        %2412 = vrot.lane.b32.xlu0 %v732, 64
        %v2413 = vpop.permute.xlu0 %2412
        %2414 = vrot.lane.b32.xlu0 %v733, 64
        %v2415 = vpop.permute.xlu0 %2414
        %2416 = vrot.lane.b32.xlu0 %v734, 64
        %v2417 = vpop.permute.xlu0 %2416
        %2418 = vrot.lane.b32.xlu0 %v735, 64
        %v2419 = vpop.permute.xlu0 %2418
        %2420 = vrot.lane.b32.xlu0 %v736, 64
        %v2421 = vpop.permute.xlu0 %2420
        %2422 = vrot.lane.b32.xlu0 %v737, 64
        %v2423 = vpop.permute.xlu0 %2422
        %2424 = vrot.lane.b32.xlu0 %v738, 64
        %v2425 = vpop.permute.xlu0 %2424
        %2434 = vmatprep.subr.bf16.mxu0 0
        %2435 = vmatpush1.bf16.msra.mxu0 %v2411
        %2436 = vmatprep.subr.bf16.mxu0 0
        %2437 = vmatpush1.bf16.msra.mxu0 %v2413
        %2438 = vmatprep.subr.bf16.mxu0 0
        %2439 = vmatpush1.bf16.msra.mxu0 %v2415
        %2440 = vmatprep.subr.bf16.mxu0 0
        %2441 = vmatpush1.bf16.msra.mxu0 %v2417
        %2442 = vmatprep.subr.bf16.mxu0 0
        %2443 = vmatpush1.bf16.msra.mxu0 %v2419
        %2444 = vmatprep.subr.bf16.mxu0 0
        %2445 = vmatpush1.bf16.msra.mxu0 %v2421
        %2446 = vmatprep.subr.bf16.mxu0 0
        %2447 = vmatpush1.bf16.msra.mxu0 %v2423
        %2448 = vmatprep.subr.bf16.mxu0 0
        %2449 = vmatpush1.bf16.msra.mxu0 %v2425
        %2450 = vmatprep.subr.bf16.mxu0 0
        %2451 = vmatpush1.bf16.msra.mxu0 0
        %2452 = vmatprep.subr.bf16.mxu0 0
        %2453 = vmatpush1.bf16.msra.mxu0 0
        %2454 = vmatprep.subr.bf16.mxu0 0
        %2455 = vmatpush1.bf16.msra.mxu0 0
        %2456 = vmatprep.subr.bf16.mxu0 0
        %2457 = vmatpush1.bf16.msra.mxu0 0
        %2458 = vmatprep.subr.bf16.mxu0 0
        %2459 = vmatpush1.bf16.msra.mxu0 0
        %2460 = vmatprep.subr.bf16.mxu0 0
        %2461 = vmatpush1.bf16.msra.mxu0 0
        %2462 = vmatprep.subr.bf16.mxu0 0
        %2463 = vmatpush1.bf16.msra.mxu0 0
        %2464 = vmatprep.subr.bf16.mxu0 0
        %2465 = vmatpush1.bf16.msra.mxu0 0
        %2466 = vmatprep.mubr.bf16.mxu0 0
        %2467 = vmatmul.mubr.bf16.gmra.mrb[0].mxu0 %v2402
        %v2468 = vpop.f32.mrb[0].mxu0
        %v2469 = vadd.f32 0.0, %v2468
        %v2470 = vpop.f32.mrb[0].mxu0
        %v2471 = vpop.f32.mrb[0].mxu0
        %v2472 = vadd.f32 0.0, %v2471
        %v2473 = vpop.f32.mrb[0].mxu0
        %2474 = vmatprep.mubr.bf16.mxu0 0
        %2475 = vmatmul.mubr.bf16.gmra.mrb[0].mxu0 %v2403
        %v2476 = vpop.f32.mrb[0].mxu0
        %v2477 = vadd.f32 0.0, %v2476
        %v2478 = vpop.f32.mrb[0].mxu0
        %v2479 = vpop.f32.mrb[0].mxu0
        %v2480 = vadd.f32 0.0, %v2479
        %v2481 = vpop.f32.mrb[0].mxu0
        %2482 = vmatprep.mubr.bf16.mxu0 0
        %2483 = vmatmul.mubr.bf16.gmra.mrb[0].mxu0 %v2404
        %v2484 = vpop.f32.mrb[0].mxu0
        %v2485 = vadd.f32 0.0, %v2484
        %v2486 = vpop.f32.mrb[0].mxu0
        %v2487 = vpop.f32.mrb[0].mxu0
        %v2488 = vadd.f32 0.0, %v2487
        %v2489 = vpop.f32.mrb[0].mxu0
        %2490 = vmatprep.mubr.bf16.mxu0 0
        %2491 = vmatmul.mubr.bf16.gmra.mrb[0].mxu0 %v2405
        %v2492 = vpop.f32.mrb[0].mxu0
        %v2493 = vadd.f32 0.0, %v2492
        %v2494 = vpop.f32.mrb[0].mxu0
        %v2495 = vpop.f32.mrb[0].mxu0
        %v2496 = vadd.f32 0.0, %v2495
        %v2497 = vpop.f32.mrb[0].mxu0
        %2498 = vmatprep.mubr.bf16.mxu0 0
        %2499 = vmatmul.mubr.bf16.gmra.mrb[0].mxu0 %v2406
        %v2500 = vpop.f32.mrb[0].mxu0
        %v2501 = vadd.f32 0.0, %v2500
        %v2502 = vpop.f32.mrb[0].mxu0
        %v2503 = vpop.f32.mrb[0].mxu0
        %v2504 = vadd.f32 0.0, %v2503
        %v2505 = vpop.f32.mrb[0].mxu0
        %2506 = vmatprep.mubr.bf16.mxu0 0
        %2507 = vmatmul.mubr.bf16.gmra.mrb[0].mxu0 %v2407
        %v2508 = vpop.f32.mrb[0].mxu0
        %v2509 = vadd.f32 0.0, %v2508
        %v2510 = vpop.f32.mrb[0].mxu0
        %v2511 = vpop.f32.mrb[0].mxu0
        %v2512 = vadd.f32 0.0, %v2511
        %v2513 = vpop.f32.mrb[0].mxu0
        %2514 = vmatprep.mubr.bf16.mxu0 0
        %2515 = vmatmul.mubr.bf16.gmra.mrb[0].mxu0 %v2408
        %v2516 = vpop.f32.mrb[0].mxu0
        %v2517 = vadd.f32 0.0, %v2516
        %v2518 = vpop.f32.mrb[0].mxu0
        %v2519 = vpop.f32.mrb[0].mxu0
        %v2520 = vadd.f32 0.0, %v2519
        %v2521 = vpop.f32.mrb[0].mxu0
        %2522 = vmatprep.mubr.bf16.mxu0 0
        %2523 = vmatmul.mubr.bf16.gmra.mrb[0].mxu0 %v2409
        %v2524 = vpop.f32.mrb[0].mxu0
        %v2525 = vadd.f32 0.0, %v2524
        %v2526 = vpop.f32.mrb[0].mxu0
        %v2527 = vpop.f32.mrb[0].mxu0
        %v2528 = vadd.f32 0.0, %v2527
        %v2529 = vpop.f32.mrb[0].mxu0
        %2530 = vdwg.mxu0
        %vm2531 = vcmp.gt.f32.partialorder %v2469, 0.0
        %vm2532 = vcmp.gt.f32.partialorder %v2472, 0.0
        %vm2533 = vcmp.gt.f32.partialorder %v2477, 0.0
        %vm2534 = vcmp.gt.f32.partialorder %v2480, 0.0
        %vm2535 = vcmp.gt.f32.partialorder %v2485, 0.0
        %vm2536 = vcmp.gt.f32.partialorder %v2488, 0.0
        %vm2537 = vcmp.gt.f32.partialorder %v2493, 0.0
        %vm2538 = vcmp.gt.f32.partialorder %v2496, 0.0
        %vm2539 = vcmp.gt.f32.partialorder %v2501, 0.0
        %vm2540 = vcmp.gt.f32.partialorder %v2504, 0.0
        %vm2541 = vcmp.gt.f32.partialorder %v2509, 0.0
        %vm2542 = vcmp.gt.f32.partialorder %v2512, 0.0
        %vm2543 = vcmp.gt.f32.partialorder %v2517, 0.0
        %vm2544 = vcmp.gt.f32.partialorder %v2520, 0.0
        %vm2545 = vcmp.gt.f32.partialorder %v2525, 0.0
        %vm2546 = vcmp.gt.f32.partialorder %v2528, 0.0
        %v2547 = vmin.f32 %v2469, 0.0
        %v2548 = vmin.f32 %v2472, 0.0
        %v2549 = vmin.f32 %v2477, 0.0
        %v2550 = vmin.f32 %v2480, 0.0
        %v2551 = vmin.f32 %v2485, 0.0
        %v2552 = vmin.f32 %v2488, 0.0
        %v2553 = vmin.f32 %v2493, 0.0
        %v2554 = vmin.f32 %v2496, 0.0
        %v2555 = vmin.f32 %v2501, 0.0
        %v2556 = vmin.f32 %v2504, 0.0
        %v2557 = vmin.f32 %v2509, 0.0
        %v2558 = vmin.f32 %v2512, 0.0
        %v2559 = vmin.f32 %v2517, 0.0
        %v2560 = vmin.f32 %v2520, 0.0
        %v2561 = vmin.f32 %v2525, 0.0
        %v2562 = vmin.f32 %v2528, 0.0
        %v2563 = vmul.f32 %v2547, 1.442695
        %v2564 = vpow.pop %v2563
        %v2565 = vmul.f32 %v2548, 1.442695
        %v2566 = vpow.pop %v2565
        %v2567 = vmul.f32 %v2549, 1.442695
        %v2568 = vpow.pop %v2567
        %v2569 = vmul.f32 %v2550, 1.442695
        %v2570 = vpow.pop %v2569
        %v2571 = vmul.f32 %v2551, 1.442695
        %v2572 = vpow.pop %v2571
        %v2573 = vmul.f32 %v2552, 1.442695
        %v2574 = vpow.pop %v2573
        %v2575 = vmul.f32 %v2553, 1.442695
        %v2576 = vpow.pop %v2575
        %v2577 = vmul.f32 %v2554, 1.442695
        %v2578 = vpow.pop %v2577
        %v2579 = vmul.f32 %v2555, 1.442695
        %v2580 = vpow.pop %v2579
        %v2581 = vmul.f32 %v2556, 1.442695
        %v2582 = vpow.pop %v2581
        %v2583 = vmul.f32 %v2557, 1.442695
        %v2584 = vpow.pop %v2583
        %v2585 = vmul.f32 %v2558, 1.442695
        %v2586 = vpow.pop %v2585
        %v2587 = vmul.f32 %v2559, 1.442695
        %v2588 = vpow.pop %v2587
        %v2589 = vmul.f32 %v2560, 1.442695
        %v2590 = vpow.pop %v2589
        %v2591 = vmul.f32 %v2561, 1.442695
        %v2592 = vpow.pop %v2591
        %v2593 = vmul.f32 %v2562, 1.442695
        %v2594 = vpow.pop %v2593
        %v2595 = vsub.f32 %v2564, 1.0
        %v2596 = vsub.f32 %v2566, 1.0
        %v2597 = vsub.f32 %v2568, 1.0
        %v2598 = vsub.f32 %v2570, 1.0
        %v2599 = vsub.f32 %v2572, 1.0
        %v2600 = vsub.f32 %v2574, 1.0
        %v2601 = vsub.f32 %v2576, 1.0
        %v2602 = vsub.f32 %v2578, 1.0
        %v2603 = vsub.f32 %v2580, 1.0
        %v2604 = vsub.f32 %v2582, 1.0
        %v2605 = vsub.f32 %v2584, 1.0
        %v2606 = vsub.f32 %v2586, 1.0
        %v2607 = vsub.f32 %v2588, 1.0
        %v2608 = vsub.f32 %v2590, 1.0
        %v2609 = vsub.f32 %v2592, 1.0
        %v2610 = vsub.f32 %v2594, 1.0
        %v2611 = vsel %vm2531, %v2469, %v2595
        %v2612 = vsel %vm2532, %v2472, %v2596
        %v2613 = vsel %vm2533, %v2477, %v2597
        %v2614 = vsel %vm2534, %v2480, %v2598
        %v2615 = vsel %vm2535, %v2485, %v2599
        %v2616 = vsel %vm2536, %v2488, %v2600
        %v2617 = vsel %vm2537, %v2493, %v2601
        %v2618 = vsel %vm2538, %v2496, %v2602
        %v2619 = vsel %vm2539, %v2501, %v2603
        %v2620 = vsel %vm2540, %v2504, %v2604
        %v2621 = vsel %vm2541, %v2509, %v2605
        %v2622 = vsel %vm2542, %v2512, %v2606
        %v2623 = vsel %vm2543, %v2517, %v2607
        %v2624 = vsel %vm2544, %v2520, %v2608
        %v2625 = vsel %vm2545, %v2525, %v2609
        %v2626 = vsel %vm2546, %v2528, %v2610
        %2627 = vset.pattern.permute.xlu0 7
        %2628 = vperm.xlu0 %2627, %v838
        %v2629 = vpop.permute.xlu0 %2628
        %2631 = vset.pattern.permute.xlu0 7
        %2632 = vperm.xlu0 %2631, %v841
        %v2633 = vpop.permute.xlu0 %2632
        %2635 = vset.pattern.permute.xlu0 7
        %2636 = vperm.xlu0 %2635, %v846
        %v2637 = vpop.permute.xlu0 %2636
        %2639 = vset.pattern.permute.xlu0 7
        %2640 = vperm.xlu0 %2639, %v849
        %v2641 = vpop.permute.xlu0 %2640
        %2643 = vset.pattern.permute.xlu0 7
        %2644 = vperm.xlu0 %2643, %v854
        %v2645 = vpop.permute.xlu0 %2644
        %2647 = vset.pattern.permute.xlu0 7
        %2648 = vperm.xlu0 %2647, %v857
        %v2649 = vpop.permute.xlu0 %2648
        %2651 = vset.pattern.permute.xlu0 7
        %2652 = vperm.xlu0 %2651, %v862
        %v2653 = vpop.permute.xlu0 %2652
        %2655 = vset.pattern.permute.xlu0 7
        %2656 = vperm.xlu0 %2655, %v865
        %v2657 = vpop.permute.xlu0 %2656
        %2659 = vset.pattern.permute.xlu0 7
        %2660 = vperm.xlu0 %2659, %v870
        %v2661 = vpop.permute.xlu0 %2660
        %2663 = vset.pattern.permute.xlu0 7
        %2664 = vperm.xlu0 %2663, %v873
        %v2665 = vpop.permute.xlu0 %2664
        %2667 = vset.pattern.permute.xlu0 7
        %2668 = vperm.xlu0 %2667, %v878
        %v2669 = vpop.permute.xlu0 %2668
        %2671 = vset.pattern.permute.xlu0 7
        %2672 = vperm.xlu0 %2671, %v881
        %v2673 = vpop.permute.xlu0 %2672
        %2675 = vset.pattern.permute.xlu0 7
        %2676 = vperm.xlu0 %2675, %v886
        %v2677 = vpop.permute.xlu0 %2676
        %2679 = vset.pattern.permute.xlu0 7
        %2680 = vperm.xlu0 %2679, %v889
        %v2681 = vpop.permute.xlu0 %2680
        %2683 = vset.pattern.permute.xlu0 7
        %2684 = vperm.xlu0 %2683, %v894
        %v2685 = vpop.permute.xlu0 %2684
        %2687 = vset.pattern.permute.xlu0 7
        %2688 = vperm.xlu0 %2687, %v897
        %v2689 = vpop.permute.xlu0 %2688
        %v2691 = vlaneseq
        %v2692 = vshrl.u32 %v2691, 7
        %v2693 = vsub.s32 3, %v2692
        %v2694 = vrot.slane %v916, %v2693
        %v2695 = vadd.f32 %v2629, %v2694
        %v2696 = vadd.f32 %v2633, %v2694
        %v2697 = vadd.f32 %v2637, %v2694
        %v2698 = vadd.f32 %v2641, %v2694
        %v2699 = vadd.f32 %v2645, %v2694
        %v2700 = vadd.f32 %v2649, %v2694
        %v2701 = vadd.f32 %v2653, %v2694
        %v2702 = vadd.f32 %v2657, %v2694
        %v2703 = vadd.f32 %v2661, %v2694
        %v2704 = vadd.f32 %v2665, %v2694
        %v2705 = vadd.f32 %v2669, %v2694
        %v2706 = vadd.f32 %v2673, %v2694
        %v2707 = vadd.f32 %v2677, %v2694
        %v2708 = vadd.f32 %v2681, %v2694
        %v2709 = vadd.f32 %v2685, %v2694
        %v2710 = vadd.f32 %v2689, %v2694
        %vm2711 = vcmp.gt.f32.partialorder %v2695, 0.0
        %vm2712 = vcmp.gt.f32.partialorder %v2696, 0.0
        %vm2713 = vcmp.gt.f32.partialorder %v2697, 0.0
        %vm2714 = vcmp.gt.f32.partialorder %v2698, 0.0
        %vm2715 = vcmp.gt.f32.partialorder %v2699, 0.0
        %vm2716 = vcmp.gt.f32.partialorder %v2700, 0.0
        %vm2717 = vcmp.gt.f32.partialorder %v2701, 0.0
        %vm2718 = vcmp.gt.f32.partialorder %v2702, 0.0
        %vm2719 = vcmp.gt.f32.partialorder %v2703, 0.0
        %vm2720 = vcmp.gt.f32.partialorder %v2704, 0.0
        %vm2721 = vcmp.gt.f32.partialorder %v2705, 0.0
        %vm2722 = vcmp.gt.f32.partialorder %v2706, 0.0
        %vm2723 = vcmp.gt.f32.partialorder %v2707, 0.0
        %vm2724 = vcmp.gt.f32.partialorder %v2708, 0.0
        %vm2725 = vcmp.gt.f32.partialorder %v2709, 0.0
        %vm2726 = vcmp.gt.f32.partialorder %v2710, 0.0
        %v2727 = vmul.f32 %v2695, 0.2
        %v2728 = vmul.f32 %v2696, 0.2
        %v2729 = vmul.f32 %v2697, 0.2
        %v2730 = vmul.f32 %v2698, 0.2
        %v2731 = vmul.f32 %v2699, 0.2
        %v2732 = vmul.f32 %v2700, 0.2
        %v2733 = vmul.f32 %v2701, 0.2
        %v2734 = vmul.f32 %v2702, 0.2
        %v2735 = vmul.f32 %v2703, 0.2
        %v2736 = vmul.f32 %v2704, 0.2
        %v2737 = vmul.f32 %v2705, 0.2
        %v2738 = vmul.f32 %v2706, 0.2
        %v2739 = vmul.f32 %v2707, 0.2
        %v2740 = vmul.f32 %v2708, 0.2
        %v2741 = vmul.f32 %v2709, 0.2
        %v2742 = vmul.f32 %v2710, 0.2
        %v2743 = vsel %vm2711, %v2695, %v2727
        %v2744 = vsel %vm2712, %v2696, %v2728
        %v2745 = vsel %vm2713, %v2697, %v2729
        %v2746 = vsel %vm2714, %v2698, %v2730
        %v2747 = vsel %vm2715, %v2699, %v2731
        %v2748 = vsel %vm2716, %v2700, %v2732
        %v2749 = vsel %vm2717, %v2701, %v2733
        %v2750 = vsel %vm2718, %v2702, %v2734
        %v2751 = vsel %vm2719, %v2703, %v2735
        %v2752 = vsel %vm2720, %v2704, %v2736
        %v2753 = vsel %vm2721, %v2705, %v2737
        %v2754 = vsel %vm2722, %v2706, %v2738
        %v2755 = vsel %vm2723, %v2707, %v2739
        %v2756 = vsel %vm2724, %v2708, %v2740
        %v2757 = vsel %vm2725, %v2709, %v2741
        %v2758 = vsel %vm2726, %v2710, %v2742
        %v2759 = vadd.f32 %v2743, %v513
        %v2760 = vadd.f32 %v2744, %v514
        %v2761 = vadd.f32 %v2745, %v515
        %v2762 = vadd.f32 %v2746, %v516
        %v2763 = vadd.f32 %v2747, %v517
        %v2764 = vadd.f32 %v2748, %v518
        %v2765 = vadd.f32 %v2749, %v519
        %v2766 = vadd.f32 %v2750, %v520
        %v2767 = vadd.f32 %v2751, %v521
        %v2768 = vadd.f32 %v2752, %v522
        %v2769 = vadd.f32 %v2753, %v523
        %v2770 = vadd.f32 %v2754, %v524
        %v2771 = vadd.f32 %v2755, %v525
        %v2772 = vadd.f32 %v2756, %v526
        %v2773 = vadd.f32 %v2757, %v527
        %v2774 = vadd.f32 %v2758, %v528
        %2775 = vmax.xlane.f32.xlu0 %v2759
        %v2776 = vpop.xlane.xlu0 %2775
        %2777 = vmax.xlane.f32.xlu0 %v2760
        %v2778 = vpop.xlane.xlu0 %2777
        %2779 = vmax.xlane.f32.xlu0 %v2761
        %v2780 = vpop.xlane.xlu0 %2779
        %2781 = vmax.xlane.f32.xlu0 %v2762
        %v2782 = vpop.xlane.xlu0 %2781
        %2783 = vmax.xlane.f32.xlu0 %v2763
        %v2784 = vpop.xlane.xlu0 %2783
        %2785 = vmax.xlane.f32.xlu0 %v2764
        %v2786 = vpop.xlane.xlu0 %2785
        %2787 = vmax.xlane.f32.xlu0 %v2765
        %v2788 = vpop.xlane.xlu0 %2787
        %2789 = vmax.xlane.f32.xlu0 %v2766
        %v2790 = vpop.xlane.xlu0 %2789
        %2791 = vmax.xlane.f32.xlu0 %v2767
        %v2792 = vpop.xlane.xlu0 %2791
        %2793 = vmax.xlane.f32.xlu0 %v2768
        %v2794 = vpop.xlane.xlu0 %2793
        %2795 = vmax.xlane.f32.xlu0 %v2769
        %v2796 = vpop.xlane.xlu0 %2795
        %2797 = vmax.xlane.f32.xlu0 %v2770
        %v2798 = vpop.xlane.xlu0 %2797
        %2799 = vmax.xlane.f32.xlu0 %v2771
        %v2800 = vpop.xlane.xlu0 %2799
        %2801 = vmax.xlane.f32.xlu0 %v2772
        %v2802 = vpop.xlane.xlu0 %2801
        %2803 = vmax.xlane.f32.xlu0 %v2773
        %v2804 = vpop.xlane.xlu0 %2803
        %2805 = vmax.xlane.f32.xlu0 %v2774
        %v2806 = vpop.xlane.xlu0 %2805
        %v2807 = vsub.f32 %v2759, %v2776
        %v2808 = vsub.f32 %v2760, %v2778
        %v2809 = vsub.f32 %v2761, %v2780
        %v2810 = vsub.f32 %v2762, %v2782
        %v2811 = vsub.f32 %v2763, %v2784
        %v2812 = vsub.f32 %v2764, %v2786
        %v2813 = vsub.f32 %v2765, %v2788
        %v2814 = vsub.f32 %v2766, %v2790
        %v2815 = vsub.f32 %v2767, %v2792
        %v2816 = vsub.f32 %v2768, %v2794
        %v2817 = vsub.f32 %v2769, %v2796
        %v2818 = vsub.f32 %v2770, %v2798
        %v2819 = vsub.f32 %v2771, %v2800
        %v2820 = vsub.f32 %v2772, %v2802
        %v2821 = vsub.f32 %v2773, %v2804
        %v2822 = vsub.f32 %v2774, %v2806
        %v2823 = vmul.f32 %v2807, 1.442695
        %v2824 = vpow.pop %v2823
        %v2825 = vmul.f32 %v2808, 1.442695
        %v2826 = vpow.pop %v2825
        %v2827 = vmul.f32 %v2809, 1.442695
        %v2828 = vpow.pop %v2827
        %v2829 = vmul.f32 %v2810, 1.442695
        %v2830 = vpow.pop %v2829
        %v2831 = vmul.f32 %v2811, 1.442695
        %v2832 = vpow.pop %v2831
        %v2833 = vmul.f32 %v2812, 1.442695
        %v2834 = vpow.pop %v2833
        %v2835 = vmul.f32 %v2813, 1.442695
        %v2836 = vpow.pop %v2835
        %v2837 = vmul.f32 %v2814, 1.442695
        %v2838 = vpow.pop %v2837
        %v2839 = vmul.f32 %v2815, 1.442695
        %v2840 = vpow.pop %v2839
        %v2841 = vmul.f32 %v2816, 1.442695
        %v2842 = vpow.pop %v2841
        %v2843 = vmul.f32 %v2817, 1.442695
        %v2844 = vpow.pop %v2843
        %v2845 = vmul.f32 %v2818, 1.442695
        %v2846 = vpow.pop %v2845
        %v2847 = vmul.f32 %v2819, 1.442695
        %v2848 = vpow.pop %v2847
        %v2849 = vmul.f32 %v2820, 1.442695
        %v2850 = vpow.pop %v2849
        %v2851 = vmul.f32 %v2821, 1.442695
        %v2852 = vpow.pop %v2851
        %v2853 = vmul.f32 %v2822, 1.442695
        %v2854 = vpow.pop %v2853
        %v2855 = vsel %vm529, %v2824, 0.0
        %v2856 = vsel %vm530, %v2826, 0.0
        %v2857 = vsel %vm531, %v2828, 0.0
        %v2858 = vsel %vm532, %v2830, 0.0
        %v2859 = vsel %vm533, %v2832, 0.0
        %v2860 = vsel %vm534, %v2834, 0.0
        %v2861 = vsel %vm535, %v2836, 0.0
        %v2862 = vsel %vm536, %v2838, 0.0
        %v2863 = vsel %vm537, %v2840, 0.0
        %v2864 = vsel %vm538, %v2842, 0.0
        %v2865 = vsel %vm539, %v2844, 0.0
        %v2866 = vsel %vm540, %v2846, 0.0
        %v2867 = vsel %vm541, %v2848, 0.0
        %v2868 = vsel %vm542, %v2850, 0.0
        %v2869 = vsel %vm543, %v2852, 0.0
        %v2870 = vsel %vm544, %v2854, 0.0
        %2871 = vadd.xlane.f32.xlu0 %v2855
        %v2872 = vpop.xlane.xlu0 %2871
        %2873 = vadd.xlane.f32.xlu0 %v2856
        %v2874 = vpop.xlane.xlu0 %2873
        %2875 = vadd.xlane.f32.xlu0 %v2857
        %v2876 = vpop.xlane.xlu0 %2875
        %2877 = vadd.xlane.f32.xlu0 %v2858
        %v2878 = vpop.xlane.xlu0 %2877
        %2879 = vadd.xlane.f32.xlu0 %v2859
        %v2880 = vpop.xlane.xlu0 %2879
        %2881 = vadd.xlane.f32.xlu0 %v2860
        %v2882 = vpop.xlane.xlu0 %2881
        %2883 = vadd.xlane.f32.xlu0 %v2861
        %v2884 = vpop.xlane.xlu0 %2883
        %2885 = vadd.xlane.f32.xlu0 %v2862
        %v2886 = vpop.xlane.xlu0 %2885
        %2887 = vadd.xlane.f32.xlu0 %v2863
        %v2888 = vpop.xlane.xlu0 %2887
        %2889 = vadd.xlane.f32.xlu0 %v2864
        %v2890 = vpop.xlane.xlu0 %2889
        %2891 = vadd.xlane.f32.xlu0 %v2865
        %v2892 = vpop.xlane.xlu0 %2891
        %2893 = vadd.xlane.f32.xlu0 %v2866
        %v2894 = vpop.xlane.xlu0 %2893
        %2895 = vadd.xlane.f32.xlu0 %v2867
        %v2896 = vpop.xlane.xlu0 %2895
        %2897 = vadd.xlane.f32.xlu0 %v2868
        %v2898 = vpop.xlane.xlu0 %2897
        %2899 = vadd.xlane.f32.xlu0 %v2869
        %v2900 = vpop.xlane.xlu0 %2899
        %2901 = vadd.xlane.f32.xlu0 %v2870
        %v2902 = vpop.xlane.xlu0 %2901
        %vm2903 = vcmp.eq.f32.partialorder %v2872, 0.0
        %vm2904 = vcmp.eq.f32.partialorder %v2874, 0.0
        %vm2905 = vcmp.eq.f32.partialorder %v2876, 0.0
        %vm2906 = vcmp.eq.f32.partialorder %v2878, 0.0
        %vm2907 = vcmp.eq.f32.partialorder %v2880, 0.0
        %vm2908 = vcmp.eq.f32.partialorder %v2882, 0.0
        %vm2909 = vcmp.eq.f32.partialorder %v2884, 0.0
        %vm2910 = vcmp.eq.f32.partialorder %v2886, 0.0
        %vm2911 = vcmp.eq.f32.partialorder %v2888, 0.0
        %vm2912 = vcmp.eq.f32.partialorder %v2890, 0.0
        %vm2913 = vcmp.eq.f32.partialorder %v2892, 0.0
        %vm2914 = vcmp.eq.f32.partialorder %v2894, 0.0
        %vm2915 = vcmp.eq.f32.partialorder %v2896, 0.0
        %vm2916 = vcmp.eq.f32.partialorder %v2898, 0.0
        %vm2917 = vcmp.eq.f32.partialorder %v2900, 0.0
        %vm2918 = vcmp.eq.f32.partialorder %v2902, 0.0
        %v2919 = vsel %vm2903, 1.0, %v2872
        %v2920 = vsel %vm2904, 1.0, %v2874
        %v2921 = vsel %vm2905, 1.0, %v2876
        %v2922 = vsel %vm2906, 1.0, %v2878
        %v2923 = vsel %vm2907, 1.0, %v2880
        %v2924 = vsel %vm2908, 1.0, %v2882
        %v2925 = vsel %vm2909, 1.0, %v2884
        %v2926 = vsel %vm2910, 1.0, %v2886
        %v2927 = vsel %vm2911, 1.0, %v2888
        %v2928 = vsel %vm2912, 1.0, %v2890
        %v2929 = vsel %vm2913, 1.0, %v2892
        %v2930 = vsel %vm2914, 1.0, %v2894
        %v2931 = vsel %vm2915, 1.0, %v2896
        %v2932 = vsel %vm2916, 1.0, %v2898
        %v2933 = vsel %vm2917, 1.0, %v2900
        %v2934 = vsel %vm2918, 1.0, %v2902
        %v2935 = vrcp.pop %v2919
        %v2936 = vrcp.pop %v2920
        %v2937 = vrcp.pop %v2921
        %v2938 = vrcp.pop %v2922
        %v2939 = vrcp.pop %v2923
        %v2940 = vrcp.pop %v2924
        %v2941 = vrcp.pop %v2925
        %v2942 = vrcp.pop %v2926
        %v2943 = vrcp.pop %v2927
        %v2944 = vrcp.pop %v2928
        %v2945 = vrcp.pop %v2929
        %v2946 = vrcp.pop %v2930
        %v2947 = vrcp.pop %v2931
        %v2948 = vrcp.pop %v2932
        %v2949 = vrcp.pop %v2933
        %v2950 = vrcp.pop %v2934
        %v2951 = vmul.f32 %v2855, %v2935
        %v2952 = vmul.f32 %v2856, %v2936
        %v2953 = vmul.f32 %v2857, %v2937
        %v2954 = vmul.f32 %v2858, %v2938
        %v2955 = vmul.f32 %v2859, %v2939
        %v2956 = vmul.f32 %v2860, %v2940
        %v2957 = vmul.f32 %v2861, %v2941
        %v2958 = vmul.f32 %v2862, %v2942
        %v2959 = vmul.f32 %v2863, %v2943
        %v2960 = vmul.f32 %v2864, %v2944
        %v2961 = vmul.f32 %v2865, %v2945
        %v2962 = vmul.f32 %v2866, %v2946
        %v2963 = vmul.f32 %v2867, %v2947
        %v2964 = vmul.f32 %v2868, %v2948
        %v2965 = vmul.f32 %v2869, %v2949
        %v2966 = vmul.f32 %v2870, %v2950
        %v2967 = vpack.c.bf16 %v2952, %v2951
        %v2968 = vpack.c.bf16 %v2954, %v2953
        %v2969 = vpack.c.bf16 %v2956, %v2955
        %v2970 = vpack.c.bf16 %v2958, %v2957
        %v2971 = vpack.c.bf16 %v2960, %v2959
        %v2972 = vpack.c.bf16 %v2962, %v2961
        %v2973 = vpack.c.bf16 %v2964, %v2963
        %v2974 = vpack.c.bf16 %v2966, %v2965
        %2975 = vrot.lane.b32.xlu0 %v731, 32
        %v2976 = vpop.permute.xlu0 %2975
        %2977 = vrot.lane.b32.xlu0 %v732, 32
        %v2978 = vpop.permute.xlu0 %2977
        %2979 = vrot.lane.b32.xlu0 %v733, 32
        %v2980 = vpop.permute.xlu0 %2979
        %2981 = vrot.lane.b32.xlu0 %v734, 32
        %v2982 = vpop.permute.xlu0 %2981
        %2983 = vrot.lane.b32.xlu0 %v735, 32
        %v2984 = vpop.permute.xlu0 %2983
        %2985 = vrot.lane.b32.xlu0 %v736, 32
        %v2986 = vpop.permute.xlu0 %2985
        %2987 = vrot.lane.b32.xlu0 %v737, 32
        %v2988 = vpop.permute.xlu0 %2987
        %2989 = vrot.lane.b32.xlu0 %v738, 32
        %v2990 = vpop.permute.xlu0 %2989
        %2999 = vmatprep.subr.bf16.mxu0 0
        %3000 = vmatpush1.bf16.msra.mxu0 %v2976
        %3001 = vmatprep.subr.bf16.mxu0 0
        %3002 = vmatpush1.bf16.msra.mxu0 %v2978
        %3003 = vmatprep.subr.bf16.mxu0 0
        %3004 = vmatpush1.bf16.msra.mxu0 %v2980
        %3005 = vmatprep.subr.bf16.mxu0 0
        %3006 = vmatpush1.bf16.msra.mxu0 %v2982
        %3007 = vmatprep.subr.bf16.mxu0 0
        %3008 = vmatpush1.bf16.msra.mxu0 %v2984
        %3009 = vmatprep.subr.bf16.mxu0 0
        %3010 = vmatpush1.bf16.msra.mxu0 %v2986
        %3011 = vmatprep.subr.bf16.mxu0 0
        %3012 = vmatpush1.bf16.msra.mxu0 %v2988
        %3013 = vmatprep.subr.bf16.mxu0 0
        %3014 = vmatpush1.bf16.msra.mxu0 %v2990
        %3015 = vmatprep.subr.bf16.mxu0 0
        %3016 = vmatpush1.bf16.msra.mxu0 0
        %3017 = vmatprep.subr.bf16.mxu0 0
        %3018 = vmatpush1.bf16.msra.mxu0 0
        %3019 = vmatprep.subr.bf16.mxu0 0
        %3020 = vmatpush1.bf16.msra.mxu0 0
        %3021 = vmatprep.subr.bf16.mxu0 0
        %3022 = vmatpush1.bf16.msra.mxu0 0
        %3023 = vmatprep.subr.bf16.mxu0 0
        %3024 = vmatpush1.bf16.msra.mxu0 0
        %3025 = vmatprep.subr.bf16.mxu0 0
        %3026 = vmatpush1.bf16.msra.mxu0 0
        %3027 = vmatprep.subr.bf16.mxu0 0
        %3028 = vmatpush1.bf16.msra.mxu0 0
        %3029 = vmatprep.subr.bf16.mxu0 0
        %3030 = vmatpush1.bf16.msra.mxu0 0
        %3031 = vmatprep.mubr.bf16.mxu0 0
        %3032 = vmatmul.mubr.bf16.gmra.mrb[0].mxu0 %v2967
        %v3033 = vpop.f32.mrb[0].mxu0
        %v3034 = vadd.f32 0.0, %v3033
        %v3035 = vpop.f32.mrb[0].mxu0
        %v3036 = vpop.f32.mrb[0].mxu0
        %v3037 = vadd.f32 0.0, %v3036
        %v3038 = vpop.f32.mrb[0].mxu0
        %3039 = vmatprep.mubr.bf16.mxu0 0
        %3040 = vmatmul.mubr.bf16.gmra.mrb[0].mxu0 %v2968
        %v3041 = vpop.f32.mrb[0].mxu0
        %v3042 = vadd.f32 0.0, %v3041
        %v3043 = vpop.f32.mrb[0].mxu0
        %v3044 = vpop.f32.mrb[0].mxu0
        %v3045 = vadd.f32 0.0, %v3044
        %v3046 = vpop.f32.mrb[0].mxu0
        %3047 = vmatprep.mubr.bf16.mxu0 0
        %3048 = vmatmul.mubr.bf16.gmra.mrb[0].mxu0 %v2969
        %v3049 = vpop.f32.mrb[0].mxu0
        %v3050 = vadd.f32 0.0, %v3049
        %v3051 = vpop.f32.mrb[0].mxu0
        %v3052 = vpop.f32.mrb[0].mxu0
        %v3053 = vadd.f32 0.0, %v3052
        %v3054 = vpop.f32.mrb[0].mxu0
        %3055 = vmatprep.mubr.bf16.mxu0 0
        %3056 = vmatmul.mubr.bf16.gmra.mrb[0].mxu0 %v2970
        %v3057 = vpop.f32.mrb[0].mxu0
        %v3058 = vadd.f32 0.0, %v3057
        %v3059 = vpop.f32.mrb[0].mxu0
        %v3060 = vpop.f32.mrb[0].mxu0
        %v3061 = vadd.f32 0.0, %v3060
        %v3062 = vpop.f32.mrb[0].mxu0
        %3063 = vmatprep.mubr.bf16.mxu0 0
        %3064 = vmatmul.mubr.bf16.gmra.mrb[0].mxu0 %v2971
        %v3065 = vpop.f32.mrb[0].mxu0
        %v3066 = vadd.f32 0.0, %v3065
        %v3067 = vpop.f32.mrb[0].mxu0
        %v3068 = vpop.f32.mrb[0].mxu0
        %v3069 = vadd.f32 0.0, %v3068
        %v3070 = vpop.f32.mrb[0].mxu0
        %3071 = vmatprep.mubr.bf16.mxu0 0
        %3072 = vmatmul.mubr.bf16.gmra.mrb[0].mxu0 %v2972
        %v3073 = vpop.f32.mrb[0].mxu0
        %v3074 = vadd.f32 0.0, %v3073
        %v3075 = vpop.f32.mrb[0].mxu0
        %v3076 = vpop.f32.mrb[0].mxu0
        %v3077 = vadd.f32 0.0, %v3076
        %v3078 = vpop.f32.mrb[0].mxu0
        %3079 = vmatprep.mubr.bf16.mxu0 0
        %3080 = vmatmul.mubr.bf16.gmra.mrb[0].mxu0 %v2973
        %v3081 = vpop.f32.mrb[0].mxu0
        %v3082 = vadd.f32 0.0, %v3081
        %v3083 = vpop.f32.mrb[0].mxu0
        %v3084 = vpop.f32.mrb[0].mxu0
        %v3085 = vadd.f32 0.0, %v3084
        %v3086 = vpop.f32.mrb[0].mxu0
        %3087 = vmatprep.mubr.bf16.mxu0 0
        %3088 = vmatmul.mubr.bf16.gmra.mrb[0].mxu0 %v2974
        %v3089 = vpop.f32.mrb[0].mxu0
        %v3090 = vadd.f32 0.0, %v3089
        %v3091 = vpop.f32.mrb[0].mxu0
        %v3092 = vpop.f32.mrb[0].mxu0
        %v3093 = vadd.f32 0.0, %v3092
        %v3094 = vpop.f32.mrb[0].mxu0
        %3095 = vdwg.mxu0
        %vm3096 = vcmp.gt.f32.partialorder %v3034, 0.0
        %vm3097 = vcmp.gt.f32.partialorder %v3037, 0.0
        %vm3098 = vcmp.gt.f32.partialorder %v3042, 0.0
        %vm3099 = vcmp.gt.f32.partialorder %v3045, 0.0
        %vm3100 = vcmp.gt.f32.partialorder %v3050, 0.0
        %vm3101 = vcmp.gt.f32.partialorder %v3053, 0.0
        %vm3102 = vcmp.gt.f32.partialorder %v3058, 0.0
        %vm3103 = vcmp.gt.f32.partialorder %v3061, 0.0
        %vm3104 = vcmp.gt.f32.partialorder %v3066, 0.0
        %vm3105 = vcmp.gt.f32.partialorder %v3069, 0.0
        %vm3106 = vcmp.gt.f32.partialorder %v3074, 0.0
        %vm3107 = vcmp.gt.f32.partialorder %v3077, 0.0
        %vm3108 = vcmp.gt.f32.partialorder %v3082, 0.0
        %vm3109 = vcmp.gt.f32.partialorder %v3085, 0.0
        %vm3110 = vcmp.gt.f32.partialorder %v3090, 0.0
        %vm3111 = vcmp.gt.f32.partialorder %v3093, 0.0
        %v3112 = vmin.f32 %v3034, 0.0
        %v3113 = vmin.f32 %v3037, 0.0
        %v3114 = vmin.f32 %v3042, 0.0
        %v3115 = vmin.f32 %v3045, 0.0
        %v3116 = vmin.f32 %v3050, 0.0
        %v3117 = vmin.f32 %v3053, 0.0
        %v3118 = vmin.f32 %v3058, 0.0
        %v3119 = vmin.f32 %v3061, 0.0
        %v3120 = vmin.f32 %v3066, 0.0
        %v3121 = vmin.f32 %v3069, 0.0
        %v3122 = vmin.f32 %v3074, 0.0
        %v3123 = vmin.f32 %v3077, 0.0
        %v3124 = vmin.f32 %v3082, 0.0
        %v3125 = vmin.f32 %v3085, 0.0
        %v3126 = vmin.f32 %v3090, 0.0
        %v3127 = vmin.f32 %v3093, 0.0
        %v3128 = vmul.f32 %v3112, 1.442695
        %v3129 = vpow.pop %v3128
        %v3130 = vmul.f32 %v3113, 1.442695
        %v3131 = vpow.pop %v3130
        %v3132 = vmul.f32 %v3114, 1.442695
        %v3133 = vpow.pop %v3132
        %v3134 = vmul.f32 %v3115, 1.442695
        %v3135 = vpow.pop %v3134
        %v3136 = vmul.f32 %v3116, 1.442695
        %v3137 = vpow.pop %v3136
        %v3138 = vmul.f32 %v3117, 1.442695
        %v3139 = vpow.pop %v3138
        %v3140 = vmul.f32 %v3118, 1.442695
        %v3141 = vpow.pop %v3140
        %v3142 = vmul.f32 %v3119, 1.442695
        %v3143 = vpow.pop %v3142
        %v3144 = vmul.f32 %v3120, 1.442695
        %v3145 = vpow.pop %v3144
        %v3146 = vmul.f32 %v3121, 1.442695
        %v3147 = vpow.pop %v3146
        %v3148 = vmul.f32 %v3122, 1.442695
        %v3149 = vpow.pop %v3148
        %v3150 = vmul.f32 %v3123, 1.442695
        %v3151 = vpow.pop %v3150
        %v3152 = vmul.f32 %v3124, 1.442695
        %v3153 = vpow.pop %v3152
        %v3154 = vmul.f32 %v3125, 1.442695
        %v3155 = vpow.pop %v3154
        %v3156 = vmul.f32 %v3126, 1.442695
        %v3157 = vpow.pop %v3156
        %v3158 = vmul.f32 %v3127, 1.442695
        %v3159 = vpow.pop %v3158
        %v3160 = vsub.f32 %v3129, 1.0
        %v3161 = vsub.f32 %v3131, 1.0
        %v3162 = vsub.f32 %v3133, 1.0
        %v3163 = vsub.f32 %v3135, 1.0
        %v3164 = vsub.f32 %v3137, 1.0
        %v3165 = vsub.f32 %v3139, 1.0
        %v3166 = vsub.f32 %v3141, 1.0
        %v3167 = vsub.f32 %v3143, 1.0
        %v3168 = vsub.f32 %v3145, 1.0
        %v3169 = vsub.f32 %v3147, 1.0
        %v3170 = vsub.f32 %v3149, 1.0
        %v3171 = vsub.f32 %v3151, 1.0
        %v3172 = vsub.f32 %v3153, 1.0
        %v3173 = vsub.f32 %v3155, 1.0
        %v3174 = vsub.f32 %v3157, 1.0
        %v3175 = vsub.f32 %v3159, 1.0
        %v3176 = vsel %vm3096, %v3034, %v3160
        %v3177 = vsel %vm3097, %v3037, %v3161
        %v3178 = vsel %vm3098, %v3042, %v3162
        %v3179 = vsel %vm3099, %v3045, %v3163
        %v3180 = vsel %vm3100, %v3050, %v3164
        %v3181 = vsel %vm3101, %v3053, %v3165
        %v3182 = vsel %vm3102, %v3058, %v3166
        %v3183 = vsel %vm3103, %v3061, %v3167
        %v3184 = vsel %vm3104, %v3066, %v3168
        %v3185 = vsel %vm3105, %v3069, %v3169
        %v3186 = vsel %vm3106, %v3074, %v3170
        %v3187 = vsel %vm3107, %v3077, %v3171
        %v3188 = vsel %vm3108, %v3082, %v3172
        %v3189 = vsel %vm3109, %v3085, %v3173
        %v3190 = vsel %vm3110, %v3090, %v3174
        %v3191 = vsel %vm3111, %v3093, %v3175
        %v3192 = vpack.c.bf16 %v1474, %v1473
        %v3193 = vpack.c.bf16 %v1476, %v1475
        %v3194 = vpack.c.bf16 %v1478, %v1477
        %v3195 = vpack.c.bf16 %v1480, %v1479
        %v3196 = vpack.c.bf16 %v1482, %v1481
        %v3197 = vpack.c.bf16 %v1484, %v1483
        %v3198 = vpack.c.bf16 %v1486, %v1485
        %v3199 = vpack.c.bf16 %v1488, %v1487
        %v3200 = vld [vmem:[%s4] sm:$0xf]
        %v3201 = vld [vmem:[%s4 + $0x4] sm:$0xf]
        %v3202 = vld [vmem:[%s4 + $0x8] sm:$0xf]
        %v3203 = vld [vmem:[%s4 + $0xc] sm:$0xf]
        %v3204 = vpack.c.bf16 %v2047, %v2046
        %v3205 = vpack.c.bf16 %v2049, %v2048
        %v3206 = vpack.c.bf16 %v2051, %v2050
        %v3207 = vpack.c.bf16 %v2053, %v2052
        %v3208 = vpack.c.bf16 %v2055, %v2054
        %v3209 = vpack.c.bf16 %v2057, %v2056
        %v3210 = vpack.c.bf16 %v2059, %v2058
        %v3211 = vpack.c.bf16 %v2061, %v2060
        %v3212 = vld [vmem:[%s4 + $0x10] sm:$0xf]
        %v3213 = vld [vmem:[%s4 + $0x14] sm:$0xf]
        %v3214 = vld [vmem:[%s4 + $0x18] sm:$0xf]
        %v3215 = vld [vmem:[%s4 + $0x1c] sm:$0xf]
        %v3220 = vunpack.c.l.b16 %v3212
        %v3221 = vunpack.c.l.b16 %v3213
        %v3222 = vunpack.c.l.b16 %v3214
        %v3223 = vunpack.c.l.b16 %v3215
        %v3224 = vpack.c.b16 %v3221, %v3220
        %v3225 = vpack.c.b16 %v3223, %v3222
        %vm3228 = vcmask 261120
        %v3230 = vsel %vm3228, %v3204, 0
        %v3233 = vsel %vm3228, %v3205, 0
        %v3236 = vsel %vm3228, %v3206, 0
        %v3239 = vsel %vm3228, %v3207, 0
        %v3242 = vsel %vm3228, %v3208, 0
        %v3245 = vsel %vm3228, %v3209, 0
        %v3248 = vsel %vm3228, %v3210, 0
        %v3251 = vsel %vm3228, %v3211, 0
        %3253 = vmatprep.subr.bf16.mxu0 0
        %3254 = vmatpush1.bf16.msra.mxu0 %v3224
        %3255 = vmatprep.subr.bf16.mxu0 0
        %3256 = vmatpush1.bf16.msra.mxu0 %v3225
        %3257 = vmatprep.subr.bf16.mxu0 0
        %3258 = vmatpush1.bf16.msra.mxu0 0
        %3259 = vmatprep.subr.bf16.mxu0 0
        %3260 = vmatpush1.bf16.msra.mxu0 0
        %3261 = vmatprep.subr.bf16.mxu0 0
        %3262 = vmatpush1.bf16.msra.mxu0 0
        %3263 = vmatprep.subr.bf16.mxu0 0
        %3264 = vmatpush1.bf16.msra.mxu0 0
        %3265 = vmatprep.subr.bf16.mxu0 0
        %3266 = vmatpush1.bf16.msra.mxu0 0
        %3267 = vmatprep.subr.bf16.mxu0 0
        %3268 = vmatpush1.bf16.msra.mxu0 0
        %3269 = vmatprep.subr.bf16.mxu0 0
        %3270 = vmatpush1.bf16.msra.mxu0 0
        %3271 = vmatprep.subr.bf16.mxu0 0
        %3272 = vmatpush1.bf16.msra.mxu0 0
        %3273 = vmatprep.subr.bf16.mxu0 0
        %3274 = vmatpush1.bf16.msra.mxu0 0
        %3275 = vmatprep.subr.bf16.mxu0 0
        %3276 = vmatpush1.bf16.msra.mxu0 0
        %3277 = vmatprep.subr.bf16.mxu0 0
        %3278 = vmatpush1.bf16.msra.mxu0 0
        %3279 = vmatprep.subr.bf16.mxu0 0
        %3280 = vmatpush1.bf16.msra.mxu0 0
        %3281 = vmatprep.subr.bf16.mxu0 0
        %3282 = vmatpush1.bf16.msra.mxu0 0
        %3283 = vmatprep.subr.bf16.mxu0 0
        %3284 = vmatpush1.bf16.msra.mxu0 0
        %3285 = vmatprep.mubr.bf16.mxu0 0
        %3286 = vmatmul.mubr.bf16.gmra.mrb[0].mxu0 %v3230
        %v3287 = vpop.f32.mrb[0].mxu0
        %v3288 = vadd.f32 0.0, %v3287
        %v3289 = vpop.f32.mrb[0].mxu0
        %v3290 = vpop.f32.mrb[0].mxu0
        %v3291 = vadd.f32 0.0, %v3290
        %v3292 = vpop.f32.mrb[0].mxu0
        %3293 = vmatprep.mubr.bf16.mxu0 0
        %3294 = vmatmul.mubr.bf16.gmra.mrb[0].mxu0 %v3233
        %v3295 = vpop.f32.mrb[0].mxu0
        %v3296 = vadd.f32 0.0, %v3295
        %v3297 = vpop.f32.mrb[0].mxu0
        %v3298 = vpop.f32.mrb[0].mxu0
        %v3299 = vadd.f32 0.0, %v3298
        %v3300 = vpop.f32.mrb[0].mxu0
        %3301 = vmatprep.mubr.bf16.mxu0 0
        %3302 = vmatmul.mubr.bf16.gmra.mrb[0].mxu0 %v3236
        %v3303 = vpop.f32.mrb[0].mxu0
        %v3304 = vadd.f32 0.0, %v3303
        %v3305 = vpop.f32.mrb[0].mxu0
        %v3306 = vpop.f32.mrb[0].mxu0
        %v3307 = vadd.f32 0.0, %v3306
        %v3308 = vpop.f32.mrb[0].mxu0
        %3309 = vmatprep.mubr.bf16.mxu0 0
        %3310 = vmatmul.mubr.bf16.gmra.mrb[0].mxu0 %v3239
        %v3311 = vpop.f32.mrb[0].mxu0
        %v3312 = vadd.f32 0.0, %v3311
        %v3313 = vpop.f32.mrb[0].mxu0
        %v3314 = vpop.f32.mrb[0].mxu0
        %v3315 = vadd.f32 0.0, %v3314
        %v3316 = vpop.f32.mrb[0].mxu0
        %3317 = vmatprep.mubr.bf16.mxu0 0
        %3318 = vmatmul.mubr.bf16.gmra.mrb[0].mxu0 %v3242
        %v3319 = vpop.f32.mrb[0].mxu0
        %v3320 = vadd.f32 0.0, %v3319
        %v3321 = vpop.f32.mrb[0].mxu0
        %v3322 = vpop.f32.mrb[0].mxu0
        %v3323 = vadd.f32 0.0, %v3322
        %v3324 = vpop.f32.mrb[0].mxu0
        %3325 = vmatprep.mubr.bf16.mxu0 0
        %3326 = vmatmul.mubr.bf16.gmra.mrb[0].mxu0 %v3245
        %v3327 = vpop.f32.mrb[0].mxu0
        %v3328 = vadd.f32 0.0, %v3327
        %v3329 = vpop.f32.mrb[0].mxu0
        %v3330 = vpop.f32.mrb[0].mxu0
        %v3331 = vadd.f32 0.0, %v3330
        %v3332 = vpop.f32.mrb[0].mxu0
        %3333 = vmatprep.mubr.bf16.mxu0 0
        %3334 = vmatmul.mubr.bf16.gmra.mrb[0].mxu0 %v3248
        %v3335 = vpop.f32.mrb[0].mxu0
        %v3336 = vadd.f32 0.0, %v3335
        %v3337 = vpop.f32.mrb[0].mxu0
        %v3338 = vpop.f32.mrb[0].mxu0
        %v3339 = vadd.f32 0.0, %v3338
        %v3340 = vpop.f32.mrb[0].mxu0
        %3341 = vmatprep.mubr.bf16.mxu0 0
        %3342 = vmatmul.mubr.bf16.gmra.mrb[0].mxu0 %v3251
        %v3343 = vpop.f32.mrb[0].mxu0
        %v3344 = vadd.f32 0.0, %v3343
        %v3345 = vpop.f32.mrb[0].mxu0
        %v3346 = vpop.f32.mrb[0].mxu0
        %v3347 = vadd.f32 0.0, %v3346
        %v3348 = vpop.f32.mrb[0].mxu0
        %3349 = vdwg.mxu0
        %v3354 = vunpack.c.l.b16 %v3200
        %v3355 = vunpack.c.l.b16 %v3201
        %v3356 = vunpack.c.l.b16 %v3202
        %v3357 = vunpack.c.l.b16 %v3203
        %v3358 = vpack.c.b16 %v3355, %v3354
        %v3359 = vpack.c.b16 %v3357, %v3356
        %v3363 = vsel %vm3228, %v3192, 0
        %v3366 = vsel %vm3228, %v3193, 0
        %v3369 = vsel %vm3228, %v3194, 0
        %v3372 = vsel %vm3228, %v3195, 0
        %v3375 = vsel %vm3228, %v3196, 0
        %v3378 = vsel %vm3228, %v3197, 0
        %v3381 = vsel %vm3228, %v3198, 0
        %v3384 = vsel %vm3228, %v3199, 0
        %3386 = vmatprep.subr.bf16.mxu0 0
        %3387 = vmatpush1.bf16.msra.mxu0 %v3358
        %3388 = vmatprep.subr.bf16.mxu0 0
        %3389 = vmatpush1.bf16.msra.mxu0 %v3359
        %3390 = vmatprep.subr.bf16.mxu0 0
        %3391 = vmatpush1.bf16.msra.mxu0 0
        %3392 = vmatprep.subr.bf16.mxu0 0
        %3393 = vmatpush1.bf16.msra.mxu0 0
        %3394 = vmatprep.subr.bf16.mxu0 0
        %3395 = vmatpush1.bf16.msra.mxu0 0
        %3396 = vmatprep.subr.bf16.mxu0 0
        %3397 = vmatpush1.bf16.msra.mxu0 0
        %3398 = vmatprep.subr.bf16.mxu0 0
        %3399 = vmatpush1.bf16.msra.mxu0 0
        %3400 = vmatprep.subr.bf16.mxu0 0
        %3401 = vmatpush1.bf16.msra.mxu0 0
        %3402 = vmatprep.subr.bf16.mxu0 0
        %3403 = vmatpush1.bf16.msra.mxu0 0
        %3404 = vmatprep.subr.bf16.mxu0 0
        %3405 = vmatpush1.bf16.msra.mxu0 0
        %3406 = vmatprep.subr.bf16.mxu0 0
        %3407 = vmatpush1.bf16.msra.mxu0 0
        %3408 = vmatprep.subr.bf16.mxu0 0
        %3409 = vmatpush1.bf16.msra.mxu0 0
        %3410 = vmatprep.subr.bf16.mxu0 0
        %3411 = vmatpush1.bf16.msra.mxu0 0
        %3412 = vmatprep.subr.bf16.mxu0 0
        %3413 = vmatpush1.bf16.msra.mxu0 0
        %3414 = vmatprep.subr.bf16.mxu0 0
        %3415 = vmatpush1.bf16.msra.mxu0 0
        %3416 = vmatprep.subr.bf16.mxu0 0
        %3417 = vmatpush1.bf16.msra.mxu0 0
        %3418 = vmatprep.mubr.bf16.mxu0 0
        %3419 = vmatmul.mubr.bf16.gmra.mrb[0].mxu0 %v3363
        %v3420 = vpop.f32.mrb[0].mxu0
        %v3421 = vadd.f32 %v3288, %v3420
        %v3422 = vpop.f32.mrb[0].mxu0
        %v3423 = vpop.f32.mrb[0].mxu0
        %v3424 = vadd.f32 %v3291, %v3423
        %v3425 = vpop.f32.mrb[0].mxu0
        %3426 = vmatprep.mubr.bf16.mxu0 0
        %3427 = vmatmul.mubr.bf16.gmra.mrb[0].mxu0 %v3366
        %v3428 = vpop.f32.mrb[0].mxu0
        %v3429 = vadd.f32 %v3296, %v3428
        %v3430 = vpop.f32.mrb[0].mxu0
        %v3431 = vpop.f32.mrb[0].mxu0
        %v3432 = vadd.f32 %v3299, %v3431
        %v3433 = vpop.f32.mrb[0].mxu0
        %3434 = vmatprep.mubr.bf16.mxu0 0
        %3435 = vmatmul.mubr.bf16.gmra.mrb[0].mxu0 %v3369
        %v3436 = vpop.f32.mrb[0].mxu0
        %v3437 = vadd.f32 %v3304, %v3436
        %v3438 = vpop.f32.mrb[0].mxu0
        %v3439 = vpop.f32.mrb[0].mxu0
        %v3440 = vadd.f32 %v3307, %v3439
        %v3441 = vpop.f32.mrb[0].mxu0
        %3442 = vmatprep.mubr.bf16.mxu0 0
        %3443 = vmatmul.mubr.bf16.gmra.mrb[0].mxu0 %v3372
        %v3444 = vpop.f32.mrb[0].mxu0
        %v3445 = vadd.f32 %v3312, %v3444
        %v3446 = vpop.f32.mrb[0].mxu0
        %v3447 = vpop.f32.mrb[0].mxu0
        %v3448 = vadd.f32 %v3315, %v3447
        %v3449 = vpop.f32.mrb[0].mxu0
        %3450 = vmatprep.mubr.bf16.mxu0 0
        %3451 = vmatmul.mubr.bf16.gmra.mrb[0].mxu0 %v3375
        %v3452 = vpop.f32.mrb[0].mxu0
        %v3453 = vadd.f32 %v3320, %v3452
        %v3454 = vpop.f32.mrb[0].mxu0
        %v3455 = vpop.f32.mrb[0].mxu0
        %v3456 = vadd.f32 %v3323, %v3455
        %v3457 = vpop.f32.mrb[0].mxu0
        %3458 = vmatprep.mubr.bf16.mxu0 0
        %3459 = vmatmul.mubr.bf16.gmra.mrb[0].mxu0 %v3378
        %v3460 = vpop.f32.mrb[0].mxu0
        %v3461 = vadd.f32 %v3328, %v3460
        %v3462 = vpop.f32.mrb[0].mxu0
        %v3463 = vpop.f32.mrb[0].mxu0
        %v3464 = vadd.f32 %v3331, %v3463
        %v3465 = vpop.f32.mrb[0].mxu0
        %3466 = vmatprep.mubr.bf16.mxu0 0
        %3467 = vmatmul.mubr.bf16.gmra.mrb[0].mxu0 %v3381
        %v3468 = vpop.f32.mrb[0].mxu0
        %v3469 = vadd.f32 %v3336, %v3468
        %v3470 = vpop.f32.mrb[0].mxu0
        %v3471 = vpop.f32.mrb[0].mxu0
        %v3472 = vadd.f32 %v3339, %v3471
        %v3473 = vpop.f32.mrb[0].mxu0
        %3474 = vmatprep.mubr.bf16.mxu0 0
        %3475 = vmatmul.mubr.bf16.gmra.mrb[0].mxu0 %v3384
        %v3476 = vpop.f32.mrb[0].mxu0
        %v3477 = vadd.f32 %v3344, %v3476
        %v3478 = vpop.f32.mrb[0].mxu0
        %v3479 = vpop.f32.mrb[0].mxu0
        %v3480 = vadd.f32 %v3347, %v3479
        %v3481 = vpop.f32.mrb[0].mxu0
        %3482 = vdwg.mxu0
        %v3483 = vpack.c.bf16 %v2612, %v2611
        %v3484 = vpack.c.bf16 %v2614, %v2613
        %v3485 = vpack.c.bf16 %v2616, %v2615
        %v3486 = vpack.c.bf16 %v2618, %v2617
        %v3487 = vpack.c.bf16 %v2620, %v2619
        %v3488 = vpack.c.bf16 %v2622, %v2621
        %v3489 = vpack.c.bf16 %v2624, %v2623
        %v3490 = vpack.c.bf16 %v2626, %v2625
        %v3491 = vld [vmem:[%s4 + $0x20] sm:$0xf]
        %v3492 = vld [vmem:[%s4 + $0x24] sm:$0xf]
        %v3493 = vld [vmem:[%s4 + $0x28] sm:$0xf]
        %v3494 = vld [vmem:[%s4 + $0x2c] sm:$0xf]
        %v3499 = vunpack.c.l.b16 %v3491
        %v3500 = vunpack.c.l.b16 %v3492
        %v3501 = vunpack.c.l.b16 %v3493
        %v3502 = vunpack.c.l.b16 %v3494
        %v3503 = vpack.c.b16 %v3500, %v3499
        %v3504 = vpack.c.b16 %v3502, %v3501
        %v3508 = vsel %vm3228, %v3483, 0
        %v3511 = vsel %vm3228, %v3484, 0
        %v3514 = vsel %vm3228, %v3485, 0
        %v3517 = vsel %vm3228, %v3486, 0
        %v3520 = vsel %vm3228, %v3487, 0
        %v3523 = vsel %vm3228, %v3488, 0
        %v3526 = vsel %vm3228, %v3489, 0
        %v3529 = vsel %vm3228, %v3490, 0
        %3531 = vmatprep.subr.bf16.mxu0 0
        %3532 = vmatpush1.bf16.msra.mxu0 %v3503
        %3533 = vmatprep.subr.bf16.mxu0 0
        %3534 = vmatpush1.bf16.msra.mxu0 %v3504
        %3535 = vmatprep.subr.bf16.mxu0 0
        %3536 = vmatpush1.bf16.msra.mxu0 0
        %3537 = vmatprep.subr.bf16.mxu0 0
        %3538 = vmatpush1.bf16.msra.mxu0 0
        %3539 = vmatprep.subr.bf16.mxu0 0
        %3540 = vmatpush1.bf16.msra.mxu0 0
        %3541 = vmatprep.subr.bf16.mxu0 0
        %3542 = vmatpush1.bf16.msra.mxu0 0
        %3543 = vmatprep.subr.bf16.mxu0 0
        %3544 = vmatpush1.bf16.msra.mxu0 0
        %3545 = vmatprep.subr.bf16.mxu0 0
        %3546 = vmatpush1.bf16.msra.mxu0 0
        %3547 = vmatprep.subr.bf16.mxu0 0
        %3548 = vmatpush1.bf16.msra.mxu0 0
        %3549 = vmatprep.subr.bf16.mxu0 0
        %3550 = vmatpush1.bf16.msra.mxu0 0
        %3551 = vmatprep.subr.bf16.mxu0 0
        %3552 = vmatpush1.bf16.msra.mxu0 0
        %3553 = vmatprep.subr.bf16.mxu0 0
        %3554 = vmatpush1.bf16.msra.mxu0 0
        %3555 = vmatprep.subr.bf16.mxu0 0
        %3556 = vmatpush1.bf16.msra.mxu0 0
        %3557 = vmatprep.subr.bf16.mxu0 0
        %3558 = vmatpush1.bf16.msra.mxu0 0
        %3559 = vmatprep.subr.bf16.mxu0 0
        %3560 = vmatpush1.bf16.msra.mxu0 0
        %3561 = vmatprep.subr.bf16.mxu0 0
        %3562 = vmatpush1.bf16.msra.mxu0 0
        %3563 = vmatprep.mubr.bf16.mxu0 0
        %3564 = vmatmul.mubr.bf16.gmra.mrb[0].mxu0 %v3508
        %v3565 = vpop.f32.mrb[0].mxu0
        %v3566 = vadd.f32 0.0, %v3565
        %v3567 = vpop.f32.mrb[0].mxu0
        %v3568 = vpop.f32.mrb[0].mxu0
        %v3569 = vadd.f32 0.0, %v3568
        %v3570 = vpop.f32.mrb[0].mxu0
        %3571 = vmatprep.mubr.bf16.mxu0 0
        %3572 = vmatmul.mubr.bf16.gmra.mrb[0].mxu0 %v3511
        %v3573 = vpop.f32.mrb[0].mxu0
        %v3574 = vadd.f32 0.0, %v3573
        %v3575 = vpop.f32.mrb[0].mxu0
        %v3576 = vpop.f32.mrb[0].mxu0
        %v3577 = vadd.f32 0.0, %v3576
        %v3578 = vpop.f32.mrb[0].mxu0
        %3579 = vmatprep.mubr.bf16.mxu0 0
        %3580 = vmatmul.mubr.bf16.gmra.mrb[0].mxu0 %v3514
        %v3581 = vpop.f32.mrb[0].mxu0
        %v3582 = vadd.f32 0.0, %v3581
        %v3583 = vpop.f32.mrb[0].mxu0
        %v3584 = vpop.f32.mrb[0].mxu0
        %v3585 = vadd.f32 0.0, %v3584
        %v3586 = vpop.f32.mrb[0].mxu0
        %3587 = vmatprep.mubr.bf16.mxu0 0
        %3588 = vmatmul.mubr.bf16.gmra.mrb[0].mxu0 %v3517
        %v3589 = vpop.f32.mrb[0].mxu0
        %v3590 = vadd.f32 0.0, %v3589
        %v3591 = vpop.f32.mrb[0].mxu0
        %v3592 = vpop.f32.mrb[0].mxu0
        %v3593 = vadd.f32 0.0, %v3592
        %v3594 = vpop.f32.mrb[0].mxu0
        %3595 = vmatprep.mubr.bf16.mxu0 0
        %3596 = vmatmul.mubr.bf16.gmra.mrb[0].mxu0 %v3520
        %v3597 = vpop.f32.mrb[0].mxu0
        %v3598 = vadd.f32 0.0, %v3597
        %v3599 = vpop.f32.mrb[0].mxu0
        %v3600 = vpop.f32.mrb[0].mxu0
        %v3601 = vadd.f32 0.0, %v3600
        %v3602 = vpop.f32.mrb[0].mxu0
        %3603 = vmatprep.mubr.bf16.mxu0 0
        %3604 = vmatmul.mubr.bf16.gmra.mrb[0].mxu0 %v3523
        %v3605 = vpop.f32.mrb[0].mxu0
        %v3606 = vadd.f32 0.0, %v3605
        %v3607 = vpop.f32.mrb[0].mxu0
        %v3608 = vpop.f32.mrb[0].mxu0
        %v3609 = vadd.f32 0.0, %v3608
        %v3610 = vpop.f32.mrb[0].mxu0
        %3611 = vmatprep.mubr.bf16.mxu0 0
        %3612 = vmatmul.mubr.bf16.gmra.mrb[0].mxu0 %v3526
        %v3613 = vpop.f32.mrb[0].mxu0
        %v3614 = vadd.f32 0.0, %v3613
        %v3615 = vpop.f32.mrb[0].mxu0
        %v3616 = vpop.f32.mrb[0].mxu0
        %v3617 = vadd.f32 0.0, %v3616
        %v3618 = vpop.f32.mrb[0].mxu0
        %3619 = vmatprep.mubr.bf16.mxu0 0
        %3620 = vmatmul.mubr.bf16.gmra.mrb[0].mxu0 %v3529
        %v3621 = vpop.f32.mrb[0].mxu0
        %v3622 = vadd.f32 0.0, %v3621
        %v3623 = vpop.f32.mrb[0].mxu0
        %v3624 = vpop.f32.mrb[0].mxu0
        %v3625 = vadd.f32 0.0, %v3624
        %v3626 = vpop.f32.mrb[0].mxu0
        %3627 = vdwg.mxu0
        %v3628 = vadd.f32 %v3421, %v3566
        %v3629 = vadd.f32 %v3424, %v3569
        %v3630 = vadd.f32 %v3429, %v3574
        %v3631 = vadd.f32 %v3432, %v3577
        %v3632 = vadd.f32 %v3437, %v3582
        %v3633 = vadd.f32 %v3440, %v3585
        %v3634 = vadd.f32 %v3445, %v3590
        %v3635 = vadd.f32 %v3448, %v3593
        %v3636 = vadd.f32 %v3453, %v3598
        %v3637 = vadd.f32 %v3456, %v3601
        %v3638 = vadd.f32 %v3461, %v3606
        %v3639 = vadd.f32 %v3464, %v3609
        %v3640 = vadd.f32 %v3469, %v3614
        %v3641 = vadd.f32 %v3472, %v3617
        %v3642 = vadd.f32 %v3477, %v3622
        %v3643 = vadd.f32 %v3480, %v3625
        %v3644 = vpack.c.bf16 %v3177, %v3176
        %v3645 = vpack.c.bf16 %v3179, %v3178
        %v3646 = vpack.c.bf16 %v3181, %v3180
        %v3647 = vpack.c.bf16 %v3183, %v3182
        %v3648 = vpack.c.bf16 %v3185, %v3184
        %v3649 = vpack.c.bf16 %v3187, %v3186
        %v3650 = vpack.c.bf16 %v3189, %v3188
        %v3651 = vpack.c.bf16 %v3191, %v3190
        %v3652 = vld [vmem:[%s4 + $0x30] sm:$0xf]
        %v3653 = vld [vmem:[%s4 + $0x34] sm:$0xf]
        %v3654 = vld [vmem:[%s4 + $0x38] sm:$0xf]
        %v3655 = vld [vmem:[%s4 + $0x3c] sm:$0xf]
        %v3660 = vunpack.c.l.b16 %v3652
        %v3661 = vunpack.c.l.b16 %v3653
        %v3662 = vunpack.c.l.b16 %v3654
        %v3663 = vunpack.c.l.b16 %v3655
        %v3664 = vpack.c.b16 %v3661, %v3660
        %v3665 = vpack.c.b16 %v3663, %v3662
        %v3669 = vsel %vm3228, %v3644, 0
        %v3672 = vsel %vm3228, %v3645, 0
        %v3675 = vsel %vm3228, %v3646, 0
        %v3678 = vsel %vm3228, %v3647, 0
        %v3681 = vsel %vm3228, %v3648, 0
        %v3684 = vsel %vm3228, %v3649, 0
        %v3687 = vsel %vm3228, %v3650, 0
        %v3690 = vsel %vm3228, %v3651, 0
        %3692 = vmatprep.subr.bf16.mxu0 0
        %3693 = vmatpush1.bf16.msra.mxu0 %v3664
        %3694 = vmatprep.subr.bf16.mxu0 0
        %3695 = vmatpush1.bf16.msra.mxu0 %v3665
        %3696 = vmatprep.subr.bf16.mxu0 0
        %3697 = vmatpush1.bf16.msra.mxu0 0
        %3698 = vmatprep.subr.bf16.mxu0 0
        %3699 = vmatpush1.bf16.msra.mxu0 0
        %3700 = vmatprep.subr.bf16.mxu0 0
        %3701 = vmatpush1.bf16.msra.mxu0 0
        %3702 = vmatprep.subr.bf16.mxu0 0
        %3703 = vmatpush1.bf16.msra.mxu0 0
        %3704 = vmatprep.subr.bf16.mxu0 0
        %3705 = vmatpush1.bf16.msra.mxu0 0
        %3706 = vmatprep.subr.bf16.mxu0 0
        %3707 = vmatpush1.bf16.msra.mxu0 0
        %3708 = vmatprep.subr.bf16.mxu0 0
        %3709 = vmatpush1.bf16.msra.mxu0 0
        %3710 = vmatprep.subr.bf16.mxu0 0
        %3711 = vmatpush1.bf16.msra.mxu0 0
        %3712 = vmatprep.subr.bf16.mxu0 0
        %3713 = vmatpush1.bf16.msra.mxu0 0
        %3714 = vmatprep.subr.bf16.mxu0 0
        %3715 = vmatpush1.bf16.msra.mxu0 0
        %3716 = vmatprep.subr.bf16.mxu0 0
        %3717 = vmatpush1.bf16.msra.mxu0 0
        %3718 = vmatprep.subr.bf16.mxu0 0
        %3719 = vmatpush1.bf16.msra.mxu0 0
        %3720 = vmatprep.subr.bf16.mxu0 0
        %3721 = vmatpush1.bf16.msra.mxu0 0
        %3722 = vmatprep.subr.bf16.mxu0 0
        %3723 = vmatpush1.bf16.msra.mxu0 0
        %3724 = vmatprep.mubr.bf16.mxu0 0
        %3725 = vmatmul.mubr.bf16.gmra.mrb[0].mxu0 %v3669
        %v3726 = vpop.f32.mrb[0].mxu0
        %v3727 = vadd.f32 0.0, %v3726
        %v3728 = vpop.f32.mrb[0].mxu0
        %v3729 = vpop.f32.mrb[0].mxu0
        %v3730 = vadd.f32 0.0, %v3729
        %v3731 = vpop.f32.mrb[0].mxu0
        %3732 = vmatprep.mubr.bf16.mxu0 0
        %3733 = vmatmul.mubr.bf16.gmra.mrb[0].mxu0 %v3672
        %v3734 = vpop.f32.mrb[0].mxu0
        %v3735 = vadd.f32 0.0, %v3734
        %v3736 = vpop.f32.mrb[0].mxu0
        %v3737 = vpop.f32.mrb[0].mxu0
        %v3738 = vadd.f32 0.0, %v3737
        %v3739 = vpop.f32.mrb[0].mxu0
        %3740 = vmatprep.mubr.bf16.mxu0 0
        %3741 = vmatmul.mubr.bf16.gmra.mrb[0].mxu0 %v3675
        %v3742 = vpop.f32.mrb[0].mxu0
        %v3743 = vadd.f32 0.0, %v3742
        %v3744 = vpop.f32.mrb[0].mxu0
        %v3745 = vpop.f32.mrb[0].mxu0
        %v3746 = vadd.f32 0.0, %v3745
        %v3747 = vpop.f32.mrb[0].mxu0
        %3748 = vmatprep.mubr.bf16.mxu0 0
        %3749 = vmatmul.mubr.bf16.gmra.mrb[0].mxu0 %v3678
        %v3750 = vpop.f32.mrb[0].mxu0
        %v3751 = vadd.f32 0.0, %v3750
        %v3752 = vpop.f32.mrb[0].mxu0
        %v3753 = vpop.f32.mrb[0].mxu0
        %v3754 = vadd.f32 0.0, %v3753
        %v3755 = vpop.f32.mrb[0].mxu0
        %3756 = vmatprep.mubr.bf16.mxu0 0
        %3757 = vmatmul.mubr.bf16.gmra.mrb[0].mxu0 %v3681
        %v3758 = vpop.f32.mrb[0].mxu0
        %v3759 = vadd.f32 0.0, %v3758
        %v3760 = vpop.f32.mrb[0].mxu0
        %v3761 = vpop.f32.mrb[0].mxu0
        %v3762 = vadd.f32 0.0, %v3761
        %v3763 = vpop.f32.mrb[0].mxu0
        %3764 = vmatprep.mubr.bf16.mxu0 0
        %3765 = vmatmul.mubr.bf16.gmra.mrb[0].mxu0 %v3684
        %v3766 = vpop.f32.mrb[0].mxu0
        %v3767 = vadd.f32 0.0, %v3766
        %v3768 = vpop.f32.mrb[0].mxu0
        %v3769 = vpop.f32.mrb[0].mxu0
        %v3770 = vadd.f32 0.0, %v3769
        %v3771 = vpop.f32.mrb[0].mxu0
        %3772 = vmatprep.mubr.bf16.mxu0 0
        %3773 = vmatmul.mubr.bf16.gmra.mrb[0].mxu0 %v3687
        %v3774 = vpop.f32.mrb[0].mxu0
        %v3775 = vadd.f32 0.0, %v3774
        %v3776 = vpop.f32.mrb[0].mxu0
        %v3777 = vpop.f32.mrb[0].mxu0
        %v3778 = vadd.f32 0.0, %v3777
        %v3779 = vpop.f32.mrb[0].mxu0
        %3780 = vmatprep.mubr.bf16.mxu0 0
        %3781 = vmatmul.mubr.bf16.gmra.mrb[0].mxu0 %v3690
        %v3782 = vpop.f32.mrb[0].mxu0
        %v3783 = vadd.f32 0.0, %v3782
        %v3784 = vpop.f32.mrb[0].mxu0
        %v3785 = vpop.f32.mrb[0].mxu0
        %v3786 = vadd.f32 0.0, %v3785
        %v3787 = vpop.f32.mrb[0].mxu0
        %3788 = vdwg.mxu0
        %v3789 = vadd.f32 %v3628, %v3727
        %v3790 = vadd.f32 %v3629, %v3730
        %v3791 = vadd.f32 %v3630, %v3735
        %v3792 = vadd.f32 %v3631, %v3738
        %v3793 = vadd.f32 %v3632, %v3743
        %v3794 = vadd.f32 %v3633, %v3746
        %v3795 = vadd.f32 %v3634, %v3751
        %v3796 = vadd.f32 %v3635, %v3754
        %v3797 = vadd.f32 %v3636, %v3759
        %v3798 = vadd.f32 %v3637, %v3762
        %v3799 = vadd.f32 %v3638, %v3767
        %v3800 = vadd.f32 %v3639, %v3770
        %v3801 = vadd.f32 %v3640, %v3775
        %v3802 = vadd.f32 %v3641, %v3778
        %v3803 = vadd.f32 %v3642, %v3783
        %v3804 = vadd.f32 %v3643, %v3786
        %v3805 = vpack.c.bf16 %v3790, %v3789
        %v3806 = vpack.c.bf16 %v3792, %v3791
        %v3807 = vpack.c.bf16 %v3794, %v3793
        %v3808 = vpack.c.bf16 %v3796, %v3795
        %v3809 = vpack.c.bf16 %v3798, %v3797
        %v3810 = vpack.c.bf16 %v3800, %v3799
        %v3811 = vpack.c.bf16 %v3802, %v3801
        %v3812 = vpack.c.bf16 %v3804, %v3803
        %v3813 = vld [vmem:[%s5] sm:$0xf]
        %v3814 = vld [vmem:[%s5 + $0x4] sm:$0xf]
        %v3815 = vld [vmem:[%s5 + $0x8] sm:$0xf]
        %v3816 = vld [vmem:[%s5 + $0xc] sm:$0xf]
        %v3817 = vld [vmem:[%s5 + $0x10] sm:$0xf]
        %v3818 = vld [vmem:[%s5 + $0x14] sm:$0xf]
        %v3819 = vld [vmem:[%s5 + $0x18] sm:$0xf]
        %v3820 = vld [vmem:[%s5 + $0x1c] sm:$0xf]
        %v3821 = vld [vmem:[%s5 + $0x20] sm:$0xf]
        %v3822 = vld [vmem:[%s5 + $0x24] sm:$0xf]
        %v3823 = vld [vmem:[%s5 + $0x28] sm:$0xf]
        %v3824 = vld [vmem:[%s5 + $0x2c] sm:$0xf]
        %v3825 = vld [vmem:[%s5 + $0x30] sm:$0xf]
        %v3826 = vld [vmem:[%s5 + $0x34] sm:$0xf]
        %v3827 = vld [vmem:[%s5 + $0x38] sm:$0xf]
        %v3828 = vld [vmem:[%s5 + $0x3c] sm:$0xf]
        %v3845 = vunpack.c.l.b16 %v3813
        %v3846 = vunpack.c.l.b16 %v3814
        %v3847 = vunpack.c.l.b16 %v3815
        %v3848 = vunpack.c.l.b16 %v3816
        %v3849 = vunpack.c.l.b16 %v3817
        %v3850 = vunpack.c.l.b16 %v3818
        %v3851 = vunpack.c.l.b16 %v3819
        %v3852 = vunpack.c.l.b16 %v3820
        %v3853 = vunpack.c.l.b16 %v3821
        %v3854 = vunpack.c.l.b16 %v3822
        %v3855 = vunpack.c.l.b16 %v3823
        %v3856 = vunpack.c.l.b16 %v3824
        %v3857 = vunpack.c.l.b16 %v3825
        %v3858 = vunpack.c.l.b16 %v3826
        %v3859 = vunpack.c.l.b16 %v3827
        %v3860 = vunpack.c.l.b16 %v3828
        %v3861 = vpack.c.b16 %v3846, %v3845
        %v3862 = vpack.c.b16 %v3848, %v3847
        %v3863 = vpack.c.b16 %v3850, %v3849
        %v3864 = vpack.c.b16 %v3852, %v3851
        %v3865 = vpack.c.b16 %v3854, %v3853
        %v3866 = vpack.c.b16 %v3856, %v3855
        %v3867 = vpack.c.b16 %v3858, %v3857
        %v3868 = vpack.c.b16 %v3860, %v3859
        %3877 = vmatprep.subr.bf16.mxu0 0
        %3878 = vmatpush1.bf16.msra.mxu0 %v3861
        %3879 = vmatprep.subr.bf16.mxu0 0
        %3880 = vmatpush1.bf16.msra.mxu0 %v3862
        %3881 = vmatprep.subr.bf16.mxu0 0
        %3882 = vmatpush1.bf16.msra.mxu0 %v3863
        %3883 = vmatprep.subr.bf16.mxu0 0
        %3884 = vmatpush1.bf16.msra.mxu0 %v3864
        %3885 = vmatprep.subr.bf16.mxu0 0
        %3886 = vmatpush1.bf16.msra.mxu0 %v3865
        %3887 = vmatprep.subr.bf16.mxu0 0
        %3888 = vmatpush1.bf16.msra.mxu0 %v3866
        %3889 = vmatprep.subr.bf16.mxu0 0
        %3890 = vmatpush1.bf16.msra.mxu0 %v3867
        %3891 = vmatprep.subr.bf16.mxu0 0
        %3892 = vmatpush1.bf16.msra.mxu0 %v3868
        %3893 = vmatprep.subr.bf16.mxu0 0
        %3894 = vmatpush1.bf16.msra.mxu0 0
        %3895 = vmatprep.subr.bf16.mxu0 0
        %3896 = vmatpush1.bf16.msra.mxu0 0
        %3897 = vmatprep.subr.bf16.mxu0 0
        %3898 = vmatpush1.bf16.msra.mxu0 0
        %3899 = vmatprep.subr.bf16.mxu0 0
        %3900 = vmatpush1.bf16.msra.mxu0 0
        %3901 = vmatprep.subr.bf16.mxu0 0
        %3902 = vmatpush1.bf16.msra.mxu0 0
        %3903 = vmatprep.subr.bf16.mxu0 0
        %3904 = vmatpush1.bf16.msra.mxu0 0
        %3905 = vmatprep.subr.bf16.mxu0 0
        %3906 = vmatpush1.bf16.msra.mxu0 0
        %3907 = vmatprep.subr.bf16.mxu0 0
        %3908 = vmatpush1.bf16.msra.mxu0 0
        %3909 = vmatprep.mubr.bf16.mxu0 0
        %3910 = vmatmul.mubr.bf16.gmra.mrb[0].mxu0 %v3805
        %v3911 = vpop.f32.mrb[0].mxu0
        %v3912 = vadd.f32 0.0, %v3911
        %v3913 = vpop.f32.mrb[0].mxu0
        %v3914 = vpop.f32.mrb[0].mxu0
        %v3915 = vadd.f32 0.0, %v3914
        %v3916 = vpop.f32.mrb[0].mxu0
        %3917 = vmatprep.mubr.bf16.mxu0 0
        %3918 = vmatmul.mubr.bf16.gmra.mrb[0].mxu0 %v3806
        %v3919 = vpop.f32.mrb[0].mxu0
        %v3920 = vadd.f32 0.0, %v3919
        %v3921 = vpop.f32.mrb[0].mxu0
        %v3922 = vpop.f32.mrb[0].mxu0
        %v3923 = vadd.f32 0.0, %v3922
        %v3924 = vpop.f32.mrb[0].mxu0
        %3925 = vmatprep.mubr.bf16.mxu0 0
        %3926 = vmatmul.mubr.bf16.gmra.mrb[0].mxu0 %v3807
        %v3927 = vpop.f32.mrb[0].mxu0
        %v3928 = vadd.f32 0.0, %v3927
        %v3929 = vpop.f32.mrb[0].mxu0
        %v3930 = vpop.f32.mrb[0].mxu0
        %v3931 = vadd.f32 0.0, %v3930
        %v3932 = vpop.f32.mrb[0].mxu0
        %3933 = vmatprep.mubr.bf16.mxu0 0
        %3934 = vmatmul.mubr.bf16.gmra.mrb[0].mxu0 %v3808
        %v3935 = vpop.f32.mrb[0].mxu0
        %v3936 = vadd.f32 0.0, %v3935
        %v3937 = vpop.f32.mrb[0].mxu0
        %v3938 = vpop.f32.mrb[0].mxu0
        %v3939 = vadd.f32 0.0, %v3938
        %v3940 = vpop.f32.mrb[0].mxu0
        %3941 = vmatprep.mubr.bf16.mxu0 0
        %3942 = vmatmul.mubr.bf16.gmra.mrb[0].mxu0 %v3809
        %v3943 = vpop.f32.mrb[0].mxu0
        %v3944 = vadd.f32 0.0, %v3943
        %v3945 = vpop.f32.mrb[0].mxu0
        %v3946 = vpop.f32.mrb[0].mxu0
        %v3947 = vadd.f32 0.0, %v3946
        %v3948 = vpop.f32.mrb[0].mxu0
        %3949 = vmatprep.mubr.bf16.mxu0 0
        %3950 = vmatmul.mubr.bf16.gmra.mrb[0].mxu0 %v3810
        %v3951 = vpop.f32.mrb[0].mxu0
        %v3952 = vadd.f32 0.0, %v3951
        %v3953 = vpop.f32.mrb[0].mxu0
        %v3954 = vpop.f32.mrb[0].mxu0
        %v3955 = vadd.f32 0.0, %v3954
        %v3956 = vpop.f32.mrb[0].mxu0
        %3957 = vmatprep.mubr.bf16.mxu0 0
        %3958 = vmatmul.mubr.bf16.gmra.mrb[0].mxu0 %v3811
        %v3959 = vpop.f32.mrb[0].mxu0
        %v3960 = vadd.f32 0.0, %v3959
        %v3961 = vpop.f32.mrb[0].mxu0
        %v3962 = vpop.f32.mrb[0].mxu0
        %v3963 = vadd.f32 0.0, %v3962
        %v3964 = vpop.f32.mrb[0].mxu0
        %3965 = vmatprep.mubr.bf16.mxu0 0
        %3966 = vmatmul.mubr.bf16.gmra.mrb[0].mxu0 %v3812
        %v3967 = vpop.f32.mrb[0].mxu0
        %v3968 = vadd.f32 0.0, %v3967
        %v3969 = vpop.f32.mrb[0].mxu0
        %v3970 = vpop.f32.mrb[0].mxu0
        %v3971 = vadd.f32 0.0, %v3970
        %v3972 = vpop.f32.mrb[0].mxu0
        %3973 = vdwg.mxu0
        %3974 = vxpose.xlu0.b32.start [1/16] %v3912, 128
        %3975 = vxpose.xlu0.b32.cont [2/16] %v3915, 128
        %3976 = vxpose.xlu0.b32.cont [3/16] %v3920, 128
        %3977 = vxpose.xlu0.b32.cont [4/16] %v3923, 128
        %3978 = vxpose.xlu0.b32.cont [5/16] %v3928, 128
        %3979 = vxpose.xlu0.b32.cont [6/16] %v3931, 128
        %3980 = vxpose.xlu0.b32.cont [7/16] %v3936, 128
        %3981 = vxpose.xlu0.b32.cont [8/16] %v3939, 128
        %3982 = vxpose.xlu0.b32.cont [9/16] %v3944, 128
        %3983 = vxpose.xlu0.b32.cont [10/16] %v3947, 128
        %3984 = vxpose.xlu0.b32.cont [11/16] %v3952, 128
        %3985 = vxpose.xlu0.b32.cont [12/16] %v3955, 128
        %3986 = vxpose.xlu0.b32.cont [13/16] %v3960, 128
        %3987 = vxpose.xlu0.b32.cont [14/16] %v3963, 128
        %3988 = vxpose.xlu0.b32.cont [15/16] %v3968, 128
        %3989 = vxpose.xlu0.b32.end [16/16] %v3971, 128
        %v3990 = vpop.trf.xlu0
        %v3991 = vpop.trf.xlu0
        %v3992 = vpop.trf.xlu0
        %v3993 = vpop.trf.xlu0
        %v3994 = vpop.trf.xlu0
        %v3995 = vpop.trf.xlu0
        %v3996 = vpop.trf.xlu0
        %v3997 = vpop.trf.xlu0
        %v3998 = vpop.trf.xlu0
        %v3999 = vpop.trf.xlu0
        %v4000 = vpop.trf.xlu0
        %v4001 = vpop.trf.xlu0
        %v4002 = vpop.trf.xlu0
        %v4003 = vpop.trf.xlu0
        %v4004 = vpop.trf.xlu0
        %v4005 = vpop.trf.xlu0
        %4007 = vset.pattern.permute.xlu0 4
        %4008 = vperm.xlu0 %4007, %v3912
        %v4009 = vpop.permute.xlu0 %4008
        %4012 = vset.pattern.permute.xlu0 4
        %4013 = vperm.xlu0 %4012, %v3915
        %v4014 = vpop.permute.xlu0 %4013
        %4017 = vset.pattern.permute.xlu0 4
        %4018 = vperm.xlu0 %4017, %v3920
        %v4019 = vpop.permute.xlu0 %4018
        %4022 = vset.pattern.permute.xlu0 4
        %4023 = vperm.xlu0 %4022, %v3923
        %v4024 = vpop.permute.xlu0 %4023
        %4027 = vset.pattern.permute.xlu0 4
        %4028 = vperm.xlu0 %4027, %v3928
        %v4029 = vpop.permute.xlu0 %4028
        %4032 = vset.pattern.permute.xlu0 4
        %4033 = vperm.xlu0 %4032, %v3931
        %v4034 = vpop.permute.xlu0 %4033
        %4037 = vset.pattern.permute.xlu0 4
        %4038 = vperm.xlu0 %4037, %v3936
        %v4039 = vpop.permute.xlu0 %4038
        %4042 = vset.pattern.permute.xlu0 4
        %4043 = vperm.xlu0 %4042, %v3939
        %v4044 = vpop.permute.xlu0 %4043
        %4047 = vset.pattern.permute.xlu0 4
        %4048 = vperm.xlu0 %4047, %v3944
        %v4049 = vpop.permute.xlu0 %4048
        %4052 = vset.pattern.permute.xlu0 4
        %4053 = vperm.xlu0 %4052, %v3947
        %v4054 = vpop.permute.xlu0 %4053
        %4057 = vset.pattern.permute.xlu0 4
        %4058 = vperm.xlu0 %4057, %v3952
        %v4059 = vpop.permute.xlu0 %4058
        %4062 = vset.pattern.permute.xlu0 4
        %4063 = vperm.xlu0 %4062, %v3955
        %v4064 = vpop.permute.xlu0 %4063
        %4067 = vset.pattern.permute.xlu0 4
        %4068 = vperm.xlu0 %4067, %v3960
        %v4069 = vpop.permute.xlu0 %4068
        %4072 = vset.pattern.permute.xlu0 4
        %4073 = vperm.xlu0 %4072, %v3963
        %v4074 = vpop.permute.xlu0 %4073
        %4077 = vset.pattern.permute.xlu0 4
        %4078 = vperm.xlu0 %4077, %v3968
        %v4079 = vpop.permute.xlu0 %4078
        %4082 = vset.pattern.permute.xlu0 4
        %4083 = vperm.xlu0 %4082, %v3971
        %v4084 = vpop.permute.xlu0 %4083
        %v4086 = vlaneseq
        %v4087 = vshrl.u32 %v4086, 7
        %v4088 = vsub.s32 0, %v4087
        %v4089 = vrot.slane %v3990, %v4088
        %v4090 = vadd.f32 %v4009, %v4089
        %v4091 = vadd.f32 %v4014, %v4089
        %v4092 = vadd.f32 %v4019, %v4089
        %v4093 = vadd.f32 %v4024, %v4089
        %v4094 = vadd.f32 %v4029, %v4089
        %v4095 = vadd.f32 %v4034, %v4089
        %v4096 = vadd.f32 %v4039, %v4089
        %v4097 = vadd.f32 %v4044, %v4089
        %v4098 = vadd.f32 %v4049, %v4089
        %v4099 = vadd.f32 %v4054, %v4089
        %v4100 = vadd.f32 %v4059, %v4089
        %v4101 = vadd.f32 %v4064, %v4089
        %v4102 = vadd.f32 %v4069, %v4089
        %v4103 = vadd.f32 %v4074, %v4089
        %v4104 = vadd.f32 %v4079, %v4089
        %v4105 = vadd.f32 %v4084, %v4089
        %vm4106 = vcmp.gt.f32.partialorder %v4090, 0.0
        %vm4107 = vcmp.gt.f32.partialorder %v4091, 0.0
        %vm4108 = vcmp.gt.f32.partialorder %v4092, 0.0
        %vm4109 = vcmp.gt.f32.partialorder %v4093, 0.0
        %vm4110 = vcmp.gt.f32.partialorder %v4094, 0.0
        %vm4111 = vcmp.gt.f32.partialorder %v4095, 0.0
        %vm4112 = vcmp.gt.f32.partialorder %v4096, 0.0
        %vm4113 = vcmp.gt.f32.partialorder %v4097, 0.0
        %vm4114 = vcmp.gt.f32.partialorder %v4098, 0.0
        %vm4115 = vcmp.gt.f32.partialorder %v4099, 0.0
        %vm4116 = vcmp.gt.f32.partialorder %v4100, 0.0
        %vm4117 = vcmp.gt.f32.partialorder %v4101, 0.0
        %vm4118 = vcmp.gt.f32.partialorder %v4102, 0.0
        %vm4119 = vcmp.gt.f32.partialorder %v4103, 0.0
        %vm4120 = vcmp.gt.f32.partialorder %v4104, 0.0
        %vm4121 = vcmp.gt.f32.partialorder %v4105, 0.0
        %v4122 = vmul.f32 %v4090, 0.2
        %v4123 = vmul.f32 %v4091, 0.2
        %v4124 = vmul.f32 %v4092, 0.2
        %v4125 = vmul.f32 %v4093, 0.2
        %v4126 = vmul.f32 %v4094, 0.2
        %v4127 = vmul.f32 %v4095, 0.2
        %v4128 = vmul.f32 %v4096, 0.2
        %v4129 = vmul.f32 %v4097, 0.2
        %v4130 = vmul.f32 %v4098, 0.2
        %v4131 = vmul.f32 %v4099, 0.2
        %v4132 = vmul.f32 %v4100, 0.2
        %v4133 = vmul.f32 %v4101, 0.2
        %v4134 = vmul.f32 %v4102, 0.2
        %v4135 = vmul.f32 %v4103, 0.2
        %v4136 = vmul.f32 %v4104, 0.2
        %v4137 = vmul.f32 %v4105, 0.2
        %v4138 = vsel %vm4106, %v4090, %v4122
        %v4139 = vsel %vm4107, %v4091, %v4123
        %v4140 = vsel %vm4108, %v4092, %v4124
        %v4141 = vsel %vm4109, %v4093, %v4125
        %v4142 = vsel %vm4110, %v4094, %v4126
        %v4143 = vsel %vm4111, %v4095, %v4127
        %v4144 = vsel %vm4112, %v4096, %v4128
        %v4145 = vsel %vm4113, %v4097, %v4129
        %v4146 = vsel %vm4114, %v4098, %v4130
        %v4147 = vsel %vm4115, %v4099, %v4131
        %v4148 = vsel %vm4116, %v4100, %v4132
        %v4149 = vsel %vm4117, %v4101, %v4133
        %v4150 = vsel %vm4118, %v4102, %v4134
        %v4151 = vsel %vm4119, %v4103, %v4135
        %v4152 = vsel %vm4120, %v4104, %v4136
        %v4153 = vsel %vm4121, %v4105, %v4137
        %v4154 = vadd.f32 %v4138, %v513
        %v4155 = vadd.f32 %v4139, %v514
        %v4156 = vadd.f32 %v4140, %v515
        %v4157 = vadd.f32 %v4141, %v516
        %v4158 = vadd.f32 %v4142, %v517
        %v4159 = vadd.f32 %v4143, %v518
        %v4160 = vadd.f32 %v4144, %v519
        %v4161 = vadd.f32 %v4145, %v520
        %v4162 = vadd.f32 %v4146, %v521
        %v4163 = vadd.f32 %v4147, %v522
        %v4164 = vadd.f32 %v4148, %v523
        %v4165 = vadd.f32 %v4149, %v524
        %v4166 = vadd.f32 %v4150, %v525
        %v4167 = vadd.f32 %v4151, %v526
        %v4168 = vadd.f32 %v4152, %v527
        %v4169 = vadd.f32 %v4153, %v528
        %4170 = vmax.xlane.f32.xlu0 %v4154
        %v4171 = vpop.xlane.xlu0 %4170
        %4172 = vmax.xlane.f32.xlu0 %v4155
        %v4173 = vpop.xlane.xlu0 %4172
        %4174 = vmax.xlane.f32.xlu0 %v4156
        %v4175 = vpop.xlane.xlu0 %4174
        %4176 = vmax.xlane.f32.xlu0 %v4157
        %v4177 = vpop.xlane.xlu0 %4176
        %4178 = vmax.xlane.f32.xlu0 %v4158
        %v4179 = vpop.xlane.xlu0 %4178
        %4180 = vmax.xlane.f32.xlu0 %v4159
        %v4181 = vpop.xlane.xlu0 %4180
        %4182 = vmax.xlane.f32.xlu0 %v4160
        %v4183 = vpop.xlane.xlu0 %4182
        %4184 = vmax.xlane.f32.xlu0 %v4161
        %v4185 = vpop.xlane.xlu0 %4184
        %4186 = vmax.xlane.f32.xlu0 %v4162
        %v4187 = vpop.xlane.xlu0 %4186
        %4188 = vmax.xlane.f32.xlu0 %v4163
        %v4189 = vpop.xlane.xlu0 %4188
        %4190 = vmax.xlane.f32.xlu0 %v4164
        %v4191 = vpop.xlane.xlu0 %4190
        %4192 = vmax.xlane.f32.xlu0 %v4165
        %v4193 = vpop.xlane.xlu0 %4192
        %4194 = vmax.xlane.f32.xlu0 %v4166
        %v4195 = vpop.xlane.xlu0 %4194
        %4196 = vmax.xlane.f32.xlu0 %v4167
        %v4197 = vpop.xlane.xlu0 %4196
        %4198 = vmax.xlane.f32.xlu0 %v4168
        %v4199 = vpop.xlane.xlu0 %4198
        %4200 = vmax.xlane.f32.xlu0 %v4169
        %v4201 = vpop.xlane.xlu0 %4200
        %v4202 = vsub.f32 %v4154, %v4171
        %v4203 = vsub.f32 %v4155, %v4173
        %v4204 = vsub.f32 %v4156, %v4175
        %v4205 = vsub.f32 %v4157, %v4177
        %v4206 = vsub.f32 %v4158, %v4179
        %v4207 = vsub.f32 %v4159, %v4181
        %v4208 = vsub.f32 %v4160, %v4183
        %v4209 = vsub.f32 %v4161, %v4185
        %v4210 = vsub.f32 %v4162, %v4187
        %v4211 = vsub.f32 %v4163, %v4189
        %v4212 = vsub.f32 %v4164, %v4191
        %v4213 = vsub.f32 %v4165, %v4193
        %v4214 = vsub.f32 %v4166, %v4195
        %v4215 = vsub.f32 %v4167, %v4197
        %v4216 = vsub.f32 %v4168, %v4199
        %v4217 = vsub.f32 %v4169, %v4201
        %v4218 = vmul.f32 %v4202, 1.442695
        %v4219 = vpow.pop %v4218
        %v4220 = vmul.f32 %v4203, 1.442695
        %v4221 = vpow.pop %v4220
        %v4222 = vmul.f32 %v4204, 1.442695
        %v4223 = vpow.pop %v4222
        %v4224 = vmul.f32 %v4205, 1.442695
        %v4225 = vpow.pop %v4224
        %v4226 = vmul.f32 %v4206, 1.442695
        %v4227 = vpow.pop %v4226
        %v4228 = vmul.f32 %v4207, 1.442695
        %v4229 = vpow.pop %v4228
        %v4230 = vmul.f32 %v4208, 1.442695
        %v4231 = vpow.pop %v4230
        %v4232 = vmul.f32 %v4209, 1.442695
        %v4233 = vpow.pop %v4232
        %v4234 = vmul.f32 %v4210, 1.442695
        %v4235 = vpow.pop %v4234
        %v4236 = vmul.f32 %v4211, 1.442695
        %v4237 = vpow.pop %v4236
        %v4238 = vmul.f32 %v4212, 1.442695
        %v4239 = vpow.pop %v4238
        %v4240 = vmul.f32 %v4213, 1.442695
        %v4241 = vpow.pop %v4240
        %v4242 = vmul.f32 %v4214, 1.442695
        %v4243 = vpow.pop %v4242
        %v4244 = vmul.f32 %v4215, 1.442695
        %v4245 = vpow.pop %v4244
        %v4246 = vmul.f32 %v4216, 1.442695
        %v4247 = vpow.pop %v4246
        %v4248 = vmul.f32 %v4217, 1.442695
        %v4249 = vpow.pop %v4248
        %v4250 = vsel %vm529, %v4219, 0.0
        %v4251 = vsel %vm530, %v4221, 0.0
        %v4252 = vsel %vm531, %v4223, 0.0
        %v4253 = vsel %vm532, %v4225, 0.0
        %v4254 = vsel %vm533, %v4227, 0.0
        %v4255 = vsel %vm534, %v4229, 0.0
        %v4256 = vsel %vm535, %v4231, 0.0
        %v4257 = vsel %vm536, %v4233, 0.0
        %v4258 = vsel %vm537, %v4235, 0.0
        %v4259 = vsel %vm538, %v4237, 0.0
        %v4260 = vsel %vm539, %v4239, 0.0
        %v4261 = vsel %vm540, %v4241, 0.0
        %v4262 = vsel %vm541, %v4243, 0.0
        %v4263 = vsel %vm542, %v4245, 0.0
        %v4264 = vsel %vm543, %v4247, 0.0
        %v4265 = vsel %vm544, %v4249, 0.0
        %4266 = vadd.xlane.f32.xlu0 %v4250
        %v4267 = vpop.xlane.xlu0 %4266
        %4268 = vadd.xlane.f32.xlu0 %v4251
        %v4269 = vpop.xlane.xlu0 %4268
        %4270 = vadd.xlane.f32.xlu0 %v4252
        %v4271 = vpop.xlane.xlu0 %4270
        %4272 = vadd.xlane.f32.xlu0 %v4253
        %v4273 = vpop.xlane.xlu0 %4272
        %4274 = vadd.xlane.f32.xlu0 %v4254
        %v4275 = vpop.xlane.xlu0 %4274
        %4276 = vadd.xlane.f32.xlu0 %v4255
        %v4277 = vpop.xlane.xlu0 %4276
        %4278 = vadd.xlane.f32.xlu0 %v4256
        %v4279 = vpop.xlane.xlu0 %4278
        %4280 = vadd.xlane.f32.xlu0 %v4257
        %v4281 = vpop.xlane.xlu0 %4280
        %4282 = vadd.xlane.f32.xlu0 %v4258
        %v4283 = vpop.xlane.xlu0 %4282
        %4284 = vadd.xlane.f32.xlu0 %v4259
        %v4285 = vpop.xlane.xlu0 %4284
        %4286 = vadd.xlane.f32.xlu0 %v4260
        %v4287 = vpop.xlane.xlu0 %4286
        %4288 = vadd.xlane.f32.xlu0 %v4261
        %v4289 = vpop.xlane.xlu0 %4288
        %4290 = vadd.xlane.f32.xlu0 %v4262
        %v4291 = vpop.xlane.xlu0 %4290
        %4292 = vadd.xlane.f32.xlu0 %v4263
        %v4293 = vpop.xlane.xlu0 %4292
        %4294 = vadd.xlane.f32.xlu0 %v4264
        %v4295 = vpop.xlane.xlu0 %4294
        %4296 = vadd.xlane.f32.xlu0 %v4265
        %v4297 = vpop.xlane.xlu0 %4296
        %vm4298 = vcmp.eq.f32.partialorder %v4267, 0.0
        %vm4299 = vcmp.eq.f32.partialorder %v4269, 0.0
        %vm4300 = vcmp.eq.f32.partialorder %v4271, 0.0
        %vm4301 = vcmp.eq.f32.partialorder %v4273, 0.0
        %vm4302 = vcmp.eq.f32.partialorder %v4275, 0.0
        %vm4303 = vcmp.eq.f32.partialorder %v4277, 0.0
        %vm4304 = vcmp.eq.f32.partialorder %v4279, 0.0
        %vm4305 = vcmp.eq.f32.partialorder %v4281, 0.0
        %vm4306 = vcmp.eq.f32.partialorder %v4283, 0.0
        %vm4307 = vcmp.eq.f32.partialorder %v4285, 0.0
        %vm4308 = vcmp.eq.f32.partialorder %v4287, 0.0
        %vm4309 = vcmp.eq.f32.partialorder %v4289, 0.0
        %vm4310 = vcmp.eq.f32.partialorder %v4291, 0.0
        %vm4311 = vcmp.eq.f32.partialorder %v4293, 0.0
        %vm4312 = vcmp.eq.f32.partialorder %v4295, 0.0
        %vm4313 = vcmp.eq.f32.partialorder %v4297, 0.0
        %v4314 = vsel %vm4298, 1.0, %v4267
        %v4315 = vsel %vm4299, 1.0, %v4269
        %v4316 = vsel %vm4300, 1.0, %v4271
        %v4317 = vsel %vm4301, 1.0, %v4273
        %v4318 = vsel %vm4302, 1.0, %v4275
        %v4319 = vsel %vm4303, 1.0, %v4277
        %v4320 = vsel %vm4304, 1.0, %v4279
        %v4321 = vsel %vm4305, 1.0, %v4281
        %v4322 = vsel %vm4306, 1.0, %v4283
        %v4323 = vsel %vm4307, 1.0, %v4285
        %v4324 = vsel %vm4308, 1.0, %v4287
        %v4325 = vsel %vm4309, 1.0, %v4289
        %v4326 = vsel %vm4310, 1.0, %v4291
        %v4327 = vsel %vm4311, 1.0, %v4293
        %v4328 = vsel %vm4312, 1.0, %v4295
        %v4329 = vsel %vm4313, 1.0, %v4297
        %v4330 = vrcp.pop %v4314
        %v4331 = vrcp.pop %v4315
        %v4332 = vrcp.pop %v4316
        %v4333 = vrcp.pop %v4317
        %v4334 = vrcp.pop %v4318
        %v4335 = vrcp.pop %v4319
        %v4336 = vrcp.pop %v4320
        %v4337 = vrcp.pop %v4321
        %v4338 = vrcp.pop %v4322
        %v4339 = vrcp.pop %v4323
        %v4340 = vrcp.pop %v4324
        %v4341 = vrcp.pop %v4325
        %v4342 = vrcp.pop %v4326
        %v4343 = vrcp.pop %v4327
        %v4344 = vrcp.pop %v4328
        %v4345 = vrcp.pop %v4329
        %v4346 = vmul.f32 %v4250, %v4330
        %v4347 = vmul.f32 %v4251, %v4331
        %v4348 = vmul.f32 %v4252, %v4332
        %v4349 = vmul.f32 %v4253, %v4333
        %v4350 = vmul.f32 %v4254, %v4334
        %v4351 = vmul.f32 %v4255, %v4335
        %v4352 = vmul.f32 %v4256, %v4336
        %v4353 = vmul.f32 %v4257, %v4337
        %v4354 = vmul.f32 %v4258, %v4338
        %v4355 = vmul.f32 %v4259, %v4339
        %v4356 = vmul.f32 %v4260, %v4340
        %v4357 = vmul.f32 %v4261, %v4341
        %v4358 = vmul.f32 %v4262, %v4342
        %v4359 = vmul.f32 %v4263, %v4343
        %v4360 = vmul.f32 %v4264, %v4344
        %v4361 = vmul.f32 %v4265, %v4345
        %v4362 = vpack.c.bf16 %v4347, %v4346
        %v4363 = vpack.c.bf16 %v4349, %v4348
        %v4364 = vpack.c.bf16 %v4351, %v4350
        %v4365 = vpack.c.bf16 %v4353, %v4352
        %v4366 = vpack.c.bf16 %v4355, %v4354
        %v4367 = vpack.c.bf16 %v4357, %v4356
        %v4368 = vpack.c.bf16 %v4359, %v4358
        %v4369 = vpack.c.bf16 %v4361, %v4360
        %4370 = vmatprep.subr.bf16.mxu0 0
        %4371 = vmatpush1.bf16.msra.mxu0 %v3805
        %4372 = vmatprep.subr.bf16.mxu0 0
        %4373 = vmatpush1.bf16.msra.mxu0 %v3806
        %4374 = vmatprep.subr.bf16.mxu0 0
        %4375 = vmatpush1.bf16.msra.mxu0 %v3807
        %4376 = vmatprep.subr.bf16.mxu0 0
        %4377 = vmatpush1.bf16.msra.mxu0 %v3808
        %4378 = vmatprep.subr.bf16.mxu0 0
        %4379 = vmatpush1.bf16.msra.mxu0 %v3809
        %4380 = vmatprep.subr.bf16.mxu0 0
        %4381 = vmatpush1.bf16.msra.mxu0 %v3810
        %4382 = vmatprep.subr.bf16.mxu0 0
        %4383 = vmatpush1.bf16.msra.mxu0 %v3811
        %4384 = vmatprep.subr.bf16.mxu0 0
        %4385 = vmatpush1.bf16.msra.mxu0 %v3812
        %4386 = vmatprep.subr.bf16.mxu0 0
        %4387 = vmatpush1.bf16.msra.mxu0 0
        %4388 = vmatprep.subr.bf16.mxu0 0
        %4389 = vmatpush1.bf16.msra.mxu0 0
        %4390 = vmatprep.subr.bf16.mxu0 0
        %4391 = vmatpush1.bf16.msra.mxu0 0
        %4392 = vmatprep.subr.bf16.mxu0 0
        %4393 = vmatpush1.bf16.msra.mxu0 0
        %4394 = vmatprep.subr.bf16.mxu0 0
        %4395 = vmatpush1.bf16.msra.mxu0 0
        %4396 = vmatprep.subr.bf16.mxu0 0
        %4397 = vmatpush1.bf16.msra.mxu0 0
        %4398 = vmatprep.subr.bf16.mxu0 0
        %4399 = vmatpush1.bf16.msra.mxu0 0
        %4400 = vmatprep.subr.bf16.mxu0 0
        %4401 = vmatpush1.bf16.msra.mxu0 0
        %4402 = vmatprep.mubr.bf16.mxu0 0
        %4403 = vmatmul.mubr.bf16.gmra.mrb[0].mxu0 %v4362
        %v4404 = vpop.f32.mrb[0].mxu0
        %v4405 = vadd.f32 0.0, %v4404
        %v4406 = vpop.f32.mrb[0].mxu0
        %v4407 = vpop.f32.mrb[0].mxu0
        %v4408 = vadd.f32 0.0, %v4407
        %v4409 = vpop.f32.mrb[0].mxu0
        %4410 = vmatprep.mubr.bf16.mxu0 0
        %4411 = vmatmul.mubr.bf16.gmra.mrb[0].mxu0 %v4363
        %v4412 = vpop.f32.mrb[0].mxu0
        %v4413 = vadd.f32 0.0, %v4412
        %v4414 = vpop.f32.mrb[0].mxu0
        %v4415 = vpop.f32.mrb[0].mxu0
        %v4416 = vadd.f32 0.0, %v4415
        %v4417 = vpop.f32.mrb[0].mxu0
        %4418 = vmatprep.mubr.bf16.mxu0 0
        %4419 = vmatmul.mubr.bf16.gmra.mrb[0].mxu0 %v4364
        %v4420 = vpop.f32.mrb[0].mxu0
        %v4421 = vadd.f32 0.0, %v4420
        %v4422 = vpop.f32.mrb[0].mxu0
        %v4423 = vpop.f32.mrb[0].mxu0
        %v4424 = vadd.f32 0.0, %v4423
        %v4425 = vpop.f32.mrb[0].mxu0
        %4426 = vmatprep.mubr.bf16.mxu0 0
        %4427 = vmatmul.mubr.bf16.gmra.mrb[0].mxu0 %v4365
        %v4428 = vpop.f32.mrb[0].mxu0
        %v4429 = vadd.f32 0.0, %v4428
        %v4430 = vpop.f32.mrb[0].mxu0
        %v4431 = vpop.f32.mrb[0].mxu0
        %v4432 = vadd.f32 0.0, %v4431
        %v4433 = vpop.f32.mrb[0].mxu0
        %4434 = vmatprep.mubr.bf16.mxu0 0
        %4435 = vmatmul.mubr.bf16.gmra.mrb[0].mxu0 %v4366
        %v4436 = vpop.f32.mrb[0].mxu0
        %v4437 = vadd.f32 0.0, %v4436
        %v4438 = vpop.f32.mrb[0].mxu0
        %v4439 = vpop.f32.mrb[0].mxu0
        %v4440 = vadd.f32 0.0, %v4439
        %v4441 = vpop.f32.mrb[0].mxu0
        %4442 = vmatprep.mubr.bf16.mxu0 0
        %4443 = vmatmul.mubr.bf16.gmra.mrb[0].mxu0 %v4367
        %v4444 = vpop.f32.mrb[0].mxu0
        %v4445 = vadd.f32 0.0, %v4444
        %v4446 = vpop.f32.mrb[0].mxu0
        %v4447 = vpop.f32.mrb[0].mxu0
        %v4448 = vadd.f32 0.0, %v4447
        %v4449 = vpop.f32.mrb[0].mxu0
        %4450 = vmatprep.mubr.bf16.mxu0 0
        %4451 = vmatmul.mubr.bf16.gmra.mrb[0].mxu0 %v4368
        %v4452 = vpop.f32.mrb[0].mxu0
        %v4453 = vadd.f32 0.0, %v4452
        %v4454 = vpop.f32.mrb[0].mxu0
        %v4455 = vpop.f32.mrb[0].mxu0
        %v4456 = vadd.f32 0.0, %v4455
        %v4457 = vpop.f32.mrb[0].mxu0
        %4458 = vmatprep.mubr.bf16.mxu0 0
        %4459 = vmatmul.mubr.bf16.gmra.mrb[0].mxu0 %v4369
        %v4460 = vpop.f32.mrb[0].mxu0
        %v4461 = vadd.f32 0.0, %v4460
        %v4462 = vpop.f32.mrb[0].mxu0
        %v4463 = vpop.f32.mrb[0].mxu0
        %v4464 = vadd.f32 0.0, %v4463
        %v4465 = vpop.f32.mrb[0].mxu0
        %4466 = vdwg.mxu0
        %vm4467 = vcmp.gt.f32.partialorder %v4405, 0.0
        %vm4468 = vcmp.gt.f32.partialorder %v4408, 0.0
        %vm4469 = vcmp.gt.f32.partialorder %v4413, 0.0
        %vm4470 = vcmp.gt.f32.partialorder %v4416, 0.0
        %vm4471 = vcmp.gt.f32.partialorder %v4421, 0.0
        %vm4472 = vcmp.gt.f32.partialorder %v4424, 0.0
        %vm4473 = vcmp.gt.f32.partialorder %v4429, 0.0
        %vm4474 = vcmp.gt.f32.partialorder %v4432, 0.0
        %vm4475 = vcmp.gt.f32.partialorder %v4437, 0.0
        %vm4476 = vcmp.gt.f32.partialorder %v4440, 0.0
        %vm4477 = vcmp.gt.f32.partialorder %v4445, 0.0
        %vm4478 = vcmp.gt.f32.partialorder %v4448, 0.0
        %vm4479 = vcmp.gt.f32.partialorder %v4453, 0.0
        %vm4480 = vcmp.gt.f32.partialorder %v4456, 0.0
        %vm4481 = vcmp.gt.f32.partialorder %v4461, 0.0
        %vm4482 = vcmp.gt.f32.partialorder %v4464, 0.0
        %v4483 = vmin.f32 %v4405, 0.0
        %v4484 = vmin.f32 %v4408, 0.0
        %v4485 = vmin.f32 %v4413, 0.0
        %v4486 = vmin.f32 %v4416, 0.0
        %v4487 = vmin.f32 %v4421, 0.0
        %v4488 = vmin.f32 %v4424, 0.0
        %v4489 = vmin.f32 %v4429, 0.0
        %v4490 = vmin.f32 %v4432, 0.0
        %v4491 = vmin.f32 %v4437, 0.0
        %v4492 = vmin.f32 %v4440, 0.0
        %v4493 = vmin.f32 %v4445, 0.0
        %v4494 = vmin.f32 %v4448, 0.0
        %v4495 = vmin.f32 %v4453, 0.0
        %v4496 = vmin.f32 %v4456, 0.0
        %v4497 = vmin.f32 %v4461, 0.0
        %v4498 = vmin.f32 %v4464, 0.0
        %v4499 = vmul.f32 %v4483, 1.442695
        %v4500 = vpow.pop %v4499
        %v4501 = vmul.f32 %v4484, 1.442695
        %v4502 = vpow.pop %v4501
        %v4503 = vmul.f32 %v4485, 1.442695
        %v4504 = vpow.pop %v4503
        %v4505 = vmul.f32 %v4486, 1.442695
        %v4506 = vpow.pop %v4505
        %v4507 = vmul.f32 %v4487, 1.442695
        %v4508 = vpow.pop %v4507
        %v4509 = vmul.f32 %v4488, 1.442695
        %v4510 = vpow.pop %v4509
        %v4511 = vmul.f32 %v4489, 1.442695
        %v4512 = vpow.pop %v4511
        %v4513 = vmul.f32 %v4490, 1.442695
        %v4514 = vpow.pop %v4513
        %v4515 = vmul.f32 %v4491, 1.442695
        %v4516 = vpow.pop %v4515
        %v4517 = vmul.f32 %v4492, 1.442695
        %v4518 = vpow.pop %v4517
        %v4519 = vmul.f32 %v4493, 1.442695
        %v4520 = vpow.pop %v4519
        %v4521 = vmul.f32 %v4494, 1.442695
        %v4522 = vpow.pop %v4521
        %v4523 = vmul.f32 %v4495, 1.442695
        %v4524 = vpow.pop %v4523
        %v4525 = vmul.f32 %v4496, 1.442695
        %v4526 = vpow.pop %v4525
        %v4527 = vmul.f32 %v4497, 1.442695
        %v4528 = vpow.pop %v4527
        %v4529 = vmul.f32 %v4498, 1.442695
        %v4530 = vpow.pop %v4529
        %v4531 = vsub.f32 %v4500, 1.0
        %v4532 = vsub.f32 %v4502, 1.0
        %v4533 = vsub.f32 %v4504, 1.0
        %v4534 = vsub.f32 %v4506, 1.0
        %v4535 = vsub.f32 %v4508, 1.0
        %v4536 = vsub.f32 %v4510, 1.0
        %v4537 = vsub.f32 %v4512, 1.0
        %v4538 = vsub.f32 %v4514, 1.0
        %v4539 = vsub.f32 %v4516, 1.0
        %v4540 = vsub.f32 %v4518, 1.0
        %v4541 = vsub.f32 %v4520, 1.0
        %v4542 = vsub.f32 %v4522, 1.0
        %v4543 = vsub.f32 %v4524, 1.0
        %v4544 = vsub.f32 %v4526, 1.0
        %v4545 = vsub.f32 %v4528, 1.0
        %v4546 = vsub.f32 %v4530, 1.0
        %v4547 = vsel %vm4467, %v4405, %v4531
        %v4548 = vsel %vm4468, %v4408, %v4532
        %v4549 = vsel %vm4469, %v4413, %v4533
        %v4550 = vsel %vm4470, %v4416, %v4534
        %v4551 = vsel %vm4471, %v4421, %v4535
        %v4552 = vsel %vm4472, %v4424, %v4536
        %v4553 = vsel %vm4473, %v4429, %v4537
        %v4554 = vsel %vm4474, %v4432, %v4538
        %v4555 = vsel %vm4475, %v4437, %v4539
        %v4556 = vsel %vm4476, %v4440, %v4540
        %v4557 = vsel %vm4477, %v4445, %v4541
        %v4558 = vsel %vm4478, %v4448, %v4542
        %v4559 = vsel %vm4479, %v4453, %v4543
        %v4560 = vsel %vm4480, %v4456, %v4544
        %v4561 = vsel %vm4481, %v4461, %v4545
        %v4562 = vsel %vm4482, %v4464, %v4546
        %4563 = vset.pattern.permute.xlu0 5
        %4564 = vperm.xlu0 %4563, %v3912
        %v4565 = vpop.permute.xlu0 %4564
        %4567 = vset.pattern.permute.xlu0 5
        %4568 = vperm.xlu0 %4567, %v3915
        %v4569 = vpop.permute.xlu0 %4568
        %4571 = vset.pattern.permute.xlu0 5
        %4572 = vperm.xlu0 %4571, %v3920
        %v4573 = vpop.permute.xlu0 %4572
        %4575 = vset.pattern.permute.xlu0 5
        %4576 = vperm.xlu0 %4575, %v3923
        %v4577 = vpop.permute.xlu0 %4576
        %4579 = vset.pattern.permute.xlu0 5
        %4580 = vperm.xlu0 %4579, %v3928
        %v4581 = vpop.permute.xlu0 %4580
        %4583 = vset.pattern.permute.xlu0 5
        %4584 = vperm.xlu0 %4583, %v3931
        %v4585 = vpop.permute.xlu0 %4584
        %4587 = vset.pattern.permute.xlu0 5
        %4588 = vperm.xlu0 %4587, %v3936
        %v4589 = vpop.permute.xlu0 %4588
        %4591 = vset.pattern.permute.xlu0 5
        %4592 = vperm.xlu0 %4591, %v3939
        %v4593 = vpop.permute.xlu0 %4592
        %4595 = vset.pattern.permute.xlu0 5
        %4596 = vperm.xlu0 %4595, %v3944
        %v4597 = vpop.permute.xlu0 %4596
        %4599 = vset.pattern.permute.xlu0 5
        %4600 = vperm.xlu0 %4599, %v3947
        %v4601 = vpop.permute.xlu0 %4600
        %4603 = vset.pattern.permute.xlu0 5
        %4604 = vperm.xlu0 %4603, %v3952
        %v4605 = vpop.permute.xlu0 %4604
        %4607 = vset.pattern.permute.xlu0 5
        %4608 = vperm.xlu0 %4607, %v3955
        %v4609 = vpop.permute.xlu0 %4608
        %4611 = vset.pattern.permute.xlu0 5
        %4612 = vperm.xlu0 %4611, %v3960
        %v4613 = vpop.permute.xlu0 %4612
        %4615 = vset.pattern.permute.xlu0 5
        %4616 = vperm.xlu0 %4615, %v3963
        %v4617 = vpop.permute.xlu0 %4616
        %4619 = vset.pattern.permute.xlu0 5
        %4620 = vperm.xlu0 %4619, %v3968
        %v4621 = vpop.permute.xlu0 %4620
        %4623 = vset.pattern.permute.xlu0 5
        %4624 = vperm.xlu0 %4623, %v3971
        %v4625 = vpop.permute.xlu0 %4624
        %v4627 = vlaneseq
        %v4628 = vshrl.u32 %v4627, 7
        %v4629 = vsub.s32 1, %v4628
        %v4630 = vrot.slane %v3990, %v4629
        %v4631 = vadd.f32 %v4565, %v4630
        %v4632 = vadd.f32 %v4569, %v4630
        %v4633 = vadd.f32 %v4573, %v4630
        %v4634 = vadd.f32 %v4577, %v4630
        %v4635 = vadd.f32 %v4581, %v4630
        %v4636 = vadd.f32 %v4585, %v4630
        %v4637 = vadd.f32 %v4589, %v4630
        %v4638 = vadd.f32 %v4593, %v4630
        %v4639 = vadd.f32 %v4597, %v4630
        %v4640 = vadd.f32 %v4601, %v4630
        %v4641 = vadd.f32 %v4605, %v4630
        %v4642 = vadd.f32 %v4609, %v4630
        %v4643 = vadd.f32 %v4613, %v4630
        %v4644 = vadd.f32 %v4617, %v4630
        %v4645 = vadd.f32 %v4621, %v4630
        %v4646 = vadd.f32 %v4625, %v4630
        %vm4647 = vcmp.gt.f32.partialorder %v4631, 0.0
        %vm4648 = vcmp.gt.f32.partialorder %v4632, 0.0
        %vm4649 = vcmp.gt.f32.partialorder %v4633, 0.0
        %vm4650 = vcmp.gt.f32.partialorder %v4634, 0.0
        %vm4651 = vcmp.gt.f32.partialorder %v4635, 0.0
        %vm4652 = vcmp.gt.f32.partialorder %v4636, 0.0
        %vm4653 = vcmp.gt.f32.partialorder %v4637, 0.0
        %vm4654 = vcmp.gt.f32.partialorder %v4638, 0.0
        %vm4655 = vcmp.gt.f32.partialorder %v4639, 0.0
        %vm4656 = vcmp.gt.f32.partialorder %v4640, 0.0
        %vm4657 = vcmp.gt.f32.partialorder %v4641, 0.0
        %vm4658 = vcmp.gt.f32.partialorder %v4642, 0.0
        %vm4659 = vcmp.gt.f32.partialorder %v4643, 0.0
        %vm4660 = vcmp.gt.f32.partialorder %v4644, 0.0
        %vm4661 = vcmp.gt.f32.partialorder %v4645, 0.0
        %vm4662 = vcmp.gt.f32.partialorder %v4646, 0.0
        %v4663 = vmul.f32 %v4631, 0.2
        %v4664 = vmul.f32 %v4632, 0.2
        %v4665 = vmul.f32 %v4633, 0.2
        %v4666 = vmul.f32 %v4634, 0.2
        %v4667 = vmul.f32 %v4635, 0.2
        %v4668 = vmul.f32 %v4636, 0.2
        %v4669 = vmul.f32 %v4637, 0.2
        %v4670 = vmul.f32 %v4638, 0.2
        %v4671 = vmul.f32 %v4639, 0.2
        %v4672 = vmul.f32 %v4640, 0.2
        %v4673 = vmul.f32 %v4641, 0.2
        %v4674 = vmul.f32 %v4642, 0.2
        %v4675 = vmul.f32 %v4643, 0.2
        %v4676 = vmul.f32 %v4644, 0.2
        %v4677 = vmul.f32 %v4645, 0.2
        %v4678 = vmul.f32 %v4646, 0.2
        %v4679 = vsel %vm4647, %v4631, %v4663
        %v4680 = vsel %vm4648, %v4632, %v4664
        %v4681 = vsel %vm4649, %v4633, %v4665
        %v4682 = vsel %vm4650, %v4634, %v4666
        %v4683 = vsel %vm4651, %v4635, %v4667
        %v4684 = vsel %vm4652, %v4636, %v4668
        %v4685 = vsel %vm4653, %v4637, %v4669
        %v4686 = vsel %vm4654, %v4638, %v4670
        %v4687 = vsel %vm4655, %v4639, %v4671
        %v4688 = vsel %vm4656, %v4640, %v4672
        %v4689 = vsel %vm4657, %v4641, %v4673
        %v4690 = vsel %vm4658, %v4642, %v4674
        %v4691 = vsel %vm4659, %v4643, %v4675
        %v4692 = vsel %vm4660, %v4644, %v4676
        %v4693 = vsel %vm4661, %v4645, %v4677
        %v4694 = vsel %vm4662, %v4646, %v4678
        %v4695 = vadd.f32 %v4679, %v513
        %v4696 = vadd.f32 %v4680, %v514
        %v4697 = vadd.f32 %v4681, %v515
        %v4698 = vadd.f32 %v4682, %v516
        %v4699 = vadd.f32 %v4683, %v517
        %v4700 = vadd.f32 %v4684, %v518
        %v4701 = vadd.f32 %v4685, %v519
        %v4702 = vadd.f32 %v4686, %v520
        %v4703 = vadd.f32 %v4687, %v521
        %v4704 = vadd.f32 %v4688, %v522
        %v4705 = vadd.f32 %v4689, %v523
        %v4706 = vadd.f32 %v4690, %v524
        %v4707 = vadd.f32 %v4691, %v525
        %v4708 = vadd.f32 %v4692, %v526
        %v4709 = vadd.f32 %v4693, %v527
        %v4710 = vadd.f32 %v4694, %v528
        %4711 = vmax.xlane.f32.xlu0 %v4695
        %v4712 = vpop.xlane.xlu0 %4711
        %4713 = vmax.xlane.f32.xlu0 %v4696
        %v4714 = vpop.xlane.xlu0 %4713
        %4715 = vmax.xlane.f32.xlu0 %v4697
        %v4716 = vpop.xlane.xlu0 %4715
        %4717 = vmax.xlane.f32.xlu0 %v4698
        %v4718 = vpop.xlane.xlu0 %4717
        %4719 = vmax.xlane.f32.xlu0 %v4699
        %v4720 = vpop.xlane.xlu0 %4719
        %4721 = vmax.xlane.f32.xlu0 %v4700
        %v4722 = vpop.xlane.xlu0 %4721
        %4723 = vmax.xlane.f32.xlu0 %v4701
        %v4724 = vpop.xlane.xlu0 %4723
        %4725 = vmax.xlane.f32.xlu0 %v4702
        %v4726 = vpop.xlane.xlu0 %4725
        %4727 = vmax.xlane.f32.xlu0 %v4703
        %v4728 = vpop.xlane.xlu0 %4727
        %4729 = vmax.xlane.f32.xlu0 %v4704
        %v4730 = vpop.xlane.xlu0 %4729
        %4731 = vmax.xlane.f32.xlu0 %v4705
        %v4732 = vpop.xlane.xlu0 %4731
        %4733 = vmax.xlane.f32.xlu0 %v4706
        %v4734 = vpop.xlane.xlu0 %4733
        %4735 = vmax.xlane.f32.xlu0 %v4707
        %v4736 = vpop.xlane.xlu0 %4735
        %4737 = vmax.xlane.f32.xlu0 %v4708
        %v4738 = vpop.xlane.xlu0 %4737
        %4739 = vmax.xlane.f32.xlu0 %v4709
        %v4740 = vpop.xlane.xlu0 %4739
        %4741 = vmax.xlane.f32.xlu0 %v4710
        %v4742 = vpop.xlane.xlu0 %4741
        %v4743 = vsub.f32 %v4695, %v4712
        %v4744 = vsub.f32 %v4696, %v4714
        %v4745 = vsub.f32 %v4697, %v4716
        %v4746 = vsub.f32 %v4698, %v4718
        %v4747 = vsub.f32 %v4699, %v4720
        %v4748 = vsub.f32 %v4700, %v4722
        %v4749 = vsub.f32 %v4701, %v4724
        %v4750 = vsub.f32 %v4702, %v4726
        %v4751 = vsub.f32 %v4703, %v4728
        %v4752 = vsub.f32 %v4704, %v4730
        %v4753 = vsub.f32 %v4705, %v4732
        %v4754 = vsub.f32 %v4706, %v4734
        %v4755 = vsub.f32 %v4707, %v4736
        %v4756 = vsub.f32 %v4708, %v4738
        %v4757 = vsub.f32 %v4709, %v4740
        %v4758 = vsub.f32 %v4710, %v4742
        %v4759 = vmul.f32 %v4743, 1.442695
        %v4760 = vpow.pop %v4759
        %v4761 = vmul.f32 %v4744, 1.442695
        %v4762 = vpow.pop %v4761
        %v4763 = vmul.f32 %v4745, 1.442695
        %v4764 = vpow.pop %v4763
        %v4765 = vmul.f32 %v4746, 1.442695
        %v4766 = vpow.pop %v4765
        %v4767 = vmul.f32 %v4747, 1.442695
        %v4768 = vpow.pop %v4767
        %v4769 = vmul.f32 %v4748, 1.442695
        %v4770 = vpow.pop %v4769
        %v4771 = vmul.f32 %v4749, 1.442695
        %v4772 = vpow.pop %v4771
        %v4773 = vmul.f32 %v4750, 1.442695
        %v4774 = vpow.pop %v4773
        %v4775 = vmul.f32 %v4751, 1.442695
        %v4776 = vpow.pop %v4775
        %v4777 = vmul.f32 %v4752, 1.442695
        %v4778 = vpow.pop %v4777
        %v4779 = vmul.f32 %v4753, 1.442695
        %v4780 = vpow.pop %v4779
        %v4781 = vmul.f32 %v4754, 1.442695
        %v4782 = vpow.pop %v4781
        %v4783 = vmul.f32 %v4755, 1.442695
        %v4784 = vpow.pop %v4783
        %v4785 = vmul.f32 %v4756, 1.442695
        %v4786 = vpow.pop %v4785
        %v4787 = vmul.f32 %v4757, 1.442695
        %v4788 = vpow.pop %v4787
        %v4789 = vmul.f32 %v4758, 1.442695
        %v4790 = vpow.pop %v4789
        %v4791 = vsel %vm529, %v4760, 0.0
        %v4792 = vsel %vm530, %v4762, 0.0
        %v4793 = vsel %vm531, %v4764, 0.0
        %v4794 = vsel %vm532, %v4766, 0.0
        %v4795 = vsel %vm533, %v4768, 0.0
        %v4796 = vsel %vm534, %v4770, 0.0
        %v4797 = vsel %vm535, %v4772, 0.0
        %v4798 = vsel %vm536, %v4774, 0.0
        %v4799 = vsel %vm537, %v4776, 0.0
        %v4800 = vsel %vm538, %v4778, 0.0
        %v4801 = vsel %vm539, %v4780, 0.0
        %v4802 = vsel %vm540, %v4782, 0.0
        %v4803 = vsel %vm541, %v4784, 0.0
        %v4804 = vsel %vm542, %v4786, 0.0
        %v4805 = vsel %vm543, %v4788, 0.0
        %v4806 = vsel %vm544, %v4790, 0.0
        %4807 = vadd.xlane.f32.xlu0 %v4791
        %v4808 = vpop.xlane.xlu0 %4807
        %4809 = vadd.xlane.f32.xlu0 %v4792
        %v4810 = vpop.xlane.xlu0 %4809
        %4811 = vadd.xlane.f32.xlu0 %v4793
        %v4812 = vpop.xlane.xlu0 %4811
        %4813 = vadd.xlane.f32.xlu0 %v4794
        %v4814 = vpop.xlane.xlu0 %4813
        %4815 = vadd.xlane.f32.xlu0 %v4795
        %v4816 = vpop.xlane.xlu0 %4815
        %4817 = vadd.xlane.f32.xlu0 %v4796
        %v4818 = vpop.xlane.xlu0 %4817
        %4819 = vadd.xlane.f32.xlu0 %v4797
        %v4820 = vpop.xlane.xlu0 %4819
        %4821 = vadd.xlane.f32.xlu0 %v4798
        %v4822 = vpop.xlane.xlu0 %4821
        %4823 = vadd.xlane.f32.xlu0 %v4799
        %v4824 = vpop.xlane.xlu0 %4823
        %4825 = vadd.xlane.f32.xlu0 %v4800
        %v4826 = vpop.xlane.xlu0 %4825
        %4827 = vadd.xlane.f32.xlu0 %v4801
        %v4828 = vpop.xlane.xlu0 %4827
        %4829 = vadd.xlane.f32.xlu0 %v4802
        %v4830 = vpop.xlane.xlu0 %4829
        %4831 = vadd.xlane.f32.xlu0 %v4803
        %v4832 = vpop.xlane.xlu0 %4831
        %4833 = vadd.xlane.f32.xlu0 %v4804
        %v4834 = vpop.xlane.xlu0 %4833
        %4835 = vadd.xlane.f32.xlu0 %v4805
        %v4836 = vpop.xlane.xlu0 %4835
        %4837 = vadd.xlane.f32.xlu0 %v4806
        %v4838 = vpop.xlane.xlu0 %4837
        %vm4839 = vcmp.eq.f32.partialorder %v4808, 0.0
        %vm4840 = vcmp.eq.f32.partialorder %v4810, 0.0
        %vm4841 = vcmp.eq.f32.partialorder %v4812, 0.0
        %vm4842 = vcmp.eq.f32.partialorder %v4814, 0.0
        %vm4843 = vcmp.eq.f32.partialorder %v4816, 0.0
        %vm4844 = vcmp.eq.f32.partialorder %v4818, 0.0
        %vm4845 = vcmp.eq.f32.partialorder %v4820, 0.0
        %vm4846 = vcmp.eq.f32.partialorder %v4822, 0.0
        %vm4847 = vcmp.eq.f32.partialorder %v4824, 0.0
        %vm4848 = vcmp.eq.f32.partialorder %v4826, 0.0
        %vm4849 = vcmp.eq.f32.partialorder %v4828, 0.0
        %vm4850 = vcmp.eq.f32.partialorder %v4830, 0.0
        %vm4851 = vcmp.eq.f32.partialorder %v4832, 0.0
        %vm4852 = vcmp.eq.f32.partialorder %v4834, 0.0
        %vm4853 = vcmp.eq.f32.partialorder %v4836, 0.0
        %vm4854 = vcmp.eq.f32.partialorder %v4838, 0.0
        %v4855 = vsel %vm4839, 1.0, %v4808
        %v4856 = vsel %vm4840, 1.0, %v4810
        %v4857 = vsel %vm4841, 1.0, %v4812
        %v4858 = vsel %vm4842, 1.0, %v4814
        %v4859 = vsel %vm4843, 1.0, %v4816
        %v4860 = vsel %vm4844, 1.0, %v4818
        %v4861 = vsel %vm4845, 1.0, %v4820
        %v4862 = vsel %vm4846, 1.0, %v4822
        %v4863 = vsel %vm4847, 1.0, %v4824
        %v4864 = vsel %vm4848, 1.0, %v4826
        %v4865 = vsel %vm4849, 1.0, %v4828
        %v4866 = vsel %vm4850, 1.0, %v4830
        %v4867 = vsel %vm4851, 1.0, %v4832
        %v4868 = vsel %vm4852, 1.0, %v4834
        %v4869 = vsel %vm4853, 1.0, %v4836
        %v4870 = vsel %vm4854, 1.0, %v4838
        %v4871 = vrcp.pop %v4855
        %v4872 = vrcp.pop %v4856
        %v4873 = vrcp.pop %v4857
        %v4874 = vrcp.pop %v4858
        %v4875 = vrcp.pop %v4859
        %v4876 = vrcp.pop %v4860
        %v4877 = vrcp.pop %v4861
        %v4878 = vrcp.pop %v4862
        %v4879 = vrcp.pop %v4863
        %v4880 = vrcp.pop %v4864
        %v4881 = vrcp.pop %v4865
        %v4882 = vrcp.pop %v4866
        %v4883 = vrcp.pop %v4867
        %v4884 = vrcp.pop %v4868
        %v4885 = vrcp.pop %v4869
        %v4886 = vrcp.pop %v4870
        %v4887 = vmul.f32 %v4791, %v4871
        %v4888 = vmul.f32 %v4792, %v4872
        %v4889 = vmul.f32 %v4793, %v4873
        %v4890 = vmul.f32 %v4794, %v4874
        %v4891 = vmul.f32 %v4795, %v4875
        %v4892 = vmul.f32 %v4796, %v4876
        %v4893 = vmul.f32 %v4797, %v4877
        %v4894 = vmul.f32 %v4798, %v4878
        %v4895 = vmul.f32 %v4799, %v4879
        %v4896 = vmul.f32 %v4800, %v4880
        %v4897 = vmul.f32 %v4801, %v4881
        %v4898 = vmul.f32 %v4802, %v4882
        %v4899 = vmul.f32 %v4803, %v4883
        %v4900 = vmul.f32 %v4804, %v4884
        %v4901 = vmul.f32 %v4805, %v4885
        %v4902 = vmul.f32 %v4806, %v4886
        %v4903 = vpack.c.bf16 %v4888, %v4887
        %v4904 = vpack.c.bf16 %v4890, %v4889
        %v4905 = vpack.c.bf16 %v4892, %v4891
        %v4906 = vpack.c.bf16 %v4894, %v4893
        %v4907 = vpack.c.bf16 %v4896, %v4895
        %v4908 = vpack.c.bf16 %v4898, %v4897
        %v4909 = vpack.c.bf16 %v4900, %v4899
        %v4910 = vpack.c.bf16 %v4902, %v4901
        %4919 = vrot.lane.b32.xlu0 %v3805, 96
        %v4920 = vpop.permute.xlu0 %4919
        %4921 = vrot.lane.b32.xlu0 %v3806, 96
        %v4922 = vpop.permute.xlu0 %4921
        %4923 = vrot.lane.b32.xlu0 %v3807, 96
        %v4924 = vpop.permute.xlu0 %4923
        %4925 = vrot.lane.b32.xlu0 %v3808, 96
        %v4926 = vpop.permute.xlu0 %4925
        %4927 = vrot.lane.b32.xlu0 %v3809, 96
        %v4928 = vpop.permute.xlu0 %4927
        %4929 = vrot.lane.b32.xlu0 %v3810, 96
        %v4930 = vpop.permute.xlu0 %4929
        %4931 = vrot.lane.b32.xlu0 %v3811, 96
        %v4932 = vpop.permute.xlu0 %4931
        %4933 = vrot.lane.b32.xlu0 %v3812, 96
        %v4934 = vpop.permute.xlu0 %4933
        %4943 = vmatprep.subr.bf16.mxu0 0
        %4944 = vmatpush1.bf16.msra.mxu0 %v4920
        %4945 = vmatprep.subr.bf16.mxu0 0
        %4946 = vmatpush1.bf16.msra.mxu0 %v4922
        %4947 = vmatprep.subr.bf16.mxu0 0
        %4948 = vmatpush1.bf16.msra.mxu0 %v4924
        %4949 = vmatprep.subr.bf16.mxu0 0
        %4950 = vmatpush1.bf16.msra.mxu0 %v4926
        %4951 = vmatprep.subr.bf16.mxu0 0
        %4952 = vmatpush1.bf16.msra.mxu0 %v4928
        %4953 = vmatprep.subr.bf16.mxu0 0
        %4954 = vmatpush1.bf16.msra.mxu0 %v4930
        %4955 = vmatprep.subr.bf16.mxu0 0
        %4956 = vmatpush1.bf16.msra.mxu0 %v4932
        %4957 = vmatprep.subr.bf16.mxu0 0
        %4958 = vmatpush1.bf16.msra.mxu0 %v4934
        %4959 = vmatprep.subr.bf16.mxu0 0
        %4960 = vmatpush1.bf16.msra.mxu0 0
        %4961 = vmatprep.subr.bf16.mxu0 0
        %4962 = vmatpush1.bf16.msra.mxu0 0
        %4963 = vmatprep.subr.bf16.mxu0 0
        %4964 = vmatpush1.bf16.msra.mxu0 0
        %4965 = vmatprep.subr.bf16.mxu0 0
        %4966 = vmatpush1.bf16.msra.mxu0 0
        %4967 = vmatprep.subr.bf16.mxu0 0
        %4968 = vmatpush1.bf16.msra.mxu0 0
        %4969 = vmatprep.subr.bf16.mxu0 0
        %4970 = vmatpush1.bf16.msra.mxu0 0
        %4971 = vmatprep.subr.bf16.mxu0 0
        %4972 = vmatpush1.bf16.msra.mxu0 0
        %4973 = vmatprep.subr.bf16.mxu0 0
        %4974 = vmatpush1.bf16.msra.mxu0 0
        %4975 = vmatprep.mubr.bf16.mxu0 0
        %4976 = vmatmul.mubr.bf16.gmra.mrb[0].mxu0 %v4903
        %v4977 = vpop.f32.mrb[0].mxu0
        %v4978 = vadd.f32 0.0, %v4977
        %v4979 = vpop.f32.mrb[0].mxu0
        %v4980 = vpop.f32.mrb[0].mxu0
        %v4981 = vadd.f32 0.0, %v4980
        %v4982 = vpop.f32.mrb[0].mxu0
        %4983 = vmatprep.mubr.bf16.mxu0 0
        %4984 = vmatmul.mubr.bf16.gmra.mrb[0].mxu0 %v4904
        %v4985 = vpop.f32.mrb[0].mxu0
        %v4986 = vadd.f32 0.0, %v4985
        %v4987 = vpop.f32.mrb[0].mxu0
        %v4988 = vpop.f32.mrb[0].mxu0
        %v4989 = vadd.f32 0.0, %v4988
        %v4990 = vpop.f32.mrb[0].mxu0
        %4991 = vmatprep.mubr.bf16.mxu0 0
        %4992 = vmatmul.mubr.bf16.gmra.mrb[0].mxu0 %v4905
        %v4993 = vpop.f32.mrb[0].mxu0
        %v4994 = vadd.f32 0.0, %v4993
        %v4995 = vpop.f32.mrb[0].mxu0
        %v4996 = vpop.f32.mrb[0].mxu0
        %v4997 = vadd.f32 0.0, %v4996
        %v4998 = vpop.f32.mrb[0].mxu0
        %4999 = vmatprep.mubr.bf16.mxu0 0
        %5000 = vmatmul.mubr.bf16.gmra.mrb[0].mxu0 %v4906
        %v5001 = vpop.f32.mrb[0].mxu0
        %v5002 = vadd.f32 0.0, %v5001
        %v5003 = vpop.f32.mrb[0].mxu0
        %v5004 = vpop.f32.mrb[0].mxu0
        %v5005 = vadd.f32 0.0, %v5004
        %v5006 = vpop.f32.mrb[0].mxu0
        %5007 = vmatprep.mubr.bf16.mxu0 0
        %5008 = vmatmul.mubr.bf16.gmra.mrb[0].mxu0 %v4907
        %v5009 = vpop.f32.mrb[0].mxu0
        %v5010 = vadd.f32 0.0, %v5009
        %v5011 = vpop.f32.mrb[0].mxu0
        %v5012 = vpop.f32.mrb[0].mxu0
        %v5013 = vadd.f32 0.0, %v5012
        %v5014 = vpop.f32.mrb[0].mxu0
        %5015 = vmatprep.mubr.bf16.mxu0 0
        %5016 = vmatmul.mubr.bf16.gmra.mrb[0].mxu0 %v4908
        %v5017 = vpop.f32.mrb[0].mxu0
        %v5018 = vadd.f32 0.0, %v5017
        %v5019 = vpop.f32.mrb[0].mxu0
        %v5020 = vpop.f32.mrb[0].mxu0
        %v5021 = vadd.f32 0.0, %v5020
        %v5022 = vpop.f32.mrb[0].mxu0
        %5023 = vmatprep.mubr.bf16.mxu0 0
        %5024 = vmatmul.mubr.bf16.gmra.mrb[0].mxu0 %v4909
        %v5025 = vpop.f32.mrb[0].mxu0
        %v5026 = vadd.f32 0.0, %v5025
        %v5027 = vpop.f32.mrb[0].mxu0
        %v5028 = vpop.f32.mrb[0].mxu0
        %v5029 = vadd.f32 0.0, %v5028
        %v5030 = vpop.f32.mrb[0].mxu0
        %5031 = vmatprep.mubr.bf16.mxu0 0
        %5032 = vmatmul.mubr.bf16.gmra.mrb[0].mxu0 %v4910
        %v5033 = vpop.f32.mrb[0].mxu0
        %v5034 = vadd.f32 0.0, %v5033
        %v5035 = vpop.f32.mrb[0].mxu0
        %v5036 = vpop.f32.mrb[0].mxu0
        %v5037 = vadd.f32 0.0, %v5036
        %v5038 = vpop.f32.mrb[0].mxu0
        %5039 = vdwg.mxu0
        %vm5040 = vcmp.gt.f32.partialorder %v4978, 0.0
        %vm5041 = vcmp.gt.f32.partialorder %v4981, 0.0
        %vm5042 = vcmp.gt.f32.partialorder %v4986, 0.0
        %vm5043 = vcmp.gt.f32.partialorder %v4989, 0.0
        %vm5044 = vcmp.gt.f32.partialorder %v4994, 0.0
        %vm5045 = vcmp.gt.f32.partialorder %v4997, 0.0
        %vm5046 = vcmp.gt.f32.partialorder %v5002, 0.0
        %vm5047 = vcmp.gt.f32.partialorder %v5005, 0.0
        %vm5048 = vcmp.gt.f32.partialorder %v5010, 0.0
        %vm5049 = vcmp.gt.f32.partialorder %v5013, 0.0
        %vm5050 = vcmp.gt.f32.partialorder %v5018, 0.0
        %vm5051 = vcmp.gt.f32.partialorder %v5021, 0.0
        %vm5052 = vcmp.gt.f32.partialorder %v5026, 0.0
        %vm5053 = vcmp.gt.f32.partialorder %v5029, 0.0
        %vm5054 = vcmp.gt.f32.partialorder %v5034, 0.0
        %vm5055 = vcmp.gt.f32.partialorder %v5037, 0.0
        %v5056 = vmin.f32 %v4978, 0.0
        %v5057 = vmin.f32 %v4981, 0.0
        %v5058 = vmin.f32 %v4986, 0.0
        %v5059 = vmin.f32 %v4989, 0.0
        %v5060 = vmin.f32 %v4994, 0.0
        %v5061 = vmin.f32 %v4997, 0.0
        %v5062 = vmin.f32 %v5002, 0.0
        %v5063 = vmin.f32 %v5005, 0.0
        %v5064 = vmin.f32 %v5010, 0.0
        %v5065 = vmin.f32 %v5013, 0.0
        %v5066 = vmin.f32 %v5018, 0.0
        %v5067 = vmin.f32 %v5021, 0.0
        %v5068 = vmin.f32 %v5026, 0.0
        %v5069 = vmin.f32 %v5029, 0.0
        %v5070 = vmin.f32 %v5034, 0.0
        %v5071 = vmin.f32 %v5037, 0.0
        %v5072 = vmul.f32 %v5056, 1.442695
        %v5073 = vpow.pop %v5072
        %v5074 = vmul.f32 %v5057, 1.442695
        %v5075 = vpow.pop %v5074
        %v5076 = vmul.f32 %v5058, 1.442695
        %v5077 = vpow.pop %v5076
        %v5078 = vmul.f32 %v5059, 1.442695
        %v5079 = vpow.pop %v5078
        %v5080 = vmul.f32 %v5060, 1.442695
        %v5081 = vpow.pop %v5080
        %v5082 = vmul.f32 %v5061, 1.442695
        %v5083 = vpow.pop %v5082
        %v5084 = vmul.f32 %v5062, 1.442695
        %v5085 = vpow.pop %v5084
        %v5086 = vmul.f32 %v5063, 1.442695
        %v5087 = vpow.pop %v5086
        %v5088 = vmul.f32 %v5064, 1.442695
        %v5089 = vpow.pop %v5088
        %v5090 = vmul.f32 %v5065, 1.442695
        %v5091 = vpow.pop %v5090
        %v5092 = vmul.f32 %v5066, 1.442695
        %v5093 = vpow.pop %v5092
        %v5094 = vmul.f32 %v5067, 1.442695
        %v5095 = vpow.pop %v5094
        %v5096 = vmul.f32 %v5068, 1.442695
        %v5097 = vpow.pop %v5096
        %v5098 = vmul.f32 %v5069, 1.442695
        %v5099 = vpow.pop %v5098
        %v5100 = vmul.f32 %v5070, 1.442695
        %v5101 = vpow.pop %v5100
        %v5102 = vmul.f32 %v5071, 1.442695
        %v5103 = vpow.pop %v5102
        %v5104 = vsub.f32 %v5073, 1.0
        %v5105 = vsub.f32 %v5075, 1.0
        %v5106 = vsub.f32 %v5077, 1.0
        %v5107 = vsub.f32 %v5079, 1.0
        %v5108 = vsub.f32 %v5081, 1.0
        %v5109 = vsub.f32 %v5083, 1.0
        %v5110 = vsub.f32 %v5085, 1.0
        %v5111 = vsub.f32 %v5087, 1.0
        %v5112 = vsub.f32 %v5089, 1.0
        %v5113 = vsub.f32 %v5091, 1.0
        %v5114 = vsub.f32 %v5093, 1.0
        %v5115 = vsub.f32 %v5095, 1.0
        %v5116 = vsub.f32 %v5097, 1.0
        %v5117 = vsub.f32 %v5099, 1.0
        %v5118 = vsub.f32 %v5101, 1.0
        %v5119 = vsub.f32 %v5103, 1.0
        %v5120 = vsel %vm5040, %v4978, %v5104
        %v5121 = vsel %vm5041, %v4981, %v5105
        %v5122 = vsel %vm5042, %v4986, %v5106
        %v5123 = vsel %vm5043, %v4989, %v5107
        %v5124 = vsel %vm5044, %v4994, %v5108
        %v5125 = vsel %vm5045, %v4997, %v5109
        %v5126 = vsel %vm5046, %v5002, %v5110
        %v5127 = vsel %vm5047, %v5005, %v5111
        %v5128 = vsel %vm5048, %v5010, %v5112
        %v5129 = vsel %vm5049, %v5013, %v5113
        %v5130 = vsel %vm5050, %v5018, %v5114
        %v5131 = vsel %vm5051, %v5021, %v5115
        %v5132 = vsel %vm5052, %v5026, %v5116
        %v5133 = vsel %vm5053, %v5029, %v5117
        %v5134 = vsel %vm5054, %v5034, %v5118
        %v5135 = vsel %vm5055, %v5037, %v5119
        %5136 = vset.pattern.permute.xlu0 6
        %5137 = vperm.xlu0 %5136, %v3912
        %v5138 = vpop.permute.xlu0 %5137
        %5140 = vset.pattern.permute.xlu0 6
        %5141 = vperm.xlu0 %5140, %v3915
        %v5142 = vpop.permute.xlu0 %5141
        %5144 = vset.pattern.permute.xlu0 6
        %5145 = vperm.xlu0 %5144, %v3920
        %v5146 = vpop.permute.xlu0 %5145
        %5148 = vset.pattern.permute.xlu0 6
        %5149 = vperm.xlu0 %5148, %v3923
        %v5150 = vpop.permute.xlu0 %5149
        %5152 = vset.pattern.permute.xlu0 6
        %5153 = vperm.xlu0 %5152, %v3928
        %v5154 = vpop.permute.xlu0 %5153
        %5156 = vset.pattern.permute.xlu0 6
        %5157 = vperm.xlu0 %5156, %v3931
        %v5158 = vpop.permute.xlu0 %5157
        %5160 = vset.pattern.permute.xlu0 6
        %5161 = vperm.xlu0 %5160, %v3936
        %v5162 = vpop.permute.xlu0 %5161
        %5164 = vset.pattern.permute.xlu0 6
        %5165 = vperm.xlu0 %5164, %v3939
        %v5166 = vpop.permute.xlu0 %5165
        %5168 = vset.pattern.permute.xlu0 6
        %5169 = vperm.xlu0 %5168, %v3944
        %v5170 = vpop.permute.xlu0 %5169
        %5172 = vset.pattern.permute.xlu0 6
        %5173 = vperm.xlu0 %5172, %v3947
        %v5174 = vpop.permute.xlu0 %5173
        %5176 = vset.pattern.permute.xlu0 6
        %5177 = vperm.xlu0 %5176, %v3952
        %v5178 = vpop.permute.xlu0 %5177
        %5180 = vset.pattern.permute.xlu0 6
        %5181 = vperm.xlu0 %5180, %v3955
        %v5182 = vpop.permute.xlu0 %5181
        %5184 = vset.pattern.permute.xlu0 6
        %5185 = vperm.xlu0 %5184, %v3960
        %v5186 = vpop.permute.xlu0 %5185
        %5188 = vset.pattern.permute.xlu0 6
        %5189 = vperm.xlu0 %5188, %v3963
        %v5190 = vpop.permute.xlu0 %5189
        %5192 = vset.pattern.permute.xlu0 6
        %5193 = vperm.xlu0 %5192, %v3968
        %v5194 = vpop.permute.xlu0 %5193
        %5196 = vset.pattern.permute.xlu0 6
        %5197 = vperm.xlu0 %5196, %v3971
        %v5198 = vpop.permute.xlu0 %5197
        %v5200 = vlaneseq
        %v5201 = vshrl.u32 %v5200, 7
        %v5202 = vsub.s32 2, %v5201
        %v5203 = vrot.slane %v3990, %v5202
        %v5204 = vadd.f32 %v5138, %v5203
        %v5205 = vadd.f32 %v5142, %v5203
        %v5206 = vadd.f32 %v5146, %v5203
        %v5207 = vadd.f32 %v5150, %v5203
        %v5208 = vadd.f32 %v5154, %v5203
        %v5209 = vadd.f32 %v5158, %v5203
        %v5210 = vadd.f32 %v5162, %v5203
        %v5211 = vadd.f32 %v5166, %v5203
        %v5212 = vadd.f32 %v5170, %v5203
        %v5213 = vadd.f32 %v5174, %v5203
        %v5214 = vadd.f32 %v5178, %v5203
        %v5215 = vadd.f32 %v5182, %v5203
        %v5216 = vadd.f32 %v5186, %v5203
        %v5217 = vadd.f32 %v5190, %v5203
        %v5218 = vadd.f32 %v5194, %v5203
        %v5219 = vadd.f32 %v5198, %v5203
        %vm5220 = vcmp.gt.f32.partialorder %v5204, 0.0
        %vm5221 = vcmp.gt.f32.partialorder %v5205, 0.0
        %vm5222 = vcmp.gt.f32.partialorder %v5206, 0.0
        %vm5223 = vcmp.gt.f32.partialorder %v5207, 0.0
        %vm5224 = vcmp.gt.f32.partialorder %v5208, 0.0
        %vm5225 = vcmp.gt.f32.partialorder %v5209, 0.0
        %vm5226 = vcmp.gt.f32.partialorder %v5210, 0.0
        %vm5227 = vcmp.gt.f32.partialorder %v5211, 0.0
        %vm5228 = vcmp.gt.f32.partialorder %v5212, 0.0
        %vm5229 = vcmp.gt.f32.partialorder %v5213, 0.0
        %vm5230 = vcmp.gt.f32.partialorder %v5214, 0.0
        %vm5231 = vcmp.gt.f32.partialorder %v5215, 0.0
        %vm5232 = vcmp.gt.f32.partialorder %v5216, 0.0
        %vm5233 = vcmp.gt.f32.partialorder %v5217, 0.0
        %vm5234 = vcmp.gt.f32.partialorder %v5218, 0.0
        %vm5235 = vcmp.gt.f32.partialorder %v5219, 0.0
        %v5236 = vmul.f32 %v5204, 0.2
        %v5237 = vmul.f32 %v5205, 0.2
        %v5238 = vmul.f32 %v5206, 0.2
        %v5239 = vmul.f32 %v5207, 0.2
        %v5240 = vmul.f32 %v5208, 0.2
        %v5241 = vmul.f32 %v5209, 0.2
        %v5242 = vmul.f32 %v5210, 0.2
        %v5243 = vmul.f32 %v5211, 0.2
        %v5244 = vmul.f32 %v5212, 0.2
        %v5245 = vmul.f32 %v5213, 0.2
        %v5246 = vmul.f32 %v5214, 0.2
        %v5247 = vmul.f32 %v5215, 0.2
        %v5248 = vmul.f32 %v5216, 0.2
        %v5249 = vmul.f32 %v5217, 0.2
        %v5250 = vmul.f32 %v5218, 0.2
        %v5251 = vmul.f32 %v5219, 0.2
        %v5252 = vsel %vm5220, %v5204, %v5236
        %v5253 = vsel %vm5221, %v5205, %v5237
        %v5254 = vsel %vm5222, %v5206, %v5238
        %v5255 = vsel %vm5223, %v5207, %v5239
        %v5256 = vsel %vm5224, %v5208, %v5240
        %v5257 = vsel %vm5225, %v5209, %v5241
        %v5258 = vsel %vm5226, %v5210, %v5242
        %v5259 = vsel %vm5227, %v5211, %v5243
        %v5260 = vsel %vm5228, %v5212, %v5244
        %v5261 = vsel %vm5229, %v5213, %v5245
        %v5262 = vsel %vm5230, %v5214, %v5246
        %v5263 = vsel %vm5231, %v5215, %v5247
        %v5264 = vsel %vm5232, %v5216, %v5248
        %v5265 = vsel %vm5233, %v5217, %v5249
        %v5266 = vsel %vm5234, %v5218, %v5250
        %v5267 = vsel %vm5235, %v5219, %v5251
        %v5268 = vadd.f32 %v5252, %v513
        %v5269 = vadd.f32 %v5253, %v514
        %v5270 = vadd.f32 %v5254, %v515
        %v5271 = vadd.f32 %v5255, %v516
        %v5272 = vadd.f32 %v5256, %v517
        %v5273 = vadd.f32 %v5257, %v518
        %v5274 = vadd.f32 %v5258, %v519
        %v5275 = vadd.f32 %v5259, %v520
        %v5276 = vadd.f32 %v5260, %v521
        %v5277 = vadd.f32 %v5261, %v522
        %v5278 = vadd.f32 %v5262, %v523
        %v5279 = vadd.f32 %v5263, %v524
        %v5280 = vadd.f32 %v5264, %v525
        %v5281 = vadd.f32 %v5265, %v526
        %v5282 = vadd.f32 %v5266, %v527
        %v5283 = vadd.f32 %v5267, %v528
        %5284 = vmax.xlane.f32.xlu0 %v5268
        %v5285 = vpop.xlane.xlu0 %5284
        %5286 = vmax.xlane.f32.xlu0 %v5269
        %v5287 = vpop.xlane.xlu0 %5286
        %5288 = vmax.xlane.f32.xlu0 %v5270
        %v5289 = vpop.xlane.xlu0 %5288
        %5290 = vmax.xlane.f32.xlu0 %v5271
        %v5291 = vpop.xlane.xlu0 %5290
        %5292 = vmax.xlane.f32.xlu0 %v5272
        %v5293 = vpop.xlane.xlu0 %5292
        %5294 = vmax.xlane.f32.xlu0 %v5273
        %v5295 = vpop.xlane.xlu0 %5294
        %5296 = vmax.xlane.f32.xlu0 %v5274
        %v5297 = vpop.xlane.xlu0 %5296
        %5298 = vmax.xlane.f32.xlu0 %v5275
        %v5299 = vpop.xlane.xlu0 %5298
        %5300 = vmax.xlane.f32.xlu0 %v5276
        %v5301 = vpop.xlane.xlu0 %5300
        %5302 = vmax.xlane.f32.xlu0 %v5277
        %v5303 = vpop.xlane.xlu0 %5302
        %5304 = vmax.xlane.f32.xlu0 %v5278
        %v5305 = vpop.xlane.xlu0 %5304
        %5306 = vmax.xlane.f32.xlu0 %v5279
        %v5307 = vpop.xlane.xlu0 %5306
        %5308 = vmax.xlane.f32.xlu0 %v5280
        %v5309 = vpop.xlane.xlu0 %5308
        %5310 = vmax.xlane.f32.xlu0 %v5281
        %v5311 = vpop.xlane.xlu0 %5310
        %5312 = vmax.xlane.f32.xlu0 %v5282
        %v5313 = vpop.xlane.xlu0 %5312
        %5314 = vmax.xlane.f32.xlu0 %v5283
        %v5315 = vpop.xlane.xlu0 %5314
        %v5316 = vsub.f32 %v5268, %v5285
        %v5317 = vsub.f32 %v5269, %v5287
        %v5318 = vsub.f32 %v5270, %v5289
        %v5319 = vsub.f32 %v5271, %v5291
        %v5320 = vsub.f32 %v5272, %v5293
        %v5321 = vsub.f32 %v5273, %v5295
        %v5322 = vsub.f32 %v5274, %v5297
        %v5323 = vsub.f32 %v5275, %v5299
        %v5324 = vsub.f32 %v5276, %v5301
        %v5325 = vsub.f32 %v5277, %v5303
        %v5326 = vsub.f32 %v5278, %v5305
        %v5327 = vsub.f32 %v5279, %v5307
        %v5328 = vsub.f32 %v5280, %v5309
        %v5329 = vsub.f32 %v5281, %v5311
        %v5330 = vsub.f32 %v5282, %v5313
        %v5331 = vsub.f32 %v5283, %v5315
        %v5332 = vmul.f32 %v5316, 1.442695
        %v5333 = vpow.pop %v5332
        %v5334 = vmul.f32 %v5317, 1.442695
        %v5335 = vpow.pop %v5334
        %v5336 = vmul.f32 %v5318, 1.442695
        %v5337 = vpow.pop %v5336
        %v5338 = vmul.f32 %v5319, 1.442695
        %v5339 = vpow.pop %v5338
        %v5340 = vmul.f32 %v5320, 1.442695
        %v5341 = vpow.pop %v5340
        %v5342 = vmul.f32 %v5321, 1.442695
        %v5343 = vpow.pop %v5342
        %v5344 = vmul.f32 %v5322, 1.442695
        %v5345 = vpow.pop %v5344
        %v5346 = vmul.f32 %v5323, 1.442695
        %v5347 = vpow.pop %v5346
        %v5348 = vmul.f32 %v5324, 1.442695
        %v5349 = vpow.pop %v5348
        %v5350 = vmul.f32 %v5325, 1.442695
        %v5351 = vpow.pop %v5350
        %v5352 = vmul.f32 %v5326, 1.442695
        %v5353 = vpow.pop %v5352
        %v5354 = vmul.f32 %v5327, 1.442695
        %v5355 = vpow.pop %v5354
        %v5356 = vmul.f32 %v5328, 1.442695
        %v5357 = vpow.pop %v5356
        %v5358 = vmul.f32 %v5329, 1.442695
        %v5359 = vpow.pop %v5358
        %v5360 = vmul.f32 %v5330, 1.442695
        %v5361 = vpow.pop %v5360
        %v5362 = vmul.f32 %v5331, 1.442695
        %v5363 = vpow.pop %v5362
        %v5364 = vsel %vm529, %v5333, 0.0
        %v5365 = vsel %vm530, %v5335, 0.0
        %v5366 = vsel %vm531, %v5337, 0.0
        %v5367 = vsel %vm532, %v5339, 0.0
        %v5368 = vsel %vm533, %v5341, 0.0
        %v5369 = vsel %vm534, %v5343, 0.0
        %v5370 = vsel %vm535, %v5345, 0.0
        %v5371 = vsel %vm536, %v5347, 0.0
        %v5372 = vsel %vm537, %v5349, 0.0
        %v5373 = vsel %vm538, %v5351, 0.0
        %v5374 = vsel %vm539, %v5353, 0.0
        %v5375 = vsel %vm540, %v5355, 0.0
        %v5376 = vsel %vm541, %v5357, 0.0
        %v5377 = vsel %vm542, %v5359, 0.0
        %v5378 = vsel %vm543, %v5361, 0.0
        %v5379 = vsel %vm544, %v5363, 0.0
        %5380 = vadd.xlane.f32.xlu0 %v5364
        %v5381 = vpop.xlane.xlu0 %5380
        %5382 = vadd.xlane.f32.xlu0 %v5365
        %v5383 = vpop.xlane.xlu0 %5382
        %5384 = vadd.xlane.f32.xlu0 %v5366
        %v5385 = vpop.xlane.xlu0 %5384
        %5386 = vadd.xlane.f32.xlu0 %v5367
        %v5387 = vpop.xlane.xlu0 %5386
        %5388 = vadd.xlane.f32.xlu0 %v5368
        %v5389 = vpop.xlane.xlu0 %5388
        %5390 = vadd.xlane.f32.xlu0 %v5369
        %v5391 = vpop.xlane.xlu0 %5390
        %5392 = vadd.xlane.f32.xlu0 %v5370
        %v5393 = vpop.xlane.xlu0 %5392
        %5394 = vadd.xlane.f32.xlu0 %v5371
        %v5395 = vpop.xlane.xlu0 %5394
        %5396 = vadd.xlane.f32.xlu0 %v5372
        %v5397 = vpop.xlane.xlu0 %5396
        %5398 = vadd.xlane.f32.xlu0 %v5373
        %v5399 = vpop.xlane.xlu0 %5398
        %5400 = vadd.xlane.f32.xlu0 %v5374
        %v5401 = vpop.xlane.xlu0 %5400
        %5402 = vadd.xlane.f32.xlu0 %v5375
        %v5403 = vpop.xlane.xlu0 %5402
        %5404 = vadd.xlane.f32.xlu0 %v5376
        %v5405 = vpop.xlane.xlu0 %5404
        %5406 = vadd.xlane.f32.xlu0 %v5377
        %v5407 = vpop.xlane.xlu0 %5406
        %5408 = vadd.xlane.f32.xlu0 %v5378
        %v5409 = vpop.xlane.xlu0 %5408
        %5410 = vadd.xlane.f32.xlu0 %v5379
        %v5411 = vpop.xlane.xlu0 %5410
        %vm5412 = vcmp.eq.f32.partialorder %v5381, 0.0
        %vm5413 = vcmp.eq.f32.partialorder %v5383, 0.0
        %vm5414 = vcmp.eq.f32.partialorder %v5385, 0.0
        %vm5415 = vcmp.eq.f32.partialorder %v5387, 0.0
        %vm5416 = vcmp.eq.f32.partialorder %v5389, 0.0
        %vm5417 = vcmp.eq.f32.partialorder %v5391, 0.0
        %vm5418 = vcmp.eq.f32.partialorder %v5393, 0.0
        %vm5419 = vcmp.eq.f32.partialorder %v5395, 0.0
        %vm5420 = vcmp.eq.f32.partialorder %v5397, 0.0
        %vm5421 = vcmp.eq.f32.partialorder %v5399, 0.0
        %vm5422 = vcmp.eq.f32.partialorder %v5401, 0.0
        %vm5423 = vcmp.eq.f32.partialorder %v5403, 0.0
        %vm5424 = vcmp.eq.f32.partialorder %v5405, 0.0
        %vm5425 = vcmp.eq.f32.partialorder %v5407, 0.0
        %vm5426 = vcmp.eq.f32.partialorder %v5409, 0.0
        %vm5427 = vcmp.eq.f32.partialorder %v5411, 0.0
        %v5428 = vsel %vm5412, 1.0, %v5381
        %v5429 = vsel %vm5413, 1.0, %v5383
        %v5430 = vsel %vm5414, 1.0, %v5385
        %v5431 = vsel %vm5415, 1.0, %v5387
        %v5432 = vsel %vm5416, 1.0, %v5389
        %v5433 = vsel %vm5417, 1.0, %v5391
        %v5434 = vsel %vm5418, 1.0, %v5393
        %v5435 = vsel %vm5419, 1.0, %v5395
        %v5436 = vsel %vm5420, 1.0, %v5397
        %v5437 = vsel %vm5421, 1.0, %v5399
        %v5438 = vsel %vm5422, 1.0, %v5401
        %v5439 = vsel %vm5423, 1.0, %v5403
        %v5440 = vsel %vm5424, 1.0, %v5405
        %v5441 = vsel %vm5425, 1.0, %v5407
        %v5442 = vsel %vm5426, 1.0, %v5409
        %v5443 = vsel %vm5427, 1.0, %v5411
        %v5444 = vrcp.pop %v5428
        %v5445 = vrcp.pop %v5429
        %v5446 = vrcp.pop %v5430
        %v5447 = vrcp.pop %v5431
        %v5448 = vrcp.pop %v5432
        %v5449 = vrcp.pop %v5433
        %v5450 = vrcp.pop %v5434
        %v5451 = vrcp.pop %v5435
        %v5452 = vrcp.pop %v5436
        %v5453 = vrcp.pop %v5437
        %v5454 = vrcp.pop %v5438
        %v5455 = vrcp.pop %v5439
        %v5456 = vrcp.pop %v5440
        %v5457 = vrcp.pop %v5441
        %v5458 = vrcp.pop %v5442
        %v5459 = vrcp.pop %v5443
        %v5460 = vmul.f32 %v5364, %v5444
        %v5461 = vmul.f32 %v5365, %v5445
        %v5462 = vmul.f32 %v5366, %v5446
        %v5463 = vmul.f32 %v5367, %v5447
        %v5464 = vmul.f32 %v5368, %v5448
        %v5465 = vmul.f32 %v5369, %v5449
        %v5466 = vmul.f32 %v5370, %v5450
        %v5467 = vmul.f32 %v5371, %v5451
        %v5468 = vmul.f32 %v5372, %v5452
        %v5469 = vmul.f32 %v5373, %v5453
        %v5470 = vmul.f32 %v5374, %v5454
        %v5471 = vmul.f32 %v5375, %v5455
        %v5472 = vmul.f32 %v5376, %v5456
        %v5473 = vmul.f32 %v5377, %v5457
        %v5474 = vmul.f32 %v5378, %v5458
        %v5475 = vmul.f32 %v5379, %v5459
        %v5476 = vpack.c.bf16 %v5461, %v5460
        %v5477 = vpack.c.bf16 %v5463, %v5462
        %v5478 = vpack.c.bf16 %v5465, %v5464
        %v5479 = vpack.c.bf16 %v5467, %v5466
        %v5480 = vpack.c.bf16 %v5469, %v5468
        %v5481 = vpack.c.bf16 %v5471, %v5470
        %v5482 = vpack.c.bf16 %v5473, %v5472
        %v5483 = vpack.c.bf16 %v5475, %v5474
        %5484 = vrot.lane.b32.xlu0 %v3805, 64
        %v5485 = vpop.permute.xlu0 %5484
        %5486 = vrot.lane.b32.xlu0 %v3806, 64
        %v5487 = vpop.permute.xlu0 %5486
        %5488 = vrot.lane.b32.xlu0 %v3807, 64
        %v5489 = vpop.permute.xlu0 %5488
        %5490 = vrot.lane.b32.xlu0 %v3808, 64
        %v5491 = vpop.permute.xlu0 %5490
        %5492 = vrot.lane.b32.xlu0 %v3809, 64
        %v5493 = vpop.permute.xlu0 %5492
        %5494 = vrot.lane.b32.xlu0 %v3810, 64
        %v5495 = vpop.permute.xlu0 %5494
        %5496 = vrot.lane.b32.xlu0 %v3811, 64
        %v5497 = vpop.permute.xlu0 %5496
        %5498 = vrot.lane.b32.xlu0 %v3812, 64
        %v5499 = vpop.permute.xlu0 %5498
        %5508 = vmatprep.subr.bf16.mxu0 0
        %5509 = vmatpush1.bf16.msra.mxu0 %v5485
        %5510 = vmatprep.subr.bf16.mxu0 0
        %5511 = vmatpush1.bf16.msra.mxu0 %v5487
        %5512 = vmatprep.subr.bf16.mxu0 0
        %5513 = vmatpush1.bf16.msra.mxu0 %v5489
        %5514 = vmatprep.subr.bf16.mxu0 0
        %5515 = vmatpush1.bf16.msra.mxu0 %v5491
        %5516 = vmatprep.subr.bf16.mxu0 0
        %5517 = vmatpush1.bf16.msra.mxu0 %v5493
        %5518 = vmatprep.subr.bf16.mxu0 0
        %5519 = vmatpush1.bf16.msra.mxu0 %v5495
        %5520 = vmatprep.subr.bf16.mxu0 0
        %5521 = vmatpush1.bf16.msra.mxu0 %v5497
        %5522 = vmatprep.subr.bf16.mxu0 0
        %5523 = vmatpush1.bf16.msra.mxu0 %v5499
        %5524 = vmatprep.subr.bf16.mxu0 0
        %5525 = vmatpush1.bf16.msra.mxu0 0
        %5526 = vmatprep.subr.bf16.mxu0 0
        %5527 = vmatpush1.bf16.msra.mxu0 0
        %5528 = vmatprep.subr.bf16.mxu0 0
        %5529 = vmatpush1.bf16.msra.mxu0 0
        %5530 = vmatprep.subr.bf16.mxu0 0
        %5531 = vmatpush1.bf16.msra.mxu0 0
        %5532 = vmatprep.subr.bf16.mxu0 0
        %5533 = vmatpush1.bf16.msra.mxu0 0
        %5534 = vmatprep.subr.bf16.mxu0 0
        %5535 = vmatpush1.bf16.msra.mxu0 0
        %5536 = vmatprep.subr.bf16.mxu0 0
        %5537 = vmatpush1.bf16.msra.mxu0 0
        %5538 = vmatprep.subr.bf16.mxu0 0
        %5539 = vmatpush1.bf16.msra.mxu0 0
        %5540 = vmatprep.mubr.bf16.mxu0 0
        %5541 = vmatmul.mubr.bf16.gmra.mrb[0].mxu0 %v5476
        %v5542 = vpop.f32.mrb[0].mxu0
        %v5543 = vadd.f32 0.0, %v5542
        %v5544 = vpop.f32.mrb[0].mxu0
        %v5545 = vpop.f32.mrb[0].mxu0
        %v5546 = vadd.f32 0.0, %v5545
        %v5547 = vpop.f32.mrb[0].mxu0
        %5548 = vmatprep.mubr.bf16.mxu0 0
        %5549 = vmatmul.mubr.bf16.gmra.mrb[0].mxu0 %v5477
        %v5550 = vpop.f32.mrb[0].mxu0
        %v5551 = vadd.f32 0.0, %v5550
        %v5552 = vpop.f32.mrb[0].mxu0
        %v5553 = vpop.f32.mrb[0].mxu0
        %v5554 = vadd.f32 0.0, %v5553
        %v5555 = vpop.f32.mrb[0].mxu0
        %5556 = vmatprep.mubr.bf16.mxu0 0
        %5557 = vmatmul.mubr.bf16.gmra.mrb[0].mxu0 %v5478
        %v5558 = vpop.f32.mrb[0].mxu0
        %v5559 = vadd.f32 0.0, %v5558
        %v5560 = vpop.f32.mrb[0].mxu0
        %v5561 = vpop.f32.mrb[0].mxu0
        %v5562 = vadd.f32 0.0, %v5561
        %v5563 = vpop.f32.mrb[0].mxu0
        %5564 = vmatprep.mubr.bf16.mxu0 0
        %5565 = vmatmul.mubr.bf16.gmra.mrb[0].mxu0 %v5479
        %v5566 = vpop.f32.mrb[0].mxu0
        %v5567 = vadd.f32 0.0, %v5566
        %v5568 = vpop.f32.mrb[0].mxu0
        %v5569 = vpop.f32.mrb[0].mxu0
        %v5570 = vadd.f32 0.0, %v5569
        %v5571 = vpop.f32.mrb[0].mxu0
        %5572 = vmatprep.mubr.bf16.mxu0 0
        %5573 = vmatmul.mubr.bf16.gmra.mrb[0].mxu0 %v5480
        %v5574 = vpop.f32.mrb[0].mxu0
        %v5575 = vadd.f32 0.0, %v5574
        %v5576 = vpop.f32.mrb[0].mxu0
        %v5577 = vpop.f32.mrb[0].mxu0
        %v5578 = vadd.f32 0.0, %v5577
        %v5579 = vpop.f32.mrb[0].mxu0
        %5580 = vmatprep.mubr.bf16.mxu0 0
        %5581 = vmatmul.mubr.bf16.gmra.mrb[0].mxu0 %v5481
        %v5582 = vpop.f32.mrb[0].mxu0
        %v5583 = vadd.f32 0.0, %v5582
        %v5584 = vpop.f32.mrb[0].mxu0
        %v5585 = vpop.f32.mrb[0].mxu0
        %v5586 = vadd.f32 0.0, %v5585
        %v5587 = vpop.f32.mrb[0].mxu0
        %5588 = vmatprep.mubr.bf16.mxu0 0
        %5589 = vmatmul.mubr.bf16.gmra.mrb[0].mxu0 %v5482
        %v5590 = vpop.f32.mrb[0].mxu0
        %v5591 = vadd.f32 0.0, %v5590
        %v5592 = vpop.f32.mrb[0].mxu0
        %v5593 = vpop.f32.mrb[0].mxu0
        %v5594 = vadd.f32 0.0, %v5593
        %v5595 = vpop.f32.mrb[0].mxu0
        %5596 = vmatprep.mubr.bf16.mxu0 0
        %5597 = vmatmul.mubr.bf16.gmra.mrb[0].mxu0 %v5483
        %v5598 = vpop.f32.mrb[0].mxu0
        %v5599 = vadd.f32 0.0, %v5598
        %v5600 = vpop.f32.mrb[0].mxu0
        %v5601 = vpop.f32.mrb[0].mxu0
        %v5602 = vadd.f32 0.0, %v5601
        %v5603 = vpop.f32.mrb[0].mxu0
        %5604 = vdwg.mxu0
        %vm5605 = vcmp.gt.f32.partialorder %v5543, 0.0
        %vm5606 = vcmp.gt.f32.partialorder %v5546, 0.0
        %vm5607 = vcmp.gt.f32.partialorder %v5551, 0.0
        %vm5608 = vcmp.gt.f32.partialorder %v5554, 0.0
        %vm5609 = vcmp.gt.f32.partialorder %v5559, 0.0
        %vm5610 = vcmp.gt.f32.partialorder %v5562, 0.0
        %vm5611 = vcmp.gt.f32.partialorder %v5567, 0.0
        %vm5612 = vcmp.gt.f32.partialorder %v5570, 0.0
        %vm5613 = vcmp.gt.f32.partialorder %v5575, 0.0
        %vm5614 = vcmp.gt.f32.partialorder %v5578, 0.0
        %vm5615 = vcmp.gt.f32.partialorder %v5583, 0.0
        %vm5616 = vcmp.gt.f32.partialorder %v5586, 0.0
        %vm5617 = vcmp.gt.f32.partialorder %v5591, 0.0
        %vm5618 = vcmp.gt.f32.partialorder %v5594, 0.0
        %vm5619 = vcmp.gt.f32.partialorder %v5599, 0.0
        %vm5620 = vcmp.gt.f32.partialorder %v5602, 0.0
        %v5621 = vmin.f32 %v5543, 0.0
        %v5622 = vmin.f32 %v5546, 0.0
        %v5623 = vmin.f32 %v5551, 0.0
        %v5624 = vmin.f32 %v5554, 0.0
        %v5625 = vmin.f32 %v5559, 0.0
        %v5626 = vmin.f32 %v5562, 0.0
        %v5627 = vmin.f32 %v5567, 0.0
        %v5628 = vmin.f32 %v5570, 0.0
        %v5629 = vmin.f32 %v5575, 0.0
        %v5630 = vmin.f32 %v5578, 0.0
        %v5631 = vmin.f32 %v5583, 0.0
        %v5632 = vmin.f32 %v5586, 0.0
        %v5633 = vmin.f32 %v5591, 0.0
        %v5634 = vmin.f32 %v5594, 0.0
        %v5635 = vmin.f32 %v5599, 0.0
        %v5636 = vmin.f32 %v5602, 0.0
        %v5637 = vmul.f32 %v5621, 1.442695
        %v5638 = vpow.pop %v5637
        %v5639 = vmul.f32 %v5622, 1.442695
        %v5640 = vpow.pop %v5639
        %v5641 = vmul.f32 %v5623, 1.442695
        %v5642 = vpow.pop %v5641
        %v5643 = vmul.f32 %v5624, 1.442695
        %v5644 = vpow.pop %v5643
        %v5645 = vmul.f32 %v5625, 1.442695
        %v5646 = vpow.pop %v5645
        %v5647 = vmul.f32 %v5626, 1.442695
        %v5648 = vpow.pop %v5647
        %v5649 = vmul.f32 %v5627, 1.442695
        %v5650 = vpow.pop %v5649
        %v5651 = vmul.f32 %v5628, 1.442695
        %v5652 = vpow.pop %v5651
        %v5653 = vmul.f32 %v5629, 1.442695
        %v5654 = vpow.pop %v5653
        %v5655 = vmul.f32 %v5630, 1.442695
        %v5656 = vpow.pop %v5655
        %v5657 = vmul.f32 %v5631, 1.442695
        %v5658 = vpow.pop %v5657
        %v5659 = vmul.f32 %v5632, 1.442695
        %v5660 = vpow.pop %v5659
        %v5661 = vmul.f32 %v5633, 1.442695
        %v5662 = vpow.pop %v5661
        %v5663 = vmul.f32 %v5634, 1.442695
        %v5664 = vpow.pop %v5663
        %v5665 = vmul.f32 %v5635, 1.442695
        %v5666 = vpow.pop %v5665
        %v5667 = vmul.f32 %v5636, 1.442695
        %v5668 = vpow.pop %v5667
        %v5669 = vsub.f32 %v5638, 1.0
        %v5670 = vsub.f32 %v5640, 1.0
        %v5671 = vsub.f32 %v5642, 1.0
        %v5672 = vsub.f32 %v5644, 1.0
        %v5673 = vsub.f32 %v5646, 1.0
        %v5674 = vsub.f32 %v5648, 1.0
        %v5675 = vsub.f32 %v5650, 1.0
        %v5676 = vsub.f32 %v5652, 1.0
        %v5677 = vsub.f32 %v5654, 1.0
        %v5678 = vsub.f32 %v5656, 1.0
        %v5679 = vsub.f32 %v5658, 1.0
        %v5680 = vsub.f32 %v5660, 1.0
        %v5681 = vsub.f32 %v5662, 1.0
        %v5682 = vsub.f32 %v5664, 1.0
        %v5683 = vsub.f32 %v5666, 1.0
        %v5684 = vsub.f32 %v5668, 1.0
        %v5685 = vsel %vm5605, %v5543, %v5669
        %v5686 = vsel %vm5606, %v5546, %v5670
        %v5687 = vsel %vm5607, %v5551, %v5671
        %v5688 = vsel %vm5608, %v5554, %v5672
        %v5689 = vsel %vm5609, %v5559, %v5673
        %v5690 = vsel %vm5610, %v5562, %v5674
        %v5691 = vsel %vm5611, %v5567, %v5675
        %v5692 = vsel %vm5612, %v5570, %v5676
        %v5693 = vsel %vm5613, %v5575, %v5677
        %v5694 = vsel %vm5614, %v5578, %v5678
        %v5695 = vsel %vm5615, %v5583, %v5679
        %v5696 = vsel %vm5616, %v5586, %v5680
        %v5697 = vsel %vm5617, %v5591, %v5681
        %v5698 = vsel %vm5618, %v5594, %v5682
        %v5699 = vsel %vm5619, %v5599, %v5683
        %v5700 = vsel %vm5620, %v5602, %v5684
        %5701 = vset.pattern.permute.xlu0 7
        %5702 = vperm.xlu0 %5701, %v3912
        %v5703 = vpop.permute.xlu0 %5702
        %5705 = vset.pattern.permute.xlu0 7
        %5706 = vperm.xlu0 %5705, %v3915
        %v5707 = vpop.permute.xlu0 %5706
        %5709 = vset.pattern.permute.xlu0 7
        %5710 = vperm.xlu0 %5709, %v3920
        %v5711 = vpop.permute.xlu0 %5710
        %5713 = vset.pattern.permute.xlu0 7
        %5714 = vperm.xlu0 %5713, %v3923
        %v5715 = vpop.permute.xlu0 %5714
        %5717 = vset.pattern.permute.xlu0 7
        %5718 = vperm.xlu0 %5717, %v3928
        %v5719 = vpop.permute.xlu0 %5718
        %5721 = vset.pattern.permute.xlu0 7
        %5722 = vperm.xlu0 %5721, %v3931
        %v5723 = vpop.permute.xlu0 %5722
        %5725 = vset.pattern.permute.xlu0 7
        %5726 = vperm.xlu0 %5725, %v3936
        %v5727 = vpop.permute.xlu0 %5726
        %5729 = vset.pattern.permute.xlu0 7
        %5730 = vperm.xlu0 %5729, %v3939
        %v5731 = vpop.permute.xlu0 %5730
        %5733 = vset.pattern.permute.xlu0 7
        %5734 = vperm.xlu0 %5733, %v3944
        %v5735 = vpop.permute.xlu0 %5734
        %5737 = vset.pattern.permute.xlu0 7
        %5738 = vperm.xlu0 %5737, %v3947
        %v5739 = vpop.permute.xlu0 %5738
        %5741 = vset.pattern.permute.xlu0 7
        %5742 = vperm.xlu0 %5741, %v3952
        %v5743 = vpop.permute.xlu0 %5742
        %5745 = vset.pattern.permute.xlu0 7
        %5746 = vperm.xlu0 %5745, %v3955
        %v5747 = vpop.permute.xlu0 %5746
        %5749 = vset.pattern.permute.xlu0 7
        %5750 = vperm.xlu0 %5749, %v3960
        %v5751 = vpop.permute.xlu0 %5750
        %5753 = vset.pattern.permute.xlu0 7
        %5754 = vperm.xlu0 %5753, %v3963
        %v5755 = vpop.permute.xlu0 %5754
        %5757 = vset.pattern.permute.xlu0 7
        %5758 = vperm.xlu0 %5757, %v3968
        %v5759 = vpop.permute.xlu0 %5758
        %5761 = vset.pattern.permute.xlu0 7
        %5762 = vperm.xlu0 %5761, %v3971
        %v5763 = vpop.permute.xlu0 %5762
        %v5765 = vlaneseq
        %v5766 = vshrl.u32 %v5765, 7
        %v5767 = vsub.s32 3, %v5766
        %v5768 = vrot.slane %v3990, %v5767
        %v5769 = vadd.f32 %v5703, %v5768
        %v5770 = vadd.f32 %v5707, %v5768
        %v5771 = vadd.f32 %v5711, %v5768
        %v5772 = vadd.f32 %v5715, %v5768
        %v5773 = vadd.f32 %v5719, %v5768
        %v5774 = vadd.f32 %v5723, %v5768
        %v5775 = vadd.f32 %v5727, %v5768
        %v5776 = vadd.f32 %v5731, %v5768
        %v5777 = vadd.f32 %v5735, %v5768
        %v5778 = vadd.f32 %v5739, %v5768
        %v5779 = vadd.f32 %v5743, %v5768
        %v5780 = vadd.f32 %v5747, %v5768
        %v5781 = vadd.f32 %v5751, %v5768
        %v5782 = vadd.f32 %v5755, %v5768
        %v5783 = vadd.f32 %v5759, %v5768
        %v5784 = vadd.f32 %v5763, %v5768
        %vm5785 = vcmp.gt.f32.partialorder %v5769, 0.0
        %vm5786 = vcmp.gt.f32.partialorder %v5770, 0.0
        %vm5787 = vcmp.gt.f32.partialorder %v5771, 0.0
        %vm5788 = vcmp.gt.f32.partialorder %v5772, 0.0
        %vm5789 = vcmp.gt.f32.partialorder %v5773, 0.0
        %vm5790 = vcmp.gt.f32.partialorder %v5774, 0.0
        %vm5791 = vcmp.gt.f32.partialorder %v5775, 0.0
        %vm5792 = vcmp.gt.f32.partialorder %v5776, 0.0
        %vm5793 = vcmp.gt.f32.partialorder %v5777, 0.0
        %vm5794 = vcmp.gt.f32.partialorder %v5778, 0.0
        %vm5795 = vcmp.gt.f32.partialorder %v5779, 0.0
        %vm5796 = vcmp.gt.f32.partialorder %v5780, 0.0
        %vm5797 = vcmp.gt.f32.partialorder %v5781, 0.0
        %vm5798 = vcmp.gt.f32.partialorder %v5782, 0.0
        %vm5799 = vcmp.gt.f32.partialorder %v5783, 0.0
        %vm5800 = vcmp.gt.f32.partialorder %v5784, 0.0
        %v5801 = vmul.f32 %v5769, 0.2
        %v5802 = vmul.f32 %v5770, 0.2
        %v5803 = vmul.f32 %v5771, 0.2
        %v5804 = vmul.f32 %v5772, 0.2
        %v5805 = vmul.f32 %v5773, 0.2
        %v5806 = vmul.f32 %v5774, 0.2
        %v5807 = vmul.f32 %v5775, 0.2
        %v5808 = vmul.f32 %v5776, 0.2
        %v5809 = vmul.f32 %v5777, 0.2
        %v5810 = vmul.f32 %v5778, 0.2
        %v5811 = vmul.f32 %v5779, 0.2
        %v5812 = vmul.f32 %v5780, 0.2
        %v5813 = vmul.f32 %v5781, 0.2
        %v5814 = vmul.f32 %v5782, 0.2
        %v5815 = vmul.f32 %v5783, 0.2
        %v5816 = vmul.f32 %v5784, 0.2
        %v5817 = vsel %vm5785, %v5769, %v5801
        %v5818 = vsel %vm5786, %v5770, %v5802
        %v5819 = vsel %vm5787, %v5771, %v5803
        %v5820 = vsel %vm5788, %v5772, %v5804
        %v5821 = vsel %vm5789, %v5773, %v5805
        %v5822 = vsel %vm5790, %v5774, %v5806
        %v5823 = vsel %vm5791, %v5775, %v5807
        %v5824 = vsel %vm5792, %v5776, %v5808
        %v5825 = vsel %vm5793, %v5777, %v5809
        %v5826 = vsel %vm5794, %v5778, %v5810
        %v5827 = vsel %vm5795, %v5779, %v5811
        %v5828 = vsel %vm5796, %v5780, %v5812
        %v5829 = vsel %vm5797, %v5781, %v5813
        %v5830 = vsel %vm5798, %v5782, %v5814
        %v5831 = vsel %vm5799, %v5783, %v5815
        %v5832 = vsel %vm5800, %v5784, %v5816
        %v5833 = vadd.f32 %v5817, %v513
        %v5834 = vadd.f32 %v5818, %v514
        %v5835 = vadd.f32 %v5819, %v515
        %v5836 = vadd.f32 %v5820, %v516
        %v5837 = vadd.f32 %v5821, %v517
        %v5838 = vadd.f32 %v5822, %v518
        %v5839 = vadd.f32 %v5823, %v519
        %v5840 = vadd.f32 %v5824, %v520
        %v5841 = vadd.f32 %v5825, %v521
        %v5842 = vadd.f32 %v5826, %v522
        %v5843 = vadd.f32 %v5827, %v523
        %v5844 = vadd.f32 %v5828, %v524
        %v5845 = vadd.f32 %v5829, %v525
        %v5846 = vadd.f32 %v5830, %v526
        %v5847 = vadd.f32 %v5831, %v527
        %v5848 = vadd.f32 %v5832, %v528
        %5849 = vmax.xlane.f32.xlu0 %v5833
        %v5850 = vpop.xlane.xlu0 %5849
        %5851 = vmax.xlane.f32.xlu0 %v5834
        %v5852 = vpop.xlane.xlu0 %5851
        %5853 = vmax.xlane.f32.xlu0 %v5835
        %v5854 = vpop.xlane.xlu0 %5853
        %5855 = vmax.xlane.f32.xlu0 %v5836
        %v5856 = vpop.xlane.xlu0 %5855
        %5857 = vmax.xlane.f32.xlu0 %v5837
        %v5858 = vpop.xlane.xlu0 %5857
        %5859 = vmax.xlane.f32.xlu0 %v5838
        %v5860 = vpop.xlane.xlu0 %5859
        %5861 = vmax.xlane.f32.xlu0 %v5839
        %v5862 = vpop.xlane.xlu0 %5861
        %5863 = vmax.xlane.f32.xlu0 %v5840
        %v5864 = vpop.xlane.xlu0 %5863
        %5865 = vmax.xlane.f32.xlu0 %v5841
        %v5866 = vpop.xlane.xlu0 %5865
        %5867 = vmax.xlane.f32.xlu0 %v5842
        %v5868 = vpop.xlane.xlu0 %5867
        %5869 = vmax.xlane.f32.xlu0 %v5843
        %v5870 = vpop.xlane.xlu0 %5869
        %5871 = vmax.xlane.f32.xlu0 %v5844
        %v5872 = vpop.xlane.xlu0 %5871
        %5873 = vmax.xlane.f32.xlu0 %v5845
        %v5874 = vpop.xlane.xlu0 %5873
        %5875 = vmax.xlane.f32.xlu0 %v5846
        %v5876 = vpop.xlane.xlu0 %5875
        %5877 = vmax.xlane.f32.xlu0 %v5847
        %v5878 = vpop.xlane.xlu0 %5877
        %5879 = vmax.xlane.f32.xlu0 %v5848
        %v5880 = vpop.xlane.xlu0 %5879
        %v5881 = vsub.f32 %v5833, %v5850
        %v5882 = vsub.f32 %v5834, %v5852
        %v5883 = vsub.f32 %v5835, %v5854
        %v5884 = vsub.f32 %v5836, %v5856
        %v5885 = vsub.f32 %v5837, %v5858
        %v5886 = vsub.f32 %v5838, %v5860
        %v5887 = vsub.f32 %v5839, %v5862
        %v5888 = vsub.f32 %v5840, %v5864
        %v5889 = vsub.f32 %v5841, %v5866
        %v5890 = vsub.f32 %v5842, %v5868
        %v5891 = vsub.f32 %v5843, %v5870
        %v5892 = vsub.f32 %v5844, %v5872
        %v5893 = vsub.f32 %v5845, %v5874
        %v5894 = vsub.f32 %v5846, %v5876
        %v5895 = vsub.f32 %v5847, %v5878
        %v5896 = vsub.f32 %v5848, %v5880
        %v5897 = vmul.f32 %v5881, 1.442695
        %v5898 = vpow.pop %v5897
        %v5899 = vmul.f32 %v5882, 1.442695
        %v5900 = vpow.pop %v5899
        %v5901 = vmul.f32 %v5883, 1.442695
        %v5902 = vpow.pop %v5901
        %v5903 = vmul.f32 %v5884, 1.442695
        %v5904 = vpow.pop %v5903
        %v5905 = vmul.f32 %v5885, 1.442695
        %v5906 = vpow.pop %v5905
        %v5907 = vmul.f32 %v5886, 1.442695
        %v5908 = vpow.pop %v5907
        %v5909 = vmul.f32 %v5887, 1.442695
        %v5910 = vpow.pop %v5909
        %v5911 = vmul.f32 %v5888, 1.442695
        %v5912 = vpow.pop %v5911
        %v5913 = vmul.f32 %v5889, 1.442695
        %v5914 = vpow.pop %v5913
        %v5915 = vmul.f32 %v5890, 1.442695
        %v5916 = vpow.pop %v5915
        %v5917 = vmul.f32 %v5891, 1.442695
        %v5918 = vpow.pop %v5917
        %v5919 = vmul.f32 %v5892, 1.442695
        %v5920 = vpow.pop %v5919
        %v5921 = vmul.f32 %v5893, 1.442695
        %v5922 = vpow.pop %v5921
        %v5923 = vmul.f32 %v5894, 1.442695
        %v5924 = vpow.pop %v5923
        %v5925 = vmul.f32 %v5895, 1.442695
        %v5926 = vpow.pop %v5925
        %v5927 = vmul.f32 %v5896, 1.442695
        %v5928 = vpow.pop %v5927
        %v5929 = vsel %vm529, %v5898, 0.0
        %v5930 = vsel %vm530, %v5900, 0.0
        %v5931 = vsel %vm531, %v5902, 0.0
        %v5932 = vsel %vm532, %v5904, 0.0
        %v5933 = vsel %vm533, %v5906, 0.0
        %v5934 = vsel %vm534, %v5908, 0.0
        %v5935 = vsel %vm535, %v5910, 0.0
        %v5936 = vsel %vm536, %v5912, 0.0
        %v5937 = vsel %vm537, %v5914, 0.0
        %v5938 = vsel %vm538, %v5916, 0.0
        %v5939 = vsel %vm539, %v5918, 0.0
        %v5940 = vsel %vm540, %v5920, 0.0
        %v5941 = vsel %vm541, %v5922, 0.0
        %v5942 = vsel %vm542, %v5924, 0.0
        %v5943 = vsel %vm543, %v5926, 0.0
        %v5944 = vsel %vm544, %v5928, 0.0
        %5945 = vadd.xlane.f32.xlu0 %v5929
        %v5946 = vpop.xlane.xlu0 %5945
        %5947 = vadd.xlane.f32.xlu0 %v5930
        %v5948 = vpop.xlane.xlu0 %5947
        %5949 = vadd.xlane.f32.xlu0 %v5931
        %v5950 = vpop.xlane.xlu0 %5949
        %5951 = vadd.xlane.f32.xlu0 %v5932
        %v5952 = vpop.xlane.xlu0 %5951
        %5953 = vadd.xlane.f32.xlu0 %v5933
        %v5954 = vpop.xlane.xlu0 %5953
        %5955 = vadd.xlane.f32.xlu0 %v5934
        %v5956 = vpop.xlane.xlu0 %5955
        %5957 = vadd.xlane.f32.xlu0 %v5935
        %v5958 = vpop.xlane.xlu0 %5957
        %5959 = vadd.xlane.f32.xlu0 %v5936
        %v5960 = vpop.xlane.xlu0 %5959
        %5961 = vadd.xlane.f32.xlu0 %v5937
        %v5962 = vpop.xlane.xlu0 %5961
        %5963 = vadd.xlane.f32.xlu0 %v5938
        %v5964 = vpop.xlane.xlu0 %5963
        %5965 = vadd.xlane.f32.xlu0 %v5939
        %v5966 = vpop.xlane.xlu0 %5965
        %5967 = vadd.xlane.f32.xlu0 %v5940
        %v5968 = vpop.xlane.xlu0 %5967
        %5969 = vadd.xlane.f32.xlu0 %v5941
        %v5970 = vpop.xlane.xlu0 %5969
        %5971 = vadd.xlane.f32.xlu0 %v5942
        %v5972 = vpop.xlane.xlu0 %5971
        %5973 = vadd.xlane.f32.xlu0 %v5943
        %v5974 = vpop.xlane.xlu0 %5973
        %5975 = vadd.xlane.f32.xlu0 %v5944
        %v5976 = vpop.xlane.xlu0 %5975
        %vm5977 = vcmp.eq.f32.partialorder %v5946, 0.0
        %vm5978 = vcmp.eq.f32.partialorder %v5948, 0.0
        %vm5979 = vcmp.eq.f32.partialorder %v5950, 0.0
        %vm5980 = vcmp.eq.f32.partialorder %v5952, 0.0
        %vm5981 = vcmp.eq.f32.partialorder %v5954, 0.0
        %vm5982 = vcmp.eq.f32.partialorder %v5956, 0.0
        %vm5983 = vcmp.eq.f32.partialorder %v5958, 0.0
        %vm5984 = vcmp.eq.f32.partialorder %v5960, 0.0
        %vm5985 = vcmp.eq.f32.partialorder %v5962, 0.0
        %vm5986 = vcmp.eq.f32.partialorder %v5964, 0.0
        %vm5987 = vcmp.eq.f32.partialorder %v5966, 0.0
        %vm5988 = vcmp.eq.f32.partialorder %v5968, 0.0
        %vm5989 = vcmp.eq.f32.partialorder %v5970, 0.0
        %vm5990 = vcmp.eq.f32.partialorder %v5972, 0.0
        %vm5991 = vcmp.eq.f32.partialorder %v5974, 0.0
        %vm5992 = vcmp.eq.f32.partialorder %v5976, 0.0
        %v5993 = vsel %vm5977, 1.0, %v5946
        %v5994 = vsel %vm5978, 1.0, %v5948
        %v5995 = vsel %vm5979, 1.0, %v5950
        %v5996 = vsel %vm5980, 1.0, %v5952
        %v5997 = vsel %vm5981, 1.0, %v5954
        %v5998 = vsel %vm5982, 1.0, %v5956
        %v5999 = vsel %vm5983, 1.0, %v5958
        %v6000 = vsel %vm5984, 1.0, %v5960
        %v6001 = vsel %vm5985, 1.0, %v5962
        %v6002 = vsel %vm5986, 1.0, %v5964
        %v6003 = vsel %vm5987, 1.0, %v5966
        %v6004 = vsel %vm5988, 1.0, %v5968
        %v6005 = vsel %vm5989, 1.0, %v5970
        %v6006 = vsel %vm5990, 1.0, %v5972
        %v6007 = vsel %vm5991, 1.0, %v5974
        %v6008 = vsel %vm5992, 1.0, %v5976
        %v6009 = vrcp.pop %v5993
        %v6010 = vrcp.pop %v5994
        %v6011 = vrcp.pop %v5995
        %v6012 = vrcp.pop %v5996
        %v6013 = vrcp.pop %v5997
        %v6014 = vrcp.pop %v5998
        %v6015 = vrcp.pop %v5999
        %v6016 = vrcp.pop %v6000
        %v6017 = vrcp.pop %v6001
        %v6018 = vrcp.pop %v6002
        %v6019 = vrcp.pop %v6003
        %v6020 = vrcp.pop %v6004
        %v6021 = vrcp.pop %v6005
        %v6022 = vrcp.pop %v6006
        %v6023 = vrcp.pop %v6007
        %v6024 = vrcp.pop %v6008
        %v6025 = vmul.f32 %v5929, %v6009
        %v6026 = vmul.f32 %v5930, %v6010
        %v6027 = vmul.f32 %v5931, %v6011
        %v6028 = vmul.f32 %v5932, %v6012
        %v6029 = vmul.f32 %v5933, %v6013
        %v6030 = vmul.f32 %v5934, %v6014
        %v6031 = vmul.f32 %v5935, %v6015
        %v6032 = vmul.f32 %v5936, %v6016
        %v6033 = vmul.f32 %v5937, %v6017
        %v6034 = vmul.f32 %v5938, %v6018
        %v6035 = vmul.f32 %v5939, %v6019
        %v6036 = vmul.f32 %v5940, %v6020
        %v6037 = vmul.f32 %v5941, %v6021
        %v6038 = vmul.f32 %v5942, %v6022
        %v6039 = vmul.f32 %v5943, %v6023
        %v6040 = vmul.f32 %v5944, %v6024
        %v6041 = vpack.c.bf16 %v6026, %v6025
        %v6042 = vpack.c.bf16 %v6028, %v6027
        %v6043 = vpack.c.bf16 %v6030, %v6029
        %v6044 = vpack.c.bf16 %v6032, %v6031
        %v6045 = vpack.c.bf16 %v6034, %v6033
        %v6046 = vpack.c.bf16 %v6036, %v6035
        %v6047 = vpack.c.bf16 %v6038, %v6037
        %v6048 = vpack.c.bf16 %v6040, %v6039
        %6049 = vrot.lane.b32.xlu0 %v3805, 32
        %v6050 = vpop.permute.xlu0 %6049
        %6051 = vrot.lane.b32.xlu0 %v3806, 32
        %v6052 = vpop.permute.xlu0 %6051
        %6053 = vrot.lane.b32.xlu0 %v3807, 32
        %v6054 = vpop.permute.xlu0 %6053
        %6055 = vrot.lane.b32.xlu0 %v3808, 32
        %v6056 = vpop.permute.xlu0 %6055
        %6057 = vrot.lane.b32.xlu0 %v3809, 32
        %v6058 = vpop.permute.xlu0 %6057
        %6059 = vrot.lane.b32.xlu0 %v3810, 32
        %v6060 = vpop.permute.xlu0 %6059
        %6061 = vrot.lane.b32.xlu0 %v3811, 32
        %v6062 = vpop.permute.xlu0 %6061
        %6063 = vrot.lane.b32.xlu0 %v3812, 32
        %v6064 = vpop.permute.xlu0 %6063
        %6073 = vmatprep.subr.bf16.mxu0 0
        %6074 = vmatpush1.bf16.msra.mxu0 %v6050
        %6075 = vmatprep.subr.bf16.mxu0 0
        %6076 = vmatpush1.bf16.msra.mxu0 %v6052
        %6077 = vmatprep.subr.bf16.mxu0 0
        %6078 = vmatpush1.bf16.msra.mxu0 %v6054
        %6079 = vmatprep.subr.bf16.mxu0 0
        %6080 = vmatpush1.bf16.msra.mxu0 %v6056
        %6081 = vmatprep.subr.bf16.mxu0 0
        %6082 = vmatpush1.bf16.msra.mxu0 %v6058
        %6083 = vmatprep.subr.bf16.mxu0 0
        %6084 = vmatpush1.bf16.msra.mxu0 %v6060
        %6085 = vmatprep.subr.bf16.mxu0 0
        %6086 = vmatpush1.bf16.msra.mxu0 %v6062
        %6087 = vmatprep.subr.bf16.mxu0 0
        %6088 = vmatpush1.bf16.msra.mxu0 %v6064
        %6089 = vmatprep.subr.bf16.mxu0 0
        %6090 = vmatpush1.bf16.msra.mxu0 0
        %6091 = vmatprep.subr.bf16.mxu0 0
        %6092 = vmatpush1.bf16.msra.mxu0 0
        %6093 = vmatprep.subr.bf16.mxu0 0
        %6094 = vmatpush1.bf16.msra.mxu0 0
        %6095 = vmatprep.subr.bf16.mxu0 0
        %6096 = vmatpush1.bf16.msra.mxu0 0
        %6097 = vmatprep.subr.bf16.mxu0 0
        %6098 = vmatpush1.bf16.msra.mxu0 0
        %6099 = vmatprep.subr.bf16.mxu0 0
        %6100 = vmatpush1.bf16.msra.mxu0 0
        %6101 = vmatprep.subr.bf16.mxu0 0
        %6102 = vmatpush1.bf16.msra.mxu0 0
        %6103 = vmatprep.subr.bf16.mxu0 0
        %6104 = vmatpush1.bf16.msra.mxu0 0
        %6105 = vmatprep.mubr.bf16.mxu0 0
        %6106 = vmatmul.mubr.bf16.gmra.mrb[0].mxu0 %v6041
        %v6107 = vpop.f32.mrb[0].mxu0
        %v6108 = vadd.f32 0.0, %v6107
        %v6109 = vpop.f32.mrb[0].mxu0
        %v6110 = vpop.f32.mrb[0].mxu0
        %v6111 = vadd.f32 0.0, %v6110
        %v6112 = vpop.f32.mrb[0].mxu0
        %6113 = vmatprep.mubr.bf16.mxu0 0
        %6114 = vmatmul.mubr.bf16.gmra.mrb[0].mxu0 %v6042
        %v6115 = vpop.f32.mrb[0].mxu0
        %v6116 = vadd.f32 0.0, %v6115
        %v6117 = vpop.f32.mrb[0].mxu0
        %v6118 = vpop.f32.mrb[0].mxu0
        %v6119 = vadd.f32 0.0, %v6118
        %v6120 = vpop.f32.mrb[0].mxu0
        %6121 = vmatprep.mubr.bf16.mxu0 0
        %6122 = vmatmul.mubr.bf16.gmra.mrb[0].mxu0 %v6043
        %v6123 = vpop.f32.mrb[0].mxu0
        %v6124 = vadd.f32 0.0, %v6123
        %v6125 = vpop.f32.mrb[0].mxu0
        %v6126 = vpop.f32.mrb[0].mxu0
        %v6127 = vadd.f32 0.0, %v6126
        %v6128 = vpop.f32.mrb[0].mxu0
        %6129 = vmatprep.mubr.bf16.mxu0 0
        %6130 = vmatmul.mubr.bf16.gmra.mrb[0].mxu0 %v6044
        %v6131 = vpop.f32.mrb[0].mxu0
        %v6132 = vadd.f32 0.0, %v6131
        %v6133 = vpop.f32.mrb[0].mxu0
        %v6134 = vpop.f32.mrb[0].mxu0
        %v6135 = vadd.f32 0.0, %v6134
        %v6136 = vpop.f32.mrb[0].mxu0
        %6137 = vmatprep.mubr.bf16.mxu0 0
        %6138 = vmatmul.mubr.bf16.gmra.mrb[0].mxu0 %v6045
        %v6139 = vpop.f32.mrb[0].mxu0
        %v6140 = vadd.f32 0.0, %v6139
        %v6141 = vpop.f32.mrb[0].mxu0
        %v6142 = vpop.f32.mrb[0].mxu0
        %v6143 = vadd.f32 0.0, %v6142
        %v6144 = vpop.f32.mrb[0].mxu0
        %6145 = vmatprep.mubr.bf16.mxu0 0
        %6146 = vmatmul.mubr.bf16.gmra.mrb[0].mxu0 %v6046
        %v6147 = vpop.f32.mrb[0].mxu0
        %v6148 = vadd.f32 0.0, %v6147
        %v6149 = vpop.f32.mrb[0].mxu0
        %v6150 = vpop.f32.mrb[0].mxu0
        %v6151 = vadd.f32 0.0, %v6150
        %v6152 = vpop.f32.mrb[0].mxu0
        %6153 = vmatprep.mubr.bf16.mxu0 0
        %6154 = vmatmul.mubr.bf16.gmra.mrb[0].mxu0 %v6047
        %v6155 = vpop.f32.mrb[0].mxu0
        %v6156 = vadd.f32 0.0, %v6155
        %v6157 = vpop.f32.mrb[0].mxu0
        %v6158 = vpop.f32.mrb[0].mxu0
        %v6159 = vadd.f32 0.0, %v6158
        %v6160 = vpop.f32.mrb[0].mxu0
        %6161 = vmatprep.mubr.bf16.mxu0 0
        %6162 = vmatmul.mubr.bf16.gmra.mrb[0].mxu0 %v6048
        %v6163 = vpop.f32.mrb[0].mxu0
        %v6164 = vadd.f32 0.0, %v6163
        %v6165 = vpop.f32.mrb[0].mxu0
        %v6166 = vpop.f32.mrb[0].mxu0
        %v6167 = vadd.f32 0.0, %v6166
        %v6168 = vpop.f32.mrb[0].mxu0
        %6169 = vdwg.mxu0
        %vm6170 = vcmp.gt.f32.partialorder %v6108, 0.0
        %vm6171 = vcmp.gt.f32.partialorder %v6111, 0.0
        %vm6172 = vcmp.gt.f32.partialorder %v6116, 0.0
        %vm6173 = vcmp.gt.f32.partialorder %v6119, 0.0
        %vm6174 = vcmp.gt.f32.partialorder %v6124, 0.0
        %vm6175 = vcmp.gt.f32.partialorder %v6127, 0.0
        %vm6176 = vcmp.gt.f32.partialorder %v6132, 0.0
        %vm6177 = vcmp.gt.f32.partialorder %v6135, 0.0
        %vm6178 = vcmp.gt.f32.partialorder %v6140, 0.0
        %vm6179 = vcmp.gt.f32.partialorder %v6143, 0.0
        %vm6180 = vcmp.gt.f32.partialorder %v6148, 0.0
        %vm6181 = vcmp.gt.f32.partialorder %v6151, 0.0
        %vm6182 = vcmp.gt.f32.partialorder %v6156, 0.0
        %vm6183 = vcmp.gt.f32.partialorder %v6159, 0.0
        %vm6184 = vcmp.gt.f32.partialorder %v6164, 0.0
        %vm6185 = vcmp.gt.f32.partialorder %v6167, 0.0
        %v6186 = vmin.f32 %v6108, 0.0
        %v6187 = vmin.f32 %v6111, 0.0
        %v6188 = vmin.f32 %v6116, 0.0
        %v6189 = vmin.f32 %v6119, 0.0
        %v6190 = vmin.f32 %v6124, 0.0
        %v6191 = vmin.f32 %v6127, 0.0
        %v6192 = vmin.f32 %v6132, 0.0
        %v6193 = vmin.f32 %v6135, 0.0
        %v6194 = vmin.f32 %v6140, 0.0
        %v6195 = vmin.f32 %v6143, 0.0
        %v6196 = vmin.f32 %v6148, 0.0
        %v6197 = vmin.f32 %v6151, 0.0
        %v6198 = vmin.f32 %v6156, 0.0
        %v6199 = vmin.f32 %v6159, 0.0
        %v6200 = vmin.f32 %v6164, 0.0
        %v6201 = vmin.f32 %v6167, 0.0
        %v6202 = vmul.f32 %v6186, 1.442695
        %v6203 = vpow.pop %v6202
        %v6204 = vmul.f32 %v6187, 1.442695
        %v6205 = vpow.pop %v6204
        %v6206 = vmul.f32 %v6188, 1.442695
        %v6207 = vpow.pop %v6206
        %v6208 = vmul.f32 %v6189, 1.442695
        %v6209 = vpow.pop %v6208
        %v6210 = vmul.f32 %v6190, 1.442695
        %v6211 = vpow.pop %v6210
        %v6212 = vmul.f32 %v6191, 1.442695
        %v6213 = vpow.pop %v6212
        %v6214 = vmul.f32 %v6192, 1.442695
        %v6215 = vpow.pop %v6214
        %v6216 = vmul.f32 %v6193, 1.442695
        %v6217 = vpow.pop %v6216
        %v6218 = vmul.f32 %v6194, 1.442695
        %v6219 = vpow.pop %v6218
        %v6220 = vmul.f32 %v6195, 1.442695
        %v6221 = vpow.pop %v6220
        %v6222 = vmul.f32 %v6196, 1.442695
        %v6223 = vpow.pop %v6222
        %v6224 = vmul.f32 %v6197, 1.442695
        %v6225 = vpow.pop %v6224
        %v6226 = vmul.f32 %v6198, 1.442695
        %v6227 = vpow.pop %v6226
        %v6228 = vmul.f32 %v6199, 1.442695
        %v6229 = vpow.pop %v6228
        %v6230 = vmul.f32 %v6200, 1.442695
        %v6231 = vpow.pop %v6230
        %v6232 = vmul.f32 %v6201, 1.442695
        %v6233 = vpow.pop %v6232
        %v6234 = vsub.f32 %v6203, 1.0
        %v6235 = vsub.f32 %v6205, 1.0
        %v6236 = vsub.f32 %v6207, 1.0
        %v6237 = vsub.f32 %v6209, 1.0
        %v6238 = vsub.f32 %v6211, 1.0
        %v6239 = vsub.f32 %v6213, 1.0
        %v6240 = vsub.f32 %v6215, 1.0
        %v6241 = vsub.f32 %v6217, 1.0
        %v6242 = vsub.f32 %v6219, 1.0
        %v6243 = vsub.f32 %v6221, 1.0
        %v6244 = vsub.f32 %v6223, 1.0
        %v6245 = vsub.f32 %v6225, 1.0
        %v6246 = vsub.f32 %v6227, 1.0
        %v6247 = vsub.f32 %v6229, 1.0
        %v6248 = vsub.f32 %v6231, 1.0
        %v6249 = vsub.f32 %v6233, 1.0
        %v6250 = vsel %vm6170, %v6108, %v6234
        %v6251 = vsel %vm6171, %v6111, %v6235
        %v6252 = vsel %vm6172, %v6116, %v6236
        %v6253 = vsel %vm6173, %v6119, %v6237
        %v6254 = vsel %vm6174, %v6124, %v6238
        %v6255 = vsel %vm6175, %v6127, %v6239
        %v6256 = vsel %vm6176, %v6132, %v6240
        %v6257 = vsel %vm6177, %v6135, %v6241
        %v6258 = vsel %vm6178, %v6140, %v6242
        %v6259 = vsel %vm6179, %v6143, %v6243
        %v6260 = vsel %vm6180, %v6148, %v6244
        %v6261 = vsel %vm6181, %v6151, %v6245
        %v6262 = vsel %vm6182, %v6156, %v6246
        %v6263 = vsel %vm6183, %v6159, %v6247
        %v6264 = vsel %vm6184, %v6164, %v6248
        %v6265 = vsel %vm6185, %v6167, %v6249
        %v6266 = vld [vmem:[%s8] sm:$0x1]
        %v6267 = vld [vmem:[#allocation7] sm:$0xf]
        %v6268 = vld [vmem:[#allocation7 + $0x4] sm:$0xf]
        %v6269 = vpack.c.bf16 %v4548, %v4547
        %v6270 = vpack.c.bf16 %v4550, %v4549
        %v6271 = vpack.c.bf16 %v4552, %v4551
        %v6272 = vpack.c.bf16 %v4554, %v4553
        %v6273 = vpack.c.bf16 %v4556, %v4555
        %v6274 = vpack.c.bf16 %v4558, %v4557
        %v6275 = vpack.c.bf16 %v4560, %v4559
        %v6276 = vpack.c.bf16 %v4562, %v4561
        %v6279 = vunpack.c.l.b16 %v6267
        %v6280 = vunpack.c.l.b16 %v6268
        %v6281 = vpack.c.b16 %v6280, %v6279
        %6283 = vmatprep.subr.bf16.mxu0 0
        %6284 = vmatpush1.bf16.msra.mxu0 %v6269
        %6285 = vmatprep.subr.bf16.mxu0 0
        %6286 = vmatpush1.bf16.msra.mxu0 %v6270
        %6287 = vmatprep.subr.bf16.mxu0 0
        %6288 = vmatpush1.bf16.msra.mxu0 %v6271
        %6289 = vmatprep.subr.bf16.mxu0 0
        %6290 = vmatpush1.bf16.msra.mxu0 %v6272
        %6291 = vmatprep.subr.bf16.mxu0 0
        %6292 = vmatpush1.bf16.msra.mxu0 %v6273
        %6293 = vmatprep.subr.bf16.mxu0 0
        %6294 = vmatpush1.bf16.msra.mxu0 %v6274
        %6295 = vmatprep.subr.bf16.mxu0 0
        %6296 = vmatpush1.bf16.msra.mxu0 %v6275
        %6297 = vmatprep.subr.bf16.mxu0 0
        %6298 = vmatpush1.bf16.msra.mxu0 %v6276
        %6299 = vmatprep.subr.bf16.mxu0 0
        %6300 = vmatpush1.bf16.msra.mxu0 0
        %6301 = vmatprep.subr.bf16.mxu0 0
        %6302 = vmatpush1.bf16.msra.mxu0 0
        %6303 = vmatprep.subr.bf16.mxu0 0
        %6304 = vmatpush1.bf16.msra.mxu0 0
        %6305 = vmatprep.subr.bf16.mxu0 0
        %6306 = vmatpush1.bf16.msra.mxu0 0
        %6307 = vmatprep.subr.bf16.mxu0 0
        %6308 = vmatpush1.bf16.msra.mxu0 0
        %6309 = vmatprep.subr.bf16.mxu0 0
        %6310 = vmatpush1.bf16.msra.mxu0 0
        %6311 = vmatprep.subr.bf16.mxu0 0
        %6312 = vmatpush1.bf16.msra.mxu0 0
        %6313 = vmatprep.subr.bf16.mxu0 0
        %6314 = vmatpush1.bf16.msra.mxu0 0
        %6315 = vmatprep.mubr.bf16.mxu0 0
        %6316 = vmatmul.mubr.bf16.gmra.mrb[0].mxu0 %v6281
        %v6317 = vpop.f32.mrb[0].mxu0
        %v6318 = vadd.f32 0.0, %v6317
        %v6319 = vpop.f32.mrb[0].mxu0
        %v6320 = vpop.f32.mrb[0].mxu0
        %v6321 = vadd.f32 0.0, %v6320
        %v6322 = vpop.f32.mrb[0].mxu0
        %6323 = vdwg.mxu0
        %v6324 = vpack.c.bf16 %v6321, %v6318
        %v6325 = vld [vmem:[%s7] sm:$0xf]
        %v6326 = vld [vmem:[%s7 + $0x4] sm:$0xf]
        %v6327 = vld [vmem:[%s7 + $0x8] sm:$0xf]
        %v6328 = vld [vmem:[%s7 + $0xc] sm:$0xf]
        %v6333 = vunpack.c.l.b16 %v6325
        %v6334 = vunpack.c.l.b16 %v6326
        %v6335 = vunpack.c.l.b16 %v6327
        %v6336 = vunpack.c.l.b16 %v6328
        %v6337 = vpack.c.b16 %v6334, %v6333
        %v6338 = vpack.c.b16 %v6336, %v6335
        %v6342 = vsel %vm3228, %v6324, 0
        %6344 = vmatprep.subr.bf16.mxu0 0
        %6345 = vmatpush1.bf16.msra.mxu0 %v6337
        %6346 = vmatprep.subr.bf16.mxu0 0
        %6347 = vmatpush1.bf16.msra.mxu0 %v6338
        %6348 = vmatprep.subr.bf16.mxu0 0
        %6349 = vmatpush1.bf16.msra.mxu0 0
        %6350 = vmatprep.subr.bf16.mxu0 0
        %6351 = vmatpush1.bf16.msra.mxu0 0
        %6352 = vmatprep.subr.bf16.mxu0 0
        %6353 = vmatpush1.bf16.msra.mxu0 0
        %6354 = vmatprep.subr.bf16.mxu0 0
        %6355 = vmatpush1.bf16.msra.mxu0 0
        %6356 = vmatprep.subr.bf16.mxu0 0
        %6357 = vmatpush1.bf16.msra.mxu0 0
        %6358 = vmatprep.subr.bf16.mxu0 0
        %6359 = vmatpush1.bf16.msra.mxu0 0
        %6360 = vmatprep.subr.bf16.mxu0 0
        %6361 = vmatpush1.bf16.msra.mxu0 0
        %6362 = vmatprep.subr.bf16.mxu0 0
        %6363 = vmatpush1.bf16.msra.mxu0 0
        %6364 = vmatprep.subr.bf16.mxu0 0
        %6365 = vmatpush1.bf16.msra.mxu0 0
        %6366 = vmatprep.subr.bf16.mxu0 0
        %6367 = vmatpush1.bf16.msra.mxu0 0
        %6368 = vmatprep.subr.bf16.mxu0 0
        %6369 = vmatpush1.bf16.msra.mxu0 0
        %6370 = vmatprep.subr.bf16.mxu0 0
        %6371 = vmatpush1.bf16.msra.mxu0 0
        %6372 = vmatprep.subr.bf16.mxu0 0
        %6373 = vmatpush1.bf16.msra.mxu0 0
        %6374 = vmatprep.subr.bf16.mxu0 0
        %6375 = vmatpush1.bf16.msra.mxu0 0
        %6376 = vmatprep.mubr.bf16.mxu0 0
        %6377 = vmatmul.mubr.bf16.gmra.mrb[0].mxu0 %v6342
        %v6378 = vpop.f32.mrb[0].mxu0
        %v6379 = vadd.f32 0.0, %v6378
        %v6380 = vpop.f32.mrb[0].mxu0
        %v6381 = vpop.f32.mrb[0].mxu0
        %v6382 = vadd.f32 0.0, %v6381
        %v6383 = vpop.f32.mrb[0].mxu0
        %6384 = vdwg.mxu0
        %v6386 = vlaneseq
        %v6387 = vshrl.u32 %v6386, 7
        %v6388 = vsub.s32 0, %v6387
        %v6389 = vrot.slane %v6266, %v6388
        %v6391 = vadd.f32 %v6389, %v6379
        %v6392 = vadd.f32 %v6389, %v6382
        %v6393 = vpack.c.bf16 %v5121, %v5120
        %v6394 = vpack.c.bf16 %v5123, %v5122
        %v6395 = vpack.c.bf16 %v5125, %v5124
        %v6396 = vpack.c.bf16 %v5127, %v5126
        %v6397 = vpack.c.bf16 %v5129, %v5128
        %v6398 = vpack.c.bf16 %v5131, %v5130
        %v6399 = vpack.c.bf16 %v5133, %v5132
        %v6400 = vpack.c.bf16 %v5135, %v5134
        %6401 = vmatprep.subr.bf16.mxu0 0
        %6402 = vmatpush1.bf16.msra.mxu0 %v6393
        %6403 = vmatprep.subr.bf16.mxu0 0
        %6404 = vmatpush1.bf16.msra.mxu0 %v6394
        %6405 = vmatprep.subr.bf16.mxu0 0
        %6406 = vmatpush1.bf16.msra.mxu0 %v6395
        %6407 = vmatprep.subr.bf16.mxu0 0
        %6408 = vmatpush1.bf16.msra.mxu0 %v6396
        %6409 = vmatprep.subr.bf16.mxu0 0
        %6410 = vmatpush1.bf16.msra.mxu0 %v6397
        %6411 = vmatprep.subr.bf16.mxu0 0
        %6412 = vmatpush1.bf16.msra.mxu0 %v6398
        %6413 = vmatprep.subr.bf16.mxu0 0
        %6414 = vmatpush1.bf16.msra.mxu0 %v6399
        %6415 = vmatprep.subr.bf16.mxu0 0
        %6416 = vmatpush1.bf16.msra.mxu0 %v6400
        %6417 = vmatprep.subr.bf16.mxu0 0
        %6418 = vmatpush1.bf16.msra.mxu0 0
        %6419 = vmatprep.subr.bf16.mxu0 0
        %6420 = vmatpush1.bf16.msra.mxu0 0
        %6421 = vmatprep.subr.bf16.mxu0 0
        %6422 = vmatpush1.bf16.msra.mxu0 0
        %6423 = vmatprep.subr.bf16.mxu0 0
        %6424 = vmatpush1.bf16.msra.mxu0 0
        %6425 = vmatprep.subr.bf16.mxu0 0
        %6426 = vmatpush1.bf16.msra.mxu0 0
        %6427 = vmatprep.subr.bf16.mxu0 0
        %6428 = vmatpush1.bf16.msra.mxu0 0
        %6429 = vmatprep.subr.bf16.mxu0 0
        %6430 = vmatpush1.bf16.msra.mxu0 0
        %6431 = vmatprep.subr.bf16.mxu0 0
        %6432 = vmatpush1.bf16.msra.mxu0 0
        %6433 = vmatprep.mubr.bf16.mxu0 0
        %6434 = vmatmul.mubr.bf16.gmra.mrb[0].mxu0 %v6281
        %v6435 = vpop.f32.mrb[0].mxu0
        %v6436 = vadd.f32 0.0, %v6435
        %v6437 = vpop.f32.mrb[0].mxu0
        %v6438 = vpop.f32.mrb[0].mxu0
        %v6439 = vadd.f32 0.0, %v6438
        %v6440 = vpop.f32.mrb[0].mxu0
        %6441 = vdwg.mxu0
        %v6442 = vpack.c.bf16 %v6439, %v6436
        %v6443 = vld [vmem:[%s7 + $0x10] sm:$0xf]
        %v6444 = vld [vmem:[%s7 + $0x14] sm:$0xf]
        %v6445 = vld [vmem:[%s7 + $0x18] sm:$0xf]
        %v6446 = vld [vmem:[%s7 + $0x1c] sm:$0xf]
        %v6451 = vunpack.c.l.b16 %v6443
        %v6452 = vunpack.c.l.b16 %v6444
        %v6453 = vunpack.c.l.b16 %v6445
        %v6454 = vunpack.c.l.b16 %v6446
        %v6455 = vpack.c.b16 %v6452, %v6451
        %v6456 = vpack.c.b16 %v6454, %v6453
        %v6460 = vsel %vm3228, %v6442, 0
        %6462 = vmatprep.subr.bf16.mxu0 0
        %6463 = vmatpush1.bf16.msra.mxu0 %v6455
        %6464 = vmatprep.subr.bf16.mxu0 0
        %6465 = vmatpush1.bf16.msra.mxu0 %v6456
        %6466 = vmatprep.subr.bf16.mxu0 0
        %6467 = vmatpush1.bf16.msra.mxu0 0
        %6468 = vmatprep.subr.bf16.mxu0 0
        %6469 = vmatpush1.bf16.msra.mxu0 0
        %6470 = vmatprep.subr.bf16.mxu0 0
        %6471 = vmatpush1.bf16.msra.mxu0 0
        %6472 = vmatprep.subr.bf16.mxu0 0
        %6473 = vmatpush1.bf16.msra.mxu0 0
        %6474 = vmatprep.subr.bf16.mxu0 0
        %6475 = vmatpush1.bf16.msra.mxu0 0
        %6476 = vmatprep.subr.bf16.mxu0 0
        %6477 = vmatpush1.bf16.msra.mxu0 0
        %6478 = vmatprep.subr.bf16.mxu0 0
        %6479 = vmatpush1.bf16.msra.mxu0 0
        %6480 = vmatprep.subr.bf16.mxu0 0
        %6481 = vmatpush1.bf16.msra.mxu0 0
        %6482 = vmatprep.subr.bf16.mxu0 0
        %6483 = vmatpush1.bf16.msra.mxu0 0
        %6484 = vmatprep.subr.bf16.mxu0 0
        %6485 = vmatpush1.bf16.msra.mxu0 0
        %6486 = vmatprep.subr.bf16.mxu0 0
        %6487 = vmatpush1.bf16.msra.mxu0 0
        %6488 = vmatprep.subr.bf16.mxu0 0
        %6489 = vmatpush1.bf16.msra.mxu0 0
        %6490 = vmatprep.subr.bf16.mxu0 0
        %6491 = vmatpush1.bf16.msra.mxu0 0
        %6492 = vmatprep.subr.bf16.mxu0 0
        %6493 = vmatpush1.bf16.msra.mxu0 0
        %6494 = vmatprep.mubr.bf16.mxu0 0
        %6495 = vmatmul.mubr.bf16.gmra.mrb[0].mxu0 %v6460
        %v6496 = vpop.f32.mrb[0].mxu0
        %v6497 = vadd.f32 0.0, %v6496
        %v6498 = vpop.f32.mrb[0].mxu0
        %v6499 = vpop.f32.mrb[0].mxu0
        %v6500 = vadd.f32 0.0, %v6499
        %v6501 = vpop.f32.mrb[0].mxu0
        %6502 = vdwg.mxu0
        %v6503 = vadd.f32 %v6391, %v6497
        %v6504 = vadd.f32 %v6392, %v6500
        %v6505 = vpack.c.bf16 %v5686, %v5685
        %v6506 = vpack.c.bf16 %v5688, %v5687
        %v6507 = vpack.c.bf16 %v5690, %v5689
        %v6508 = vpack.c.bf16 %v5692, %v5691
        %v6509 = vpack.c.bf16 %v5694, %v5693
        %v6510 = vpack.c.bf16 %v5696, %v5695
        %v6511 = vpack.c.bf16 %v5698, %v5697
        %v6512 = vpack.c.bf16 %v5700, %v5699
        %6513 = vmatprep.subr.bf16.mxu0 0
        %6514 = vmatpush1.bf16.msra.mxu0 %v6505
        %6515 = vmatprep.subr.bf16.mxu0 0
        %6516 = vmatpush1.bf16.msra.mxu0 %v6506
        %6517 = vmatprep.subr.bf16.mxu0 0
        %6518 = vmatpush1.bf16.msra.mxu0 %v6507
        %6519 = vmatprep.subr.bf16.mxu0 0
        %6520 = vmatpush1.bf16.msra.mxu0 %v6508
        %6521 = vmatprep.subr.bf16.mxu0 0
        %6522 = vmatpush1.bf16.msra.mxu0 %v6509
        %6523 = vmatprep.subr.bf16.mxu0 0
        %6524 = vmatpush1.bf16.msra.mxu0 %v6510
        %6525 = vmatprep.subr.bf16.mxu0 0
        %6526 = vmatpush1.bf16.msra.mxu0 %v6511
        %6527 = vmatprep.subr.bf16.mxu0 0
        %6528 = vmatpush1.bf16.msra.mxu0 %v6512
        %6529 = vmatprep.subr.bf16.mxu0 0
        %6530 = vmatpush1.bf16.msra.mxu0 0
        %6531 = vmatprep.subr.bf16.mxu0 0
        %6532 = vmatpush1.bf16.msra.mxu0 0
        %6533 = vmatprep.subr.bf16.mxu0 0
        %6534 = vmatpush1.bf16.msra.mxu0 0
        %6535 = vmatprep.subr.bf16.mxu0 0
        %6536 = vmatpush1.bf16.msra.mxu0 0
        %6537 = vmatprep.subr.bf16.mxu0 0
        %6538 = vmatpush1.bf16.msra.mxu0 0
        %6539 = vmatprep.subr.bf16.mxu0 0
        %6540 = vmatpush1.bf16.msra.mxu0 0
        %6541 = vmatprep.subr.bf16.mxu0 0
        %6542 = vmatpush1.bf16.msra.mxu0 0
        %6543 = vmatprep.subr.bf16.mxu0 0
        %6544 = vmatpush1.bf16.msra.mxu0 0
        %6545 = vmatprep.mubr.bf16.mxu0 0
        %6546 = vmatmul.mubr.bf16.gmra.mrb[0].mxu0 %v6281
        %v6547 = vpop.f32.mrb[0].mxu0
        %v6548 = vadd.f32 0.0, %v6547
        %v6549 = vpop.f32.mrb[0].mxu0
        %v6550 = vpop.f32.mrb[0].mxu0
        %v6551 = vadd.f32 0.0, %v6550
        %v6552 = vpop.f32.mrb[0].mxu0
        %6553 = vdwg.mxu0
        %v6554 = vpack.c.bf16 %v6551, %v6548
        %v6555 = vld [vmem:[%s7 + $0x20] sm:$0xf]
        %v6556 = vld [vmem:[%s7 + $0x24] sm:$0xf]
        %v6557 = vld [vmem:[%s7 + $0x28] sm:$0xf]
        %v6558 = vld [vmem:[%s7 + $0x2c] sm:$0xf]
        %v6563 = vunpack.c.l.b16 %v6555
        %v6564 = vunpack.c.l.b16 %v6556
        %v6565 = vunpack.c.l.b16 %v6557
        %v6566 = vunpack.c.l.b16 %v6558
        %v6567 = vpack.c.b16 %v6564, %v6563
        %v6568 = vpack.c.b16 %v6566, %v6565
        %v6572 = vsel %vm3228, %v6554, 0
        %6574 = vmatprep.subr.bf16.mxu0 0
        %6575 = vmatpush1.bf16.msra.mxu0 %v6567
        %6576 = vmatprep.subr.bf16.mxu0 0
        %6577 = vmatpush1.bf16.msra.mxu0 %v6568
        %6578 = vmatprep.subr.bf16.mxu0 0
        %6579 = vmatpush1.bf16.msra.mxu0 0
        %6580 = vmatprep.subr.bf16.mxu0 0
        %6581 = vmatpush1.bf16.msra.mxu0 0
        %6582 = vmatprep.subr.bf16.mxu0 0
        %6583 = vmatpush1.bf16.msra.mxu0 0
        %6584 = vmatprep.subr.bf16.mxu0 0
        %6585 = vmatpush1.bf16.msra.mxu0 0
        %6586 = vmatprep.subr.bf16.mxu0 0
        %6587 = vmatpush1.bf16.msra.mxu0 0
        %6588 = vmatprep.subr.bf16.mxu0 0
        %6589 = vmatpush1.bf16.msra.mxu0 0
        %6590 = vmatprep.subr.bf16.mxu0 0
        %6591 = vmatpush1.bf16.msra.mxu0 0
        %6592 = vmatprep.subr.bf16.mxu0 0
        %6593 = vmatpush1.bf16.msra.mxu0 0
        %6594 = vmatprep.subr.bf16.mxu0 0
        %6595 = vmatpush1.bf16.msra.mxu0 0
        %6596 = vmatprep.subr.bf16.mxu0 0
        %6597 = vmatpush1.bf16.msra.mxu0 0
        %6598 = vmatprep.subr.bf16.mxu0 0
        %6599 = vmatpush1.bf16.msra.mxu0 0
        %6600 = vmatprep.subr.bf16.mxu0 0
        %6601 = vmatpush1.bf16.msra.mxu0 0
        %6602 = vmatprep.subr.bf16.mxu0 0
        %6603 = vmatpush1.bf16.msra.mxu0 0
        %6604 = vmatprep.subr.bf16.mxu0 0
        %6605 = vmatpush1.bf16.msra.mxu0 0
        %6606 = vmatprep.mubr.bf16.mxu0 0
        %6607 = vmatmul.mubr.bf16.gmra.mrb[0].mxu0 %v6572
        %v6608 = vpop.f32.mrb[0].mxu0
        %v6609 = vadd.f32 0.0, %v6608
        %v6610 = vpop.f32.mrb[0].mxu0
        %v6611 = vpop.f32.mrb[0].mxu0
        %v6612 = vadd.f32 0.0, %v6611
        %v6613 = vpop.f32.mrb[0].mxu0
        %6614 = vdwg.mxu0
        %v6615 = vadd.f32 %v6503, %v6609
        %v6616 = vadd.f32 %v6504, %v6612
        %v6617 = vpack.c.bf16 %v6251, %v6250
        %v6618 = vpack.c.bf16 %v6253, %v6252
        %v6619 = vpack.c.bf16 %v6255, %v6254
        %v6620 = vpack.c.bf16 %v6257, %v6256
        %v6621 = vpack.c.bf16 %v6259, %v6258
        %v6622 = vpack.c.bf16 %v6261, %v6260
        %v6623 = vpack.c.bf16 %v6263, %v6262
        %v6624 = vpack.c.bf16 %v6265, %v6264
        %6625 = vmatprep.subr.bf16.mxu0 0
        %6626 = vmatpush1.bf16.msra.mxu0 %v6617
        %6627 = vmatprep.subr.bf16.mxu0 0
        %6628 = vmatpush1.bf16.msra.mxu0 %v6618
        %6629 = vmatprep.subr.bf16.mxu0 0
        %6630 = vmatpush1.bf16.msra.mxu0 %v6619
        %6631 = vmatprep.subr.bf16.mxu0 0
        %6632 = vmatpush1.bf16.msra.mxu0 %v6620
        %6633 = vmatprep.subr.bf16.mxu0 0
        %6634 = vmatpush1.bf16.msra.mxu0 %v6621
        %6635 = vmatprep.subr.bf16.mxu0 0
        %6636 = vmatpush1.bf16.msra.mxu0 %v6622
        %6637 = vmatprep.subr.bf16.mxu0 0
        %6638 = vmatpush1.bf16.msra.mxu0 %v6623
        %6639 = vmatprep.subr.bf16.mxu0 0
        %6640 = vmatpush1.bf16.msra.mxu0 %v6624
        %6641 = vmatprep.subr.bf16.mxu0 0
        %6642 = vmatpush1.bf16.msra.mxu0 0
        %6643 = vmatprep.subr.bf16.mxu0 0
        %6644 = vmatpush1.bf16.msra.mxu0 0
        %6645 = vmatprep.subr.bf16.mxu0 0
        %6646 = vmatpush1.bf16.msra.mxu0 0
        %6647 = vmatprep.subr.bf16.mxu0 0
        %6648 = vmatpush1.bf16.msra.mxu0 0
        %6649 = vmatprep.subr.bf16.mxu0 0
        %6650 = vmatpush1.bf16.msra.mxu0 0
        %6651 = vmatprep.subr.bf16.mxu0 0
        %6652 = vmatpush1.bf16.msra.mxu0 0
        %6653 = vmatprep.subr.bf16.mxu0 0
        %6654 = vmatpush1.bf16.msra.mxu0 0
        %6655 = vmatprep.subr.bf16.mxu0 0
        %6656 = vmatpush1.bf16.msra.mxu0 0
        %6657 = vmatprep.mubr.bf16.mxu0 0
        %6658 = vmatmul.mubr.bf16.gmra.mrb[0].mxu0 %v6281
        %v6659 = vpop.f32.mrb[0].mxu0
        %v6660 = vadd.f32 0.0, %v6659
        %v6661 = vpop.f32.mrb[0].mxu0
        %v6662 = vpop.f32.mrb[0].mxu0
        %v6663 = vadd.f32 0.0, %v6662
        %v6664 = vpop.f32.mrb[0].mxu0
        %6665 = vdwg.mxu0
        %v6666 = vpack.c.bf16 %v6663, %v6660
        %v6667 = vld [vmem:[%s7 + $0x30] sm:$0xf]
        %v6668 = vld [vmem:[%s7 + $0x34] sm:$0xf]
        %v6669 = vld [vmem:[%s7 + $0x38] sm:$0xf]
        %v6670 = vld [vmem:[%s7 + $0x3c] sm:$0xf]
        %v6675 = vunpack.c.l.b16 %v6667
        %v6676 = vunpack.c.l.b16 %v6668
        %v6677 = vunpack.c.l.b16 %v6669
        %v6678 = vunpack.c.l.b16 %v6670
        %v6679 = vpack.c.b16 %v6676, %v6675
        %v6680 = vpack.c.b16 %v6678, %v6677
        %v6684 = vsel %vm3228, %v6666, 0
        %6686 = vmatprep.subr.bf16.mxu0 0
        %6687 = vmatpush1.bf16.msra.mxu0 %v6679
        %6688 = vmatprep.subr.bf16.mxu0 0
        %6689 = vmatpush1.bf16.msra.mxu0 %v6680
        %6690 = vmatprep.subr.bf16.mxu0 0
        %6691 = vmatpush1.bf16.msra.mxu0 0
        %6692 = vmatprep.subr.bf16.mxu0 0
        %6693 = vmatpush1.bf16.msra.mxu0 0
        %6694 = vmatprep.subr.bf16.mxu0 0
        %6695 = vmatpush1.bf16.msra.mxu0 0
        %6696 = vmatprep.subr.bf16.mxu0 0
        %6697 = vmatpush1.bf16.msra.mxu0 0
        %6698 = vmatprep.subr.bf16.mxu0 0
        %6699 = vmatpush1.bf16.msra.mxu0 0
        %6700 = vmatprep.subr.bf16.mxu0 0
        %6701 = vmatpush1.bf16.msra.mxu0 0
        %6702 = vmatprep.subr.bf16.mxu0 0
        %6703 = vmatpush1.bf16.msra.mxu0 0
        %6704 = vmatprep.subr.bf16.mxu0 0
        %6705 = vmatpush1.bf16.msra.mxu0 0
        %6706 = vmatprep.subr.bf16.mxu0 0
        %6707 = vmatpush1.bf16.msra.mxu0 0
        %6708 = vmatprep.subr.bf16.mxu0 0
        %6709 = vmatpush1.bf16.msra.mxu0 0
        %6710 = vmatprep.subr.bf16.mxu0 0
        %6711 = vmatpush1.bf16.msra.mxu0 0
        %6712 = vmatprep.subr.bf16.mxu0 0
        %6713 = vmatpush1.bf16.msra.mxu0 0
        %6714 = vmatprep.subr.bf16.mxu0 0
        %6715 = vmatpush1.bf16.msra.mxu0 0
        %6716 = vmatprep.subr.bf16.mxu0 0
        %6717 = vmatpush1.bf16.msra.mxu0 0
        %6718 = vmatprep.mubr.bf16.mxu0 0
        %6719 = vmatmul.mubr.bf16.gmra.mrb[0].mxu0 %v6684
        %v6720 = vpop.f32.mrb[0].mxu0
        %v6721 = vadd.f32 0.0, %v6720
        %v6722 = vpop.f32.mrb[0].mxu0
        %v6723 = vpop.f32.mrb[0].mxu0
        %v6724 = vadd.f32 0.0, %v6723
        %v6725 = vpop.f32.mrb[0].mxu0
        %6726 = vdwg.mxu0
        %v6727 = vadd.f32 %v6615, %v6721
        %v6728 = vadd.f32 %v6616, %v6724
        %v6729 = vmax.f32 %v6727, 0.0
        %v6730 = vmax.f32 %v6728, 0.0
        %v6731 = vpack.c.bf16 %v6730, %v6729
        %v6732 = vld [vmem:[%s9] sm:$0xf]
        %v6733 = vld [vmem:[%s9 + $0x4] sm:$0xf]
        %v6734 = vld [vmem:[%s9 + $0x8] sm:$0xf]
        %v6735 = vld [vmem:[%s9 + $0xc] sm:$0xf]
        %v6736 = vld [vmem:[%s9 + $0x10] sm:$0xf]
        %v6737 = vld [vmem:[%s9 + $0x14] sm:$0xf]
        %v6738 = vld [vmem:[%s9 + $0x18] sm:$0xf]
        %v6739 = vld [vmem:[%s9 + $0x1c] sm:$0xf]
        %v6740 = vld [vmem:[%s10] sm:$0x1]
        %v6742 = vlaneseq
        %v6743 = vshrl.u32 %v6742, 7
        %v6744 = vsub.s32 0, %v6743
        %v6745 = vrot.slane %v6740, %v6744
        %v6755 = vunpack.c.l.b16 %v6732
        %v6756 = vunpack.c.l.b16 %v6733
        %v6757 = vunpack.c.l.b16 %v6734
        %v6758 = vunpack.c.l.b16 %v6735
        %v6759 = vunpack.c.l.b16 %v6736
        %v6760 = vunpack.c.l.b16 %v6737
        %v6761 = vunpack.c.l.b16 %v6738
        %v6762 = vunpack.c.l.b16 %v6739
        %v6763 = vpack.c.b16 %v6756, %v6755
        %v6764 = vpack.c.b16 %v6758, %v6757
        %v6765 = vpack.c.b16 %v6760, %v6759
        %v6766 = vpack.c.b16 %v6762, %v6761
        %vm6771 = vcmask 523264
        %v6773 = vsel %vm6771, %v6731, 0
        %6775 = vmatprep.subr.bf16.mxu0 0
        %6776 = vmatpush1.bf16.msra.mxu0 %v6763
        %6777 = vmatprep.subr.bf16.mxu0 0
        %6778 = vmatpush1.bf16.msra.mxu0 %v6764
        %6779 = vmatprep.subr.bf16.mxu0 0
        %6780 = vmatpush1.bf16.msra.mxu0 %v6765
        %6781 = vmatprep.subr.bf16.mxu0 0
        %6782 = vmatpush1.bf16.msra.mxu0 %v6766
        %6783 = vmatprep.subr.bf16.mxu0 0
        %6784 = vmatpush1.bf16.msra.mxu0 0
        %6785 = vmatprep.subr.bf16.mxu0 0
        %6786 = vmatpush1.bf16.msra.mxu0 0
        %6787 = vmatprep.subr.bf16.mxu0 0
        %6788 = vmatpush1.bf16.msra.mxu0 0
        %6789 = vmatprep.subr.bf16.mxu0 0
        %6790 = vmatpush1.bf16.msra.mxu0 0
        %6791 = vmatprep.subr.bf16.mxu0 0
        %6792 = vmatpush1.bf16.msra.mxu0 0
        %6793 = vmatprep.subr.bf16.mxu0 0
        %6794 = vmatpush1.bf16.msra.mxu0 0
        %6795 = vmatprep.subr.bf16.mxu0 0
        %6796 = vmatpush1.bf16.msra.mxu0 0
        %6797 = vmatprep.subr.bf16.mxu0 0
        %6798 = vmatpush1.bf16.msra.mxu0 0
        %6799 = vmatprep.subr.bf16.mxu0 0
        %6800 = vmatpush1.bf16.msra.mxu0 0
        %6801 = vmatprep.subr.bf16.mxu0 0
        %6802 = vmatpush1.bf16.msra.mxu0 0
        %6803 = vmatprep.subr.bf16.mxu0 0
        %6804 = vmatpush1.bf16.msra.mxu0 0
        %6805 = vmatprep.subr.bf16.mxu0 0
        %6806 = vmatpush1.bf16.msra.mxu0 0
        %6807 = vmatprep.mubr.bf16.mxu0 0
        %6808 = vmatmul.mubr.bf16.gmra.mrb[0].mxu0 %v6773
        %v6809 = vpop.f32.mrb[0].mxu0
        %v6810 = vadd.f32 %v6745, %v6809
        %v6811 = vpop.f32.mrb[0].mxu0
        %v6812 = vpop.f32.mrb[0].mxu0
        %v6813 = vadd.f32 %v6745, %v6812
        %v6814 = vpop.f32.mrb[0].mxu0
        %6815 = vdwg.mxu0
        %v6816 = vmax.f32 %v6810, 0.0
        %v6817 = vmax.f32 %v6813, 0.0
        %v6818 = vpack.c.bf16 %v6817, %v6816
        %v6819 = vld [vmem:[%s11] sm:$0xf]
        %v6820 = vld [vmem:[%s11 + $0x4] sm:$0xf]
        %v6821 = vld [vmem:[%s11 + $0x8] sm:$0xf]
        %v6822 = vld [vmem:[%s11 + $0xc] sm:$0xf]
        %v6823 = vld [vmem:[%s11 + $0x10] sm:$0xf]
        %v6824 = vld [vmem:[%s11 + $0x14] sm:$0xf]
        %v6825 = vld [vmem:[%s11 + $0x18] sm:$0xf]
        %v6826 = vld [vmem:[%s11 + $0x1c] sm:$0xf]
        %v6827 = vld [vmem:[%s12] sm:$0x1]
        %v6829 = vlaneseq
        %v6830 = vshrl.u32 %v6829, 7
        %v6831 = vsub.s32 0, %v6830
        %v6832 = vrot.slane %v6827, %v6831
        %v6842 = vunpack.c.l.b16 %v6819
        %v6843 = vunpack.c.l.b16 %v6820
        %v6844 = vunpack.c.l.b16 %v6821
        %v6845 = vunpack.c.l.b16 %v6822
        %v6846 = vunpack.c.l.b16 %v6823
        %v6847 = vunpack.c.l.b16 %v6824
        %v6848 = vunpack.c.l.b16 %v6825
        %v6849 = vunpack.c.l.b16 %v6826
        %v6850 = vpack.c.b16 %v6843, %v6842
        %v6851 = vpack.c.b16 %v6845, %v6844
        %v6852 = vpack.c.b16 %v6847, %v6846
        %v6853 = vpack.c.b16 %v6849, %v6848
        %v6859 = vsel %vm6771, %v6818, 0
        %6861 = vmatprep.subr.bf16.mxu0 0
        %6862 = vmatpush1.bf16.msra.mxu0 %v6850
        %6863 = vmatprep.subr.bf16.mxu0 0
        %6864 = vmatpush1.bf16.msra.mxu0 %v6851
        %6865 = vmatprep.subr.bf16.mxu0 0
        %6866 = vmatpush1.bf16.msra.mxu0 %v6852
        %6867 = vmatprep.subr.bf16.mxu0 0
        %6868 = vmatpush1.bf16.msra.mxu0 %v6853
        %6869 = vmatprep.subr.bf16.mxu0 0
        %6870 = vmatpush1.bf16.msra.mxu0 0
        %6871 = vmatprep.subr.bf16.mxu0 0
        %6872 = vmatpush1.bf16.msra.mxu0 0
        %6873 = vmatprep.subr.bf16.mxu0 0
        %6874 = vmatpush1.bf16.msra.mxu0 0
        %6875 = vmatprep.subr.bf16.mxu0 0
        %6876 = vmatpush1.bf16.msra.mxu0 0
        %6877 = vmatprep.subr.bf16.mxu0 0
        %6878 = vmatpush1.bf16.msra.mxu0 0
        %6879 = vmatprep.subr.bf16.mxu0 0
        %6880 = vmatpush1.bf16.msra.mxu0 0
        %6881 = vmatprep.subr.bf16.mxu0 0
        %6882 = vmatpush1.bf16.msra.mxu0 0
        %6883 = vmatprep.subr.bf16.mxu0 0
        %6884 = vmatpush1.bf16.msra.mxu0 0
        %6885 = vmatprep.subr.bf16.mxu0 0
        %6886 = vmatpush1.bf16.msra.mxu0 0
        %6887 = vmatprep.subr.bf16.mxu0 0
        %6888 = vmatpush1.bf16.msra.mxu0 0
        %6889 = vmatprep.subr.bf16.mxu0 0
        %6890 = vmatpush1.bf16.msra.mxu0 0
        %6891 = vmatprep.subr.bf16.mxu0 0
        %6892 = vmatpush1.bf16.msra.mxu0 0
        %6893 = vmatprep.mubr.bf16.mxu0 0
        %6894 = vmatmul.mubr.bf16.gmra.mrb[0].mxu0 %v6859
        %v6895 = vpop.f32.mrb[0].mxu0
        %v6896 = vadd.f32 %v6832, %v6895
        %v6897 = vpop.f32.mrb[0].mxu0
        %v6898 = vpop.f32.mrb[0].mxu0
        %v6899 = vadd.f32 %v6832, %v6898
        %v6900 = vpop.f32.mrb[0].mxu0
        %6901 = vdwg.mxu0
        %6902 = vst [vmem:[%s503] sm:$0xff] %v6896
        %6903 = vst [vmem:[%s503 + $0x8] sm:$0xff] %v6899
        %s6904 = sand.u32 %s322, 1
        %s6905 = scalar_lea.sflag [#allocation4], %s6904
        %s6906 = sand.u32 %s322, 1
        %s6907 = smul.addr %s6906, 16
        %s6908 = scalar_lea.vmem [#allocation8], %s6907
        // Predicated region
        $region85: #{tpu_custom_call.1} parent=71 // pred_check
          %p6909 = pneg %p332
        $region86: #{tpu_custom_call.1} parent=71 // pred_check_branch
          %6911 = sbr.rel (%p6909) target = $region88
        $region87: #{tpu_custom_call.1} parent=71 // pred_region
          %s6912 = smul.u32 2, %s31
          %s6914 = ssub.s32 256, 256
          %6915 = vsyncadd %s6905, %s6914
          %s6916 = smul.addr %s6912, 128
          %s6917 = scalar_lea.hbm %s13, %s6916
          %s6918 = sshll.u32 %s6908, 4
          %s6919 = int_to_ptr.vmem [resolvable:$true] %s6918
          %6924 = dma.vmem_to_hbm [thread:$0]  %s6919, 256, %s6917, %s6905, 128, 128, 8
        $region88: #{tpu_custom_call.1} parent=71 // pred_fallthru
          _
      $region72: #{tpu_custom_call.1} parent=5 // pred_fallthru
        _
      %p6925 = scmp.le.s32.totalorder 2, %s26
      // Predicated region
      $region89: #{tpu_custom_call.1} parent=5 // pred_check
        %p6926 = pneg %p6925
      $region90: #{tpu_custom_call.1} parent=5 // pred_check_branch
        %6928 = sbr.rel (%p6926) target = $region92
      $region91: #{tpu_custom_call.1} parent=5 // pred_region
        %s6929 = ssub.s32 %s26, 2
        // Predicated region
        $region93: #{tpu_custom_call.1} parent=91 // pred_check
          %p6930 = pneg %p338
        $region94: #{tpu_custom_call.1} parent=91 // pred_check_branch
          %6932 = sbr.rel (%p6930) target = $region96
        $region95: #{tpu_custom_call.1} parent=91 // pred_region
          %s6933 = sand.u32 %s323, 1
          %s6934 = scalar_lea.sflag [#allocation4], %s6933
          %s6935 = sand.u32 %s323, 1
          %s6936 = smul.addr %s6935, 16
          %s6937 = scalar_lea.vmem [#allocation8], %s6936
          %6938 = dma.done %s6934, 256
        $region96: #{tpu_custom_call.1} parent=91 // pred_fallthru
          _
      $region92: #{tpu_custom_call.1} parent=5 // pred_fallthru
        _
    $region6: #{tpu_custom_call.1} parent=1 // loop_footer
      %s30 = sadd.s32 1, %s26
    $region7: #{tpu_custom_call.1} parent=1 // loop_footer_branch
      %25 = sbr.rel target = $region3
    $region8: #{tpu_custom_call.1} parent=1 // loop_exit
      _
    %6939 = vsyncpa [#allocation3], 1
    %s6940 = scalar_lea.sflag [#allocation3], 1
    %6941 = vsyncpa %s6940, 1
    %6942 = vsyncpa [#allocation6], 1
    %6943 = vsyncpa [#allocation4], 1
    %s6944 = scalar_lea.sflag [#allocation4], 1
    %6945 = vsyncpa %s6944, 1

</llo_original>
